<compile_context>
chip_gen: v7x
topology: tpu7x:2x2x1
jax: 0.10.0
libtpu: 0.0.40
codegen_flags: <defaults>
</compile_context>

<pallas_src>
import numpy as np
import jax
import jax.numpy as jnp
from jax import lax
from jax.experimental import pallas as pl
from jax.experimental.pallas import tpu as pltpu

HID_CHANNELS = 32
LATENT_DIM = 10
HIDDEN_DIM = 256
KERNEL_SIZE = 4
IMG_SIZE = (1, 32, 32)          # (n_chan, H, W); no convT_64 branch for 32x32 images
MLP_K1 = 16                     # lin1 contraction padded 10 -> 16

# Weight dtype for the MLP + first two deconvs (final sigmoid layer is kept in f32).
# bfloat16 halves weight DMA and uses the MXU's bf16 rate; accumulation stays f32.
MATMUL_DTYPE = jnp.bfloat16


# ------------------------------ in-kernel helpers ------------------------------
def _relu(x):
    return jnp.maximum(x, 0.0)


def _dot(a, w):
    # Weights are pre-cast in prepare_params; only the (small) activation is cast here.
    return jnp.dot(a.astype(w.dtype), w, preferred_element_type=jnp.float32)


def _interleave_rows(a, b):
    """(N, L), (N, L) -> (2N, L) rows a0, b0, a1, b1, ...  (lane dim untouched)."""
    n, l = a.shape
    a2 = jnp.broadcast_to(a[:, None, :], (n, 2, l)).reshape(2 * n, l)
    b2 = jnp.broadcast_to(b[:, None, :], (n, 2, l)).reshape(2 * n, l)
    rid = lax.broadcasted_iota(jnp.int32, (2 * n, l), 0)
    return jnp.where(rid % 2 == 0, a2, b2)


def _pair_rows(a):
    """(B, H+2, L) padded activation -> ((B*(H+1), 2L) row-pair matmul input, H+1)."""
    B, hp2, L = a.shape
    P = hp2 - 1
    g = jnp.concatenate([a[:, :P, :], a[:, 1:, :]], axis=-1)     # (B, P, 2L)
    return g.reshape(B * P, 2 * L), P


def _convt_block(g2, w, b, B, P):
    """ConvTranspose2d(k=4, s=2, p=1) + ReLU from a row-pair input.

    g2: (B*P, 2*W*Cin) row-pair input, K order (dy, iw, ci).
    w:  (2*W*Cin, 2*(2W)*Cout) Toeplitz-packed weight, N order (r, ow, co).
    Returns the next layer's padded activation (B, 2P, (2W)*Cout); its first and last rows
    are zero and double as that layer's padding.  The two output row-phases are interleaved
    and border-masked with a single iota + one fused (nested) select.
    """
    y = _relu(_dot(g2, w) + b)                                   # (B*P, 2*Lout)
    lout = y.shape[-1] // 2
    n = B * P
    up = jnp.broadcast_to(y[:, None, :lout], (n, 2, lout)).reshape(2 * n, lout)
    dn = jnp.broadcast_to(y[:, None, lout:], (n, 2, lout)).reshape(2 * n, lout)
    rid = lax.broadcasted_iota(jnp.int32, (2 * n, lout), 0)
    rb = rid % (2 * P)                                           # row index within one image
    o = jnp.where((rb == 0) | (rb == 2 * P - 1), 0.0,
                  jnp.where(rid % 2 == 0, up, dn))
    return o.reshape(B, 2 * P, lout)


# ------------------------------ fused decoder kernel ---------------------------
def _decoder_kernel(z_ref, w1_ref, b1_ref, w2_ref, b2_ref, w3_ref, b3_ref,
                    wt1_ref, bt1_ref, wt2_ref, bt2_ref, wt3_ref, bt3_ref,
                    o_ref):
    B, zdim = z_ref.shape
    k1 = w1_ref.shape[0]

    # ---------------- MLP (3 x Linear + ReLU) ----------------
    z = z_ref[...]
    if k1 > zdim:  # fold the K=10 -> 16 zero pad into the kernel (lane concat)
        z = jnp.concatenate([z, jnp.zeros((B, k1 - zdim), jnp.float32)], axis=-1)
    h = _relu(_dot(z, w1_ref[...]) + b1_ref[...])                # (B, 256)
    h = _relu(_dot(h, w2_ref[...]) + b2_ref[...])                # (B, 256)
    h3 = _relu(_dot(h, w3_ref[...]) + b3_ref[...])               # (B, 512), cols (ih, iw, ci)

    # --- build the first deconv's row-pair matmul input straight from h3 (no scatter) ---
    HC, K = HID_CHANNELS, KERNEL_SIZE
    lane = K * HC                                                # 4 * 32 = 128
    zpad = jnp.zeros((B, lane), jnp.float32)
    hp = jnp.concatenate([zpad, h3, zpad], axis=-1)              # (B, 768): [pad, ih=0..3, pad]
    P1 = K + 1                                                   # 5 row pairs
    g1 = jnp.concatenate(
        [hp[:, p * lane:(p + 2) * lane][:, None, :] for p in range(P1)], axis=1)
    g1 = g1.reshape(B * P1, 2 * lane)                            # (B*5, 256)

    # ---------------- transposed convolutions ----------------
    a = _convt_block(g1, wt1_ref[...], bt1_ref[...], B, P1)      # (B, 10,  8*32)
    g2, P2 = _pair_rows(a)                                       # (B*9, 512)
    a = _convt_block(g2, wt2_ref[...], bt2_ref[...], B, P2)      # (B, 18, 16*32)

    # Final layer: sigmoid, Cout = 1, weight kept in f32.
    g3, P3 = _pair_rows(a)                                       # (B*17, 1024)
    y = jax.nn.sigmoid(_dot(g3, wt3_ref[...]) + bt3_ref[...])    # (B*17, 64), cols (r, ow)
    W = IMG_SIZE[2]
    y3 = y.reshape(B, P3, 2 * W)                                 # (B, 17, 64)
    # Output row oh reads (p, r) = ((oh+1)//2, (oh+1)%2):
    #   even rows 0,2,...,30 -> r=1 slab at p=0..15; odd rows 1,3,...,31 -> r=0 slab at p=1..16.
    y_even = y3[:, :P3 - 1, W:].reshape(B * (P3 - 1), W)         # (B*16, 32)
    y_odd = y3[:, 1:, :W].reshape(B * (P3 - 1), W)               # (B*16, 32)
    img = _interleave_rows(y_even, y_odd)                        # (B*32, 32)
    o_ref[...] = img.reshape(B, 2 * (P3 - 1), W).astype(o_ref.dtype)


# ------------------------------ wrapper ----------------------------------------
def decoder_burgess_forward(z, prep, b_blk=None):
    B = z.shape[0]
    H, W = IMG_SIZE[1], IMG_SIZE[2]
    if b_blk is None:
        # M of the dominant wt2 matmul is 9*b_blk; 32 keeps it >= 256 once B >= 32.
        b_blk = B if B <= 32 else 32
    nb = pl.cdiv(B, b_blk)

    weights = (prep["w1"], prep["b1"], prep["w2"], prep["b2"], prep["w3"], prep["b3"],
               prep["wt1"], prep["bt1"], prep["wt2"], prep["bt2"], prep["wt3"], prep["bt3"])

    in_specs = [pl.BlockSpec((b_blk, z.shape[1]), lambda i: (i, 0))]
    for wgt in weights:  # constant block index -> weights stay VMEM-resident across steps
        in_specs.append(pl.BlockSpec(wgt.shape, lambda i, nd=wgt.ndim: (0,) * nd))

    out = pl.pallas_call(
        _decoder_kernel,
        out_shape=jax.ShapeDtypeStruct((B, H, W), jnp.float32),
        grid=(nb,),
        in_specs=in_specs,
        out_specs=pl.BlockSpec((b_blk, H, W), lambda i: (i, 0, 0)),
        compiler_params=pltpu.CompilerParams(
            dimension_semantics=("parallel",),        # v7x: shard batch steps over both TCs
            vmem_limit_bytes=48 * 1024 * 1024),       # explicit limit (v7x: 64 MiB physical)
    )(z, *weights)
    return out.reshape(B, IMG_SIZE[0], H, W)


# --------------------- one-time parameter packing (wrapper side) ----------------
def prepare_params(params):
    HC, K = HID_CHANNELS, KERNEL_SIZE
    f32 = jnp.float32

    # lin1: pad the K=10 contraction to 16.
    w1 = jnp.concatenate(
        [params["w1"], jnp.zeros((MLP_K1 - LATENT_DIM, HIDDEN_DIM), f32)], axis=0)

    # lin3: permute columns from torch's .view order (c, ih, iw) to (ih, iw, c).
    perm = np.zeros(HC * K * K, np.int32)
    for ih in range(K):
        for iw in range(K):
            for c in range(HC):
                perm[(ih * K + iw) * HC + c] = c * K * K + ih * K + iw
    w3p = params["w3"][:, perm]
    b3p = params["b3"][perm]

    def toep(wt, bias, W):
        """Pack a ConvTranspose2d weight (Cin, Cout, 4, 4) into the row-blocked
        sub-pixel matrix (2*W*Cin, 2*(2W)*Cout)."""
        Cin, Cout = wt.shape[0], wt.shape[1]
        taps = jnp.transpose(wt, (2, 3, 0, 1)).reshape(16, Cin, Cout)   # (kh*4+kw, Cin, Cout)
        idx = np.zeros((2, W, 2, 2 * W), np.int32)
        msk = np.zeros((2, W, 2, 2 * W), np.float32)
        for dy in range(2):
            for iw in range(W):
                for r in range(2):
                    for ow in range(2 * W):
                        kh = 2 + r - 2 * dy            # always in [0, 3]
                        kw = ow + 1 - 2 * iw
                        if 0 <= kw <= 3:
                            idx[dy, iw, r, ow] = kh * 4 + kw
                            msk[dy, iw, r, ow] = 1.0
        big = taps[idx] * msk[..., None, None]          # (2, W, 2, 2W, Cin, Cout)
        big = jnp.transpose(big, (0, 1, 4, 2, 3, 5))    # (dy, iw, Cin, r, ow, Cout)
        w_t = big.reshape(2 * W * Cin, 4 * W * Cout)
        b_t = jnp.tile(bias, 4 * W).reshape(1, -1)
        return w_t, b_t

    wt1, bt1 = toep(params["wc1"], params["bc1"], K)          # W = 4
    wt2, bt2 = toep(params["wc2"], params["bc2"], 2 * K)      # W = 8
    wt3, bt3 = toep(params["wc3"], params["bc3"], 4 * K)      # W = 16

    wd = MATMUL_DTYPE
    return {
        "w1": w1.astype(wd), "b1": params["b1"].reshape(1, -1),
        "w2": params["w2"].astype(wd), "b2": params["b2"].reshape(1, -1),
        "w3": w3p.astype(wd), "b3": b3p.reshape(1, -1),
        "wt1": wt1.astype(wd), "bt1": bt1,
        "wt2": wt2.astype(wd), "bt2": bt2,
        "wt3": wt3.astype(f32), "bt3": bt3,               # final sigmoid layer stays f32
    }


# --------------------------- pure-JAX reference --------------------------------
def reference_forward(z, params):
    B = z.shape[0]
    h = jax.nn.relu(z @ params["w1"] + params["b1"])
    h = jax.nn.relu(h @ params["w2"] + params["b2"])
    h = jax.nn.relu(h @ params["w3"] + params["b3"])
    x = h.reshape(B, HID_CHANNELS, KERNEL_SIZE, KERNEL_SIZE)
    x = jnp.transpose(x, (0, 2, 3, 1))

    def ct(x, w_t, b, act):
        w_conv = jnp.transpose(w_t[:, :, ::-1, ::-1], (2, 3, 0, 1))   # HWIO
        out = lax.conv_general_dilated(
            x, w_conv, window_strides=(1, 1),
            padding=((2, 2), (2, 2)), lhs_dilation=(2, 2),
            dimension_numbers=("NHWC", "HWIO", "NHWC"))
        out = out + b
        return jax.nn.relu(out) if act == "relu" else jax.nn.sigmoid(out)

    x = ct(x, params["wc1"], params["bc1"], "relu")
    x = ct(x, params["wc2"], params["bc2"], "relu")
    x = ct(x, params["wc3"], params["bc3"], "sigmoid")
    return jnp.transpose(x, (0, 3, 1, 2))


# --------------------------- parameter init ------------------------------------
def init_params(key):
    ks = jax.random.split(key, 12)
    f32 = jnp.float32
    reshape_dim = HID_CHANNELS * KERNEL_SIZE * KERNEL_SIZE            # 512
    n_chan = IMG_SIZE[0]
    return {
        # Linear weights stored as (in, out); PyTorch stores (out, in) and does x @ W^T.
        "w1": jax.random.normal(ks[0], (LATENT_DIM, HIDDEN_DIM), f32) * 0.1,
        "b1": jax.random.normal(ks[1], (HIDDEN_DIM,), f32) * 0.01,
        "w2": jax.random.normal(ks[2], (HIDDEN_DIM, HIDDEN_DIM), f32) * 0.05,
        "b2": jax.random.normal(ks[3], (HIDDEN_DIM,), f32) * 0.01,
        "w3": jax.random.normal(ks[4], (HIDDEN_DIM, reshape_dim), f32) * 0.05,
        "b3": jax.random.normal(ks[5], (reshape_dim,), f32) * 0.01,
        # ConvTranspose2d weights in PyTorch layout (Cin, Cout, KH, KW).
        "wc1": jax.random.normal(ks[6], (HID_CHANNELS, HID_CHANNELS, 4, 4), f32) * 0.05,
        "bc1": jax.random.normal(ks[7], (HID_CHANNELS,), f32) * 0.01,
        "wc2": jax.random.normal(ks[8], (HID_CHANNELS, HID_CHANNELS, 4, 4), f32) * 0.05,
        "bc2": jax.random.normal(ks[9], (HID_CHANNELS,), f32) * 0.01,
        "wc3": jax.random.normal(ks[10], (HID_CHANNELS, n_chan, 4, 4), f32) * 0.05,
        "bc3": jax.random.normal(ks[11], (n_chan,), f32) * 0.01,
    }


if __name__ == "__main__":
    key = jax.random.PRNGKey(0)
    k_param, k_z = jax.random.split(key)
    params = init_params(k_param)
    prep = prepare_params(params)      # one-time weight repacking + bf16 pre-cast

    batch = 2
    z = jax.random.normal(k_z, (batch, LATENT_DIM), jnp.float32)

    out = jax.block_until_ready(decoder_burgess_forward(z, prep))
    ref = jax.block_until_ready(reference_forward(z, params))

    assert out.shape == (batch, IMG_SIZE[0], IMG_SIZE[1], IMG_SIZE[2]), out.shape
    diff = float(np.max(np.abs(np.asarray(out) - np.asarray(ref))))
    tol = 5e-4 if MATMUL_DTYPE == jnp.float32 else 1e-2   # bf16 weights vs f32 reference
    assert diff < tol, "max abs diff %g exceeds tol %g" % (diff, tol)
    print("KERNEL_OK")
</pallas_src>

<mosaic_0001>
module attributes {stable_mosaic.version = 11 : i64} {
  func.func @_decoder_kernel(%arg0: i32, %arg1: memref<2x10xf32, #tpu.memory_space<vmem>>, %arg2: memref<16x256xbf16, #tpu.memory_space<vmem>>, %arg3: memref<1x256xf32, #tpu.memory_space<vmem>>, %arg4: memref<256x256xbf16, #tpu.memory_space<vmem>>, %arg5: memref<1x256xf32, #tpu.memory_space<vmem>>, %arg6: memref<256x512xbf16, #tpu.memory_space<vmem>>, %arg7: memref<1x512xf32, #tpu.memory_space<vmem>>, %arg8: memref<256x512xbf16, #tpu.memory_space<vmem>>, %arg9: memref<1x512xf32, #tpu.memory_space<vmem>>, %arg10: memref<512x1024xbf16, #tpu.memory_space<vmem>>, %arg11: memref<1x1024xf32, #tpu.memory_space<vmem>>, %arg12: memref<1024x64xf32, #tpu.memory_space<vmem>>, %arg13: memref<1x64xf32, #tpu.memory_space<vmem>>, %arg14: memref<2x32x32xf32, #tpu.memory_space<vmem>>) attributes {dimension_semantics = [#tpu.dimension_semantics<parallel>], iteration_bounds = array<i64: 1>, scalar_prefetch = 0 : i64, scratch_operands = 0 : i64, tpu.core_type = #tpu.core_type<tc>, window_params = [{transform_indices = @transform_0, window_bounds = array<i64: 2, 10>}, {pipeline_mode = #tpu.pipeline_mode<synchronous>, transform_indices = @transform_1, window_bounds = array<i64: 16, 256>}, {pipeline_mode = #tpu.pipeline_mode<synchronous>, transform_indices = @transform_2, window_bounds = array<i64: 1, 256>}, {pipeline_mode = #tpu.pipeline_mode<synchronous>, transform_indices = @transform_3, window_bounds = array<i64: 256, 256>}, {pipeline_mode = #tpu.pipeline_mode<synchronous>, transform_indices = @transform_4, window_bounds = array<i64: 1, 256>}, {pipeline_mode = #tpu.pipeline_mode<synchronous>, transform_indices = @transform_5, window_bounds = array<i64: 256, 512>}, {pipeline_mode = #tpu.pipeline_mode<synchronous>, transform_indices = @transform_6, window_bounds = array<i64: 1, 512>}, {pipeline_mode = #tpu.pipeline_mode<synchronous>, transform_indices = @transform_7, window_bounds = array<i64: 256, 512>}, {pipeline_mode = #tpu.pipeline_mode<synchronous>, transform_indices = @transform_8, window_bounds = array<i64: 1, 512>}, {pipeline_mode = #tpu.pipeline_mode<synchronous>, transform_indices = @transform_9, window_bounds = array<i64: 512, 1024>}, {pipeline_mode = #tpu.pipeline_mode<synchronous>, transform_indices = @transform_10, window_bounds = array<i64: 1, 1024>}, {pipeline_mode = #tpu.pipeline_mode<synchronous>, transform_indices = @transform_11, window_bounds = array<i64: 1024, 64>}, {pipeline_mode = #tpu.pipeline_mode<synchronous>, transform_indices = @transform_12, window_bounds = array<i64: 1, 64>}, {transform_indices = @transform_13, window_bounds = array<i64: 2, 32, 32>}]} {
    %c0 = arith.constant 0 : index
    %c0_0 = arith.constant 0 : index
    %0 = vector.load %arg1[%c0, %c0_0] : memref<2x10xf32, #tpu.memory_space<vmem>>, vector<2x10xf32>
    %cst = arith.constant 0.000000e+00 : f32
    %1 = vector.broadcast %cst : f32 to vector<2x6xf32>
    %2 = tpu.concatenate %0, %1 in 1 : vector<2x10xf32>, vector<2x6xf32> -> vector<2x16xf32>
    %c0_1 = arith.constant 0 : index
    %c0_2 = arith.constant 0 : index
    %3 = vector.load %arg2[%c0_1, %c0_2] : memref<16x256xbf16, #tpu.memory_space<vmem>>, vector<16x256xbf16>
    %4 = arith.truncf %2 : vector<2x16xf32> to vector<2x16xbf16>
    %cst_3 = arith.constant dense<0.000000e+00> : vector<2x256xf32>
    %5 = tpu.matmul %4, %3, %cst_3 {dimension_numbers = #tpu.dot_dimension_numbers<[1], [0], [0], [1], [0, 0, 1, 1], [], []>} : vector<2x16xbf16>, vector<16x256xbf16>, vector<2x256xf32> -> vector<2x256xf32>
    %c0_4 = arith.constant 0 : index
    %c0_5 = arith.constant 0 : index
    %6 = vector.load %arg3[%c0_4, %c0_5] : memref<1x256xf32, #tpu.memory_space<vmem>>, vector<1x256xf32>
    %7 = vector.broadcast %6 : vector<1x256xf32> to vector<2x256xf32>
    %8 = arith.addf %5, %7 : vector<2x256xf32>
    %cst_6 = arith.constant 0.000000e+00 : f32
    %9 = vector.broadcast %cst_6 : f32 to vector<2x256xf32>
    %10 = arith.maximumf %8, %9 : vector<2x256xf32>
    %c0_7 = arith.constant 0 : index
    %c0_8 = arith.constant 0 : index
    %11 = vector.load %arg4[%c0_7, %c0_8] : memref<256x256xbf16, #tpu.memory_space<vmem>>, vector<256x256xbf16>
    %12 = arith.truncf %10 : vector<2x256xf32> to vector<2x256xbf16>
    %cst_9 = arith.constant dense<0.000000e+00> : vector<2x256xf32>
    %13 = tpu.matmul %12, %11, %cst_9 {dimension_numbers = #tpu.dot_dimension_numbers<[1], [0], [0], [1], [0, 0, 1, 1], [], []>} : vector<2x256xbf16>, vector<256x256xbf16>, vector<2x256xf32> -> vector<2x256xf32>
    %c0_10 = arith.constant 0 : index
    %c0_11 = arith.constant 0 : index
    %14 = vector.load %arg5[%c0_10, %c0_11] : memref<1x256xf32, #tpu.memory_space<vmem>>, vector<1x256xf32>
    %15 = vector.broadcast %14 : vector<1x256xf32> to vector<2x256xf32>
    %16 = arith.addf %13, %15 : vector<2x256xf32>
    %cst_12 = arith.constant 0.000000e+00 : f32
    %17 = vector.broadcast %cst_12 : f32 to vector<2x256xf32>
    %18 = arith.maximumf %16, %17 : vector<2x256xf32>
    %c0_13 = arith.constant 0 : index
    %c0_14 = arith.constant 0 : index
    %19 = vector.load %arg6[%c0_13, %c0_14] : memref<256x512xbf16, #tpu.memory_space<vmem>>, vector<256x512xbf16>
    %20 = arith.truncf %18 : vector<2x256xf32> to vector<2x256xbf16>
    %cst_15 = arith.constant dense<0.000000e+00> : vector<2x512xf32>
    %21 = tpu.matmul %20, %19, %cst_15 {dimension_numbers = #tpu.dot_dimension_numbers<[1], [0], [0], [1], [0, 0, 1, 1], [], []>} : vector<2x256xbf16>, vector<256x512xbf16>, vector<2x512xf32> -> vector<2x512xf32>
    %c0_16 = arith.constant 0 : index
    %c0_17 = arith.constant 0 : index
    %22 = vector.load %arg7[%c0_16, %c0_17] : memref<1x512xf32, #tpu.memory_space<vmem>>, vector<1x512xf32>
    %23 = vector.broadcast %22 : vector<1x512xf32> to vector<2x512xf32>
    %24 = arith.addf %21, %23 : vector<2x512xf32>
    %cst_18 = arith.constant 0.000000e+00 : f32
    %25 = vector.broadcast %cst_18 : f32 to vector<2x512xf32>
    %26 = arith.maximumf %24, %25 : vector<2x512xf32>
    %cst_19 = arith.constant 0.000000e+00 : f32
    %27 = vector.broadcast %cst_19 : f32 to vector<2x128xf32>
    %28 = tpu.concatenate %27, %26, %27 in 1 : vector<2x128xf32>, vector<2x512xf32>, vector<2x128xf32> -> vector<2x768xf32>
    %29 = vector.extract_strided_slice %28 {offsets = [0, 0], sizes = [2, 256], strides = [1, 1]} : vector<2x768xf32> to vector<2x256xf32>
    %30 = vector.shape_cast %29 : vector<2x256xf32> to vector<2x1x256xf32>
    %31 = vector.extract_strided_slice %28 {offsets = [0, 128], sizes = [2, 256], strides = [1, 1]} : vector<2x768xf32> to vector<2x256xf32>
    %32 = vector.shape_cast %31 : vector<2x256xf32> to vector<2x1x256xf32>
    %33 = vector.extract_strided_slice %28 {offsets = [0, 256], sizes = [2, 256], strides = [1, 1]} : vector<2x768xf32> to vector<2x256xf32>
    %34 = vector.shape_cast %33 : vector<2x256xf32> to vector<2x1x256xf32>
    %35 = vector.extract_strided_slice %28 {offsets = [0, 384], sizes = [2, 256], strides = [1, 1]} : vector<2x768xf32> to vector<2x256xf32>
    %36 = vector.shape_cast %35 : vector<2x256xf32> to vector<2x1x256xf32>
    %37 = vector.extract_strided_slice %28 {offsets = [0, 512], sizes = [2, 256], strides = [1, 1]} : vector<2x768xf32> to vector<2x256xf32>
    %38 = vector.shape_cast %37 : vector<2x256xf32> to vector<2x1x256xf32>
    %39 = tpu.concatenate %30, %32, %34, %36, %38 in 1 : vector<2x1x256xf32>, vector<2x1x256xf32>, vector<2x1x256xf32>, vector<2x1x256xf32>, vector<2x1x256xf32> -> vector<2x5x256xf32>
    %40 = vector.shape_cast %39 : vector<2x5x256xf32> to vector<10x256xf32>
    %c0_20 = arith.constant 0 : index
    %c0_21 = arith.constant 0 : index
    %41 = vector.load %arg8[%c0_20, %c0_21] : memref<256x512xbf16, #tpu.memory_space<vmem>>, vector<256x512xbf16>
    %c0_22 = arith.constant 0 : index
    %c0_23 = arith.constant 0 : index
    %42 = vector.load %arg9[%c0_22, %c0_23] : memref<1x512xf32, #tpu.memory_space<vmem>>, vector<1x512xf32>
    %43 = arith.truncf %40 : vector<10x256xf32> to vector<10x256xbf16>
    %cst_24 = arith.constant dense<0.000000e+00> : vector<10x512xf32>
    %44 = tpu.matmul %43, %41, %cst_24 {dimension_numbers = #tpu.dot_dimension_numbers<[1], [0], [0], [1], [0, 0, 1, 1], [], []>} : vector<10x256xbf16>, vector<256x512xbf16>, vector<10x512xf32> -> vector<10x512xf32>
    %45 = vector.broadcast %42 : vector<1x512xf32> to vector<10x512xf32>
    %46 = arith.addf %44, %45 : vector<10x512xf32>
    %cst_25 = arith.constant 0.000000e+00 : f32
    %47 = vector.broadcast %cst_25 : f32 to vector<10x512xf32>
    %48 = arith.maximumf %46, %47 : vector<10x512xf32>
    %49 = vector.extract_strided_slice %48 {offsets = [0, 0], sizes = [10, 256], strides = [1, 1]} : vector<10x512xf32> to vector<10x256xf32>
    %50 = vector.shape_cast %49 : vector<10x256xf32> to vector<10x1x256xf32>
    %51 = vector.shape_cast %50 : vector<10x1x256xf32> to vector<10x1x256xf32>
    %52 = vector.broadcast %51 : vector<10x1x256xf32> to vector<10x2x256xf32>
    %53 = vector.shape_cast %52 : vector<10x2x256xf32> to vector<20x256xf32>
    %54 = vector.extract_strided_slice %48 {offsets = [0, 256], sizes = [10, 256], strides = [1, 1]} : vector<10x512xf32> to vector<10x256xf32>
    %55 = vector.shape_cast %54 : vector<10x256xf32> to vector<10x1x256xf32>
    %56 = vector.shape_cast %55 : vector<10x1x256xf32> to vector<10x1x256xf32>
    %57 = vector.broadcast %56 : vector<10x1x256xf32> to vector<10x2x256xf32>
    %58 = vector.shape_cast %57 : vector<10x2x256xf32> to vector<20x256xf32>
    %59 = tpu.iota {dimensions = array<i32: 0>} : vector<20x256xi32>
    %c10_i32 = arith.constant 10 : i32
    %c0_i32 = arith.constant 0 : i32
    %60 = arith.cmpi eq, %c10_i32, %c0_i32 : i32
    %c1_i32 = arith.constant 1 : i32
    %61 = arith.select %60, %c1_i32, %c10_i32 : i32
    %62 = vector.broadcast %61 : i32 to vector<20x256xi32>
    %63 = arith.remsi %59, %62 : vector<20x256xi32>
    %c0_i32_26 = arith.constant 0 : i32
    %64 = vector.broadcast %c0_i32_26 : i32 to vector<20x256xi32>
    %65 = arith.cmpi ne, %63, %64 : vector<20x256xi32>
    %c0_i32_27 = arith.constant 0 : i32
    %66 = vector.broadcast %c0_i32_27 : i32 to vector<20x256xi32>
    %67 = arith.cmpi slt, %63, %66 : vector<20x256xi32>
    %c0_i32_28 = arith.constant 0 : i32
    %68 = arith.cmpi slt, %61, %c0_i32_28 : i32
    %69 = vector.broadcast %68 : i1 to vector<20x256xi1>
    %70 = vector.broadcast %69 : vector<20x256xi1> to vector<20x256xi1>
    %71 = arith.xori %67, %70 : vector<20x256xi1>
    %72 = arith.andi %71, %65 : vector<20x256xi1>
    %73 = vector.broadcast %61 : i32 to vector<20x256xi32>
    %74 = arith.addi %63, %73 : vector<20x256xi32>
    %75 = arith.select %72, %74, %63 : vector<20x256xi1>, vector<20x256xi32>
    %c0_i32_29 = arith.constant 0 : i32
    %76 = vector.broadcast %c0_i32_29 : i32 to vector<20x256xi32>
    %77 = arith.cmpi eq, %75, %76 : vector<20x256xi32>
    %c9_i32 = arith.constant 9 : i32
    %78 = vector.broadcast %c9_i32 : i32 to vector<20x256xi32>
    %79 = arith.cmpi eq, %75, %78 : vector<20x256xi32>
    %80 = arith.ori %77, %79 : vector<20x256xi1>
    %c2_i32 = arith.constant 2 : i32
    %c0_i32_30 = arith.constant 0 : i32
    %81 = arith.cmpi eq, %c2_i32, %c0_i32_30 : i32
    %c1_i32_31 = arith.constant 1 : i32
    %82 = arith.select %81, %c1_i32_31, %c2_i32 : i32
    %83 = vector.broadcast %82 : i32 to vector<20x256xi32>
    %84 = arith.remsi %59, %83 : vector<20x256xi32>
    %c0_i32_32 = arith.constant 0 : i32
    %85 = vector.broadcast %c0_i32_32 : i32 to vector<20x256xi32>
    %86 = arith.cmpi ne, %84, %85 : vector<20x256xi32>
    %c0_i32_33 = arith.constant 0 : i32
    %87 = vector.broadcast %c0_i32_33 : i32 to vector<20x256xi32>
    %88 = arith.cmpi slt, %84, %87 : vector<20x256xi32>
    %c0_i32_34 = arith.constant 0 : i32
    %89 = arith.cmpi slt, %82, %c0_i32_34 : i32
    %90 = vector.broadcast %89 : i1 to vector<20x256xi1>
    %91 = vector.broadcast %90 : vector<20x256xi1> to vector<20x256xi1>
    %92 = arith.xori %88, %91 : vector<20x256xi1>
    %93 = arith.andi %92, %86 : vector<20x256xi1>
    %94 = vector.broadcast %82 : i32 to vector<20x256xi32>
    %95 = arith.addi %84, %94 : vector<20x256xi32>
    %96 = arith.select %93, %95, %84 : vector<20x256xi1>, vector<20x256xi32>
    %c0_i32_35 = arith.constant 0 : i32
    %97 = vector.broadcast %c0_i32_35 : i32 to vector<20x256xi32>
    %98 = arith.cmpi eq, %96, %97 : vector<20x256xi32>
    %99 = arith.select %98, %53, %58 : vector<20x256xi1>, vector<20x256xf32>
    %cst_36 = arith.constant 0.000000e+00 : f32
    %100 = vector.broadcast %cst_36 : f32 to vector<20x256xf32>
    %101 = arith.select %80, %100, %99 : vector<20x256xi1>, vector<20x256xf32>
    %102 = vector.shape_cast %101 : vector<20x256xf32> to vector<2x10x256xf32>
    %103 = vector.extract_strided_slice %102 {offsets = [0, 0, 0], sizes = [2, 9, 256], strides = [1, 1, 1]} : vector<2x10x256xf32> to vector<2x9x256xf32>
    %104 = vector.extract_strided_slice %102 {offsets = [0, 1, 0], sizes = [2, 9, 256], strides = [1, 1, 1]} : vector<2x10x256xf32> to vector<2x9x256xf32>
    %105 = tpu.concatenate %103, %104 in 2 : vector<2x9x256xf32>, vector<2x9x256xf32> -> vector<2x9x512xf32>
    %106 = vector.shape_cast %105 : vector<2x9x512xf32> to vector<18x512xf32>
    %c0_37 = arith.constant 0 : index
    %c0_38 = arith.constant 0 : index
    %107 = vector.load %arg10[%c0_37, %c0_38] : memref<512x1024xbf16, #tpu.memory_space<vmem>>, vector<512x1024xbf16>
    %c0_39 = arith.constant 0 : index
    %c0_40 = arith.constant 0 : index
    %108 = vector.load %arg11[%c0_39, %c0_40] : memref<1x1024xf32, #tpu.memory_space<vmem>>, vector<1x1024xf32>
    %109 = arith.truncf %106 : vector<18x512xf32> to vector<18x512xbf16>
    %cst_41 = arith.constant dense<0.000000e+00> : vector<18x1024xf32>
    %110 = tpu.matmul %109, %107, %cst_41 {dimension_numbers = #tpu.dot_dimension_numbers<[1], [0], [0], [1], [0, 0, 1, 1], [], []>} : vector<18x512xbf16>, vector<512x1024xbf16>, vector<18x1024xf32> -> vector<18x1024xf32>
    %111 = vector.broadcast %108 : vector<1x1024xf32> to vector<18x1024xf32>
    %112 = arith.addf %110, %111 : vector<18x1024xf32>
    %cst_42 = arith.constant 0.000000e+00 : f32
    %113 = vector.broadcast %cst_42 : f32 to vector<18x1024xf32>
    %114 = arith.maximumf %112, %113 : vector<18x1024xf32>
    %115 = vector.extract_strided_slice %114 {offsets = [0, 0], sizes = [18, 512], strides = [1, 1]} : vector<18x1024xf32> to vector<18x512xf32>
    %116 = vector.shape_cast %115 : vector<18x512xf32> to vector<18x1x512xf32>
    %117 = vector.shape_cast %116 : vector<18x1x512xf32> to vector<18x1x512xf32>
    %118 = vector.broadcast %117 : vector<18x1x512xf32> to vector<18x2x512xf32>
    %119 = vector.shape_cast %118 : vector<18x2x512xf32> to vector<36x512xf32>
    %120 = vector.extract_strided_slice %114 {offsets = [0, 512], sizes = [18, 512], strides = [1, 1]} : vector<18x1024xf32> to vector<18x512xf32>
    %121 = vector.shape_cast %120 : vector<18x512xf32> to vector<18x1x512xf32>
    %122 = vector.shape_cast %121 : vector<18x1x512xf32> to vector<18x1x512xf32>
    %123 = vector.broadcast %122 : vector<18x1x512xf32> to vector<18x2x512xf32>
    %124 = vector.shape_cast %123 : vector<18x2x512xf32> to vector<36x512xf32>
    %125 = tpu.iota {dimensions = array<i32: 0>} : vector<36x512xi32>
    %c18_i32 = arith.constant 18 : i32
    %c0_i32_43 = arith.constant 0 : i32
    %126 = arith.cmpi eq, %c18_i32, %c0_i32_43 : i32
    %c1_i32_44 = arith.constant 1 : i32
    %127 = arith.select %126, %c1_i32_44, %c18_i32 : i32
    %128 = vector.broadcast %127 : i32 to vector<36x512xi32>
    %129 = arith.remsi %125, %128 : vector<36x512xi32>
    %c0_i32_45 = arith.constant 0 : i32
    %130 = vector.broadcast %c0_i32_45 : i32 to vector<36x512xi32>
    %131 = arith.cmpi ne, %129, %130 : vector<36x512xi32>
    %c0_i32_46 = arith.constant 0 : i32
    %132 = vector.broadcast %c0_i32_46 : i32 to vector<36x512xi32>
    %133 = arith.cmpi slt, %129, %132 : vector<36x512xi32>
    %c0_i32_47 = arith.constant 0 : i32
    %134 = arith.cmpi slt, %127, %c0_i32_47 : i32
    %135 = vector.broadcast %134 : i1 to vector<36x512xi1>
    %136 = vector.broadcast %135 : vector<36x512xi1> to vector<36x512xi1>
    %137 = arith.xori %133, %136 : vector<36x512xi1>
    %138 = arith.andi %137, %131 : vector<36x512xi1>
    %139 = vector.broadcast %127 : i32 to vector<36x512xi32>
    %140 = arith.addi %129, %139 : vector<36x512xi32>
    %141 = arith.select %138, %140, %129 : vector<36x512xi1>, vector<36x512xi32>
    %c0_i32_48 = arith.constant 0 : i32
    %142 = vector.broadcast %c0_i32_48 : i32 to vector<36x512xi32>
    %143 = arith.cmpi eq, %141, %142 : vector<36x512xi32>
    %c17_i32 = arith.constant 17 : i32
    %144 = vector.broadcast %c17_i32 : i32 to vector<36x512xi32>
    %145 = arith.cmpi eq, %141, %144 : vector<36x512xi32>
    %146 = arith.ori %143, %145 : vector<36x512xi1>
    %c2_i32_49 = arith.constant 2 : i32
    %c0_i32_50 = arith.constant 0 : i32
    %147 = arith.cmpi eq, %c2_i32_49, %c0_i32_50 : i32
    %c1_i32_51 = arith.constant 1 : i32
    %148 = arith.select %147, %c1_i32_51, %c2_i32_49 : i32
    %149 = vector.broadcast %148 : i32 to vector<36x512xi32>
    %150 = arith.remsi %125, %149 : vector<36x512xi32>
    %c0_i32_52 = arith.constant 0 : i32
    %151 = vector.broadcast %c0_i32_52 : i32 to vector<36x512xi32>
    %152 = arith.cmpi ne, %150, %151 : vector<36x512xi32>
    %c0_i32_53 = arith.constant 0 : i32
    %153 = vector.broadcast %c0_i32_53 : i32 to vector<36x512xi32>
    %154 = arith.cmpi slt, %150, %153 : vector<36x512xi32>
    %c0_i32_54 = arith.constant 0 : i32
    %155 = arith.cmpi slt, %148, %c0_i32_54 : i32
    %156 = vector.broadcast %155 : i1 to vector<36x512xi1>
    %157 = vector.broadcast %156 : vector<36x512xi1> to vector<36x512xi1>
    %158 = arith.xori %154, %157 : vector<36x512xi1>
    %159 = arith.andi %158, %152 : vector<36x512xi1>
    %160 = vector.broadcast %148 : i32 to vector<36x512xi32>
    %161 = arith.addi %150, %160 : vector<36x512xi32>
    %162 = arith.select %159, %161, %150 : vector<36x512xi1>, vector<36x512xi32>
    %c0_i32_55 = arith.constant 0 : i32
    %163 = vector.broadcast %c0_i32_55 : i32 to vector<36x512xi32>
    %164 = arith.cmpi eq, %162, %163 : vector<36x512xi32>
    %165 = arith.select %164, %119, %124 : vector<36x512xi1>, vector<36x512xf32>
    %cst_56 = arith.constant 0.000000e+00 : f32
    %166 = vector.broadcast %cst_56 : f32 to vector<36x512xf32>
    %167 = arith.select %146, %166, %165 : vector<36x512xi1>, vector<36x512xf32>
    %168 = vector.shape_cast %167 : vector<36x512xf32> to vector<2x18x512xf32>
    %169 = vector.extract_strided_slice %168 {offsets = [0, 0, 0], sizes = [2, 17, 512], strides = [1, 1, 1]} : vector<2x18x512xf32> to vector<2x17x512xf32>
    %170 = vector.extract_strided_slice %168 {offsets = [0, 1, 0], sizes = [2, 17, 512], strides = [1, 1, 1]} : vector<2x18x512xf32> to vector<2x17x512xf32>
    %171 = tpu.concatenate %169, %170 in 2 : vector<2x17x512xf32>, vector<2x17x512xf32> -> vector<2x17x1024xf32>
    %172 = vector.shape_cast %171 : vector<2x17x1024xf32> to vector<34x1024xf32>
    %c0_57 = arith.constant 0 : index
    %c0_58 = arith.constant 0 : index
    %173 = vector.load %arg12[%c0_57, %c0_58] : memref<1024x64xf32, #tpu.memory_space<vmem>>, vector<1024x64xf32>
    %cst_59 = arith.constant dense<0.000000e+00> : vector<34x64xf32>
    %174 = tpu.matmul %172, %173, %cst_59 {dimension_numbers = #tpu.dot_dimension_numbers<[1], [0], [0], [1], [0, 0, 1, 1], [], []>} : vector<34x1024xf32>, vector<1024x64xf32>, vector<34x64xf32> -> vector<34x64xf32>
    %c0_60 = arith.constant 0 : index
    %c0_61 = arith.constant 0 : index
    %175 = vector.load %arg13[%c0_60, %c0_61] : memref<1x64xf32, #tpu.memory_space<vmem>>, vector<1x64xf32>
    %176 = vector.broadcast %175 : vector<1x64xf32> to vector<34x64xf32>
    %177 = arith.addf %174, %176 : vector<34x64xf32>
    %178 = arith.negf %177 : vector<34x64xf32>
    %179 = math.exp %178 : vector<34x64xf32>
    %cst_62 = arith.constant 1.000000e+00 : f32
    %180 = vector.broadcast %cst_62 : f32 to vector<34x64xf32>
    %181 = arith.addf %180, %179 : vector<34x64xf32>
    %182 = arith.divf %180, %181 : vector<34x64xf32>
    %183 = vector.shape_cast %182 : vector<34x64xf32> to vector<2x17x64xf32>
    %184 = vector.extract_strided_slice %183 {offsets = [0, 0, 32], sizes = [2, 16, 32], strides = [1, 1, 1]} : vector<2x17x64xf32> to vector<2x16x32xf32>
    %185 = vector.shape_cast %184 : vector<2x16x32xf32> to vector<32x32xf32>
    %186 = vector.extract_strided_slice %183 {offsets = [0, 1, 0], sizes = [2, 16, 32], strides = [1, 1, 1]} : vector<2x17x64xf32> to vector<2x16x32xf32>
    %187 = vector.shape_cast %186 : vector<2x16x32xf32> to vector<32x32xf32>
    %188 = vector.shape_cast %185 : vector<32x32xf32> to vector<32x1x32xf32>
    %189 = vector.shape_cast %188 : vector<32x1x32xf32> to vector<32x1x32xf32>
    %190 = vector.broadcast %189 : vector<32x1x32xf32> to vector<32x2x32xf32>
    %191 = vector.shape_cast %190 : vector<32x2x32xf32> to vector<64x32xf32>
    %192 = vector.shape_cast %187 : vector<32x32xf32> to vector<32x1x32xf32>
    %193 = vector.shape_cast %192 : vector<32x1x32xf32> to vector<32x1x32xf32>
    %194 = vector.broadcast %193 : vector<32x1x32xf32> to vector<32x2x32xf32>
    %195 = vector.shape_cast %194 : vector<32x2x32xf32> to vector<64x32xf32>
    %196 = tpu.iota {dimensions = array<i32: 0>} : vector<64x32xi32>
    %c2_i32_63 = arith.constant 2 : i32
    %c0_i32_64 = arith.constant 0 : i32
    %197 = arith.cmpi eq, %c2_i32_63, %c0_i32_64 : i32
    %c1_i32_65 = arith.constant 1 : i32
    %198 = arith.select %197, %c1_i32_65, %c2_i32_63 : i32
    %199 = vector.broadcast %198 : i32 to vector<64x32xi32>
    %200 = arith.remsi %196, %199 : vector<64x32xi32>
    %c0_i32_66 = arith.constant 0 : i32
    %201 = vector.broadcast %c0_i32_66 : i32 to vector<64x32xi32>
    %202 = arith.cmpi ne, %200, %201 : vector<64x32xi32>
    %c0_i32_67 = arith.constant 0 : i32
    %203 = vector.broadcast %c0_i32_67 : i32 to vector<64x32xi32>
    %204 = arith.cmpi slt, %200, %203 : vector<64x32xi32>
    %c0_i32_68 = arith.constant 0 : i32
    %205 = arith.cmpi slt, %198, %c0_i32_68 : i32
    %206 = vector.broadcast %205 : i1 to vector<64x32xi1>
    %207 = vector.broadcast %206 : vector<64x32xi1> to vector<64x32xi1>
    %208 = arith.xori %204, %207 : vector<64x32xi1>
    %209 = arith.andi %208, %202 : vector<64x32xi1>
    %210 = vector.broadcast %198 : i32 to vector<64x32xi32>
    %211 = arith.addi %200, %210 : vector<64x32xi32>
    %212 = arith.select %209, %211, %200 : vector<64x32xi1>, vector<64x32xi32>
    %c0_i32_69 = arith.constant 0 : i32
    %213 = vector.broadcast %c0_i32_69 : i32 to vector<64x32xi32>
    %214 = arith.cmpi eq, %212, %213 : vector<64x32xi32>
    %215 = arith.select %214, %191, %195 : vector<64x32xi1>, vector<64x32xf32>
    %216 = vector.shape_cast %215 : vector<64x32xf32> to vector<2x32x32xf32>
    %c0_70 = arith.constant 0 : index
    %c0_71 = arith.constant 0 : index
    %c0_72 = arith.constant 0 : index
    %217 = vector.load %arg14[%c0_70, %c0_71, %c0_72] : memref<2x32x32xf32, #tpu.memory_space<vmem>>, vector<2x32x32xf32>
    tpu.vector_store %arg14[%c0_70, %c0_71, %c0_72], %216 {strides = array<i32>} : memref<2x32x32xf32, #tpu.memory_space<vmem>>, vector<2x32x32xf32>,
    return
  }
  func.func @transform_0(%arg0: i32) -> (i32, i32) {
    %c0_i32 = arith.constant 0 : i32
    %c0_i32_0 = arith.constant 0 : i32
    return %arg0, %c0_i32 : i32, i32
  }
  func.func @transform_1(%arg0: i32) -> (i32, i32) {
    %c0_i32 = arith.constant 0 : i32
    %c0_i32_0 = arith.constant 0 : i32
    %c0_i32_1 = arith.constant 0 : i32
    return %c0_i32, %c0_i32_0 : i32, i32
  }
  func.func @transform_2(%arg0: i32) -> (i32, i32) {
    %c0_i32 = arith.constant 0 : i32
    %c0_i32_0 = arith.constant 0 : i32
    %c0_i32_1 = arith.constant 0 : i32
    return %c0_i32, %c0_i32_0 : i32, i32
  }
  func.func @transform_3(%arg0: i32) -> (i32, i32) {
    %c0_i32 = arith.constant 0 : i32
    %c0_i32_0 = arith.constant 0 : i32
    %c0_i32_1 = arith.constant 0 : i32
    return %c0_i32, %c0_i32_0 : i32, i32
  }
  func.func @transform_4(%arg0: i32) -> (i32, i32) {
    %c0_i32 = arith.constant 0 : i32
    %c0_i32_0 = arith.constant 0 : i32
    %c0_i32_1 = arith.constant 0 : i32
    return %c0_i32, %c0_i32_0 : i32, i32
  }
  func.func @transform_5(%arg0: i32) -> (i32, i32) {
    %c0_i32 = arith.constant 0 : i32
    %c0_i32_0 = arith.constant 0 : i32
    %c0_i32_1 = arith.constant 0 : i32
    return %c0_i32, %c0_i32_0 : i32, i32
  }
  func.func @transform_6(%arg0: i32) -> (i32, i32) {
    %c0_i32 = arith.constant 0 : i32
    %c0_i32_0 = arith.constant 0 : i32
    %c0_i32_1 = arith.constant 0 : i32
    return %c0_i32, %c0_i32_0 : i32, i32
  }
  func.func @transform_7(%arg0: i32) -> (i32, i32) {
    %c0_i32 = arith.constant 0 : i32
    %c0_i32_0 = arith.constant 0 : i32
    %c0_i32_1 = arith.constant 0 : i32
    return %c0_i32, %c0_i32_0 : i32, i32
  }
  func.func @transform_8(%arg0: i32) -> (i32, i32) {
    %c0_i32 = arith.constant 0 : i32
    %c0_i32_0 = arith.constant 0 : i32
    %c0_i32_1 = arith.constant 0 : i32
    return %c0_i32, %c0_i32_0 : i32, i32
  }
  func.func @transform_9(%arg0: i32) -> (i32, i32) {
    %c0_i32 = arith.constant 0 : i32
    %c0_i32_0 = arith.constant 0 : i32
    %c0_i32_1 = arith.constant 0 : i32
    return %c0_i32, %c0_i32_0 : i32, i32
  }
  func.func @transform_10(%arg0: i32) -> (i32, i32) {
    %c0_i32 = arith.constant 0 : i32
    %c0_i32_0 = arith.constant 0 : i32
    %c0_i32_1 = arith.constant 0 : i32
    return %c0_i32, %c0_i32_0 : i32, i32
  }
  func.func @transform_11(%arg0: i32) -> (i32, i32) {
    %c0_i32 = arith.constant 0 : i32
    %c0_i32_0 = arith.constant 0 : i32
    %c0_i32_1 = arith.constant 0 : i32
    return %c0_i32, %c0_i32_0 : i32, i32
  }
  func.func @transform_12(%arg0: i32) -> (i32, i32) {
    %c0_i32 = arith.constant 0 : i32
    %c0_i32_0 = arith.constant 0 : i32
    %c0_i32_1 = arith.constant 0 : i32
    return %c0_i32, %c0_i32_0 : i32, i32
  }
  func.func @transform_13(%arg0: i32) -> (i32, i32, i32) {
    %c0_i32 = arith.constant 0 : i32
    %c0_i32_0 = arith.constant 0 : i32
    %c0_i32_1 = arith.constant 0 : i32
    return %arg0, %c0_i32, %c0_i32_0 : i32, i32, i32
  }
}

</mosaic_0001>

<llo_original>
// kernel: tpu_custom_call.1
$region0: #{tpu_custom_call.1}
  #allocation0 [shape = 'u32[]', space=smem, size = 0x4, offset = 0x4, fixed_abs, tag = 'smem constant byte address 0x4 - core index']
  #allocation1 [shape = 'u32[144,128]{1,0:T(1,128)}', space=vmem, size = 0x12000, scoped, tag = 'internal scratch']
  %s0 = inlined_call_operand.vmem [shape: f32[2,10], index: 0, kind: input, shape index: {}]
  %s1 = inlined_call_operand.vmem [shape: bf16[16,256], index: 1, kind: input, shape index: {}]
  %s2 = inlined_call_operand.vmem [shape: f32[1,256], index: 2, kind: input, shape index: {}]
  %s3 = inlined_call_operand.vmem [shape: bf16[256,256], index: 3, kind: input, shape index: {}]
  %s4 = inlined_call_operand.vmem [shape: f32[1,256], index: 4, kind: input, shape index: {}]
  %s5 = inlined_call_operand.vmem [shape: bf16[256,512], index: 5, kind: input, shape index: {}]
  %s6 = inlined_call_operand.vmem [shape: f32[1,512], index: 6, kind: input, shape index: {}]
  %s7 = inlined_call_operand.vmem [shape: bf16[256,512], index: 7, kind: input, shape index: {}]
  %s8 = inlined_call_operand.vmem [shape: f32[1,512], index: 8, kind: input, shape index: {}]
  %s9 = inlined_call_operand.hbm [shape: bf16[512,1024], index: 9, kind: input, shape index: {}]
  %s10 = inlined_call_operand.vmem [shape: f32[1,1024], index: 10, kind: input, shape index: {}]
  %s11 = inlined_call_operand.vmem [shape: f32[1024,64], index: 11, kind: input, shape index: {}]
  %s12 = inlined_call_operand.vmem [shape: f32[1,64], index: 12, kind: input, shape index: {}]
  %s13 = inlined_call_operand.hbm [shape: f32[2,32,32], index: 13, kind: output, shape index: {}]
  %s14 = sld [smem:[#allocation0]]
  $region66: #{tpu_custom_call.1} parent=0
    _
  %s16 = ssub.s32 1, %s14
  %s17 = scalar_select 0, %s16, %s14
  $region1: #{tpu_custom_call.1} parent=0
    #allocation2 [shape = 'u8[1048576]{0}', space=vmem, size = 0x100000, scoped, tag = 'input window, operand 9, single buffered']
    #allocation3 [shape = 's32[1]{0}', space=sflag, size = 0x4, scoped, tag = 'scoped memory for tpu_custom_call.1']
    #allocation4 [shape = 's32[1]{0}', space=sflag, size = 0x4, scoped, tag = 'scoped memory for tpu_custom_call.1']
    #allocation5 [shape = 'u8[32768]{0}', space=vmem, size = 0x8000, scoped, tag = 'output window, operand 0, single buffered']
    %18 = vsyncpa [#allocation3], 0
    %19 = vsyncpa [#allocation4], 0
    // Predicated region
    $region2: #{tpu_custom_call.1} parent=1 // pred_check
      _
    $region3: #{tpu_custom_call.1} parent=1 // pred_check_branch
      %21 = sbr.rel (0) target = $region5
    $region4: #{tpu_custom_call.1} parent=1 // pred_region
      _
    $region5: #{tpu_custom_call.1} parent=1 // pred_fallthru
      _
    // Predicated region
    $region6: #{tpu_custom_call.1} parent=1 // pred_check
      _
    $region7: #{tpu_custom_call.1} parent=1 // pred_check_branch
      %23 = sbr.rel (0) target = $region9
    $region8: #{tpu_custom_call.1} parent=1 // pred_region
      _
    $region9: #{tpu_custom_call.1} parent=1 // pred_fallthru
      _
    // Predicated region
    $region10: #{tpu_custom_call.1} parent=1 // pred_check
      _
    $region11: #{tpu_custom_call.1} parent=1 // pred_check_branch
      %25 = sbr.rel (0) target = $region13
    $region12: #{tpu_custom_call.1} parent=1 // pred_region
      _
    $region13: #{tpu_custom_call.1} parent=1 // pred_fallthru
      _
    // Predicated region
    $region14: #{tpu_custom_call.1} parent=1 // pred_check
      _
    $region15: #{tpu_custom_call.1} parent=1 // pred_check_branch
      %27 = sbr.rel (0) target = $region17
    $region16: #{tpu_custom_call.1} parent=1 // pred_region
      _
    $region17: #{tpu_custom_call.1} parent=1 // pred_fallthru
      _
    // Predicated region
    $region18: #{tpu_custom_call.1} parent=1 // pred_check
      _
    $region19: #{tpu_custom_call.1} parent=1 // pred_check_branch
      %29 = sbr.rel (0) target = $region21
    $region20: #{tpu_custom_call.1} parent=1 // pred_region
      _
    $region21: #{tpu_custom_call.1} parent=1 // pred_fallthru
      _
    // Predicated region
    $region22: #{tpu_custom_call.1} parent=1 // pred_check
      _
    $region23: #{tpu_custom_call.1} parent=1 // pred_check_branch
      %31 = sbr.rel (0) target = $region25
    $region24: #{tpu_custom_call.1} parent=1 // pred_region
      _
    $region25: #{tpu_custom_call.1} parent=1 // pred_fallthru
      _
    // Predicated region
    $region26: #{tpu_custom_call.1} parent=1 // pred_check
      _
    $region27: #{tpu_custom_call.1} parent=1 // pred_check_branch
      %33 = sbr.rel (0) target = $region29
    $region28: #{tpu_custom_call.1} parent=1 // pred_region
      _
    $region29: #{tpu_custom_call.1} parent=1 // pred_fallthru
      _
    // Predicated region
    $region30: #{tpu_custom_call.1} parent=1 // pred_check
      _
    $region31: #{tpu_custom_call.1} parent=1 // pred_check_branch
      %35 = sbr.rel (0) target = $region33
    $region32: #{tpu_custom_call.1} parent=1 // pred_region
      _
    $region33: #{tpu_custom_call.1} parent=1 // pred_fallthru
      _
    // Predicated region
    $region34: #{tpu_custom_call.1} parent=1 // pred_check
      _
    $region35: #{tpu_custom_call.1} parent=1 // pred_check_branch
      %37 = sbr.rel (0) target = $region37
    $region36: #{tpu_custom_call.1} parent=1 // pred_region
      _
    $region37: #{tpu_custom_call.1} parent=1 // pred_fallthru
      _
    // Predicated region
    $region38: #{tpu_custom_call.1} parent=1 // pred_check
      _
    $region39: #{tpu_custom_call.1} parent=1 // pred_check_branch
      %39 = sbr.rel (0) target = $region41
    $region40: #{tpu_custom_call.1} parent=1 // pred_region
      %s41 = ssub.s32 32768, 32768
      %42 = vsyncadd [#allocation3], %s41
      %s43 = sshll.u32 [#allocation2], 4
      %s44 = int_to_ptr.vmem [resolvable:$true] %s43
      %49 = dma.hbm_to_vmem [thread:$0]  %s9, 32768, %s44, [#allocation3], 512, 512, 32
    $region41: #{tpu_custom_call.1} parent=1 // pred_fallthru
      _
    // Predicated region
    $region42: #{tpu_custom_call.1} parent=1 // pred_check
      _
    $region43: #{tpu_custom_call.1} parent=1 // pred_check_branch
      %51 = sbr.rel (0) target = $region45
    $region44: #{tpu_custom_call.1} parent=1 // pred_region
      _
    $region45: #{tpu_custom_call.1} parent=1 // pred_fallthru
      _
    // Predicated region
    $region46: #{tpu_custom_call.1} parent=1 // pred_check
      _
    $region47: #{tpu_custom_call.1} parent=1 // pred_check_branch
      %53 = sbr.rel (0) target = $region49
    $region48: #{tpu_custom_call.1} parent=1 // pred_region
      _
    $region49: #{tpu_custom_call.1} parent=1 // pred_fallthru
      _
    // Predicated region
    $region50: #{tpu_custom_call.1} parent=1 // pred_check
      _
    $region51: #{tpu_custom_call.1} parent=1 // pred_check_branch
      %55 = sbr.rel (0) target = $region53
    $region52: #{tpu_custom_call.1} parent=1 // pred_region
      _
    $region53: #{tpu_custom_call.1} parent=1 // pred_fallthru
      _
    // Predicated region
    $region54: #{tpu_custom_call.1} parent=1 // pred_check
      _
    $region55: #{tpu_custom_call.1} parent=1 // pred_check_branch
      %57 = sbr.rel (0) target = $region57
    $region56: #{tpu_custom_call.1} parent=1 // pred_region
      %58 = dma.done [#allocation3], 32768
    $region57: #{tpu_custom_call.1} parent=1 // pred_fallthru
      _
    %v60 = vld [vmem:[%s0] sm:$0x3]
    %vm61 = vcmask 80896
    %v62 = vsel %vm61, %v60, 0.0
    %v63 = vld [vmem:[%s1] sm:$0xff]
    %v64 = vld [vmem:[%s1 + $0x8] sm:$0xff]
    %v65 = vpack.c.bf16 %v62, %v62
    %v66 = vld [vmem:[%s2] sm:$0x3]
    %v68 = vlaneseq
    %v69 = vshrl.u32 %v68, 7
    %v70 = vsub.s32 0, %v69
    %v71 = vrot.slane %v66, %v70
    %v72 = vlaneseq
    %v73 = vshrl.u32 %v72, 7
    %v74 = vsub.s32 1, %v73
    %v75 = vrot.slane %v66, %v74
    %v80 = vunpack.c.l.b16 %v63
    %v81 = vunpack.c.h.b16 %v63
    %v82 = vunpack.c.l.b16 %v64
    %v83 = vunpack.c.h.b16 %v64
    %v84 = vpack.c.b16 %v82, %v80
    %v85 = vpack.c.b16 %v83, %v81
    %vm88 = vcmask 130048
    %v90 = vsel %vm88, %v65, 0
    %92 = vmatprep.subr.bf16.mxu0 %v85
    %93 = vmatpush1.bf16.msra.mxu0 %v84
    %94 = vmatprep.subr.bf16.mxu0 0
    %95 = vmatpush1.bf16.msra.mxu0 0
    %96 = vmatprep.subr.bf16.mxu0 0
    %97 = vmatpush1.bf16.msra.mxu0 0
    %98 = vmatprep.subr.bf16.mxu0 0
    %99 = vmatpush1.bf16.msra.mxu0 0
    %100 = vmatprep.subr.bf16.mxu0 0
    %101 = vmatpush1.bf16.msra.mxu0 0
    %102 = vmatprep.subr.bf16.mxu0 0
    %103 = vmatpush1.bf16.msra.mxu0 0
    %104 = vmatprep.subr.bf16.mxu0 0
    %105 = vmatpush1.bf16.msra.mxu0 0
    %106 = vmatprep.subr.bf16.mxu0 0
    %107 = vmatpush1.bf16.msra.mxu0 0
    %108 = vmatprep.subr.bf16.mxu0 0
    %109 = vmatpush1.bf16.msra.mxu0 0
    %110 = vmatprep.subr.bf16.mxu0 0
    %111 = vmatpush1.bf16.msra.mxu0 0
    %112 = vmatprep.subr.bf16.mxu0 0
    %113 = vmatpush1.bf16.msra.mxu0 0
    %114 = vmatprep.subr.bf16.mxu0 0
    %115 = vmatpush1.bf16.msra.mxu0 0
    %116 = vmatprep.subr.bf16.mxu0 0
    %117 = vmatpush1.bf16.msra.mxu0 0
    %118 = vmatprep.subr.bf16.mxu0 0
    %119 = vmatpush1.bf16.msra.mxu0 0
    %120 = vmatprep.subr.bf16.mxu0 0
    %121 = vmatpush1.bf16.msra.mxu0 0
    %122 = vmatprep.subr.bf16.mxu0 0
    %123 = vmatpush1.bf16.msra.mxu0 0
    %124 = vmatprep.mubr.bf16.mxu0 0
    %125 = vmatmul.mubr.bf16.gmra.mrb[0].mxu0 %v90
    %v126 = vpop.f32.mrb[0].mxu0
    %v127 = vadd.f32 %v71, %v126
    %v128 = vpop.f32.mrb[0].mxu0
    %v129 = vadd.f32 %v75, %v128
    %v130 = vpop.f32.mrb[0].mxu0
    %v131 = vpop.f32.mrb[0].mxu0
    %132 = vdwg.mxu0
    %v133 = vmax.f32 %v127, 0.0
    %v134 = vmax.f32 %v129, 0.0
    %v135 = vld [vmem:[%s3] sm:$0xff]
    %v136 = vld [vmem:[%s3 + $0x8] sm:$0xff]
    %v137 = vld [vmem:[%s3 + $0x10] sm:$0xff]
    %v138 = vld [vmem:[%s3 + $0x18] sm:$0xff]
    %v139 = vld [vmem:[%s3 + $0x20] sm:$0xff]
    %v140 = vld [vmem:[%s3 + $0x28] sm:$0xff]
    %v141 = vld [vmem:[%s3 + $0x30] sm:$0xff]
    %v142 = vld [vmem:[%s3 + $0x38] sm:$0xff]
    %v143 = vld [vmem:[%s3 + $0x40] sm:$0xff]
    %v144 = vld [vmem:[%s3 + $0x48] sm:$0xff]
    %v145 = vld [vmem:[%s3 + $0x50] sm:$0xff]
    %v146 = vld [vmem:[%s3 + $0x58] sm:$0xff]
    %v147 = vld [vmem:[%s3 + $0x60] sm:$0xff]
    %v148 = vld [vmem:[%s3 + $0x68] sm:$0xff]
    %v149 = vld [vmem:[%s3 + $0x70] sm:$0xff]
    %v150 = vld [vmem:[%s3 + $0x78] sm:$0xff]
    %v151 = vld [vmem:[%s3 + $0x80] sm:$0xff]
    %v152 = vld [vmem:[%s3 + $0x88] sm:$0xff]
    %v153 = vld [vmem:[%s3 + $0x90] sm:$0xff]
    %v154 = vld [vmem:[%s3 + $0x98] sm:$0xff]
    %v155 = vld [vmem:[%s3 + $0xa0] sm:$0xff]
    %v156 = vld [vmem:[%s3 + $0xa8] sm:$0xff]
    %v157 = vld [vmem:[%s3 + $0xb0] sm:$0xff]
    %v158 = vld [vmem:[%s3 + $0xb8] sm:$0xff]
    %v159 = vld [vmem:[%s3 + $0xc0] sm:$0xff]
    %v160 = vld [vmem:[%s3 + $0xc8] sm:$0xff]
    %v161 = vld [vmem:[%s3 + $0xd0] sm:$0xff]
    %v162 = vld [vmem:[%s3 + $0xd8] sm:$0xff]
    %v163 = vld [vmem:[%s3 + $0xe0] sm:$0xff]
    %v164 = vld [vmem:[%s3 + $0xe8] sm:$0xff]
    %v165 = vld [vmem:[%s3 + $0xf0] sm:$0xff]
    %v166 = vld [vmem:[%s3 + $0xf8] sm:$0xff]
    %v167 = vpack.c.bf16 %v133, %v133
    %v168 = vpack.c.bf16 %v134, %v134
    %v169 = vld [vmem:[%s4] sm:$0x3]
    %v171 = vlaneseq
    %v172 = vshrl.u32 %v171, 7
    %v173 = vsub.s32 0, %v172
    %v174 = vrot.slane %v169, %v173
    %v175 = vlaneseq
    %v176 = vshrl.u32 %v175, 7
    %v177 = vsub.s32 1, %v176
    %v178 = vrot.slane %v169, %v177
    %v213 = vunpack.c.l.b16 %v135
    %v214 = vunpack.c.h.b16 %v135
    %v215 = vunpack.c.l.b16 %v136
    %v216 = vunpack.c.h.b16 %v136
    %v217 = vunpack.c.l.b16 %v137
    %v218 = vunpack.c.h.b16 %v137
    %v219 = vunpack.c.l.b16 %v138
    %v220 = vunpack.c.h.b16 %v138
    %v221 = vunpack.c.l.b16 %v139
    %v222 = vunpack.c.h.b16 %v139
    %v223 = vunpack.c.l.b16 %v140
    %v224 = vunpack.c.h.b16 %v140
    %v225 = vunpack.c.l.b16 %v141
    %v226 = vunpack.c.h.b16 %v141
    %v227 = vunpack.c.l.b16 %v142
    %v228 = vunpack.c.h.b16 %v142
    %v229 = vunpack.c.l.b16 %v143
    %v230 = vunpack.c.h.b16 %v143
    %v231 = vunpack.c.l.b16 %v144
    %v232 = vunpack.c.h.b16 %v144
    %v233 = vunpack.c.l.b16 %v145
    %v234 = vunpack.c.h.b16 %v145
    %v235 = vunpack.c.l.b16 %v146
    %v236 = vunpack.c.h.b16 %v146
    %v237 = vunpack.c.l.b16 %v147
    %v238 = vunpack.c.h.b16 %v147
    %v239 = vunpack.c.l.b16 %v148
    %v240 = vunpack.c.h.b16 %v148
    %v241 = vunpack.c.l.b16 %v149
    %v242 = vunpack.c.h.b16 %v149
    %v243 = vunpack.c.l.b16 %v150
    %v244 = vunpack.c.h.b16 %v150
    %v245 = vunpack.c.l.b16 %v151
    %v246 = vunpack.c.h.b16 %v151
    %v247 = vunpack.c.l.b16 %v152
    %v248 = vunpack.c.h.b16 %v152
    %v249 = vunpack.c.l.b16 %v153
    %v250 = vunpack.c.h.b16 %v153
    %v251 = vunpack.c.l.b16 %v154
    %v252 = vunpack.c.h.b16 %v154
    %v253 = vunpack.c.l.b16 %v155
    %v254 = vunpack.c.h.b16 %v155
    %v255 = vunpack.c.l.b16 %v156
    %v256 = vunpack.c.h.b16 %v156
    %v257 = vunpack.c.l.b16 %v157
    %v258 = vunpack.c.h.b16 %v157
    %v259 = vunpack.c.l.b16 %v158
    %v260 = vunpack.c.h.b16 %v158
    %v261 = vunpack.c.l.b16 %v159
    %v262 = vunpack.c.h.b16 %v159
    %v263 = vunpack.c.l.b16 %v160
    %v264 = vunpack.c.h.b16 %v160
    %v265 = vunpack.c.l.b16 %v161
    %v266 = vunpack.c.h.b16 %v161
    %v267 = vunpack.c.l.b16 %v162
    %v268 = vunpack.c.h.b16 %v162
    %v269 = vunpack.c.l.b16 %v163
    %v270 = vunpack.c.h.b16 %v163
    %v271 = vunpack.c.l.b16 %v164
    %v272 = vunpack.c.h.b16 %v164
    %v273 = vunpack.c.l.b16 %v165
    %v274 = vunpack.c.h.b16 %v165
    %v275 = vunpack.c.l.b16 %v166
    %v276 = vunpack.c.h.b16 %v166
    %v277 = vpack.c.b16 %v215, %v213
    %v278 = vpack.c.b16 %v216, %v214
    %v279 = vpack.c.b16 %v219, %v217
    %v280 = vpack.c.b16 %v220, %v218
    %v281 = vpack.c.b16 %v223, %v221
    %v282 = vpack.c.b16 %v224, %v222
    %v283 = vpack.c.b16 %v227, %v225
    %v284 = vpack.c.b16 %v228, %v226
    %v285 = vpack.c.b16 %v231, %v229
    %v286 = vpack.c.b16 %v232, %v230
    %v287 = vpack.c.b16 %v235, %v233
    %v288 = vpack.c.b16 %v236, %v234
    %v289 = vpack.c.b16 %v239, %v237
    %v290 = vpack.c.b16 %v240, %v238
    %v291 = vpack.c.b16 %v243, %v241
    %v292 = vpack.c.b16 %v244, %v242
    %v293 = vpack.c.b16 %v247, %v245
    %v294 = vpack.c.b16 %v248, %v246
    %v295 = vpack.c.b16 %v251, %v249
    %v296 = vpack.c.b16 %v252, %v250
    %v297 = vpack.c.b16 %v255, %v253
    %v298 = vpack.c.b16 %v256, %v254
    %v299 = vpack.c.b16 %v259, %v257
    %v300 = vpack.c.b16 %v260, %v258
    %v301 = vpack.c.b16 %v263, %v261
    %v302 = vpack.c.b16 %v264, %v262
    %v303 = vpack.c.b16 %v267, %v265
    %v304 = vpack.c.b16 %v268, %v266
    %v305 = vpack.c.b16 %v271, %v269
    %v306 = vpack.c.b16 %v272, %v270
    %v307 = vpack.c.b16 %v275, %v273
    %v308 = vpack.c.b16 %v276, %v274
    %341 = vmatprep.subr.bf16.mxu0 %v278
    %342 = vmatpush1.bf16.msra.mxu0 %v277
    %343 = vmatprep.subr.bf16.mxu0 %v280
    %344 = vmatpush1.bf16.msra.mxu0 %v279
    %345 = vmatprep.subr.bf16.mxu0 %v282
    %346 = vmatpush1.bf16.msra.mxu0 %v281
    %347 = vmatprep.subr.bf16.mxu0 %v284
    %348 = vmatpush1.bf16.msra.mxu0 %v283
    %349 = vmatprep.subr.bf16.mxu0 %v286
    %350 = vmatpush1.bf16.msra.mxu0 %v285
    %351 = vmatprep.subr.bf16.mxu0 %v288
    %352 = vmatpush1.bf16.msra.mxu0 %v287
    %353 = vmatprep.subr.bf16.mxu0 %v290
    %354 = vmatpush1.bf16.msra.mxu0 %v289
    %355 = vmatprep.subr.bf16.mxu0 %v292
    %356 = vmatpush1.bf16.msra.mxu0 %v291
    %357 = vmatprep.subr.bf16.mxu0 %v294
    %358 = vmatpush1.bf16.msra.mxu0 %v293
    %359 = vmatprep.subr.bf16.mxu0 %v296
    %360 = vmatpush1.bf16.msra.mxu0 %v295
    %361 = vmatprep.subr.bf16.mxu0 %v298
    %362 = vmatpush1.bf16.msra.mxu0 %v297
    %363 = vmatprep.subr.bf16.mxu0 %v300
    %364 = vmatpush1.bf16.msra.mxu0 %v299
    %365 = vmatprep.subr.bf16.mxu0 %v302
    %366 = vmatpush1.bf16.msra.mxu0 %v301
    %367 = vmatprep.subr.bf16.mxu0 %v304
    %368 = vmatpush1.bf16.msra.mxu0 %v303
    %369 = vmatprep.subr.bf16.mxu0 %v306
    %370 = vmatpush1.bf16.msra.mxu0 %v305
    %371 = vmatprep.subr.bf16.mxu0 %v308
    %372 = vmatpush1.bf16.msra.mxu0 %v307
    %373 = vmatprep.mubr.bf16.mxu0 %v168
    %374 = vmatmul.mubr.bf16.gmra.mrb[0].mxu0 %v167
    %v375 = vpop.f32.mrb[0].mxu0
    %v376 = vadd.f32 %v174, %v375
    %v377 = vpop.f32.mrb[0].mxu0
    %v378 = vadd.f32 %v178, %v377
    %v379 = vpop.f32.mrb[0].mxu0
    %v380 = vpop.f32.mrb[0].mxu0
    %381 = vdwg.mxu0
    %v382 = vmax.f32 %v376, 0.0
    %v383 = vmax.f32 %v378, 0.0
    %v384 = vld [vmem:[%s5] sm:$0xff]
    %v385 = vld [vmem:[%s5 + $0x8] sm:$0xff]
    %v386 = vld [vmem:[%s5 + $0x10] sm:$0xff]
    %v387 = vld [vmem:[%s5 + $0x18] sm:$0xff]
    %v388 = vld [vmem:[%s5 + $0x20] sm:$0xff]
    %v389 = vld [vmem:[%s5 + $0x28] sm:$0xff]
    %v390 = vld [vmem:[%s5 + $0x30] sm:$0xff]
    %v391 = vld [vmem:[%s5 + $0x38] sm:$0xff]
    %v392 = vld [vmem:[%s5 + $0x40] sm:$0xff]
    %v393 = vld [vmem:[%s5 + $0x48] sm:$0xff]
    %v394 = vld [vmem:[%s5 + $0x50] sm:$0xff]
    %v395 = vld [vmem:[%s5 + $0x58] sm:$0xff]
    %v396 = vld [vmem:[%s5 + $0x60] sm:$0xff]
    %v397 = vld [vmem:[%s5 + $0x68] sm:$0xff]
    %v398 = vld [vmem:[%s5 + $0x70] sm:$0xff]
    %v399 = vld [vmem:[%s5 + $0x78] sm:$0xff]
    %v400 = vld [vmem:[%s5 + $0x80] sm:$0xff]
    %v401 = vld [vmem:[%s5 + $0x88] sm:$0xff]
    %v402 = vld [vmem:[%s5 + $0x90] sm:$0xff]
    %v403 = vld [vmem:[%s5 + $0x98] sm:$0xff]
    %v404 = vld [vmem:[%s5 + $0xa0] sm:$0xff]
    %v405 = vld [vmem:[%s5 + $0xa8] sm:$0xff]
    %v406 = vld [vmem:[%s5 + $0xb0] sm:$0xff]
    %v407 = vld [vmem:[%s5 + $0xb8] sm:$0xff]
    %v408 = vld [vmem:[%s5 + $0xc0] sm:$0xff]
    %v409 = vld [vmem:[%s5 + $0xc8] sm:$0xff]
    %v410 = vld [vmem:[%s5 + $0xd0] sm:$0xff]
    %v411 = vld [vmem:[%s5 + $0xd8] sm:$0xff]
    %v412 = vld [vmem:[%s5 + $0xe0] sm:$0xff]
    %v413 = vld [vmem:[%s5 + $0xe8] sm:$0xff]
    %v414 = vld [vmem:[%s5 + $0xf0] sm:$0xff]
    %v415 = vld [vmem:[%s5 + $0xf8] sm:$0xff]
    %v416 = vld [vmem:[%s5 + $0x100] sm:$0xff]
    %v417 = vld [vmem:[%s5 + $0x108] sm:$0xff]
    %v418 = vld [vmem:[%s5 + $0x110] sm:$0xff]
    %v419 = vld [vmem:[%s5 + $0x118] sm:$0xff]
    %v420 = vld [vmem:[%s5 + $0x120] sm:$0xff]
    %v421 = vld [vmem:[%s5 + $0x128] sm:$0xff]
    %v422 = vld [vmem:[%s5 + $0x130] sm:$0xff]
    %v423 = vld [vmem:[%s5 + $0x138] sm:$0xff]
    %v424 = vld [vmem:[%s5 + $0x140] sm:$0xff]
    %v425 = vld [vmem:[%s5 + $0x148] sm:$0xff]
    %v426 = vld [vmem:[%s5 + $0x150] sm:$0xff]
    %v427 = vld [vmem:[%s5 + $0x158] sm:$0xff]
    %v428 = vld [vmem:[%s5 + $0x160] sm:$0xff]
    %v429 = vld [vmem:[%s5 + $0x168] sm:$0xff]
    %v430 = vld [vmem:[%s5 + $0x170] sm:$0xff]
    %v431 = vld [vmem:[%s5 + $0x178] sm:$0xff]
    %v432 = vld [vmem:[%s5 + $0x180] sm:$0xff]
    %v433 = vld [vmem:[%s5 + $0x188] sm:$0xff]
    %v434 = vld [vmem:[%s5 + $0x190] sm:$0xff]
    %v435 = vld [vmem:[%s5 + $0x198] sm:$0xff]
    %v436 = vld [vmem:[%s5 + $0x1a0] sm:$0xff]
    %v437 = vld [vmem:[%s5 + $0x1a8] sm:$0xff]
    %v438 = vld [vmem:[%s5 + $0x1b0] sm:$0xff]
    %v439 = vld [vmem:[%s5 + $0x1b8] sm:$0xff]
    %v440 = vld [vmem:[%s5 + $0x1c0] sm:$0xff]
    %v441 = vld [vmem:[%s5 + $0x1c8] sm:$0xff]
    %v442 = vld [vmem:[%s5 + $0x1d0] sm:$0xff]
    %v443 = vld [vmem:[%s5 + $0x1d8] sm:$0xff]
    %v444 = vld [vmem:[%s5 + $0x1e0] sm:$0xff]
    %v445 = vld [vmem:[%s5 + $0x1e8] sm:$0xff]
    %v446 = vld [vmem:[%s5 + $0x1f0] sm:$0xff]
    %v447 = vld [vmem:[%s5 + $0x1f8] sm:$0xff]
    %v448 = vpack.c.bf16 %v382, %v382
    %v449 = vpack.c.bf16 %v383, %v383
    %v450 = vld [vmem:[%s6] sm:$0xf]
    %v452 = vlaneseq
    %v453 = vshrl.u32 %v452, 7
    %v454 = vsub.s32 0, %v453
    %v455 = vrot.slane %v450, %v454
    %v456 = vlaneseq
    %v457 = vshrl.u32 %v456, 7
    %v458 = vsub.s32 1, %v457
    %v459 = vrot.slane %v450, %v458
    %v460 = vlaneseq
    %v461 = vshrl.u32 %v460, 7
    %v462 = vsub.s32 2, %v461
    %v463 = vrot.slane %v450, %v462
    %v464 = vlaneseq
    %v465 = vshrl.u32 %v464, 7
    %v466 = vsub.s32 3, %v465
    %v467 = vrot.slane %v450, %v466
    %v536 = vunpack.c.l.b16 %v384
    %v537 = vunpack.c.h.b16 %v384
    %v538 = vunpack.c.l.b16 %v385
    %v539 = vunpack.c.h.b16 %v385
    %v540 = vunpack.c.l.b16 %v386
    %v541 = vunpack.c.h.b16 %v386
    %v542 = vunpack.c.l.b16 %v387
    %v543 = vunpack.c.h.b16 %v387
    %v544 = vunpack.c.l.b16 %v388
    %v545 = vunpack.c.h.b16 %v388
    %v546 = vunpack.c.l.b16 %v389
    %v547 = vunpack.c.h.b16 %v389
    %v548 = vunpack.c.l.b16 %v390
    %v549 = vunpack.c.h.b16 %v390
    %v550 = vunpack.c.l.b16 %v391
    %v551 = vunpack.c.h.b16 %v391
    %v552 = vunpack.c.l.b16 %v392
    %v553 = vunpack.c.h.b16 %v392
    %v554 = vunpack.c.l.b16 %v393
    %v555 = vunpack.c.h.b16 %v393
    %v556 = vunpack.c.l.b16 %v394
    %v557 = vunpack.c.h.b16 %v394
    %v558 = vunpack.c.l.b16 %v395
    %v559 = vunpack.c.h.b16 %v395
    %v560 = vunpack.c.l.b16 %v396
    %v561 = vunpack.c.h.b16 %v396
    %v562 = vunpack.c.l.b16 %v397
    %v563 = vunpack.c.h.b16 %v397
    %v564 = vunpack.c.l.b16 %v398
    %v565 = vunpack.c.h.b16 %v398
    %v566 = vunpack.c.l.b16 %v399
    %v567 = vunpack.c.h.b16 %v399
    %v568 = vunpack.c.l.b16 %v400
    %v569 = vunpack.c.h.b16 %v400
    %v570 = vunpack.c.l.b16 %v401
    %v571 = vunpack.c.h.b16 %v401
    %v572 = vunpack.c.l.b16 %v402
    %v573 = vunpack.c.h.b16 %v402
    %v574 = vunpack.c.l.b16 %v403
    %v575 = vunpack.c.h.b16 %v403
    %v576 = vunpack.c.l.b16 %v404
    %v577 = vunpack.c.h.b16 %v404
    %v578 = vunpack.c.l.b16 %v405
    %v579 = vunpack.c.h.b16 %v405
    %v580 = vunpack.c.l.b16 %v406
    %v581 = vunpack.c.h.b16 %v406
    %v582 = vunpack.c.l.b16 %v407
    %v583 = vunpack.c.h.b16 %v407
    %v584 = vunpack.c.l.b16 %v408
    %v585 = vunpack.c.h.b16 %v408
    %v586 = vunpack.c.l.b16 %v409
    %v587 = vunpack.c.h.b16 %v409
    %v588 = vunpack.c.l.b16 %v410
    %v589 = vunpack.c.h.b16 %v410
    %v590 = vunpack.c.l.b16 %v411
    %v591 = vunpack.c.h.b16 %v411
    %v592 = vunpack.c.l.b16 %v412
    %v593 = vunpack.c.h.b16 %v412
    %v594 = vunpack.c.l.b16 %v413
    %v595 = vunpack.c.h.b16 %v413
    %v596 = vunpack.c.l.b16 %v414
    %v597 = vunpack.c.h.b16 %v414
    %v598 = vunpack.c.l.b16 %v415
    %v599 = vunpack.c.h.b16 %v415
    %v600 = vunpack.c.l.b16 %v416
    %v601 = vunpack.c.h.b16 %v416
    %v602 = vunpack.c.l.b16 %v417
    %v603 = vunpack.c.h.b16 %v417
    %v604 = vunpack.c.l.b16 %v418
    %v605 = vunpack.c.h.b16 %v418
    %v606 = vunpack.c.l.b16 %v419
    %v607 = vunpack.c.h.b16 %v419
    %v608 = vunpack.c.l.b16 %v420
    %v609 = vunpack.c.h.b16 %v420
    %v610 = vunpack.c.l.b16 %v421
    %v611 = vunpack.c.h.b16 %v421
    %v612 = vunpack.c.l.b16 %v422
    %v613 = vunpack.c.h.b16 %v422
    %v614 = vunpack.c.l.b16 %v423
    %v615 = vunpack.c.h.b16 %v423
    %v616 = vunpack.c.l.b16 %v424
    %v617 = vunpack.c.h.b16 %v424
    %v618 = vunpack.c.l.b16 %v425
    %v619 = vunpack.c.h.b16 %v425
    %v620 = vunpack.c.l.b16 %v426
    %v621 = vunpack.c.h.b16 %v426
    %v622 = vunpack.c.l.b16 %v427
    %v623 = vunpack.c.h.b16 %v427
    %v624 = vunpack.c.l.b16 %v428
    %v625 = vunpack.c.h.b16 %v428
    %v626 = vunpack.c.l.b16 %v429
    %v627 = vunpack.c.h.b16 %v429
    %v628 = vunpack.c.l.b16 %v430
    %v629 = vunpack.c.h.b16 %v430
    %v630 = vunpack.c.l.b16 %v431
    %v631 = vunpack.c.h.b16 %v431
    %v632 = vunpack.c.l.b16 %v432
    %v633 = vunpack.c.h.b16 %v432
    %v634 = vunpack.c.l.b16 %v433
    %v635 = vunpack.c.h.b16 %v433
    %v636 = vunpack.c.l.b16 %v434
    %v637 = vunpack.c.h.b16 %v434
    %v638 = vunpack.c.l.b16 %v435
    %v639 = vunpack.c.h.b16 %v435
    %v640 = vunpack.c.l.b16 %v436
    %v641 = vunpack.c.h.b16 %v436
    %v642 = vunpack.c.l.b16 %v437
    %v643 = vunpack.c.h.b16 %v437
    %v644 = vunpack.c.l.b16 %v438
    %v645 = vunpack.c.h.b16 %v438
    %v646 = vunpack.c.l.b16 %v439
    %v647 = vunpack.c.h.b16 %v439
    %v648 = vunpack.c.l.b16 %v440
    %v649 = vunpack.c.h.b16 %v440
    %v650 = vunpack.c.l.b16 %v441
    %v651 = vunpack.c.h.b16 %v441
    %v652 = vunpack.c.l.b16 %v442
    %v653 = vunpack.c.h.b16 %v442
    %v654 = vunpack.c.l.b16 %v443
    %v655 = vunpack.c.h.b16 %v443
    %v656 = vunpack.c.l.b16 %v444
    %v657 = vunpack.c.h.b16 %v444
    %v658 = vunpack.c.l.b16 %v445
    %v659 = vunpack.c.h.b16 %v445
    %v660 = vunpack.c.l.b16 %v446
    %v661 = vunpack.c.h.b16 %v446
    %v662 = vunpack.c.l.b16 %v447
    %v663 = vunpack.c.h.b16 %v447
    %v664 = vpack.c.b16 %v540, %v536
    %v665 = vpack.c.b16 %v541, %v537
    %v666 = vpack.c.b16 %v542, %v538
    %v667 = vpack.c.b16 %v543, %v539
    %v668 = vpack.c.b16 %v548, %v544
    %v669 = vpack.c.b16 %v549, %v545
    %v670 = vpack.c.b16 %v550, %v546
    %v671 = vpack.c.b16 %v551, %v547
    %v672 = vpack.c.b16 %v556, %v552
    %v673 = vpack.c.b16 %v557, %v553
    %v674 = vpack.c.b16 %v558, %v554
    %v675 = vpack.c.b16 %v559, %v555
    %v676 = vpack.c.b16 %v564, %v560
    %v677 = vpack.c.b16 %v565, %v561
    %v678 = vpack.c.b16 %v566, %v562
    %v679 = vpack.c.b16 %v567, %v563
    %v680 = vpack.c.b16 %v572, %v568
    %v681 = vpack.c.b16 %v573, %v569
    %v682 = vpack.c.b16 %v574, %v570
    %v683 = vpack.c.b16 %v575, %v571
    %v684 = vpack.c.b16 %v580, %v576
    %v685 = vpack.c.b16 %v581, %v577
    %v686 = vpack.c.b16 %v582, %v578
    %v687 = vpack.c.b16 %v583, %v579
    %v688 = vpack.c.b16 %v588, %v584
    %v689 = vpack.c.b16 %v589, %v585
    %v690 = vpack.c.b16 %v590, %v586
    %v691 = vpack.c.b16 %v591, %v587
    %v692 = vpack.c.b16 %v596, %v592
    %v693 = vpack.c.b16 %v597, %v593
    %v694 = vpack.c.b16 %v598, %v594
    %v695 = vpack.c.b16 %v599, %v595
    %v696 = vpack.c.b16 %v604, %v600
    %v697 = vpack.c.b16 %v605, %v601
    %v698 = vpack.c.b16 %v606, %v602
    %v699 = vpack.c.b16 %v607, %v603
    %v700 = vpack.c.b16 %v612, %v608
    %v701 = vpack.c.b16 %v613, %v609
    %v702 = vpack.c.b16 %v614, %v610
    %v703 = vpack.c.b16 %v615, %v611
    %v704 = vpack.c.b16 %v620, %v616
    %v705 = vpack.c.b16 %v621, %v617
    %v706 = vpack.c.b16 %v622, %v618
    %v707 = vpack.c.b16 %v623, %v619
    %v708 = vpack.c.b16 %v628, %v624
    %v709 = vpack.c.b16 %v629, %v625
    %v710 = vpack.c.b16 %v630, %v626
    %v711 = vpack.c.b16 %v631, %v627
    %v712 = vpack.c.b16 %v636, %v632
    %v713 = vpack.c.b16 %v637, %v633
    %v714 = vpack.c.b16 %v638, %v634
    %v715 = vpack.c.b16 %v639, %v635
    %v716 = vpack.c.b16 %v644, %v640
    %v717 = vpack.c.b16 %v645, %v641
    %v718 = vpack.c.b16 %v646, %v642
    %v719 = vpack.c.b16 %v647, %v643
    %v720 = vpack.c.b16 %v652, %v648
    %v721 = vpack.c.b16 %v653, %v649
    %v722 = vpack.c.b16 %v654, %v650
    %v723 = vpack.c.b16 %v655, %v651
    %v724 = vpack.c.b16 %v660, %v656
    %v725 = vpack.c.b16 %v661, %v657
    %v726 = vpack.c.b16 %v662, %v658
    %v727 = vpack.c.b16 %v663, %v659
    %792 = vmatprep.subr.bf16.mxu0 %v665
    %793 = vmatpush1.bf16.msra.mxu0 %v664
    %794 = vmatprep.subr.bf16.mxu0 %v669
    %795 = vmatpush1.bf16.msra.mxu0 %v668
    %796 = vmatprep.subr.bf16.mxu0 %v673
    %797 = vmatpush1.bf16.msra.mxu0 %v672
    %798 = vmatprep.subr.bf16.mxu0 %v677
    %799 = vmatpush1.bf16.msra.mxu0 %v676
    %800 = vmatprep.subr.bf16.mxu0 %v681
    %801 = vmatpush1.bf16.msra.mxu0 %v680
    %802 = vmatprep.subr.bf16.mxu0 %v685
    %803 = vmatpush1.bf16.msra.mxu0 %v684
    %804 = vmatprep.subr.bf16.mxu0 %v689
    %805 = vmatpush1.bf16.msra.mxu0 %v688
    %806 = vmatprep.subr.bf16.mxu0 %v693
    %807 = vmatpush1.bf16.msra.mxu0 %v692
    %808 = vmatprep.subr.bf16.mxu0 %v697
    %809 = vmatpush1.bf16.msra.mxu0 %v696
    %810 = vmatprep.subr.bf16.mxu0 %v701
    %811 = vmatpush1.bf16.msra.mxu0 %v700
    %812 = vmatprep.subr.bf16.mxu0 %v705
    %813 = vmatpush1.bf16.msra.mxu0 %v704
    %814 = vmatprep.subr.bf16.mxu0 %v709
    %815 = vmatpush1.bf16.msra.mxu0 %v708
    %816 = vmatprep.subr.bf16.mxu0 %v713
    %817 = vmatpush1.bf16.msra.mxu0 %v712
    %818 = vmatprep.subr.bf16.mxu0 %v717
    %819 = vmatpush1.bf16.msra.mxu0 %v716
    %820 = vmatprep.subr.bf16.mxu0 %v721
    %821 = vmatpush1.bf16.msra.mxu0 %v720
    %822 = vmatprep.subr.bf16.mxu0 %v725
    %823 = vmatpush1.bf16.msra.mxu0 %v724
    %824 = vmatprep.mubr.bf16.mxu0 %v449
    %825 = vmatmul.mubr.bf16.gmra.mrb[0].mxu0 %v448
    %v826 = vpop.f32.mrb[0].mxu0
    %v827 = vadd.f32 %v455, %v826
    %v828 = vpop.f32.mrb[0].mxu0
    %v829 = vadd.f32 %v459, %v828
    %v830 = vpop.f32.mrb[0].mxu0
    %v831 = vpop.f32.mrb[0].mxu0
    %832 = vdwg.mxu0
    %833 = vmatprep.subr.bf16.mxu0 %v667
    %834 = vmatpush1.bf16.msra.mxu0 %v666
    %835 = vmatprep.subr.bf16.mxu0 %v671
    %836 = vmatpush1.bf16.msra.mxu0 %v670
    %837 = vmatprep.subr.bf16.mxu0 %v675
    %838 = vmatpush1.bf16.msra.mxu0 %v674
    %839 = vmatprep.subr.bf16.mxu0 %v679
    %840 = vmatpush1.bf16.msra.mxu0 %v678
    %841 = vmatprep.subr.bf16.mxu0 %v683
    %842 = vmatpush1.bf16.msra.mxu0 %v682
    %843 = vmatprep.subr.bf16.mxu0 %v687
    %844 = vmatpush1.bf16.msra.mxu0 %v686
    %845 = vmatprep.subr.bf16.mxu0 %v691
    %846 = vmatpush1.bf16.msra.mxu0 %v690
    %847 = vmatprep.subr.bf16.mxu0 %v695
    %848 = vmatpush1.bf16.msra.mxu0 %v694
    %849 = vmatprep.subr.bf16.mxu0 %v699
    %850 = vmatpush1.bf16.msra.mxu0 %v698
    %851 = vmatprep.subr.bf16.mxu0 %v703
    %852 = vmatpush1.bf16.msra.mxu0 %v702
    %853 = vmatprep.subr.bf16.mxu0 %v707
    %854 = vmatpush1.bf16.msra.mxu0 %v706
    %855 = vmatprep.subr.bf16.mxu0 %v711
    %856 = vmatpush1.bf16.msra.mxu0 %v710
    %857 = vmatprep.subr.bf16.mxu0 %v715
    %858 = vmatpush1.bf16.msra.mxu0 %v714
    %859 = vmatprep.subr.bf16.mxu0 %v719
    %860 = vmatpush1.bf16.msra.mxu0 %v718
    %861 = vmatprep.subr.bf16.mxu0 %v723
    %862 = vmatpush1.bf16.msra.mxu0 %v722
    %863 = vmatprep.subr.bf16.mxu0 %v727
    %864 = vmatpush1.bf16.msra.mxu0 %v726
    %865 = vmatprep.mubr.bf16.mxu0 %v449
    %866 = vmatmul.mubr.bf16.gmra.mrb[0].mxu0 %v448
    %v867 = vpop.f32.mrb[0].mxu0
    %v868 = vadd.f32 %v463, %v867
    %v869 = vpop.f32.mrb[0].mxu0
    %v870 = vadd.f32 %v467, %v869
    %v871 = vpop.f32.mrb[0].mxu0
    %v872 = vpop.f32.mrb[0].mxu0
    %873 = vdwg.mxu0
    %v874 = vmax.f32 %v827, 0.0
    %v875 = vmax.f32 %v829, 0.0
    %v876 = vmax.f32 %v868, 0.0
    %v877 = vmax.f32 %v870, 0.0
    %v880 = vcombine.low 0.0, %v874
    %v882 = vunpack.c.l.s4 1966171168
    %v883 = vunpack.c.0.s8 %v882
    %v884 = vlaneseq
    %v885 = vshrl.u32 %v884, 7
    %v886 = vsub.s32 %v883, %v885
    %v887 = vrot.slane %v880, %v886
    %v888 = vcombine.high %v887, %v887
    %v890 = vunpack.c.l.s4 1966171168
    %v891 = vunpack.c.0.s8 %v890
    %v892 = vlaneseq
    %v893 = vshrl.u32 %v892, 7
    %v894 = vsub.s32 %v891, %v893
    %v895 = vrot.slane %v887, %v894
    %v897 = vunpack.c.l.s4 1966171168
    %v898 = vunpack.c.0.s8 %v897
    %v899 = vlaneseq
    %v900 = vshrl.u32 %v899, 7
    %v901 = vsub.s32 %v898, %v900
    %v902 = vrot.slane %v888, %v901
    %v904 = vcombine.low %v874, %v875
    %v906 = vunpack.c.l.s4 1966171168
    %v907 = vunpack.c.0.s8 %v906
    %v908 = vlaneseq
    %v909 = vshrl.u32 %v908, 7
    %v910 = vsub.s32 %v907, %v909
    %v911 = vrot.slane %v904, %v910
    %v912 = vcombine.high %v911, %v911
    %v914 = vunpack.c.l.s4 1966171168
    %v915 = vunpack.c.0.s8 %v914
    %v916 = vlaneseq
    %v917 = vshrl.u32 %v916, 7
    %v918 = vsub.s32 %v915, %v917
    %v919 = vrot.slane %v911, %v918
    %v921 = vunpack.c.l.s4 1966171168
    %v922 = vunpack.c.0.s8 %v921
    %v923 = vlaneseq
    %v924 = vshrl.u32 %v923, 7
    %v925 = vsub.s32 %v922, %v924
    %v926 = vrot.slane %v912, %v925
    %v928 = vcombine.low %v875, %v876
    %v930 = vunpack.c.l.s4 1966171168
    %v931 = vunpack.c.0.s8 %v930
    %v932 = vlaneseq
    %v933 = vshrl.u32 %v932, 7
    %v934 = vsub.s32 %v931, %v933
    %v935 = vrot.slane %v928, %v934
    %v936 = vcombine.high %v935, %v935
    %v938 = vunpack.c.l.s4 1966171168
    %v939 = vunpack.c.0.s8 %v938
    %v940 = vlaneseq
    %v941 = vshrl.u32 %v940, 7
    %v942 = vsub.s32 %v939, %v941
    %v943 = vrot.slane %v935, %v942
    %v945 = vunpack.c.l.s4 1966171168
    %v946 = vunpack.c.0.s8 %v945
    %v947 = vlaneseq
    %v948 = vshrl.u32 %v947, 7
    %v949 = vsub.s32 %v946, %v948
    %v950 = vrot.slane %v936, %v949
    %v952 = vcombine.low %v876, %v877
    %v954 = vunpack.c.l.s4 1966171168
    %v955 = vunpack.c.0.s8 %v954
    %v956 = vlaneseq
    %v957 = vshrl.u32 %v956, 7
    %v958 = vsub.s32 %v955, %v957
    %v959 = vrot.slane %v952, %v958
    %v960 = vcombine.high %v959, %v959
    %v962 = vunpack.c.l.s4 1966171168
    %v963 = vunpack.c.0.s8 %v962
    %v964 = vlaneseq
    %v965 = vshrl.u32 %v964, 7
    %v966 = vsub.s32 %v963, %v965
    %v967 = vrot.slane %v959, %v966
    %v969 = vunpack.c.l.s4 1966171168
    %v970 = vunpack.c.0.s8 %v969
    %v971 = vlaneseq
    %v972 = vshrl.u32 %v971, 7
    %v973 = vsub.s32 %v970, %v972
    %v974 = vrot.slane %v960, %v973
    %v975 = vcombine.low %v877, 0.0
    %v977 = vunpack.c.l.s4 1966171168
    %v978 = vunpack.c.0.s8 %v977
    %v979 = vlaneseq
    %v980 = vshrl.u32 %v979, 7
    %v981 = vsub.s32 %v978, %v980
    %v982 = vrot.slane %v975, %v981
    %v983 = vcombine.high %v982, %v982
    %v985 = vunpack.c.l.s4 1966171168
    %v986 = vunpack.c.0.s8 %v985
    %v987 = vlaneseq
    %v988 = vshrl.u32 %v987, 7
    %v989 = vsub.s32 %v986, %v988
    %v990 = vrot.slane %v982, %v989
    %v992 = vunpack.c.l.s4 1966171168
    %v993 = vunpack.c.0.s8 %v992
    %v994 = vlaneseq
    %v995 = vshrl.u32 %v994, 7
    %v996 = vsub.s32 %v993, %v995
    %v997 = vrot.slane %v983, %v996
    %v998 = vlaneseq
    %v999 = vshrl.u32 %v998, 7
    %v1000 = vsub.s32 0, %v999
    %v1001 = vrot.slane %v895, %v1000
    %v1002 = vlaneseq
    %v1003 = vshrl.u32 %v1002, 7
    %v1004 = vsub.s32 1, %v1003
    %v1005 = vrot.slane %v895, %v1004
    %v1006 = vlaneseq
    %v1007 = vshrl.u32 %v1006, 7
    %v1008 = vsub.s32 0, %v1007
    %v1009 = vrot.slane %v902, %v1008
    %v1010 = vlaneseq
    %v1011 = vshrl.u32 %v1010, 7
    %v1012 = vsub.s32 1, %v1011
    %v1013 = vrot.slane %v902, %v1012
    %v1018 = vlaneseq
    %v1019 = vshrl.u32 %v1018, 7
    %v1020 = vsub.s32 0, %v1019
    %v1021 = vrot.slane %v919, %v1020
    %v1022 = vlaneseq
    %v1023 = vshrl.u32 %v1022, 7
    %v1024 = vsub.s32 1, %v1023
    %v1025 = vrot.slane %v919, %v1024
    %v1026 = vlaneseq
    %v1027 = vshrl.u32 %v1026, 7
    %v1028 = vsub.s32 0, %v1027
    %v1029 = vrot.slane %v926, %v1028
    %v1030 = vlaneseq
    %v1031 = vshrl.u32 %v1030, 7
    %v1032 = vsub.s32 1, %v1031
    %v1033 = vrot.slane %v926, %v1032
    %v1038 = vlaneseq
    %v1039 = vshrl.u32 %v1038, 7
    %v1040 = vsub.s32 0, %v1039
    %v1041 = vrot.slane %v943, %v1040
    %v1042 = vlaneseq
    %v1043 = vshrl.u32 %v1042, 7
    %v1044 = vsub.s32 1, %v1043
    %v1045 = vrot.slane %v943, %v1044
    %v1046 = vlaneseq
    %v1047 = vshrl.u32 %v1046, 7
    %v1048 = vsub.s32 0, %v1047
    %v1049 = vrot.slane %v950, %v1048
    %v1050 = vlaneseq
    %v1051 = vshrl.u32 %v1050, 7
    %v1052 = vsub.s32 1, %v1051
    %v1053 = vrot.slane %v950, %v1052
    %v1058 = vlaneseq
    %v1059 = vshrl.u32 %v1058, 7
    %v1060 = vsub.s32 0, %v1059
    %v1061 = vrot.slane %v967, %v1060
    %v1062 = vlaneseq
    %v1063 = vshrl.u32 %v1062, 7
    %v1064 = vsub.s32 1, %v1063
    %v1065 = vrot.slane %v967, %v1064
    %v1066 = vlaneseq
    %v1067 = vshrl.u32 %v1066, 7
    %v1068 = vsub.s32 0, %v1067
    %v1069 = vrot.slane %v974, %v1068
    %v1070 = vlaneseq
    %v1071 = vshrl.u32 %v1070, 7
    %v1072 = vsub.s32 1, %v1071
    %v1073 = vrot.slane %v974, %v1072
    %v1078 = vlaneseq
    %v1079 = vshrl.u32 %v1078, 7
    %v1080 = vsub.s32 0, %v1079
    %v1081 = vrot.slane %v990, %v1080
    %v1082 = vlaneseq
    %v1083 = vshrl.u32 %v1082, 7
    %v1084 = vsub.s32 1, %v1083
    %v1085 = vrot.slane %v990, %v1084
    %v1086 = vlaneseq
    %v1087 = vshrl.u32 %v1086, 7
    %v1088 = vsub.s32 0, %v1087
    %v1089 = vrot.slane %v997, %v1088
    %v1090 = vlaneseq
    %v1091 = vshrl.u32 %v1090, 7
    %v1092 = vsub.s32 1, %v1091
    %v1093 = vrot.slane %v997, %v1092
    %vm1098 = vcmask 1040384
    %v1099 = vsel %vm1098, %v1001, %v1021
    %v1100 = vsel %vm1098, %v1005, %v1025
    %v1101 = vsel %vm1098, %v1009, %v1029
    %v1102 = vsel %vm1098, %v1013, %v1033
    %vm1103 = vcmask 1041408
    %v1104 = vsel %vm1103, %v1099, %v1041
    %v1105 = vsel %vm1103, %v1100, %v1045
    %v1106 = vsel %vm1103, %v1101, %v1049
    %v1107 = vsel %vm1103, %v1102, %v1053
    %vm1108 = vcmask 1042432
    %v1109 = vsel %vm1108, %v1104, %v1061
    %v1110 = vsel %vm1108, %v1105, %v1065
    %v1111 = vsel %vm1108, %v1106, %v1069
    %v1112 = vsel %vm1108, %v1107, %v1073
    %vm1113 = vcmask 1043456
    %v1114 = vsel %vm1113, %v1109, %v1081
    %v1115 = vsel %vm1113, %v1110, %v1085
    %v1116 = vsel %vm1113, %v1111, %v1089
    %v1117 = vsel %vm1113, %v1112, %v1093
    %v1122 = vcombine.low %v1114, %v1115
    %v1123 = vcombine.high %v1114, %v1115
    %v1125 = vunpack.c.l.s4 1966171168
    %v1126 = vunpack.c.0.s8 %v1125
    %v1127 = vlaneseq
    %v1128 = vshrl.u32 %v1127, 7
    %v1129 = vsub.s32 %v1126, %v1128
    %v1130 = vrot.slane %v1122, %v1129
    %v1132 = vunpack.c.l.s4 1966171168
    %v1133 = vunpack.c.0.s8 %v1132
    %v1134 = vlaneseq
    %v1135 = vshrl.u32 %v1134, 7
    %v1136 = vsub.s32 %v1133, %v1135
    %v1137 = vrot.slane %v1123, %v1136
    %v1138 = vcombine.high %v1130, %v1130
    %v1140 = vunpack.c.l.s4 1966171168
    %v1141 = vunpack.c.0.s8 %v1140
    %v1142 = vlaneseq
    %v1143 = vshrl.u32 %v1142, 7
    %v1144 = vsub.s32 %v1141, %v1143
    %v1145 = vrot.slane %v1130, %v1144
    %v1147 = vunpack.c.l.s4 1966171168
    %v1148 = vunpack.c.0.s8 %v1147
    %v1149 = vlaneseq
    %v1150 = vshrl.u32 %v1149, 7
    %v1151 = vsub.s32 %v1148, %v1150
    %v1152 = vrot.slane %v1137, %v1151
    %v1154 = vunpack.c.l.s4 1966171168
    %v1155 = vunpack.c.0.s8 %v1154
    %v1156 = vlaneseq
    %v1157 = vshrl.u32 %v1156, 7
    %v1158 = vsub.s32 %v1155, %v1157
    %v1159 = vrot.slane %v1138, %v1158
    %v1160 = vcombine.high %v1145, %v1145
    %v1161 = vcombine.high %v1159, %v1159
    %v1162 = vcombine.low %v1116, %v1117
    %v1163 = vcombine.high %v1116, %v1117
    %v1165 = vunpack.c.l.s4 1966171168
    %v1166 = vunpack.c.0.s8 %v1165
    %v1167 = vlaneseq
    %v1168 = vshrl.u32 %v1167, 7
    %v1169 = vsub.s32 %v1166, %v1168
    %v1170 = vrot.slane %v1162, %v1169
    %v1172 = vunpack.c.l.s4 1966171168
    %v1173 = vunpack.c.0.s8 %v1172
    %v1174 = vlaneseq
    %v1175 = vshrl.u32 %v1174, 7
    %v1176 = vsub.s32 %v1173, %v1175
    %v1177 = vrot.slane %v1163, %v1176
    %v1178 = vcombine.high %v1170, %v1170
    %v1180 = vunpack.c.l.s4 1966171168
    %v1181 = vunpack.c.0.s8 %v1180
    %v1182 = vlaneseq
    %v1183 = vshrl.u32 %v1182, 7
    %v1184 = vsub.s32 %v1181, %v1183
    %v1185 = vrot.slane %v1170, %v1184
    %v1187 = vunpack.c.l.s4 1966171168
    %v1188 = vunpack.c.0.s8 %v1187
    %v1189 = vlaneseq
    %v1190 = vshrl.u32 %v1189, 7
    %v1191 = vsub.s32 %v1188, %v1190
    %v1192 = vrot.slane %v1177, %v1191
    %v1194 = vunpack.c.l.s4 1966171168
    %v1195 = vunpack.c.0.s8 %v1194
    %v1196 = vlaneseq
    %v1197 = vshrl.u32 %v1196, 7
    %v1198 = vsub.s32 %v1195, %v1197
    %v1199 = vrot.slane %v1178, %v1198
    %v1200 = vcombine.high %v1185, %v1185
    %v1201 = vcombine.high %v1199, %v1199
    %v1202 = vld [vmem:[%s7] sm:$0xff]
    %v1203 = vld [vmem:[%s7 + $0x8] sm:$0xff]
    %v1204 = vld [vmem:[%s7 + $0x10] sm:$0xff]
    %v1205 = vld [vmem:[%s7 + $0x18] sm:$0xff]
    %v1206 = vld [vmem:[%s7 + $0x20] sm:$0xff]
    %v1207 = vld [vmem:[%s7 + $0x28] sm:$0xff]
    %v1208 = vld [vmem:[%s7 + $0x30] sm:$0xff]
    %v1209 = vld [vmem:[%s7 + $0x38] sm:$0xff]
    %v1210 = vld [vmem:[%s7 + $0x40] sm:$0xff]
    %v1211 = vld [vmem:[%s7 + $0x48] sm:$0xff]
    %v1212 = vld [vmem:[%s7 + $0x50] sm:$0xff]
    %v1213 = vld [vmem:[%s7 + $0x58] sm:$0xff]
    %v1214 = vld [vmem:[%s7 + $0x60] sm:$0xff]
    %v1215 = vld [vmem:[%s7 + $0x68] sm:$0xff]
    %v1216 = vld [vmem:[%s7 + $0x70] sm:$0xff]
    %v1217 = vld [vmem:[%s7 + $0x78] sm:$0xff]
    %v1218 = vld [vmem:[%s7 + $0x80] sm:$0xff]
    %v1219 = vld [vmem:[%s7 + $0x88] sm:$0xff]
    %v1220 = vld [vmem:[%s7 + $0x90] sm:$0xff]
    %v1221 = vld [vmem:[%s7 + $0x98] sm:$0xff]
    %v1222 = vld [vmem:[%s7 + $0xa0] sm:$0xff]
    %v1223 = vld [vmem:[%s7 + $0xa8] sm:$0xff]
    %v1224 = vld [vmem:[%s7 + $0xb0] sm:$0xff]
    %v1225 = vld [vmem:[%s7 + $0xb8] sm:$0xff]
    %v1226 = vld [vmem:[%s7 + $0xc0] sm:$0xff]
    %v1227 = vld [vmem:[%s7 + $0xc8] sm:$0xff]
    %v1228 = vld [vmem:[%s7 + $0xd0] sm:$0xff]
    %v1229 = vld [vmem:[%s7 + $0xd8] sm:$0xff]
    %v1230 = vld [vmem:[%s7 + $0xe0] sm:$0xff]
    %v1231 = vld [vmem:[%s7 + $0xe8] sm:$0xff]
    %v1232 = vld [vmem:[%s7 + $0xf0] sm:$0xff]
    %v1233 = vld [vmem:[%s7 + $0xf8] sm:$0xff]
    %v1234 = vld [vmem:[%s7 + $0x100] sm:$0xff]
    %v1235 = vld [vmem:[%s7 + $0x108] sm:$0xff]
    %v1236 = vld [vmem:[%s7 + $0x110] sm:$0xff]
    %v1237 = vld [vmem:[%s7 + $0x118] sm:$0xff]
    %v1238 = vld [vmem:[%s7 + $0x120] sm:$0xff]
    %v1239 = vld [vmem:[%s7 + $0x128] sm:$0xff]
    %v1240 = vld [vmem:[%s7 + $0x130] sm:$0xff]
    %v1241 = vld [vmem:[%s7 + $0x138] sm:$0xff]
    %v1242 = vld [vmem:[%s7 + $0x140] sm:$0xff]
    %v1243 = vld [vmem:[%s7 + $0x148] sm:$0xff]
    %v1244 = vld [vmem:[%s7 + $0x150] sm:$0xff]
    %v1245 = vld [vmem:[%s7 + $0x158] sm:$0xff]
    %v1246 = vld [vmem:[%s7 + $0x160] sm:$0xff]
    %v1247 = vld [vmem:[%s7 + $0x168] sm:$0xff]
    %v1248 = vld [vmem:[%s7 + $0x170] sm:$0xff]
    %v1249 = vld [vmem:[%s7 + $0x178] sm:$0xff]
    %v1250 = vld [vmem:[%s7 + $0x180] sm:$0xff]
    %v1251 = vld [vmem:[%s7 + $0x188] sm:$0xff]
    %v1252 = vld [vmem:[%s7 + $0x190] sm:$0xff]
    %v1253 = vld [vmem:[%s7 + $0x198] sm:$0xff]
    %v1254 = vld [vmem:[%s7 + $0x1a0] sm:$0xff]
    %v1255 = vld [vmem:[%s7 + $0x1a8] sm:$0xff]
    %v1256 = vld [vmem:[%s7 + $0x1b0] sm:$0xff]
    %v1257 = vld [vmem:[%s7 + $0x1b8] sm:$0xff]
    %v1258 = vld [vmem:[%s7 + $0x1c0] sm:$0xff]
    %v1259 = vld [vmem:[%s7 + $0x1c8] sm:$0xff]
    %v1260 = vld [vmem:[%s7 + $0x1d0] sm:$0xff]
    %v1261 = vld [vmem:[%s7 + $0x1d8] sm:$0xff]
    %v1262 = vld [vmem:[%s7 + $0x1e0] sm:$0xff]
    %v1263 = vld [vmem:[%s7 + $0x1e8] sm:$0xff]
    %v1264 = vld [vmem:[%s7 + $0x1f0] sm:$0xff]
    %v1265 = vld [vmem:[%s7 + $0x1f8] sm:$0xff]
    %v1266 = vld [vmem:[%s8] sm:$0xf]
    %v1267 = vcombine.low %v1145, %v1159
    %v1268 = vcombine.low %v1160, %v1161
    %v1269 = vcombine.low %v1152, %v1185
    %v1270 = vcombine.low %v1199, %v1200
    %v1272 = vunpack.c.l.s4 1966171168
    %v1273 = vunpack.c.0.s8 %v1272
    %v1274 = vlaneseq
    %v1275 = vshrl.u32 %v1274, 7
    %v1276 = vsub.s32 %v1273, %v1275
    %v1277 = vrot.slane %v1267, %v1276
    %v1279 = vunpack.c.l.s4 1966171168
    %v1280 = vunpack.c.0.s8 %v1279
    %v1281 = vlaneseq
    %v1282 = vshrl.u32 %v1281, 7
    %v1283 = vsub.s32 %v1280, %v1282
    %v1284 = vrot.slane %v1268, %v1283
    %v1286 = vunpack.c.l.s4 1966171168
    %v1287 = vunpack.c.0.s8 %v1286
    %v1288 = vlaneseq
    %v1289 = vshrl.u32 %v1288, 7
    %v1290 = vsub.s32 %v1287, %v1289
    %v1291 = vrot.slane %v1269, %v1290
    %v1293 = vunpack.c.l.s4 1966171168
    %v1294 = vunpack.c.0.s8 %v1293
    %v1295 = vlaneseq
    %v1296 = vshrl.u32 %v1295, 7
    %v1297 = vsub.s32 %v1294, %v1296
    %v1298 = vrot.slane %v1270, %v1297
    %v1299 = vcombine.low %v1277, %v1284
    %v1300 = vcombine.high %v1277, %v1284
    %v1301 = vcombine.low %v1291, %v1298
    %v1302 = vcombine.high %v1291, %v1298
    %v1304 = vunpack.c.l.s4 1966171168
    %v1305 = vunpack.c.0.s8 %v1304
    %v1306 = vlaneseq
    %v1307 = vshrl.u32 %v1306, 7
    %v1308 = vsub.s32 %v1305, %v1307
    %v1309 = vrot.slane %v1299, %v1308
    %v1311 = vunpack.c.l.s4 1966171168
    %v1312 = vunpack.c.0.s8 %v1311
    %v1313 = vlaneseq
    %v1314 = vshrl.u32 %v1313, 7
    %v1315 = vsub.s32 %v1312, %v1314
    %v1316 = vrot.slane %v1300, %v1315
    %v1318 = vunpack.c.l.s4 1966171168
    %v1319 = vunpack.c.0.s8 %v1318
    %v1320 = vlaneseq
    %v1321 = vshrl.u32 %v1320, 7
    %v1322 = vsub.s32 %v1319, %v1321
    %v1323 = vrot.slane %v1301, %v1322
    %v1325 = vunpack.c.l.s4 1966171168
    %v1326 = vunpack.c.0.s8 %v1325
    %v1327 = vlaneseq
    %v1328 = vshrl.u32 %v1327, 7
    %v1329 = vsub.s32 %v1326, %v1328
    %v1330 = vrot.slane %v1302, %v1329
    %v1331 = vcombine.low %v1309, %v1323
    %v1332 = vcombine.low %v1316, %v1330
    %v1333 = vcombine.low %v1201, %v1192
    %v1335 = vunpack.c.l.s4 1966171168
    %v1336 = vunpack.c.0.s8 %v1335
    %v1337 = vlaneseq
    %v1338 = vshrl.u32 %v1337, 7
    %v1339 = vsub.s32 %v1336, %v1338
    %v1340 = vrot.slane %v1333, %v1339
    %v1341 = vcombine.high %v1340, %v1340
    %v1343 = vunpack.c.l.s4 1966171168
    %v1344 = vunpack.c.0.s8 %v1343
    %v1345 = vlaneseq
    %v1346 = vshrl.u32 %v1345, 7
    %v1347 = vsub.s32 %v1344, %v1346
    %v1348 = vrot.slane %v1340, %v1347
    %v1350 = vunpack.c.l.s4 1966171168
    %v1351 = vunpack.c.0.s8 %v1350
    %v1352 = vlaneseq
    %v1353 = vshrl.u32 %v1352, 7
    %v1354 = vsub.s32 %v1351, %v1353
    %v1355 = vrot.slane %v1341, %v1354
    %v1360 = vpack.c.bf16 %v1348, %v1331
    %v1361 = vpack.c.bf16 %v1355, %v1332
    %v1363 = vlaneseq
    %v1364 = vshrl.u32 %v1363, 7
    %v1365 = vsub.s32 0, %v1364
    %v1366 = vrot.slane %v1266, %v1365
    %v1367 = vlaneseq
    %v1368 = vshrl.u32 %v1367, 7
    %v1369 = vsub.s32 1, %v1368
    %v1370 = vrot.slane %v1266, %v1369
    %v1371 = vlaneseq
    %v1372 = vshrl.u32 %v1371, 7
    %v1373 = vsub.s32 2, %v1372
    %v1374 = vrot.slane %v1266, %v1373
    %v1375 = vlaneseq
    %v1376 = vshrl.u32 %v1375, 7
    %v1377 = vsub.s32 3, %v1376
    %v1378 = vrot.slane %v1266, %v1377
    %v1447 = vunpack.c.l.b16 %v1202
    %v1448 = vunpack.c.h.b16 %v1202
    %v1449 = vunpack.c.l.b16 %v1203
    %v1450 = vunpack.c.h.b16 %v1203
    %v1451 = vunpack.c.l.b16 %v1204
    %v1452 = vunpack.c.h.b16 %v1204
    %v1453 = vunpack.c.l.b16 %v1205
    %v1454 = vunpack.c.h.b16 %v1205
    %v1455 = vunpack.c.l.b16 %v1206
    %v1456 = vunpack.c.h.b16 %v1206
    %v1457 = vunpack.c.l.b16 %v1207
    %v1458 = vunpack.c.h.b16 %v1207
    %v1459 = vunpack.c.l.b16 %v1208
    %v1460 = vunpack.c.h.b16 %v1208
    %v1461 = vunpack.c.l.b16 %v1209
    %v1462 = vunpack.c.h.b16 %v1209
    %v1463 = vunpack.c.l.b16 %v1210
    %v1464 = vunpack.c.h.b16 %v1210
    %v1465 = vunpack.c.l.b16 %v1211
    %v1466 = vunpack.c.h.b16 %v1211
    %v1467 = vunpack.c.l.b16 %v1212
    %v1468 = vunpack.c.h.b16 %v1212
    %v1469 = vunpack.c.l.b16 %v1213
    %v1470 = vunpack.c.h.b16 %v1213
    %v1471 = vunpack.c.l.b16 %v1214
    %v1472 = vunpack.c.h.b16 %v1214
    %v1473 = vunpack.c.l.b16 %v1215
    %v1474 = vunpack.c.h.b16 %v1215
    %v1475 = vunpack.c.l.b16 %v1216
    %v1476 = vunpack.c.h.b16 %v1216
    %v1477 = vunpack.c.l.b16 %v1217
    %v1478 = vunpack.c.h.b16 %v1217
    %v1479 = vunpack.c.l.b16 %v1218
    %v1480 = vunpack.c.h.b16 %v1218
    %v1481 = vunpack.c.l.b16 %v1219
    %v1482 = vunpack.c.h.b16 %v1219
    %v1483 = vunpack.c.l.b16 %v1220
    %v1484 = vunpack.c.h.b16 %v1220
    %v1485 = vunpack.c.l.b16 %v1221
    %v1486 = vunpack.c.h.b16 %v1221
    %v1487 = vunpack.c.l.b16 %v1222
    %v1488 = vunpack.c.h.b16 %v1222
    %v1489 = vunpack.c.l.b16 %v1223
    %v1490 = vunpack.c.h.b16 %v1223
    %v1491 = vunpack.c.l.b16 %v1224
    %v1492 = vunpack.c.h.b16 %v1224
    %v1493 = vunpack.c.l.b16 %v1225
    %v1494 = vunpack.c.h.b16 %v1225
    %v1495 = vunpack.c.l.b16 %v1226
    %v1496 = vunpack.c.h.b16 %v1226
    %v1497 = vunpack.c.l.b16 %v1227
    %v1498 = vunpack.c.h.b16 %v1227
    %v1499 = vunpack.c.l.b16 %v1228
    %v1500 = vunpack.c.h.b16 %v1228
    %v1501 = vunpack.c.l.b16 %v1229
    %v1502 = vunpack.c.h.b16 %v1229
    %v1503 = vunpack.c.l.b16 %v1230
    %v1504 = vunpack.c.h.b16 %v1230
    %v1505 = vunpack.c.l.b16 %v1231
    %v1506 = vunpack.c.h.b16 %v1231
    %v1507 = vunpack.c.l.b16 %v1232
    %v1508 = vunpack.c.h.b16 %v1232
    %v1509 = vunpack.c.l.b16 %v1233
    %v1510 = vunpack.c.h.b16 %v1233
    %v1511 = vunpack.c.l.b16 %v1234
    %v1512 = vunpack.c.h.b16 %v1234
    %v1513 = vunpack.c.l.b16 %v1235
    %v1514 = vunpack.c.h.b16 %v1235
    %v1515 = vunpack.c.l.b16 %v1236
    %v1516 = vunpack.c.h.b16 %v1236
    %v1517 = vunpack.c.l.b16 %v1237
    %v1518 = vunpack.c.h.b16 %v1237
    %v1519 = vunpack.c.l.b16 %v1238
    %v1520 = vunpack.c.h.b16 %v1238
    %v1521 = vunpack.c.l.b16 %v1239
    %v1522 = vunpack.c.h.b16 %v1239
    %v1523 = vunpack.c.l.b16 %v1240
    %v1524 = vunpack.c.h.b16 %v1240
    %v1525 = vunpack.c.l.b16 %v1241
    %v1526 = vunpack.c.h.b16 %v1241
    %v1527 = vunpack.c.l.b16 %v1242
    %v1528 = vunpack.c.h.b16 %v1242
    %v1529 = vunpack.c.l.b16 %v1243
    %v1530 = vunpack.c.h.b16 %v1243
    %v1531 = vunpack.c.l.b16 %v1244
    %v1532 = vunpack.c.h.b16 %v1244
    %v1533 = vunpack.c.l.b16 %v1245
    %v1534 = vunpack.c.h.b16 %v1245
    %v1535 = vunpack.c.l.b16 %v1246
    %v1536 = vunpack.c.h.b16 %v1246
    %v1537 = vunpack.c.l.b16 %v1247
    %v1538 = vunpack.c.h.b16 %v1247
    %v1539 = vunpack.c.l.b16 %v1248
    %v1540 = vunpack.c.h.b16 %v1248
    %v1541 = vunpack.c.l.b16 %v1249
    %v1542 = vunpack.c.h.b16 %v1249
    %v1543 = vunpack.c.l.b16 %v1250
    %v1544 = vunpack.c.h.b16 %v1250
    %v1545 = vunpack.c.l.b16 %v1251
    %v1546 = vunpack.c.h.b16 %v1251
    %v1547 = vunpack.c.l.b16 %v1252
    %v1548 = vunpack.c.h.b16 %v1252
    %v1549 = vunpack.c.l.b16 %v1253
    %v1550 = vunpack.c.h.b16 %v1253
    %v1551 = vunpack.c.l.b16 %v1254
    %v1552 = vunpack.c.h.b16 %v1254
    %v1553 = vunpack.c.l.b16 %v1255
    %v1554 = vunpack.c.h.b16 %v1255
    %v1555 = vunpack.c.l.b16 %v1256
    %v1556 = vunpack.c.h.b16 %v1256
    %v1557 = vunpack.c.l.b16 %v1257
    %v1558 = vunpack.c.h.b16 %v1257
    %v1559 = vunpack.c.l.b16 %v1258
    %v1560 = vunpack.c.h.b16 %v1258
    %v1561 = vunpack.c.l.b16 %v1259
    %v1562 = vunpack.c.h.b16 %v1259
    %v1563 = vunpack.c.l.b16 %v1260
    %v1564 = vunpack.c.h.b16 %v1260
    %v1565 = vunpack.c.l.b16 %v1261
    %v1566 = vunpack.c.h.b16 %v1261
    %v1567 = vunpack.c.l.b16 %v1262
    %v1568 = vunpack.c.h.b16 %v1262
    %v1569 = vunpack.c.l.b16 %v1263
    %v1570 = vunpack.c.h.b16 %v1263
    %v1571 = vunpack.c.l.b16 %v1264
    %v1572 = vunpack.c.h.b16 %v1264
    %v1573 = vunpack.c.l.b16 %v1265
    %v1574 = vunpack.c.h.b16 %v1265
    %v1575 = vpack.c.b16 %v1451, %v1447
    %v1576 = vpack.c.b16 %v1452, %v1448
    %v1577 = vpack.c.b16 %v1453, %v1449
    %v1578 = vpack.c.b16 %v1454, %v1450
    %v1579 = vpack.c.b16 %v1459, %v1455
    %v1580 = vpack.c.b16 %v1460, %v1456
    %v1581 = vpack.c.b16 %v1461, %v1457
    %v1582 = vpack.c.b16 %v1462, %v1458
    %v1583 = vpack.c.b16 %v1467, %v1463
    %v1584 = vpack.c.b16 %v1468, %v1464
    %v1585 = vpack.c.b16 %v1469, %v1465
    %v1586 = vpack.c.b16 %v1470, %v1466
    %v1587 = vpack.c.b16 %v1475, %v1471
    %v1588 = vpack.c.b16 %v1476, %v1472
    %v1589 = vpack.c.b16 %v1477, %v1473
    %v1590 = vpack.c.b16 %v1478, %v1474
    %v1591 = vpack.c.b16 %v1483, %v1479
    %v1592 = vpack.c.b16 %v1484, %v1480
    %v1593 = vpack.c.b16 %v1485, %v1481
    %v1594 = vpack.c.b16 %v1486, %v1482
    %v1595 = vpack.c.b16 %v1491, %v1487
    %v1596 = vpack.c.b16 %v1492, %v1488
    %v1597 = vpack.c.b16 %v1493, %v1489
    %v1598 = vpack.c.b16 %v1494, %v1490
    %v1599 = vpack.c.b16 %v1499, %v1495
    %v1600 = vpack.c.b16 %v1500, %v1496
    %v1601 = vpack.c.b16 %v1501, %v1497
    %v1602 = vpack.c.b16 %v1502, %v1498
    %v1603 = vpack.c.b16 %v1507, %v1503
    %v1604 = vpack.c.b16 %v1508, %v1504
    %v1605 = vpack.c.b16 %v1509, %v1505
    %v1606 = vpack.c.b16 %v1510, %v1506
    %v1607 = vpack.c.b16 %v1515, %v1511
    %v1608 = vpack.c.b16 %v1516, %v1512
    %v1609 = vpack.c.b16 %v1517, %v1513
    %v1610 = vpack.c.b16 %v1518, %v1514
    %v1611 = vpack.c.b16 %v1523, %v1519
    %v1612 = vpack.c.b16 %v1524, %v1520
    %v1613 = vpack.c.b16 %v1525, %v1521
    %v1614 = vpack.c.b16 %v1526, %v1522
    %v1615 = vpack.c.b16 %v1531, %v1527
    %v1616 = vpack.c.b16 %v1532, %v1528
    %v1617 = vpack.c.b16 %v1533, %v1529
    %v1618 = vpack.c.b16 %v1534, %v1530
    %v1619 = vpack.c.b16 %v1539, %v1535
    %v1620 = vpack.c.b16 %v1540, %v1536
    %v1621 = vpack.c.b16 %v1541, %v1537
    %v1622 = vpack.c.b16 %v1542, %v1538
    %v1623 = vpack.c.b16 %v1547, %v1543
    %v1624 = vpack.c.b16 %v1548, %v1544
    %v1625 = vpack.c.b16 %v1549, %v1545
    %v1626 = vpack.c.b16 %v1550, %v1546
    %v1627 = vpack.c.b16 %v1555, %v1551
    %v1628 = vpack.c.b16 %v1556, %v1552
    %v1629 = vpack.c.b16 %v1557, %v1553
    %v1630 = vpack.c.b16 %v1558, %v1554
    %v1631 = vpack.c.b16 %v1563, %v1559
    %v1632 = vpack.c.b16 %v1564, %v1560
    %v1633 = vpack.c.b16 %v1565, %v1561
    %v1634 = vpack.c.b16 %v1566, %v1562
    %v1635 = vpack.c.b16 %v1571, %v1567
    %v1636 = vpack.c.b16 %v1572, %v1568
    %v1637 = vpack.c.b16 %v1573, %v1569
    %v1638 = vpack.c.b16 %v1574, %v1570
    %1703 = vmatprep.subr.bf16.mxu0 %v1576
    %1704 = vmatpush1.bf16.msra.mxu0 %v1575
    %1705 = vmatprep.subr.bf16.mxu0 %v1580
    %1706 = vmatpush1.bf16.msra.mxu0 %v1579
    %1707 = vmatprep.subr.bf16.mxu0 %v1584
    %1708 = vmatpush1.bf16.msra.mxu0 %v1583
    %1709 = vmatprep.subr.bf16.mxu0 %v1588
    %1710 = vmatpush1.bf16.msra.mxu0 %v1587
    %1711 = vmatprep.subr.bf16.mxu0 %v1592
    %1712 = vmatpush1.bf16.msra.mxu0 %v1591
    %1713 = vmatprep.subr.bf16.mxu0 %v1596
    %1714 = vmatpush1.bf16.msra.mxu0 %v1595
    %1715 = vmatprep.subr.bf16.mxu0 %v1600
    %1716 = vmatpush1.bf16.msra.mxu0 %v1599
    %1717 = vmatprep.subr.bf16.mxu0 %v1604
    %1718 = vmatpush1.bf16.msra.mxu0 %v1603
    %1719 = vmatprep.subr.bf16.mxu0 %v1608
    %1720 = vmatpush1.bf16.msra.mxu0 %v1607
    %1721 = vmatprep.subr.bf16.mxu0 %v1612
    %1722 = vmatpush1.bf16.msra.mxu0 %v1611
    %1723 = vmatprep.subr.bf16.mxu0 %v1616
    %1724 = vmatpush1.bf16.msra.mxu0 %v1615
    %1725 = vmatprep.subr.bf16.mxu0 %v1620
    %1726 = vmatpush1.bf16.msra.mxu0 %v1619
    %1727 = vmatprep.subr.bf16.mxu0 %v1624
    %1728 = vmatpush1.bf16.msra.mxu0 %v1623
    %1729 = vmatprep.subr.bf16.mxu0 %v1628
    %1730 = vmatpush1.bf16.msra.mxu0 %v1627
    %1731 = vmatprep.subr.bf16.mxu0 %v1632
    %1732 = vmatpush1.bf16.msra.mxu0 %v1631
    %1733 = vmatprep.subr.bf16.mxu0 %v1636
    %1734 = vmatpush1.bf16.msra.mxu0 %v1635
    %1735 = vmatprep.mubr.bf16.mxu0 %v1361
    %1736 = vmatmul.mubr.bf16.gmra.mrb[0].mxu0 %v1360
    %v1737 = vpop.f32.mrb[0].mxu0
    %v1738 = vadd.f32 %v1366, %v1737
    %v1739 = vpop.f32.mrb[0].mxu0
    %v1740 = vadd.f32 %v1370, %v1739
    %v1741 = vpop.f32.mrb[0].mxu0
    %v1742 = vadd.f32 %v1366, %v1741
    %v1743 = vpop.f32.mrb[0].mxu0
    %v1744 = vadd.f32 %v1370, %v1743
    %1745 = vdwg.mxu0
    %1746 = vmatprep.subr.bf16.mxu0 %v1578
    %1747 = vmatpush1.bf16.msra.mxu0 %v1577
    %1748 = vmatprep.subr.bf16.mxu0 %v1582
    %1749 = vmatpush1.bf16.msra.mxu0 %v1581
    %1750 = vmatprep.subr.bf16.mxu0 %v1586
    %1751 = vmatpush1.bf16.msra.mxu0 %v1585
    %1752 = vmatprep.subr.bf16.mxu0 %v1590
    %1753 = vmatpush1.bf16.msra.mxu0 %v1589
    %1754 = vmatprep.subr.bf16.mxu0 %v1594
    %1755 = vmatpush1.bf16.msra.mxu0 %v1593
    %1756 = vmatprep.subr.bf16.mxu0 %v1598
    %1757 = vmatpush1.bf16.msra.mxu0 %v1597
    %1758 = vmatprep.subr.bf16.mxu0 %v1602
    %1759 = vmatpush1.bf16.msra.mxu0 %v1601
    %1760 = vmatprep.subr.bf16.mxu0 %v1606
    %1761 = vmatpush1.bf16.msra.mxu0 %v1605
    %1762 = vmatprep.subr.bf16.mxu0 %v1610
    %1763 = vmatpush1.bf16.msra.mxu0 %v1609
    %1764 = vmatprep.subr.bf16.mxu0 %v1614
    %1765 = vmatpush1.bf16.msra.mxu0 %v1613
    %1766 = vmatprep.subr.bf16.mxu0 %v1618
    %1767 = vmatpush1.bf16.msra.mxu0 %v1617
    %1768 = vmatprep.subr.bf16.mxu0 %v1622
    %1769 = vmatpush1.bf16.msra.mxu0 %v1621
    %1770 = vmatprep.subr.bf16.mxu0 %v1626
    %1771 = vmatpush1.bf16.msra.mxu0 %v1625
    %1772 = vmatprep.subr.bf16.mxu0 %v1630
    %1773 = vmatpush1.bf16.msra.mxu0 %v1629
    %1774 = vmatprep.subr.bf16.mxu0 %v1634
    %1775 = vmatpush1.bf16.msra.mxu0 %v1633
    %1776 = vmatprep.subr.bf16.mxu0 %v1638
    %1777 = vmatpush1.bf16.msra.mxu0 %v1637
    %1778 = vmatprep.mubr.bf16.mxu0 %v1361
    %1779 = vmatmul.mubr.bf16.gmra.mrb[0].mxu0 %v1360
    %v1780 = vpop.f32.mrb[0].mxu0
    %v1781 = vadd.f32 %v1374, %v1780
    %v1782 = vpop.f32.mrb[0].mxu0
    %v1783 = vadd.f32 %v1378, %v1782
    %v1784 = vpop.f32.mrb[0].mxu0
    %v1785 = vadd.f32 %v1374, %v1784
    %v1786 = vpop.f32.mrb[0].mxu0
    %v1787 = vadd.f32 %v1378, %v1786
    %1788 = vdwg.mxu0
    %v1789 = vmax.f32 %v1738, 0.0
    %v1790 = vmax.f32 %v1740, 0.0
    %v1791 = vmax.f32 %v1781, 0.0
    %v1792 = vmax.f32 %v1783, 0.0
    %v1793 = vmax.f32 %v1742, 0.0
    %v1794 = vmax.f32 %v1744, 0.0
    %v1795 = vmax.f32 %v1785, 0.0
    %v1796 = vmax.f32 %v1787, 0.0
    %v1801 = vcombine.low %v1789, %v1790
    %v1802 = vcombine.high %v1789, %v1790
    %v1804 = vunpack.c.l.s4 1966171168
    %v1805 = vunpack.c.0.s8 %v1804
    %v1806 = vlaneseq
    %v1807 = vshrl.u32 %v1806, 7
    %v1808 = vsub.s32 %v1805, %v1807
    %v1809 = vrot.slane %v1801, %v1808
    %v1811 = vunpack.c.l.s4 1966171168
    %v1812 = vunpack.c.0.s8 %v1811
    %v1813 = vlaneseq
    %v1814 = vshrl.u32 %v1813, 7
    %v1815 = vsub.s32 %v1812, %v1814
    %v1816 = vrot.slane %v1802, %v1815
    %v1817 = vcombine.high %v1809, %v1809
    %v1818 = vcombine.high %v1816, %v1816
    %v1820 = vunpack.c.l.s4 1966171168
    %v1821 = vunpack.c.0.s8 %v1820
    %v1822 = vlaneseq
    %v1823 = vshrl.u32 %v1822, 7
    %v1824 = vsub.s32 %v1821, %v1823
    %v1825 = vrot.slane %v1809, %v1824
    %v1827 = vunpack.c.l.s4 1966171168
    %v1828 = vunpack.c.0.s8 %v1827
    %v1829 = vlaneseq
    %v1830 = vshrl.u32 %v1829, 7
    %v1831 = vsub.s32 %v1828, %v1830
    %v1832 = vrot.slane %v1816, %v1831
    %v1834 = vunpack.c.l.s4 1966171168
    %v1835 = vunpack.c.0.s8 %v1834
    %v1836 = vlaneseq
    %v1837 = vshrl.u32 %v1836, 7
    %v1838 = vsub.s32 %v1835, %v1837
    %v1839 = vrot.slane %v1817, %v1838
    %v1841 = vunpack.c.l.s4 1966171168
    %v1842 = vunpack.c.0.s8 %v1841
    %v1843 = vlaneseq
    %v1844 = vshrl.u32 %v1843, 7
    %v1845 = vsub.s32 %v1842, %v1844
    %v1846 = vrot.slane %v1818, %v1845
    %v1847 = vcombine.high %v1825, %v1825
    %v1848 = vcombine.high %v1832, %v1832
    %v1849 = vcombine.high %v1839, %v1839
    %v1850 = vcombine.high %v1846, %v1846
    %v1851 = vcombine.low %v1793, %v1794
    %v1853 = vunpack.c.l.s4 1966171168
    %v1854 = vunpack.c.0.s8 %v1853
    %v1855 = vlaneseq
    %v1856 = vshrl.u32 %v1855, 7
    %v1857 = vsub.s32 %v1854, %v1856
    %v1858 = vrot.slane %v1851, %v1857
    %v1859 = vcombine.high %v1858, %v1858
    %v1861 = vunpack.c.l.s4 1966171168
    %v1862 = vunpack.c.0.s8 %v1861
    %v1863 = vlaneseq
    %v1864 = vshrl.u32 %v1863, 7
    %v1865 = vsub.s32 %v1862, %v1864
    %v1866 = vrot.slane %v1858, %v1865
    %v1868 = vunpack.c.l.s4 1966171168
    %v1869 = vunpack.c.0.s8 %v1868
    %v1870 = vlaneseq
    %v1871 = vshrl.u32 %v1870, 7
    %v1872 = vsub.s32 %v1869, %v1871
    %v1873 = vrot.slane %v1859, %v1872
    %v1874 = vlaneseq
    %v1875 = vshrl.u32 %v1874, 7
    %v1876 = vsub.s32 0, %v1875
    %v1877 = vrot.slane %v1825, %v1876
    %v1878 = vlaneseq
    %v1879 = vshrl.u32 %v1878, 7
    %v1880 = vsub.s32 1, %v1879
    %v1881 = vrot.slane %v1825, %v1880
    %v1882 = vlaneseq
    %v1883 = vshrl.u32 %v1882, 7
    %v1884 = vsub.s32 0, %v1883
    %v1885 = vrot.slane %v1839, %v1884
    %v1886 = vlaneseq
    %v1887 = vshrl.u32 %v1886, 7
    %v1888 = vsub.s32 1, %v1887
    %v1889 = vrot.slane %v1839, %v1888
    %v1890 = vlaneseq
    %v1891 = vshrl.u32 %v1890, 7
    %v1892 = vsub.s32 0, %v1891
    %v1893 = vrot.slane %v1847, %v1892
    %v1894 = vlaneseq
    %v1895 = vshrl.u32 %v1894, 7
    %v1896 = vsub.s32 1, %v1895
    %v1897 = vrot.slane %v1847, %v1896
    %v1898 = vlaneseq
    %v1899 = vshrl.u32 %v1898, 7
    %v1900 = vsub.s32 0, %v1899
    %v1901 = vrot.slane %v1849, %v1900
    %v1902 = vlaneseq
    %v1903 = vshrl.u32 %v1902, 7
    %v1904 = vsub.s32 1, %v1903
    %v1905 = vrot.slane %v1849, %v1904
    %v1906 = vlaneseq
    %v1907 = vshrl.u32 %v1906, 7
    %v1908 = vsub.s32 0, %v1907
    %v1909 = vrot.slane %v1832, %v1908
    %v1910 = vlaneseq
    %v1911 = vshrl.u32 %v1910, 7
    %v1912 = vsub.s32 1, %v1911
    %v1913 = vrot.slane %v1832, %v1912
    %v1914 = vlaneseq
    %v1915 = vshrl.u32 %v1914, 7
    %v1916 = vsub.s32 0, %v1915
    %v1917 = vrot.slane %v1846, %v1916
    %v1918 = vlaneseq
    %v1919 = vshrl.u32 %v1918, 7
    %v1920 = vsub.s32 1, %v1919
    %v1921 = vrot.slane %v1846, %v1920
    %v1922 = vlaneseq
    %v1923 = vshrl.u32 %v1922, 7
    %v1924 = vsub.s32 0, %v1923
    %v1925 = vrot.slane %v1848, %v1924
    %v1926 = vlaneseq
    %v1927 = vshrl.u32 %v1926, 7
    %v1928 = vsub.s32 1, %v1927
    %v1929 = vrot.slane %v1848, %v1928
    %v1930 = vlaneseq
    %v1931 = vshrl.u32 %v1930, 7
    %v1932 = vsub.s32 0, %v1931
    %v1933 = vrot.slane %v1850, %v1932
    %v1934 = vlaneseq
    %v1935 = vshrl.u32 %v1934, 7
    %v1936 = vsub.s32 1, %v1935
    %v1937 = vrot.slane %v1850, %v1936
    %v1938 = vlaneseq
    %v1939 = vshrl.u32 %v1938, 7
    %v1940 = vsub.s32 0, %v1939
    %v1941 = vrot.slane %v1866, %v1940
    %v1942 = vlaneseq
    %v1943 = vshrl.u32 %v1942, 7
    %v1944 = vsub.s32 1, %v1943
    %v1945 = vrot.slane %v1866, %v1944
    %v1946 = vlaneseq
    %v1947 = vshrl.u32 %v1946, 7
    %v1948 = vsub.s32 0, %v1947
    %v1949 = vrot.slane %v1873, %v1948
    %v1950 = vlaneseq
    %v1951 = vshrl.u32 %v1950, 7
    %v1952 = vsub.s32 1, %v1951
    %v1953 = vrot.slane %v1873, %v1952
    %v1954 = vcombine.low %v1877, %v1881
    %v1956 = vunpack.c.l.s4 1983009808
    %v1957 = vunpack.c.0.s8 %v1956
    %v1958 = vlaneseq
    %v1959 = vshrl.u32 %v1958, 7
    %v1960 = vsub.s32 %v1957, %v1959
    %v1961 = vrot.slane %v1954, %v1960
    %v1962 = vcombine.low %v1885, %v1889
    %v1964 = vunpack.c.l.s4 1983009808
    %v1965 = vunpack.c.0.s8 %v1964
    %v1966 = vlaneseq
    %v1967 = vshrl.u32 %v1966, 7
    %v1968 = vsub.s32 %v1965, %v1967
    %v1969 = vrot.slane %v1962, %v1968
    %v1970 = vcombine.low %v1893, %v1897
    %v1972 = vunpack.c.l.s4 1983009808
    %v1973 = vunpack.c.0.s8 %v1972
    %v1974 = vlaneseq
    %v1975 = vshrl.u32 %v1974, 7
    %v1976 = vsub.s32 %v1973, %v1975
    %v1977 = vrot.slane %v1970, %v1976
    %v1978 = vcombine.low %v1901, %v1905
    %v1980 = vunpack.c.l.s4 1983009808
    %v1981 = vunpack.c.0.s8 %v1980
    %v1982 = vlaneseq
    %v1983 = vshrl.u32 %v1982, 7
    %v1984 = vsub.s32 %v1981, %v1983
    %v1985 = vrot.slane %v1978, %v1984
    %v1986 = vcombine.low %v1909, %v1913
    %v1988 = vunpack.c.l.s4 1983009808
    %v1989 = vunpack.c.0.s8 %v1988
    %v1990 = vlaneseq
    %v1991 = vshrl.u32 %v1990, 7
    %v1992 = vsub.s32 %v1989, %v1991
    %v1993 = vrot.slane %v1986, %v1992
    %v1994 = vcombine.low %v1917, %v1921
    %v1996 = vunpack.c.l.s4 1983009808
    %v1997 = vunpack.c.0.s8 %v1996
    %v1998 = vlaneseq
    %v1999 = vshrl.u32 %v1998, 7
    %v2000 = vsub.s32 %v1997, %v1999
    %v2001 = vrot.slane %v1994, %v2000
    %v2002 = vcombine.low %v1925, %v1929
    %v2004 = vunpack.c.l.s4 1983009808
    %v2005 = vunpack.c.0.s8 %v2004
    %v2006 = vlaneseq
    %v2007 = vshrl.u32 %v2006, 7
    %v2008 = vsub.s32 %v2005, %v2007
    %v2009 = vrot.slane %v2002, %v2008
    %v2010 = vcombine.low %v1933, %v1937
    %v2012 = vunpack.c.l.s4 1983009808
    %v2013 = vunpack.c.0.s8 %v2012
    %v2014 = vlaneseq
    %v2015 = vshrl.u32 %v2014, 7
    %v2016 = vsub.s32 %v2013, %v2015
    %v2017 = vrot.slane %v2010, %v2016
    %v2018 = vcombine.low %v1941, %v1945
    %v2020 = vunpack.c.l.s4 1983009808
    %v2021 = vunpack.c.0.s8 %v2020
    %v2022 = vlaneseq
    %v2023 = vshrl.u32 %v2022, 7
    %v2024 = vsub.s32 %v2021, %v2023
    %v2025 = vrot.slane %v2018, %v2024
    %v2026 = vcombine.low %v1949, %v1953
    %v2028 = vunpack.c.l.s4 1983009808
    %v2029 = vunpack.c.0.s8 %v2028
    %v2030 = vlaneseq
    %v2031 = vshrl.u32 %v2030, 7
    %v2032 = vsub.s32 %v2029, %v2031
    %v2033 = vrot.slane %v2026, %v2032
    %v2038 = vcombine.low %v1791, %v1792
    %v2039 = vcombine.high %v1791, %v1792
    %v2041 = vunpack.c.l.s4 1966171168
    %v2042 = vunpack.c.0.s8 %v2041
    %v2043 = vlaneseq
    %v2044 = vshrl.u32 %v2043, 7
    %v2045 = vsub.s32 %v2042, %v2044
    %v2046 = vrot.slane %v2038, %v2045
    %v2048 = vunpack.c.l.s4 1966171168
    %v2049 = vunpack.c.0.s8 %v2048
    %v2050 = vlaneseq
    %v2051 = vshrl.u32 %v2050, 7
    %v2052 = vsub.s32 %v2049, %v2051
    %v2053 = vrot.slane %v2039, %v2052
    %v2054 = vcombine.high %v2046, %v2046
    %v2055 = vcombine.high %v2053, %v2053
    %v2057 = vunpack.c.l.s4 1966171168
    %v2058 = vunpack.c.0.s8 %v2057
    %v2059 = vlaneseq
    %v2060 = vshrl.u32 %v2059, 7
    %v2061 = vsub.s32 %v2058, %v2060
    %v2062 = vrot.slane %v2046, %v2061
    %v2064 = vunpack.c.l.s4 1966171168
    %v2065 = vunpack.c.0.s8 %v2064
    %v2066 = vlaneseq
    %v2067 = vshrl.u32 %v2066, 7
    %v2068 = vsub.s32 %v2065, %v2067
    %v2069 = vrot.slane %v2053, %v2068
    %v2071 = vunpack.c.l.s4 1966171168
    %v2072 = vunpack.c.0.s8 %v2071
    %v2073 = vlaneseq
    %v2074 = vshrl.u32 %v2073, 7
    %v2075 = vsub.s32 %v2072, %v2074
    %v2076 = vrot.slane %v2054, %v2075
    %v2078 = vunpack.c.l.s4 1966171168
    %v2079 = vunpack.c.0.s8 %v2078
    %v2080 = vlaneseq
    %v2081 = vshrl.u32 %v2080, 7
    %v2082 = vsub.s32 %v2079, %v2081
    %v2083 = vrot.slane %v2055, %v2082
    %v2084 = vcombine.high %v2062, %v2062
    %v2085 = vcombine.high %v2069, %v2069
    %v2086 = vcombine.high %v2076, %v2076
    %v2087 = vcombine.high %v2083, %v2083
    %v2088 = vcombine.low %v1795, %v1796
    %v2090 = vunpack.c.l.s4 1966171168
    %v2091 = vunpack.c.0.s8 %v2090
    %v2092 = vlaneseq
    %v2093 = vshrl.u32 %v2092, 7
    %v2094 = vsub.s32 %v2091, %v2093
    %v2095 = vrot.slane %v2088, %v2094
    %v2096 = vcombine.high %v2095, %v2095
    %v2098 = vunpack.c.l.s4 1966171168
    %v2099 = vunpack.c.0.s8 %v2098
    %v2100 = vlaneseq
    %v2101 = vshrl.u32 %v2100, 7
    %v2102 = vsub.s32 %v2099, %v2101
    %v2103 = vrot.slane %v2095, %v2102
    %v2105 = vunpack.c.l.s4 1966171168
    %v2106 = vunpack.c.0.s8 %v2105
    %v2107 = vlaneseq
    %v2108 = vshrl.u32 %v2107, 7
    %v2109 = vsub.s32 %v2106, %v2108
    %v2110 = vrot.slane %v2096, %v2109
    %v2111 = vlaneseq
    %v2112 = vshrl.u32 %v2111, 7
    %v2113 = vsub.s32 0, %v2112
    %v2114 = vrot.slane %v2062, %v2113
    %v2115 = vlaneseq
    %v2116 = vshrl.u32 %v2115, 7
    %v2117 = vsub.s32 1, %v2116
    %v2118 = vrot.slane %v2062, %v2117
    %v2119 = vlaneseq
    %v2120 = vshrl.u32 %v2119, 7
    %v2121 = vsub.s32 0, %v2120
    %v2122 = vrot.slane %v2076, %v2121
    %v2123 = vlaneseq
    %v2124 = vshrl.u32 %v2123, 7
    %v2125 = vsub.s32 1, %v2124
    %v2126 = vrot.slane %v2076, %v2125
    %v2127 = vlaneseq
    %v2128 = vshrl.u32 %v2127, 7
    %v2129 = vsub.s32 0, %v2128
    %v2130 = vrot.slane %v2084, %v2129
    %v2131 = vlaneseq
    %v2132 = vshrl.u32 %v2131, 7
    %v2133 = vsub.s32 1, %v2132
    %v2134 = vrot.slane %v2084, %v2133
    %v2135 = vlaneseq
    %v2136 = vshrl.u32 %v2135, 7
    %v2137 = vsub.s32 0, %v2136
    %v2138 = vrot.slane %v2086, %v2137
    %v2139 = vlaneseq
    %v2140 = vshrl.u32 %v2139, 7
    %v2141 = vsub.s32 1, %v2140
    %v2142 = vrot.slane %v2086, %v2141
    %v2143 = vlaneseq
    %v2144 = vshrl.u32 %v2143, 7
    %v2145 = vsub.s32 0, %v2144
    %v2146 = vrot.slane %v2069, %v2145
    %v2147 = vlaneseq
    %v2148 = vshrl.u32 %v2147, 7
    %v2149 = vsub.s32 1, %v2148
    %v2150 = vrot.slane %v2069, %v2149
    %v2151 = vlaneseq
    %v2152 = vshrl.u32 %v2151, 7
    %v2153 = vsub.s32 0, %v2152
    %v2154 = vrot.slane %v2083, %v2153
    %v2155 = vlaneseq
    %v2156 = vshrl.u32 %v2155, 7
    %v2157 = vsub.s32 1, %v2156
    %v2158 = vrot.slane %v2083, %v2157
    %v2159 = vlaneseq
    %v2160 = vshrl.u32 %v2159, 7
    %v2161 = vsub.s32 0, %v2160
    %v2162 = vrot.slane %v2085, %v2161
    %v2163 = vlaneseq
    %v2164 = vshrl.u32 %v2163, 7
    %v2165 = vsub.s32 1, %v2164
    %v2166 = vrot.slane %v2085, %v2165
    %v2167 = vlaneseq
    %v2168 = vshrl.u32 %v2167, 7
    %v2169 = vsub.s32 0, %v2168
    %v2170 = vrot.slane %v2087, %v2169
    %v2171 = vlaneseq
    %v2172 = vshrl.u32 %v2171, 7
    %v2173 = vsub.s32 1, %v2172
    %v2174 = vrot.slane %v2087, %v2173
    %v2175 = vlaneseq
    %v2176 = vshrl.u32 %v2175, 7
    %v2177 = vsub.s32 0, %v2176
    %v2178 = vrot.slane %v2103, %v2177
    %v2179 = vlaneseq
    %v2180 = vshrl.u32 %v2179, 7
    %v2181 = vsub.s32 1, %v2180
    %v2182 = vrot.slane %v2103, %v2181
    %v2183 = vlaneseq
    %v2184 = vshrl.u32 %v2183, 7
    %v2185 = vsub.s32 0, %v2184
    %v2186 = vrot.slane %v2110, %v2185
    %v2187 = vlaneseq
    %v2188 = vshrl.u32 %v2187, 7
    %v2189 = vsub.s32 1, %v2188
    %v2190 = vrot.slane %v2110, %v2189
    %v2191 = vcombine.low %v2114, %v2118
    %v2193 = vunpack.c.l.s4 1983009808
    %v2194 = vunpack.c.0.s8 %v2193
    %v2195 = vlaneseq
    %v2196 = vshrl.u32 %v2195, 7
    %v2197 = vsub.s32 %v2194, %v2196
    %v2198 = vrot.slane %v2191, %v2197
    %v2199 = vcombine.low %v2122, %v2126
    %v2201 = vunpack.c.l.s4 1983009808
    %v2202 = vunpack.c.0.s8 %v2201
    %v2203 = vlaneseq
    %v2204 = vshrl.u32 %v2203, 7
    %v2205 = vsub.s32 %v2202, %v2204
    %v2206 = vrot.slane %v2199, %v2205
    %v2207 = vcombine.low %v2130, %v2134
    %v2209 = vunpack.c.l.s4 1983009808
    %v2210 = vunpack.c.0.s8 %v2209
    %v2211 = vlaneseq
    %v2212 = vshrl.u32 %v2211, 7
    %v2213 = vsub.s32 %v2210, %v2212
    %v2214 = vrot.slane %v2207, %v2213
    %v2215 = vcombine.low %v2138, %v2142
    %v2217 = vunpack.c.l.s4 1983009808
    %v2218 = vunpack.c.0.s8 %v2217
    %v2219 = vlaneseq
    %v2220 = vshrl.u32 %v2219, 7
    %v2221 = vsub.s32 %v2218, %v2220
    %v2222 = vrot.slane %v2215, %v2221
    %v2223 = vcombine.low %v2146, %v2150
    %v2225 = vunpack.c.l.s4 1983009808
    %v2226 = vunpack.c.0.s8 %v2225
    %v2227 = vlaneseq
    %v2228 = vshrl.u32 %v2227, 7
    %v2229 = vsub.s32 %v2226, %v2228
    %v2230 = vrot.slane %v2223, %v2229
    %v2231 = vcombine.low %v2154, %v2158
    %v2233 = vunpack.c.l.s4 1983009808
    %v2234 = vunpack.c.0.s8 %v2233
    %v2235 = vlaneseq
    %v2236 = vshrl.u32 %v2235, 7
    %v2237 = vsub.s32 %v2234, %v2236
    %v2238 = vrot.slane %v2231, %v2237
    %v2239 = vcombine.low %v2162, %v2166
    %v2241 = vunpack.c.l.s4 1983009808
    %v2242 = vunpack.c.0.s8 %v2241
    %v2243 = vlaneseq
    %v2244 = vshrl.u32 %v2243, 7
    %v2245 = vsub.s32 %v2242, %v2244
    %v2246 = vrot.slane %v2239, %v2245
    %v2247 = vcombine.low %v2170, %v2174
    %v2249 = vunpack.c.l.s4 1983009808
    %v2250 = vunpack.c.0.s8 %v2249
    %v2251 = vlaneseq
    %v2252 = vshrl.u32 %v2251, 7
    %v2253 = vsub.s32 %v2250, %v2252
    %v2254 = vrot.slane %v2247, %v2253
    %v2255 = vcombine.low %v2178, %v2182
    %v2257 = vunpack.c.l.s4 1983009808
    %v2258 = vunpack.c.0.s8 %v2257
    %v2259 = vlaneseq
    %v2260 = vshrl.u32 %v2259, 7
    %v2261 = vsub.s32 %v2258, %v2260
    %v2262 = vrot.slane %v2255, %v2261
    %v2263 = vcombine.low %v2186, %v2190
    %v2265 = vunpack.c.l.s4 1983009808
    %v2266 = vunpack.c.0.s8 %v2265
    %v2267 = vlaneseq
    %v2268 = vshrl.u32 %v2267, 7
    %v2269 = vsub.s32 %v2266, %v2268
    %v2270 = vrot.slane %v2263, %v2269
    %v2271 = vlaneseq
    %v2272 = vshrl.u32 %v2271, 7
    %v2273 = vadd.s32 %v2272, 8
    %v2274 = vadd.s32 %v2272, 16
    %vm2275 = vcmp.lt.s32.totalorder %v2272, 0
    %v2276 = vsub.s32 0, %v2272
    %v2277 = vsel %vm2275, %v2276, %v2272
    %v2278 = vmul.u32.u64.compose %v2277, 3435973837
    %v2279 = vextract.low.u32 %v2278
    %v2280 = vextract.high.u32 %v2278
    %v2281 = vshrl.u32 %v2280, 3
    %v2282 = vmul.u32 %v2281, 10
    %v2283 = vsub.s32 %v2277, %v2282
    %v2284 = vsub.s32 0, %v2283
    %v2285 = vsel %vm2275, %v2284, %v2283
    %vm2286 = vcmp.lt.s32.totalorder %v2273, 0
    %v2287 = vsub.s32 0, %v2273
    %v2288 = vsel %vm2286, %v2287, %v2273
    %v2289 = vmul.u32.u64.compose %v2288, 3435973837
    %v2290 = vextract.low.u32 %v2289
    %v2291 = vextract.high.u32 %v2289
    %v2292 = vshrl.u32 %v2291, 3
    %v2293 = vmul.u32 %v2292, 10
    %v2294 = vsub.s32 %v2288, %v2293
    %v2295 = vsub.s32 0, %v2294
    %v2296 = vsel %vm2286, %v2295, %v2294
    %vm2297 = vcmp.lt.s32.totalorder %v2274, 0
    %v2298 = vsub.s32 0, %v2274
    %v2299 = vsel %vm2297, %v2298, %v2274
    %v2300 = vmul.u32.u64.compose %v2299, 3435973837
    %v2301 = vextract.low.u32 %v2300
    %v2302 = vextract.high.u32 %v2300
    %v2303 = vshrl.u32 %v2302, 3
    %v2304 = vmul.u32 %v2303, 10
    %v2305 = vsub.s32 %v2299, %v2304
    %v2306 = vsub.s32 0, %v2305
    %v2307 = vsel %vm2297, %v2306, %v2305
    %vm2308 = vcmp.ne.s32.totalorder %v2285, 0
    %vm2309 = vcmp.ne.s32.totalorder %v2296, 0
    %vm2310 = vcmp.ne.s32.totalorder %v2307, 0
    %vm2311 = vcmp.lt.s32.totalorder %v2285, 0
    %vm2312 = vcmp.lt.s32.totalorder %v2296, 0
    %vm2313 = vcmp.lt.s32.totalorder %v2307, 0
    %vm2314 = vmand %vm2311, %vm2308
    %vm2315 = vmand %vm2312, %vm2309
    %vm2316 = vmand %vm2313, %vm2310
    %v2317 = vadd.s32 %v2285, 10
    %v2318 = vadd.s32 %v2296, 10
    %v2319 = vadd.s32 %v2307, 10
    %v2320 = vsel %vm2314, %v2317, %v2285
    %v2321 = vsel %vm2315, %v2318, %v2296
    %v2322 = vsel %vm2316, %v2319, %v2307
    %vm2323 = vcmp.eq.s32.totalorder %v2320, 0
    %vm2324 = vcmp.eq.s32.totalorder %v2321, 0
    %vm2325 = vcmp.eq.s32.totalorder %v2322, 0
    %vm2326 = vcmp.eq.s32.totalorder %v2320, 9
    %vm2327 = vcmp.eq.s32.totalorder %v2321, 9
    %vm2328 = vcmp.eq.s32.totalorder %v2322, 9
    %vm2329 = vmor %vm2323, %vm2326
    %vm2330 = vmor %vm2324, %vm2327
    %vm2331 = vmor %vm2325, %vm2328
    %vm2332 = vcmp.lt.s32.totalorder %v2272, 0
    %v2333 = vsub.s32 0, %v2272
    %v2334 = vsel %vm2332, %v2333, %v2272
    %v2335 = vshrl.u32 %v2334, 1
    %v2336 = vand.u32 %v2334, 1
    %v2337 = vsub.s32 0, %v2336
    %v2338 = vsel %vm2332, %v2337, %v2336
    %vm2339 = vcmp.lt.s32.totalorder %v2273, 0
    %v2340 = vsub.s32 0, %v2273
    %v2341 = vsel %vm2339, %v2340, %v2273
    %v2342 = vshrl.u32 %v2341, 1
    %v2343 = vand.u32 %v2341, 1
    %v2344 = vsub.s32 0, %v2343
    %v2345 = vsel %vm2339, %v2344, %v2343
    %vm2346 = vcmp.lt.s32.totalorder %v2274, 0
    %v2347 = vsub.s32 0, %v2274
    %v2348 = vsel %vm2346, %v2347, %v2274
    %v2349 = vshrl.u32 %v2348, 1
    %v2350 = vand.u32 %v2348, 1
    %v2351 = vsub.s32 0, %v2350
    %v2352 = vsel %vm2346, %v2351, %v2350
    %vm2353 = vcmp.ne.s32.totalorder %v2338, 0
    %vm2354 = vcmp.ne.s32.totalorder %v2345, 0
    %vm2355 = vcmp.ne.s32.totalorder %v2352, 0
    %vm2356 = vcmp.lt.s32.totalorder %v2338, 0
    %vm2357 = vcmp.lt.s32.totalorder %v2345, 0
    %vm2358 = vcmp.lt.s32.totalorder %v2352, 0
    %vm2359 = vmand %vm2356, %vm2353
    %vm2360 = vmand %vm2357, %vm2354
    %vm2361 = vmand %vm2358, %vm2355
    %v2362 = vadd.s32 %v2338, 2
    %v2363 = vadd.s32 %v2345, 2
    %v2364 = vadd.s32 %v2352, 2
    %v2365 = vsel %vm2359, %v2362, %v2338
    %v2366 = vsel %vm2360, %v2363, %v2345
    %v2367 = vsel %vm2361, %v2364, %v2352
    %vm2368 = vcmp.eq.s32.totalorder %v2365, 0
    %vm2369 = vcmp.eq.s32.totalorder %v2366, 0
    %vm2370 = vcmp.eq.s32.totalorder %v2367, 0
    %v2371 = vcombine.low %v1961, %v1969
    %v2372 = vcombine.low %v1977, %v1985
    %v2374 = vunpack.c.l.s4 1983009808
    %v2375 = vunpack.c.0.s8 %v2374
    %v2376 = vlaneseq
    %v2377 = vshrl.u32 %v2376, 7
    %v2378 = vsub.s32 %v2375, %v2377
    %v2379 = vrot.slane %v2371, %v2378
    %v2381 = vunpack.c.l.s4 1983009808
    %v2382 = vunpack.c.0.s8 %v2381
    %v2383 = vlaneseq
    %v2384 = vshrl.u32 %v2383, 7
    %v2385 = vsub.s32 %v2382, %v2384
    %v2386 = vrot.slane %v2372, %v2385
    %v2387 = vcombine.low %v2379, %v2386
    %v2388 = vcombine.high %v2379, %v2386
    %v2389 = vcombine.low %v1993, %v2001
    %v2390 = vcombine.low %v2009, %v2017
    %v2392 = vunpack.c.l.s4 1983009808
    %v2393 = vunpack.c.0.s8 %v2392
    %v2394 = vlaneseq
    %v2395 = vshrl.u32 %v2394, 7
    %v2396 = vsub.s32 %v2393, %v2395
    %v2397 = vrot.slane %v2389, %v2396
    %v2399 = vunpack.c.l.s4 1983009808
    %v2400 = vunpack.c.0.s8 %v2399
    %v2401 = vlaneseq
    %v2402 = vshrl.u32 %v2401, 7
    %v2403 = vsub.s32 %v2400, %v2402
    %v2404 = vrot.slane %v2390, %v2403
    %v2405 = vcombine.low %v2397, %v2404
    %v2406 = vcombine.high %v2397, %v2404
    %v2407 = vcombine.low %v2025, %v2033
    %v2409 = vunpack.c.l.s4 1983009808
    %v2410 = vunpack.c.0.s8 %v2409
    %v2411 = vlaneseq
    %v2412 = vshrl.u32 %v2411, 7
    %v2413 = vsub.s32 %v2410, %v2412
    %v2414 = vrot.slane %v2407, %v2413
    %v2415 = vcombine.high %v2414, %v2414
    %v2422 = vcombine.low %v2198, %v2206
    %v2423 = vcombine.low %v2214, %v2222
    %v2425 = vunpack.c.l.s4 1983009808
    %v2426 = vunpack.c.0.s8 %v2425
    %v2427 = vlaneseq
    %v2428 = vshrl.u32 %v2427, 7
    %v2429 = vsub.s32 %v2426, %v2428
    %v2430 = vrot.slane %v2422, %v2429
    %v2432 = vunpack.c.l.s4 1983009808
    %v2433 = vunpack.c.0.s8 %v2432
    %v2434 = vlaneseq
    %v2435 = vshrl.u32 %v2434, 7
    %v2436 = vsub.s32 %v2433, %v2435
    %v2437 = vrot.slane %v2423, %v2436
    %v2438 = vcombine.low %v2430, %v2437
    %v2439 = vcombine.high %v2430, %v2437
    %v2440 = vcombine.low %v2230, %v2238
    %v2441 = vcombine.low %v2246, %v2254
    %v2443 = vunpack.c.l.s4 1983009808
    %v2444 = vunpack.c.0.s8 %v2443
    %v2445 = vlaneseq
    %v2446 = vshrl.u32 %v2445, 7
    %v2447 = vsub.s32 %v2444, %v2446
    %v2448 = vrot.slane %v2440, %v2447
    %v2450 = vunpack.c.l.s4 1983009808
    %v2451 = vunpack.c.0.s8 %v2450
    %v2452 = vlaneseq
    %v2453 = vshrl.u32 %v2452, 7
    %v2454 = vsub.s32 %v2451, %v2453
    %v2455 = vrot.slane %v2441, %v2454
    %v2456 = vcombine.low %v2448, %v2455
    %v2457 = vcombine.high %v2448, %v2455
    %v2458 = vcombine.low %v2262, %v2270
    %v2460 = vunpack.c.l.s4 1983009808
    %v2461 = vunpack.c.0.s8 %v2460
    %v2462 = vlaneseq
    %v2463 = vshrl.u32 %v2462, 7
    %v2464 = vsub.s32 %v2461, %v2463
    %v2465 = vrot.slane %v2458, %v2464
    %v2466 = vcombine.high %v2465, %v2465
    %v2473 = vsel %vm2368, %v2387, %v2438
    %v2474 = vsel %vm2368, %v2388, %v2439
    %v2475 = vsel %vm2369, %v2405, %v2456
    %v2476 = vsel %vm2369, %v2406, %v2457
    %v2477 = vsel %vm2370, %v2414, %v2465
    %v2478 = vsel %vm2370, %v2415, %v2466
    %v2479 = vsel %vm2329, 0.0, %v2473
    %v2480 = vsel %vm2329, 0.0, %v2474
    %v2481 = vsel %vm2330, 0.0, %v2475
    %v2482 = vsel %vm2330, 0.0, %v2476
    %v2483 = vsel %vm2331, 0.0, %v2477
    %v2484 = vsel %vm2331, 0.0, %v2478
    %v2491 = vcombine.low %v2479, %v2480
    %v2492 = vcombine.high %v2479, %v2480
    %v2494 = vunpack.c.l.s4 1983009808
    %v2495 = vunpack.c.0.s8 %v2494
    %v2496 = vlaneseq
    %v2497 = vshrl.u32 %v2496, 7
    %v2498 = vsub.s32 %v2495, %v2497
    %v2499 = vrot.slane %v2491, %v2498
    %v2501 = vunpack.c.l.s4 1983009808
    %v2502 = vunpack.c.0.s8 %v2501
    %v2503 = vlaneseq
    %v2504 = vshrl.u32 %v2503, 7
    %v2505 = vsub.s32 %v2502, %v2504
    %v2506 = vrot.slane %v2492, %v2505
    %v2507 = vcombine.high %v2499, %v2499
    %v2508 = vcombine.high %v2506, %v2506
    %v2509 = vcombine.low %v2481, %v2482
    %v2510 = vcombine.high %v2481, %v2482
    %v2512 = vunpack.c.l.s4 1983009808
    %v2513 = vunpack.c.0.s8 %v2512
    %v2514 = vlaneseq
    %v2515 = vshrl.u32 %v2514, 7
    %v2516 = vsub.s32 %v2513, %v2515
    %v2517 = vrot.slane %v2509, %v2516
    %v2519 = vunpack.c.l.s4 1983009808
    %v2520 = vunpack.c.0.s8 %v2519
    %v2521 = vlaneseq
    %v2522 = vshrl.u32 %v2521, 7
    %v2523 = vsub.s32 %v2520, %v2522
    %v2524 = vrot.slane %v2510, %v2523
    %v2525 = vcombine.high %v2517, %v2517
    %v2526 = vcombine.high %v2524, %v2524
    %v2527 = vcombine.low %v2483, %v2484
    %v2529 = vunpack.c.l.s4 1983009808
    %v2530 = vunpack.c.0.s8 %v2529
    %v2531 = vlaneseq
    %v2532 = vshrl.u32 %v2531, 7
    %v2533 = vsub.s32 %v2530, %v2532
    %v2534 = vrot.slane %v2527, %v2533
    %v2535 = vcombine.high %v2534, %v2534
    %v2536 = vcombine.low %v2499, %v2507
    %v2537 = vcombine.low %v2506, %v2508
    %v2539 = vunpack.c.l.s4 1983009808
    %v2540 = vunpack.c.0.s8 %v2539
    %v2541 = vlaneseq
    %v2542 = vshrl.u32 %v2541, 7
    %v2543 = vsub.s32 %v2540, %v2542
    %v2544 = vrot.slane %v2536, %v2543
    %v2546 = vunpack.c.l.s4 1983009808
    %v2547 = vunpack.c.0.s8 %v2546
    %v2548 = vlaneseq
    %v2549 = vshrl.u32 %v2548, 7
    %v2550 = vsub.s32 %v2547, %v2549
    %v2551 = vrot.slane %v2537, %v2550
    %v2552 = vcombine.low %v2544, %v2551
    %v2553 = vcombine.high %v2544, %v2551
    %v2555 = vunpack.c.l.s4 1983009808
    %v2556 = vunpack.c.0.s8 %v2555
    %v2557 = vlaneseq
    %v2558 = vshrl.u32 %v2557, 7
    %v2559 = vsub.s32 %v2556, %v2558
    %v2560 = vrot.slane %v2517, %v2559
    %v2561 = vcombine.high %v2560, %v2560
    %v2562 = vcombine.low %v2525, %v2524
    %v2563 = vcombine.low %v2526, %v2534
    %v2565 = vunpack.c.l.s4 1983009808
    %v2566 = vunpack.c.0.s8 %v2565
    %v2567 = vlaneseq
    %v2568 = vshrl.u32 %v2567, 7
    %v2569 = vsub.s32 %v2566, %v2568
    %v2570 = vrot.slane %v2562, %v2569
    %v2572 = vunpack.c.l.s4 1983009808
    %v2573 = vunpack.c.0.s8 %v2572
    %v2574 = vlaneseq
    %v2575 = vshrl.u32 %v2574, 7
    %v2576 = vsub.s32 %v2573, %v2575
    %v2577 = vrot.slane %v2563, %v2576
    %v2578 = vcombine.low %v2570, %v2577
    %v2579 = vcombine.high %v2570, %v2577
    %v2581 = vunpack.c.l.s4 1983009808
    %v2582 = vunpack.c.0.s8 %v2581
    %v2583 = vlaneseq
    %v2584 = vshrl.u32 %v2583, 7
    %v2585 = vsub.s32 %v2582, %v2584
    %v2586 = vrot.slane %v2535, %v2585
    %v2587 = vcombine.high %v2586, %v2586
    %vm2588 = vcmask 1046528
    %v2589 = vrot.slane %v2552, 1
    %v2590 = vrot.slane %v2560, 1
    %v2591 = vsel %vm2588, %v2589, %v2590
    %v2592 = vrot.slane %v2553, 1
    %v2593 = vrot.slane %v2561, 1
    %v2594 = vsel %vm2588, %v2592, %v2593
    %v2595 = vrot.slane %v2578, 1
    %v2596 = vrot.slane %v2586, 1
    %v2597 = vsel %vm2588, %v2595, %v2596
    %v2598 = vrot.slane %v2579, 1
    %v2599 = vrot.slane %v2587, 1
    %v2600 = vsel %vm2588, %v2598, %v2599
    %v2601 = vcombine.low %v2552, %v2553
    %v2602 = vcombine.high %v2552, %v2553
    %v2603 = vcombine.low %v2591, %v2594
    %v2604 = vcombine.high %v2591, %v2594
    %v2606 = vunpack.c.l.s4 1966171168
    %v2607 = vunpack.c.0.s8 %v2606
    %v2608 = vlaneseq
    %v2609 = vshrl.u32 %v2608, 7
    %v2610 = vsub.s32 %v2607, %v2609
    %v2611 = vrot.slane %v2601, %v2610
    %v2613 = vunpack.c.l.s4 1966171168
    %v2614 = vunpack.c.0.s8 %v2613
    %v2615 = vlaneseq
    %v2616 = vshrl.u32 %v2615, 7
    %v2617 = vsub.s32 %v2614, %v2616
    %v2618 = vrot.slane %v2602, %v2617
    %v2620 = vunpack.c.l.s4 1966171168
    %v2621 = vunpack.c.0.s8 %v2620
    %v2622 = vlaneseq
    %v2623 = vshrl.u32 %v2622, 7
    %v2624 = vsub.s32 %v2621, %v2623
    %v2625 = vrot.slane %v2603, %v2624
    %v2627 = vunpack.c.l.s4 1966171168
    %v2628 = vunpack.c.0.s8 %v2627
    %v2629 = vlaneseq
    %v2630 = vshrl.u32 %v2629, 7
    %v2631 = vsub.s32 %v2628, %v2630
    %v2632 = vrot.slane %v2604, %v2631
    %v2633 = vcombine.low %v2611, %v2625
    %v2634 = vcombine.high %v2611, %v2625
    %v2635 = vcombine.low %v2618, %v2632
    %v2636 = vcombine.high %v2618, %v2632
    %v2638 = vunpack.c.l.s4 1966171168
    %v2639 = vunpack.c.0.s8 %v2638
    %v2640 = vlaneseq
    %v2641 = vshrl.u32 %v2640, 7
    %v2642 = vsub.s32 %v2639, %v2641
    %v2643 = vrot.slane %v2633, %v2642
    %v2645 = vunpack.c.l.s4 1966171168
    %v2646 = vunpack.c.0.s8 %v2645
    %v2647 = vlaneseq
    %v2648 = vshrl.u32 %v2647, 7
    %v2649 = vsub.s32 %v2646, %v2648
    %v2650 = vrot.slane %v2635, %v2649
    %v2652 = vunpack.c.l.s4 1966171168
    %v2653 = vunpack.c.0.s8 %v2652
    %v2654 = vlaneseq
    %v2655 = vshrl.u32 %v2654, 7
    %v2656 = vsub.s32 %v2653, %v2655
    %v2657 = vrot.slane %v2634, %v2656
    %v2659 = vunpack.c.l.s4 1966171168
    %v2660 = vunpack.c.0.s8 %v2659
    %v2661 = vlaneseq
    %v2662 = vshrl.u32 %v2661, 7
    %v2663 = vsub.s32 %v2660, %v2662
    %v2664 = vrot.slane %v2636, %v2663
    %v2665 = vcombine.high %v2643, %v2643
    %v2666 = vcombine.high %v2650, %v2650
    %v2667 = vcombine.high %v2657, %v2657
    %v2668 = vcombine.high %v2664, %v2664
    %v2669 = vcombine.low %v2560, %v2561
    %v2670 = vcombine.low %v2590, %v2593
    %v2672 = vunpack.c.l.s4 1966171168
    %v2673 = vunpack.c.0.s8 %v2672
    %v2674 = vlaneseq
    %v2675 = vshrl.u32 %v2674, 7
    %v2676 = vsub.s32 %v2673, %v2675
    %v2677 = vrot.slane %v2669, %v2676
    %v2679 = vunpack.c.l.s4 1966171168
    %v2680 = vunpack.c.0.s8 %v2679
    %v2681 = vlaneseq
    %v2682 = vshrl.u32 %v2681, 7
    %v2683 = vsub.s32 %v2680, %v2682
    %v2684 = vrot.slane %v2670, %v2683
    %v2685 = vcombine.low %v2677, %v2684
    %v2687 = vunpack.c.l.s4 1966171168
    %v2688 = vunpack.c.0.s8 %v2687
    %v2689 = vlaneseq
    %v2690 = vshrl.u32 %v2689, 7
    %v2691 = vsub.s32 %v2688, %v2690
    %v2692 = vrot.slane %v2685, %v2691
    %v2693 = vcombine.low %v2578, %v2579
    %v2694 = vcombine.high %v2578, %v2579
    %v2695 = vcombine.low %v2597, %v2600
    %v2696 = vcombine.high %v2597, %v2600
    %v2698 = vunpack.c.l.s4 1966171168
    %v2699 = vunpack.c.0.s8 %v2698
    %v2700 = vlaneseq
    %v2701 = vshrl.u32 %v2700, 7
    %v2702 = vsub.s32 %v2699, %v2701
    %v2703 = vrot.slane %v2693, %v2702
    %v2705 = vunpack.c.l.s4 1966171168
    %v2706 = vunpack.c.0.s8 %v2705
    %v2707 = vlaneseq
    %v2708 = vshrl.u32 %v2707, 7
    %v2709 = vsub.s32 %v2706, %v2708
    %v2710 = vrot.slane %v2694, %v2709
    %v2712 = vunpack.c.l.s4 1966171168
    %v2713 = vunpack.c.0.s8 %v2712
    %v2714 = vlaneseq
    %v2715 = vshrl.u32 %v2714, 7
    %v2716 = vsub.s32 %v2713, %v2715
    %v2717 = vrot.slane %v2695, %v2716
    %v2719 = vunpack.c.l.s4 1966171168
    %v2720 = vunpack.c.0.s8 %v2719
    %v2721 = vlaneseq
    %v2722 = vshrl.u32 %v2721, 7
    %v2723 = vsub.s32 %v2720, %v2722
    %v2724 = vrot.slane %v2696, %v2723
    %v2725 = vcombine.low %v2703, %v2717
    %v2726 = vcombine.high %v2703, %v2717
    %v2727 = vcombine.low %v2710, %v2724
    %v2728 = vcombine.high %v2710, %v2724
    %v2730 = vunpack.c.l.s4 1966171168
    %v2731 = vunpack.c.0.s8 %v2730
    %v2732 = vlaneseq
    %v2733 = vshrl.u32 %v2732, 7
    %v2734 = vsub.s32 %v2731, %v2733
    %v2735 = vrot.slane %v2725, %v2734
    %v2737 = vunpack.c.l.s4 1966171168
    %v2738 = vunpack.c.0.s8 %v2737
    %v2739 = vlaneseq
    %v2740 = vshrl.u32 %v2739, 7
    %v2741 = vsub.s32 %v2738, %v2740
    %v2742 = vrot.slane %v2727, %v2741
    %v2744 = vunpack.c.l.s4 1966171168
    %v2745 = vunpack.c.0.s8 %v2744
    %v2746 = vlaneseq
    %v2747 = vshrl.u32 %v2746, 7
    %v2748 = vsub.s32 %v2745, %v2747
    %v2749 = vrot.slane %v2726, %v2748
    %v2751 = vunpack.c.l.s4 1966171168
    %v2752 = vunpack.c.0.s8 %v2751
    %v2753 = vlaneseq
    %v2754 = vshrl.u32 %v2753, 7
    %v2755 = vsub.s32 %v2752, %v2754
    %v2756 = vrot.slane %v2728, %v2755
    %v2757 = vcombine.high %v2735, %v2735
    %v2758 = vcombine.high %v2742, %v2742
    %v2759 = vcombine.high %v2749, %v2749
    %v2760 = vcombine.high %v2756, %v2756
    %v2761 = vcombine.low %v2586, %v2587
    %v2762 = vcombine.low %v2596, %v2599
    %v2764 = vunpack.c.l.s4 1966171168
    %v2765 = vunpack.c.0.s8 %v2764
    %v2766 = vlaneseq
    %v2767 = vshrl.u32 %v2766, 7
    %v2768 = vsub.s32 %v2765, %v2767
    %v2769 = vrot.slane %v2761, %v2768
    %v2771 = vunpack.c.l.s4 1966171168
    %v2772 = vunpack.c.0.s8 %v2771
    %v2773 = vlaneseq
    %v2774 = vshrl.u32 %v2773, 7
    %v2775 = vsub.s32 %v2772, %v2774
    %v2776 = vrot.slane %v2762, %v2775
    %v2777 = vcombine.low %v2769, %v2776
    %v2779 = vunpack.c.l.s4 1966171168
    %v2780 = vunpack.c.0.s8 %v2779
    %v2781 = vlaneseq
    %v2782 = vshrl.u32 %v2781, 7
    %v2783 = vsub.s32 %v2780, %v2782
    %v2784 = vrot.slane %v2777, %v2783
    %v2785 = vld [vmem:[#allocation2] sm:$0xff]
    %v2786 = vld [vmem:[#allocation2 + $0x8] sm:$0xff]
    %v2787 = vld [vmem:[#allocation2 + $0x10] sm:$0xff]
    %v2788 = vld [vmem:[#allocation2 + $0x18] sm:$0xff]
    %v2789 = vld [vmem:[#allocation2 + $0x20] sm:$0xff]
    %v2790 = vld [vmem:[#allocation2 + $0x28] sm:$0xff]
    %v2791 = vld [vmem:[#allocation2 + $0x30] sm:$0xff]
    %v2792 = vld [vmem:[#allocation2 + $0x38] sm:$0xff]
    %v2793 = vld [vmem:[#allocation2 + $0x40] sm:$0xff]
    %v2794 = vld [vmem:[#allocation2 + $0x48] sm:$0xff]
    %v2795 = vld [vmem:[#allocation2 + $0x50] sm:$0xff]
    %v2796 = vld [vmem:[#allocation2 + $0x58] sm:$0xff]
    %v2797 = vld [vmem:[#allocation2 + $0x60] sm:$0xff]
    %v2798 = vld [vmem:[#allocation2 + $0x68] sm:$0xff]
    %v2799 = vld [vmem:[#allocation2 + $0x70] sm:$0xff]
    %v2800 = vld [vmem:[#allocation2 + $0x78] sm:$0xff]
    %v2801 = vld [vmem:[#allocation2 + $0x80] sm:$0xff]
    %v2802 = vld [vmem:[#allocation2 + $0x88] sm:$0xff]
    %v2803 = vld [vmem:[#allocation2 + $0x90] sm:$0xff]
    %v2804 = vld [vmem:[#allocation2 + $0x98] sm:$0xff]
    %v2805 = vld [vmem:[#allocation2 + $0xa0] sm:$0xff]
    %v2806 = vld [vmem:[#allocation2 + $0xa8] sm:$0xff]
    %v2807 = vld [vmem:[#allocation2 + $0xb0] sm:$0xff]
    %v2808 = vld [vmem:[#allocation2 + $0xb8] sm:$0xff]
    %v2809 = vld [vmem:[#allocation2 + $0xc0] sm:$0xff]
    %v2810 = vld [vmem:[#allocation2 + $0xc8] sm:$0xff]
    %v2811 = vld [vmem:[#allocation2 + $0xd0] sm:$0xff]
    %v2812 = vld [vmem:[#allocation2 + $0xd8] sm:$0xff]
    %v2813 = vld [vmem:[#allocation2 + $0xe0] sm:$0xff]
    %v2814 = vld [vmem:[#allocation2 + $0xe8] sm:$0xff]
    %v2815 = vld [vmem:[#allocation2 + $0xf0] sm:$0xff]
    %v2816 = vld [vmem:[#allocation2 + $0xf8] sm:$0xff]
    %v2817 = vld [vmem:[#allocation2 + $0x100] sm:$0xff]
    %v2818 = vld [vmem:[#allocation2 + $0x108] sm:$0xff]
    %v2819 = vld [vmem:[#allocation2 + $0x110] sm:$0xff]
    %v2820 = vld [vmem:[#allocation2 + $0x118] sm:$0xff]
    %v2821 = vld [vmem:[#allocation2 + $0x120] sm:$0xff]
    %v2822 = vld [vmem:[#allocation2 + $0x128] sm:$0xff]
    %v2823 = vld [vmem:[#allocation2 + $0x130] sm:$0xff]
    %v2824 = vld [vmem:[#allocation2 + $0x138] sm:$0xff]
    %v2825 = vld [vmem:[#allocation2 + $0x140] sm:$0xff]
    %v2826 = vld [vmem:[#allocation2 + $0x148] sm:$0xff]
    %v2827 = vld [vmem:[#allocation2 + $0x150] sm:$0xff]
    %v2828 = vld [vmem:[#allocation2 + $0x158] sm:$0xff]
    %v2829 = vld [vmem:[#allocation2 + $0x160] sm:$0xff]
    %v2830 = vld [vmem:[#allocation2 + $0x168] sm:$0xff]
    %v2831 = vld [vmem:[#allocation2 + $0x170] sm:$0xff]
    %v2832 = vld [vmem:[#allocation2 + $0x178] sm:$0xff]
    %v2833 = vld [vmem:[#allocation2 + $0x180] sm:$0xff]
    %v2834 = vld [vmem:[#allocation2 + $0x188] sm:$0xff]
    %v2835 = vld [vmem:[#allocation2 + $0x190] sm:$0xff]
    %v2836 = vld [vmem:[#allocation2 + $0x198] sm:$0xff]
    %v2837 = vld [vmem:[#allocation2 + $0x1a0] sm:$0xff]
    %v2838 = vld [vmem:[#allocation2 + $0x1a8] sm:$0xff]
    %v2839 = vld [vmem:[#allocation2 + $0x1b0] sm:$0xff]
    %v2840 = vld [vmem:[#allocation2 + $0x1b8] sm:$0xff]
    %v2841 = vld [vmem:[#allocation2 + $0x1c0] sm:$0xff]
    %v2842 = vld [vmem:[#allocation2 + $0x1c8] sm:$0xff]
    %v2843 = vld [vmem:[#allocation2 + $0x1d0] sm:$0xff]
    %v2844 = vld [vmem:[#allocation2 + $0x1d8] sm:$0xff]
    %v2845 = vld [vmem:[#allocation2 + $0x1e0] sm:$0xff]
    %v2846 = vld [vmem:[#allocation2 + $0x1e8] sm:$0xff]
    %v2847 = vld [vmem:[#allocation2 + $0x1f0] sm:$0xff]
    %v2848 = vld [vmem:[#allocation2 + $0x1f8] sm:$0xff]
    %v2849 = vld [vmem:[#allocation2 + $0x200] sm:$0xff]
    %v2850 = vld [vmem:[#allocation2 + $0x208] sm:$0xff]
    %v2851 = vld [vmem:[#allocation2 + $0x210] sm:$0xff]
    %v2852 = vld [vmem:[#allocation2 + $0x218] sm:$0xff]
    %v2853 = vld [vmem:[#allocation2 + $0x220] sm:$0xff]
    %v2854 = vld [vmem:[#allocation2 + $0x228] sm:$0xff]
    %v2855 = vld [vmem:[#allocation2 + $0x230] sm:$0xff]
    %v2856 = vld [vmem:[#allocation2 + $0x238] sm:$0xff]
    %v2857 = vld [vmem:[#allocation2 + $0x240] sm:$0xff]
    %v2858 = vld [vmem:[#allocation2 + $0x248] sm:$0xff]
    %v2859 = vld [vmem:[#allocation2 + $0x250] sm:$0xff]
    %v2860 = vld [vmem:[#allocation2 + $0x258] sm:$0xff]
    %v2861 = vld [vmem:[#allocation2 + $0x260] sm:$0xff]
    %v2862 = vld [vmem:[#allocation2 + $0x268] sm:$0xff]
    %v2863 = vld [vmem:[#allocation2 + $0x270] sm:$0xff]
    %v2864 = vld [vmem:[#allocation2 + $0x278] sm:$0xff]
    %v2865 = vld [vmem:[#allocation2 + $0x280] sm:$0xff]
    %v2866 = vld [vmem:[#allocation2 + $0x288] sm:$0xff]
    %v2867 = vld [vmem:[#allocation2 + $0x290] sm:$0xff]
    %v2868 = vld [vmem:[#allocation2 + $0x298] sm:$0xff]
    %v2869 = vld [vmem:[#allocation2 + $0x2a0] sm:$0xff]
    %v2870 = vld [vmem:[#allocation2 + $0x2a8] sm:$0xff]
    %v2871 = vld [vmem:[#allocation2 + $0x2b0] sm:$0xff]
    %v2872 = vld [vmem:[#allocation2 + $0x2b8] sm:$0xff]
    %v2873 = vld [vmem:[#allocation2 + $0x2c0] sm:$0xff]
    %v2874 = vld [vmem:[#allocation2 + $0x2c8] sm:$0xff]
    %v2875 = vld [vmem:[#allocation2 + $0x2d0] sm:$0xff]
    %v2876 = vld [vmem:[#allocation2 + $0x2d8] sm:$0xff]
    %v2877 = vld [vmem:[#allocation2 + $0x2e0] sm:$0xff]
    %v2878 = vld [vmem:[#allocation2 + $0x2e8] sm:$0xff]
    %v2879 = vld [vmem:[#allocation2 + $0x2f0] sm:$0xff]
    %v2880 = vld [vmem:[#allocation2 + $0x2f8] sm:$0xff]
    %v2881 = vld [vmem:[#allocation2 + $0x300] sm:$0xff]
    %v2882 = vld [vmem:[#allocation2 + $0x308] sm:$0xff]
    %v2883 = vld [vmem:[#allocation2 + $0x310] sm:$0xff]
    %v2884 = vld [vmem:[#allocation2 + $0x318] sm:$0xff]
    %v2885 = vld [vmem:[#allocation2 + $0x320] sm:$0xff]
    %v2886 = vld [vmem:[#allocation2 + $0x328] sm:$0xff]
    %v2887 = vld [vmem:[#allocation2 + $0x330] sm:$0xff]
    %v2888 = vld [vmem:[#allocation2 + $0x338] sm:$0xff]
    %v2889 = vld [vmem:[#allocation2 + $0x340] sm:$0xff]
    %v2890 = vld [vmem:[#allocation2 + $0x348] sm:$0xff]
    %v2891 = vld [vmem:[#allocation2 + $0x350] sm:$0xff]
    %v2892 = vld [vmem:[#allocation2 + $0x358] sm:$0xff]
    %v2893 = vld [vmem:[#allocation2 + $0x360] sm:$0xff]
    %v2894 = vld [vmem:[#allocation2 + $0x368] sm:$0xff]
    %v2895 = vld [vmem:[#allocation2 + $0x370] sm:$0xff]
    %v2896 = vld [vmem:[#allocation2 + $0x378] sm:$0xff]
    %v2897 = vld [vmem:[#allocation2 + $0x380] sm:$0xff]
    %v2898 = vld [vmem:[#allocation2 + $0x388] sm:$0xff]
    %v2899 = vld [vmem:[#allocation2 + $0x390] sm:$0xff]
    %v2900 = vld [vmem:[#allocation2 + $0x398] sm:$0xff]
    %v2901 = vld [vmem:[#allocation2 + $0x3a0] sm:$0xff]
    %v2902 = vld [vmem:[#allocation2 + $0x3a8] sm:$0xff]
    %v2903 = vld [vmem:[#allocation2 + $0x3b0] sm:$0xff]
    %v2904 = vld [vmem:[#allocation2 + $0x3b8] sm:$0xff]
    %v2905 = vld [vmem:[#allocation2 + $0x3c0] sm:$0xff]
    %v2906 = vld [vmem:[#allocation2 + $0x3c8] sm:$0xff]
    %v2907 = vld [vmem:[#allocation2 + $0x3d0] sm:$0xff]
    %v2908 = vld [vmem:[#allocation2 + $0x3d8] sm:$0xff]
    %v2909 = vld [vmem:[#allocation2 + $0x3e0] sm:$0xff]
    %v2910 = vld [vmem:[#allocation2 + $0x3e8] sm:$0xff]
    %v2911 = vld [vmem:[#allocation2 + $0x3f0] sm:$0xff]
    %v2912 = vld [vmem:[#allocation2 + $0x3f8] sm:$0xff]
    %v2913 = vld [vmem:[#allocation2 + $0x400] sm:$0xff]
    %v2914 = vld [vmem:[#allocation2 + $0x408] sm:$0xff]
    %v2915 = vld [vmem:[#allocation2 + $0x410] sm:$0xff]
    %v2916 = vld [vmem:[#allocation2 + $0x418] sm:$0xff]
    %v2917 = vld [vmem:[#allocation2 + $0x420] sm:$0xff]
    %v2918 = vld [vmem:[#allocation2 + $0x428] sm:$0xff]
    %v2919 = vld [vmem:[#allocation2 + $0x430] sm:$0xff]
    %v2920 = vld [vmem:[#allocation2 + $0x438] sm:$0xff]
    %v2921 = vld [vmem:[#allocation2 + $0x440] sm:$0xff]
    %v2922 = vld [vmem:[#allocation2 + $0x448] sm:$0xff]
    %v2923 = vld [vmem:[#allocation2 + $0x450] sm:$0xff]
    %v2924 = vld [vmem:[#allocation2 + $0x458] sm:$0xff]
    %v2925 = vld [vmem:[#allocation2 + $0x460] sm:$0xff]
    %v2926 = vld [vmem:[#allocation2 + $0x468] sm:$0xff]
    %v2927 = vld [vmem:[#allocation2 + $0x470] sm:$0xff]
    %v2928 = vld [vmem:[#allocation2 + $0x478] sm:$0xff]
    %v2929 = vld [vmem:[#allocation2 + $0x480] sm:$0xff]
    %v2930 = vld [vmem:[#allocation2 + $0x488] sm:$0xff]
    %v2931 = vld [vmem:[#allocation2 + $0x490] sm:$0xff]
    %v2932 = vld [vmem:[#allocation2 + $0x498] sm:$0xff]
    %v2933 = vld [vmem:[#allocation2 + $0x4a0] sm:$0xff]
    %v2934 = vld [vmem:[#allocation2 + $0x4a8] sm:$0xff]
    %v2935 = vld [vmem:[#allocation2 + $0x4b0] sm:$0xff]
    %v2936 = vld [vmem:[#allocation2 + $0x4b8] sm:$0xff]
    %v2937 = vld [vmem:[#allocation2 + $0x4c0] sm:$0xff]
    %v2938 = vld [vmem:[#allocation2 + $0x4c8] sm:$0xff]
    %v2939 = vld [vmem:[#allocation2 + $0x4d0] sm:$0xff]
    %v2940 = vld [vmem:[#allocation2 + $0x4d8] sm:$0xff]
    %v2941 = vld [vmem:[#allocation2 + $0x4e0] sm:$0xff]
    %v2942 = vld [vmem:[#allocation2 + $0x4e8] sm:$0xff]
    %v2943 = vld [vmem:[#allocation2 + $0x4f0] sm:$0xff]
    %v2944 = vld [vmem:[#allocation2 + $0x4f8] sm:$0xff]
    %v2945 = vld [vmem:[#allocation2 + $0x500] sm:$0xff]
    %v2946 = vld [vmem:[#allocation2 + $0x508] sm:$0xff]
    %v2947 = vld [vmem:[#allocation2 + $0x510] sm:$0xff]
    %v2948 = vld [vmem:[#allocation2 + $0x518] sm:$0xff]
    %v2949 = vld [vmem:[#allocation2 + $0x520] sm:$0xff]
    %v2950 = vld [vmem:[#allocation2 + $0x528] sm:$0xff]
    %v2951 = vld [vmem:[#allocation2 + $0x530] sm:$0xff]
    %v2952 = vld [vmem:[#allocation2 + $0x538] sm:$0xff]
    %v2953 = vld [vmem:[#allocation2 + $0x540] sm:$0xff]
    %v2954 = vld [vmem:[#allocation2 + $0x548] sm:$0xff]
    %v2955 = vld [vmem:[#allocation2 + $0x550] sm:$0xff]
    %v2956 = vld [vmem:[#allocation2 + $0x558] sm:$0xff]
    %v2957 = vld [vmem:[#allocation2 + $0x560] sm:$0xff]
    %v2958 = vld [vmem:[#allocation2 + $0x568] sm:$0xff]
    %v2959 = vld [vmem:[#allocation2 + $0x570] sm:$0xff]
    %v2960 = vld [vmem:[#allocation2 + $0x578] sm:$0xff]
    %v2961 = vld [vmem:[#allocation2 + $0x580] sm:$0xff]
    %v2962 = vld [vmem:[#allocation2 + $0x588] sm:$0xff]
    %v2963 = vld [vmem:[#allocation2 + $0x590] sm:$0xff]
    %v2964 = vld [vmem:[#allocation2 + $0x598] sm:$0xff]
    %v2965 = vld [vmem:[#allocation2 + $0x5a0] sm:$0xff]
    %v2966 = vld [vmem:[#allocation2 + $0x5a8] sm:$0xff]
    %v2967 = vld [vmem:[#allocation2 + $0x5b0] sm:$0xff]
    %v2968 = vld [vmem:[#allocation2 + $0x5b8] sm:$0xff]
    %v2969 = vld [vmem:[#allocation2 + $0x5c0] sm:$0xff]
    %v2970 = vld [vmem:[#allocation2 + $0x5c8] sm:$0xff]
    %v2971 = vld [vmem:[#allocation2 + $0x5d0] sm:$0xff]
    %v2972 = vld [vmem:[#allocation2 + $0x5d8] sm:$0xff]
    %v2973 = vld [vmem:[#allocation2 + $0x5e0] sm:$0xff]
    %v2974 = vld [vmem:[#allocation2 + $0x5e8] sm:$0xff]
    %v2975 = vld [vmem:[#allocation2 + $0x5f0] sm:$0xff]
    %v2976 = vld [vmem:[#allocation2 + $0x5f8] sm:$0xff]
    %v2977 = vld [vmem:[#allocation2 + $0x600] sm:$0xff]
    %v2978 = vld [vmem:[#allocation2 + $0x608] sm:$0xff]
    %v2979 = vld [vmem:[#allocation2 + $0x610] sm:$0xff]
    %v2980 = vld [vmem:[#allocation2 + $0x618] sm:$0xff]
    %v2981 = vld [vmem:[#allocation2 + $0x620] sm:$0xff]
    %v2982 = vld [vmem:[#allocation2 + $0x628] sm:$0xff]
    %v2983 = vld [vmem:[#allocation2 + $0x630] sm:$0xff]
    %v2984 = vld [vmem:[#allocation2 + $0x638] sm:$0xff]
    %v2985 = vld [vmem:[#allocation2 + $0x640] sm:$0xff]
    %v2986 = vld [vmem:[#allocation2 + $0x648] sm:$0xff]
    %v2987 = vld [vmem:[#allocation2 + $0x650] sm:$0xff]
    %v2988 = vld [vmem:[#allocation2 + $0x658] sm:$0xff]
    %v2989 = vld [vmem:[#allocation2 + $0x660] sm:$0xff]
    %v2990 = vld [vmem:[#allocation2 + $0x668] sm:$0xff]
    %v2991 = vld [vmem:[#allocation2 + $0x670] sm:$0xff]
    %v2992 = vld [vmem:[#allocation2 + $0x678] sm:$0xff]
    %v2993 = vld [vmem:[#allocation2 + $0x680] sm:$0xff]
    %v2994 = vld [vmem:[#allocation2 + $0x688] sm:$0xff]
    %v2995 = vld [vmem:[#allocation2 + $0x690] sm:$0xff]
    %v2996 = vld [vmem:[#allocation2 + $0x698] sm:$0xff]
    %v2997 = vld [vmem:[#allocation2 + $0x6a0] sm:$0xff]
    %v2998 = vld [vmem:[#allocation2 + $0x6a8] sm:$0xff]
    %v2999 = vld [vmem:[#allocation2 + $0x6b0] sm:$0xff]
    %v3000 = vld [vmem:[#allocation2 + $0x6b8] sm:$0xff]
    %v3001 = vld [vmem:[#allocation2 + $0x6c0] sm:$0xff]
    %v3002 = vld [vmem:[#allocation2 + $0x6c8] sm:$0xff]
    %v3003 = vld [vmem:[#allocation2 + $0x6d0] sm:$0xff]
    %v3004 = vld [vmem:[#allocation2 + $0x6d8] sm:$0xff]
    %v3005 = vld [vmem:[#allocation2 + $0x6e0] sm:$0xff]
    %v3006 = vld [vmem:[#allocation2 + $0x6e8] sm:$0xff]
    %v3007 = vld [vmem:[#allocation2 + $0x6f0] sm:$0xff]
    %v3008 = vld [vmem:[#allocation2 + $0x6f8] sm:$0xff]
    %v3009 = vld [vmem:[#allocation2 + $0x700] sm:$0xff]
    %v3010 = vld [vmem:[#allocation2 + $0x708] sm:$0xff]
    %v3011 = vld [vmem:[#allocation2 + $0x710] sm:$0xff]
    %v3012 = vld [vmem:[#allocation2 + $0x718] sm:$0xff]
    %v3013 = vld [vmem:[#allocation2 + $0x720] sm:$0xff]
    %v3014 = vld [vmem:[#allocation2 + $0x728] sm:$0xff]
    %v3015 = vld [vmem:[#allocation2 + $0x730] sm:$0xff]
    %v3016 = vld [vmem:[#allocation2 + $0x738] sm:$0xff]
    %v3017 = vld [vmem:[#allocation2 + $0x740] sm:$0xff]
    %v3018 = vld [vmem:[#allocation2 + $0x748] sm:$0xff]
    %v3019 = vld [vmem:[#allocation2 + $0x750] sm:$0xff]
    %v3020 = vld [vmem:[#allocation2 + $0x758] sm:$0xff]
    %v3021 = vld [vmem:[#allocation2 + $0x760] sm:$0xff]
    %v3022 = vld [vmem:[#allocation2 + $0x768] sm:$0xff]
    %v3023 = vld [vmem:[#allocation2 + $0x770] sm:$0xff]
    %v3024 = vld [vmem:[#allocation2 + $0x778] sm:$0xff]
    %v3025 = vld [vmem:[#allocation2 + $0x780] sm:$0xff]
    %v3026 = vld [vmem:[#allocation2 + $0x788] sm:$0xff]
    %v3027 = vld [vmem:[#allocation2 + $0x790] sm:$0xff]
    %v3028 = vld [vmem:[#allocation2 + $0x798] sm:$0xff]
    %v3029 = vld [vmem:[#allocation2 + $0x7a0] sm:$0xff]
    %v3030 = vld [vmem:[#allocation2 + $0x7a8] sm:$0xff]
    %v3031 = vld [vmem:[#allocation2 + $0x7b0] sm:$0xff]
    %v3032 = vld [vmem:[#allocation2 + $0x7b8] sm:$0xff]
    %v3033 = vld [vmem:[#allocation2 + $0x7c0] sm:$0xff]
    %v3034 = vld [vmem:[#allocation2 + $0x7c8] sm:$0xff]
    %v3035 = vld [vmem:[#allocation2 + $0x7d0] sm:$0xff]
    %v3036 = vld [vmem:[#allocation2 + $0x7d8] sm:$0xff]
    %v3037 = vld [vmem:[#allocation2 + $0x7e0] sm:$0xff]
    %v3038 = vld [vmem:[#allocation2 + $0x7e8] sm:$0xff]
    %v3039 = vld [vmem:[#allocation2 + $0x7f0] sm:$0xff]
    %v3040 = vld [vmem:[#allocation2 + $0x7f8] sm:$0xff]
    %v3041 = vld [vmem:[%s10] sm:$0xff]
    %v3042 = vcombine.low %v2643, %v2657
    %v3043 = vcombine.low %v2665, %v2667
    %v3044 = vcombine.low %v2650, %v2664
    %v3045 = vcombine.low %v2666, %v2668
    %v3047 = vunpack.c.l.s4 1966171168
    %v3048 = vunpack.c.0.s8 %v3047
    %v3049 = vlaneseq
    %v3050 = vshrl.u32 %v3049, 7
    %v3051 = vsub.s32 %v3048, %v3050
    %v3052 = vrot.slane %v3042, %v3051
    %v3054 = vunpack.c.l.s4 1966171168
    %v3055 = vunpack.c.0.s8 %v3054
    %v3056 = vlaneseq
    %v3057 = vshrl.u32 %v3056, 7
    %v3058 = vsub.s32 %v3055, %v3057
    %v3059 = vrot.slane %v3043, %v3058
    %v3061 = vunpack.c.l.s4 1966171168
    %v3062 = vunpack.c.0.s8 %v3061
    %v3063 = vlaneseq
    %v3064 = vshrl.u32 %v3063, 7
    %v3065 = vsub.s32 %v3062, %v3064
    %v3066 = vrot.slane %v3044, %v3065
    %v3068 = vunpack.c.l.s4 1966171168
    %v3069 = vunpack.c.0.s8 %v3068
    %v3070 = vlaneseq
    %v3071 = vshrl.u32 %v3070, 7
    %v3072 = vsub.s32 %v3069, %v3071
    %v3073 = vrot.slane %v3045, %v3072
    %v3074 = vcombine.low %v3052, %v3059
    %v3075 = vcombine.high %v3052, %v3059
    %v3076 = vcombine.low %v3066, %v3073
    %v3077 = vcombine.high %v3066, %v3073
    %v3079 = vunpack.c.l.s4 1966171168
    %v3080 = vunpack.c.0.s8 %v3079
    %v3081 = vlaneseq
    %v3082 = vshrl.u32 %v3081, 7
    %v3083 = vsub.s32 %v3080, %v3082
    %v3084 = vrot.slane %v3074, %v3083
    %v3086 = vunpack.c.l.s4 1966171168
    %v3087 = vunpack.c.0.s8 %v3086
    %v3088 = vlaneseq
    %v3089 = vshrl.u32 %v3088, 7
    %v3090 = vsub.s32 %v3087, %v3089
    %v3091 = vrot.slane %v3075, %v3090
    %v3093 = vunpack.c.l.s4 1966171168
    %v3094 = vunpack.c.0.s8 %v3093
    %v3095 = vlaneseq
    %v3096 = vshrl.u32 %v3095, 7
    %v3097 = vsub.s32 %v3094, %v3096
    %v3098 = vrot.slane %v3076, %v3097
    %v3100 = vunpack.c.l.s4 1966171168
    %v3101 = vunpack.c.0.s8 %v3100
    %v3102 = vlaneseq
    %v3103 = vshrl.u32 %v3102, 7
    %v3104 = vsub.s32 %v3101, %v3103
    %v3105 = vrot.slane %v3077, %v3104
    %v3106 = vcombine.low %v3084, %v3098
    %v3107 = vcombine.high %v3084, %v3098
    %v3108 = vcombine.low %v3091, %v3105
    %v3109 = vcombine.high %v3091, %v3105
    %v3110 = vcombine.low %v2692, %v2735
    %v3111 = vcombine.low %v2749, %v2757
    %v3112 = vcombine.low %v2759, %v2742
    %v3113 = vcombine.low %v2756, %v2758
    %v3115 = vunpack.c.l.s4 1966171168
    %v3116 = vunpack.c.0.s8 %v3115
    %v3117 = vlaneseq
    %v3118 = vshrl.u32 %v3117, 7
    %v3119 = vsub.s32 %v3116, %v3118
    %v3120 = vrot.slane %v3110, %v3119
    %v3122 = vunpack.c.l.s4 1966171168
    %v3123 = vunpack.c.0.s8 %v3122
    %v3124 = vlaneseq
    %v3125 = vshrl.u32 %v3124, 7
    %v3126 = vsub.s32 %v3123, %v3125
    %v3127 = vrot.slane %v3111, %v3126
    %v3129 = vunpack.c.l.s4 1966171168
    %v3130 = vunpack.c.0.s8 %v3129
    %v3131 = vlaneseq
    %v3132 = vshrl.u32 %v3131, 7
    %v3133 = vsub.s32 %v3130, %v3132
    %v3134 = vrot.slane %v3112, %v3133
    %v3136 = vunpack.c.l.s4 1966171168
    %v3137 = vunpack.c.0.s8 %v3136
    %v3138 = vlaneseq
    %v3139 = vshrl.u32 %v3138, 7
    %v3140 = vsub.s32 %v3137, %v3139
    %v3141 = vrot.slane %v3113, %v3140
    %v3142 = vcombine.low %v3120, %v3127
    %v3143 = vcombine.high %v3120, %v3127
    %v3144 = vcombine.low %v3134, %v3141
    %v3145 = vcombine.high %v3134, %v3141
    %v3147 = vunpack.c.l.s4 1966171168
    %v3148 = vunpack.c.0.s8 %v3147
    %v3149 = vlaneseq
    %v3150 = vshrl.u32 %v3149, 7
    %v3151 = vsub.s32 %v3148, %v3150
    %v3152 = vrot.slane %v3142, %v3151
    %v3154 = vunpack.c.l.s4 1966171168
    %v3155 = vunpack.c.0.s8 %v3154
    %v3156 = vlaneseq
    %v3157 = vshrl.u32 %v3156, 7
    %v3158 = vsub.s32 %v3155, %v3157
    %v3159 = vrot.slane %v3143, %v3158
    %v3161 = vunpack.c.l.s4 1966171168
    %v3162 = vunpack.c.0.s8 %v3161
    %v3163 = vlaneseq
    %v3164 = vshrl.u32 %v3163, 7
    %v3165 = vsub.s32 %v3162, %v3164
    %v3166 = vrot.slane %v3144, %v3165
    %v3168 = vunpack.c.l.s4 1966171168
    %v3169 = vunpack.c.0.s8 %v3168
    %v3170 = vlaneseq
    %v3171 = vshrl.u32 %v3170, 7
    %v3172 = vsub.s32 %v3169, %v3171
    %v3173 = vrot.slane %v3145, %v3172
    %v3174 = vcombine.low %v3152, %v3166
    %v3175 = vcombine.high %v3152, %v3166
    %v3176 = vcombine.low %v3159, %v3173
    %v3177 = vcombine.high %v3159, %v3173
    %v3178 = vcombine.low %v2760, %v2784
    %v3180 = vunpack.c.l.s4 1966171168
    %v3181 = vunpack.c.0.s8 %v3180
    %v3182 = vlaneseq
    %v3183 = vshrl.u32 %v3182, 7
    %v3184 = vsub.s32 %v3181, %v3183
    %v3185 = vrot.slane %v3178, %v3184
    %v3186 = vcombine.high %v3185, %v3185
    %v3188 = vunpack.c.l.s4 1966171168
    %v3189 = vunpack.c.0.s8 %v3188
    %v3190 = vlaneseq
    %v3191 = vshrl.u32 %v3190, 7
    %v3192 = vsub.s32 %v3189, %v3191
    %v3193 = vrot.slane %v3185, %v3192
    %v3195 = vunpack.c.l.s4 1966171168
    %v3196 = vunpack.c.0.s8 %v3195
    %v3197 = vlaneseq
    %v3198 = vshrl.u32 %v3197, 7
    %v3199 = vsub.s32 %v3196, %v3198
    %v3200 = vrot.slane %v3186, %v3199
    %v3201 = vcombine.high %v3193, %v3193
    %v3202 = vcombine.high %v3200, %v3200
    %v3215 = vpack.c.bf16 %v3174, %v3106
    %v3216 = vpack.c.bf16 %v3176, %v3108
    %v3217 = vpack.c.bf16 %v3175, %v3107
    %v3218 = vpack.c.bf16 %v3177, %v3109
    %v3219 = vpack.c.bf16 %v3193, %v3193
    %v3220 = vpack.c.bf16 %v3200, %v3200
    %v3221 = vpack.c.bf16 %v3201, %v3201
    %v3222 = vpack.c.bf16 %v3202, %v3202
    %v3224 = vlaneseq
    %v3225 = vshrl.u32 %v3224, 7
    %v3226 = vsub.s32 0, %v3225
    %v3227 = vrot.slane %v3041, %v3226
    %v3228 = vlaneseq
    %v3229 = vshrl.u32 %v3228, 7
    %v3230 = vsub.s32 1, %v3229
    %v3231 = vrot.slane %v3041, %v3230
    %v3232 = vlaneseq
    %v3233 = vshrl.u32 %v3232, 7
    %v3234 = vsub.s32 2, %v3233
    %v3235 = vrot.slane %v3041, %v3234
    %v3236 = vlaneseq
    %v3237 = vshrl.u32 %v3236, 7
    %v3238 = vsub.s32 3, %v3237
    %v3239 = vrot.slane %v3041, %v3238
    %v3240 = vlaneseq
    %v3241 = vshrl.u32 %v3240, 7
    %v3242 = vsub.s32 4, %v3241
    %v3243 = vrot.slane %v3041, %v3242
    %v3244 = vlaneseq
    %v3245 = vshrl.u32 %v3244, 7
    %v3246 = vsub.s32 5, %v3245
    %v3247 = vrot.slane %v3041, %v3246
    %v3248 = vlaneseq
    %v3249 = vshrl.u32 %v3248, 7
    %v3250 = vsub.s32 6, %v3249
    %v3251 = vrot.slane %v3041, %v3250
    %v3252 = vlaneseq
    %v3253 = vshrl.u32 %v3252, 7
    %v3254 = vsub.s32 7, %v3253
    %v3255 = vrot.slane %v3041, %v3254
    %v3520 = vunpack.c.l.b16 %v2785
    %v3521 = vunpack.c.h.b16 %v2785
    %v3522 = vunpack.c.l.b16 %v2786
    %v3523 = vunpack.c.h.b16 %v2786
    %v3524 = vunpack.c.l.b16 %v2787
    %v3525 = vunpack.c.h.b16 %v2787
    %v3526 = vunpack.c.l.b16 %v2788
    %v3527 = vunpack.c.h.b16 %v2788
    %v3528 = vunpack.c.l.b16 %v2789
    %v3529 = vunpack.c.h.b16 %v2789
    %v3530 = vunpack.c.l.b16 %v2790
    %v3531 = vunpack.c.h.b16 %v2790
    %v3532 = vunpack.c.l.b16 %v2791
    %v3533 = vunpack.c.h.b16 %v2791
    %v3534 = vunpack.c.l.b16 %v2792
    %v3535 = vunpack.c.h.b16 %v2792
    %v3536 = vunpack.c.l.b16 %v2793
    %v3537 = vunpack.c.h.b16 %v2793
    %v3538 = vunpack.c.l.b16 %v2794
    %v3539 = vunpack.c.h.b16 %v2794
    %v3540 = vunpack.c.l.b16 %v2795
    %v3541 = vunpack.c.h.b16 %v2795
    %v3542 = vunpack.c.l.b16 %v2796
    %v3543 = vunpack.c.h.b16 %v2796
    %v3544 = vunpack.c.l.b16 %v2797
    %v3545 = vunpack.c.h.b16 %v2797
    %v3546 = vunpack.c.l.b16 %v2798
    %v3547 = vunpack.c.h.b16 %v2798
    %v3548 = vunpack.c.l.b16 %v2799
    %v3549 = vunpack.c.h.b16 %v2799
    %v3550 = vunpack.c.l.b16 %v2800
    %v3551 = vunpack.c.h.b16 %v2800
    %v3552 = vunpack.c.l.b16 %v2801
    %v3553 = vunpack.c.h.b16 %v2801
    %v3554 = vunpack.c.l.b16 %v2802
    %v3555 = vunpack.c.h.b16 %v2802
    %v3556 = vunpack.c.l.b16 %v2803
    %v3557 = vunpack.c.h.b16 %v2803
    %v3558 = vunpack.c.l.b16 %v2804
    %v3559 = vunpack.c.h.b16 %v2804
    %v3560 = vunpack.c.l.b16 %v2805
    %v3561 = vunpack.c.h.b16 %v2805
    %v3562 = vunpack.c.l.b16 %v2806
    %v3563 = vunpack.c.h.b16 %v2806
    %v3564 = vunpack.c.l.b16 %v2807
    %v3565 = vunpack.c.h.b16 %v2807
    %v3566 = vunpack.c.l.b16 %v2808
    %v3567 = vunpack.c.h.b16 %v2808
    %v3568 = vunpack.c.l.b16 %v2809
    %v3569 = vunpack.c.h.b16 %v2809
    %v3570 = vunpack.c.l.b16 %v2810
    %v3571 = vunpack.c.h.b16 %v2810
    %v3572 = vunpack.c.l.b16 %v2811
    %v3573 = vunpack.c.h.b16 %v2811
    %v3574 = vunpack.c.l.b16 %v2812
    %v3575 = vunpack.c.h.b16 %v2812
    %v3576 = vunpack.c.l.b16 %v2813
    %v3577 = vunpack.c.h.b16 %v2813
    %v3578 = vunpack.c.l.b16 %v2814
    %v3579 = vunpack.c.h.b16 %v2814
    %v3580 = vunpack.c.l.b16 %v2815
    %v3581 = vunpack.c.h.b16 %v2815
    %v3582 = vunpack.c.l.b16 %v2816
    %v3583 = vunpack.c.h.b16 %v2816
    %v3584 = vunpack.c.l.b16 %v2817
    %v3585 = vunpack.c.h.b16 %v2817
    %v3586 = vunpack.c.l.b16 %v2818
    %v3587 = vunpack.c.h.b16 %v2818
    %v3588 = vunpack.c.l.b16 %v2819
    %v3589 = vunpack.c.h.b16 %v2819
    %v3590 = vunpack.c.l.b16 %v2820
    %v3591 = vunpack.c.h.b16 %v2820
    %v3592 = vunpack.c.l.b16 %v2821
    %v3593 = vunpack.c.h.b16 %v2821
    %v3594 = vunpack.c.l.b16 %v2822
    %v3595 = vunpack.c.h.b16 %v2822
    %v3596 = vunpack.c.l.b16 %v2823
    %v3597 = vunpack.c.h.b16 %v2823
    %v3598 = vunpack.c.l.b16 %v2824
    %v3599 = vunpack.c.h.b16 %v2824
    %v3600 = vunpack.c.l.b16 %v2825
    %v3601 = vunpack.c.h.b16 %v2825
    %v3602 = vunpack.c.l.b16 %v2826
    %v3603 = vunpack.c.h.b16 %v2826
    %v3604 = vunpack.c.l.b16 %v2827
    %v3605 = vunpack.c.h.b16 %v2827
    %v3606 = vunpack.c.l.b16 %v2828
    %v3607 = vunpack.c.h.b16 %v2828
    %v3608 = vunpack.c.l.b16 %v2829
    %v3609 = vunpack.c.h.b16 %v2829
    %v3610 = vunpack.c.l.b16 %v2830
    %v3611 = vunpack.c.h.b16 %v2830
    %v3612 = vunpack.c.l.b16 %v2831
    %v3613 = vunpack.c.h.b16 %v2831
    %v3614 = vunpack.c.l.b16 %v2832
    %v3615 = vunpack.c.h.b16 %v2832
    %v3616 = vunpack.c.l.b16 %v2833
    %v3617 = vunpack.c.h.b16 %v2833
    %v3618 = vunpack.c.l.b16 %v2834
    %v3619 = vunpack.c.h.b16 %v2834
    %v3620 = vunpack.c.l.b16 %v2835
    %v3621 = vunpack.c.h.b16 %v2835
    %v3622 = vunpack.c.l.b16 %v2836
    %v3623 = vunpack.c.h.b16 %v2836
    %v3624 = vunpack.c.l.b16 %v2837
    %v3625 = vunpack.c.h.b16 %v2837
    %v3626 = vunpack.c.l.b16 %v2838
    %v3627 = vunpack.c.h.b16 %v2838
    %v3628 = vunpack.c.l.b16 %v2839
    %v3629 = vunpack.c.h.b16 %v2839
    %v3630 = vunpack.c.l.b16 %v2840
    %v3631 = vunpack.c.h.b16 %v2840
    %v3632 = vunpack.c.l.b16 %v2841
    %v3633 = vunpack.c.h.b16 %v2841
    %v3634 = vunpack.c.l.b16 %v2842
    %v3635 = vunpack.c.h.b16 %v2842
    %v3636 = vunpack.c.l.b16 %v2843
    %v3637 = vunpack.c.h.b16 %v2843
    %v3638 = vunpack.c.l.b16 %v2844
    %v3639 = vunpack.c.h.b16 %v2844
    %v3640 = vunpack.c.l.b16 %v2845
    %v3641 = vunpack.c.h.b16 %v2845
    %v3642 = vunpack.c.l.b16 %v2846
    %v3643 = vunpack.c.h.b16 %v2846
    %v3644 = vunpack.c.l.b16 %v2847
    %v3645 = vunpack.c.h.b16 %v2847
    %v3646 = vunpack.c.l.b16 %v2848
    %v3647 = vunpack.c.h.b16 %v2848
    %v3648 = vunpack.c.l.b16 %v2849
    %v3649 = vunpack.c.h.b16 %v2849
    %v3650 = vunpack.c.l.b16 %v2850
    %v3651 = vunpack.c.h.b16 %v2850
    %v3652 = vunpack.c.l.b16 %v2851
    %v3653 = vunpack.c.h.b16 %v2851
    %v3654 = vunpack.c.l.b16 %v2852
    %v3655 = vunpack.c.h.b16 %v2852
    %v3656 = vunpack.c.l.b16 %v2853
    %v3657 = vunpack.c.h.b16 %v2853
    %v3658 = vunpack.c.l.b16 %v2854
    %v3659 = vunpack.c.h.b16 %v2854
    %v3660 = vunpack.c.l.b16 %v2855
    %v3661 = vunpack.c.h.b16 %v2855
    %v3662 = vunpack.c.l.b16 %v2856
    %v3663 = vunpack.c.h.b16 %v2856
    %v3664 = vunpack.c.l.b16 %v2857
    %v3665 = vunpack.c.h.b16 %v2857
    %v3666 = vunpack.c.l.b16 %v2858
    %v3667 = vunpack.c.h.b16 %v2858
    %v3668 = vunpack.c.l.b16 %v2859
    %v3669 = vunpack.c.h.b16 %v2859
    %v3670 = vunpack.c.l.b16 %v2860
    %v3671 = vunpack.c.h.b16 %v2860
    %v3672 = vunpack.c.l.b16 %v2861
    %v3673 = vunpack.c.h.b16 %v2861
    %v3674 = vunpack.c.l.b16 %v2862
    %v3675 = vunpack.c.h.b16 %v2862
    %v3676 = vunpack.c.l.b16 %v2863
    %v3677 = vunpack.c.h.b16 %v2863
    %v3678 = vunpack.c.l.b16 %v2864
    %v3679 = vunpack.c.h.b16 %v2864
    %v3680 = vunpack.c.l.b16 %v2865
    %v3681 = vunpack.c.h.b16 %v2865
    %v3682 = vunpack.c.l.b16 %v2866
    %v3683 = vunpack.c.h.b16 %v2866
    %v3684 = vunpack.c.l.b16 %v2867
    %v3685 = vunpack.c.h.b16 %v2867
    %v3686 = vunpack.c.l.b16 %v2868
    %v3687 = vunpack.c.h.b16 %v2868
    %v3688 = vunpack.c.l.b16 %v2869
    %v3689 = vunpack.c.h.b16 %v2869
    %v3690 = vunpack.c.l.b16 %v2870
    %v3691 = vunpack.c.h.b16 %v2870
    %v3692 = vunpack.c.l.b16 %v2871
    %v3693 = vunpack.c.h.b16 %v2871
    %v3694 = vunpack.c.l.b16 %v2872
    %v3695 = vunpack.c.h.b16 %v2872
    %v3696 = vunpack.c.l.b16 %v2873
    %v3697 = vunpack.c.h.b16 %v2873
    %v3698 = vunpack.c.l.b16 %v2874
    %v3699 = vunpack.c.h.b16 %v2874
    %v3700 = vunpack.c.l.b16 %v2875
    %v3701 = vunpack.c.h.b16 %v2875
    %v3702 = vunpack.c.l.b16 %v2876
    %v3703 = vunpack.c.h.b16 %v2876
    %v3704 = vunpack.c.l.b16 %v2877
    %v3705 = vunpack.c.h.b16 %v2877
    %v3706 = vunpack.c.l.b16 %v2878
    %v3707 = vunpack.c.h.b16 %v2878
    %v3708 = vunpack.c.l.b16 %v2879
    %v3709 = vunpack.c.h.b16 %v2879
    %v3710 = vunpack.c.l.b16 %v2880
    %v3711 = vunpack.c.h.b16 %v2880
    %v3712 = vunpack.c.l.b16 %v2881
    %v3713 = vunpack.c.h.b16 %v2881
    %v3714 = vunpack.c.l.b16 %v2882
    %v3715 = vunpack.c.h.b16 %v2882
    %v3716 = vunpack.c.l.b16 %v2883
    %v3717 = vunpack.c.h.b16 %v2883
    %v3718 = vunpack.c.l.b16 %v2884
    %v3719 = vunpack.c.h.b16 %v2884
    %v3720 = vunpack.c.l.b16 %v2885
    %v3721 = vunpack.c.h.b16 %v2885
    %v3722 = vunpack.c.l.b16 %v2886
    %v3723 = vunpack.c.h.b16 %v2886
    %v3724 = vunpack.c.l.b16 %v2887
    %v3725 = vunpack.c.h.b16 %v2887
    %v3726 = vunpack.c.l.b16 %v2888
    %v3727 = vunpack.c.h.b16 %v2888
    %v3728 = vunpack.c.l.b16 %v2889
    %v3729 = vunpack.c.h.b16 %v2889
    %v3730 = vunpack.c.l.b16 %v2890
    %v3731 = vunpack.c.h.b16 %v2890
    %v3732 = vunpack.c.l.b16 %v2891
    %v3733 = vunpack.c.h.b16 %v2891
    %v3734 = vunpack.c.l.b16 %v2892
    %v3735 = vunpack.c.h.b16 %v2892
    %v3736 = vunpack.c.l.b16 %v2893
    %v3737 = vunpack.c.h.b16 %v2893
    %v3738 = vunpack.c.l.b16 %v2894
    %v3739 = vunpack.c.h.b16 %v2894
    %v3740 = vunpack.c.l.b16 %v2895
    %v3741 = vunpack.c.h.b16 %v2895
    %v3742 = vunpack.c.l.b16 %v2896
    %v3743 = vunpack.c.h.b16 %v2896
    %v3744 = vunpack.c.l.b16 %v2897
    %v3745 = vunpack.c.h.b16 %v2897
    %v3746 = vunpack.c.l.b16 %v2898
    %v3747 = vunpack.c.h.b16 %v2898
    %v3748 = vunpack.c.l.b16 %v2899
    %v3749 = vunpack.c.h.b16 %v2899
    %v3750 = vunpack.c.l.b16 %v2900
    %v3751 = vunpack.c.h.b16 %v2900
    %v3752 = vunpack.c.l.b16 %v2901
    %v3753 = vunpack.c.h.b16 %v2901
    %v3754 = vunpack.c.l.b16 %v2902
    %v3755 = vunpack.c.h.b16 %v2902
    %v3756 = vunpack.c.l.b16 %v2903
    %v3757 = vunpack.c.h.b16 %v2903
    %v3758 = vunpack.c.l.b16 %v2904
    %v3759 = vunpack.c.h.b16 %v2904
    %v3760 = vunpack.c.l.b16 %v2905
    %v3761 = vunpack.c.h.b16 %v2905
    %v3762 = vunpack.c.l.b16 %v2906
    %v3763 = vunpack.c.h.b16 %v2906
    %v3764 = vunpack.c.l.b16 %v2907
    %v3765 = vunpack.c.h.b16 %v2907
    %v3766 = vunpack.c.l.b16 %v2908
    %v3767 = vunpack.c.h.b16 %v2908
    %v3768 = vunpack.c.l.b16 %v2909
    %v3769 = vunpack.c.h.b16 %v2909
    %v3770 = vunpack.c.l.b16 %v2910
    %v3771 = vunpack.c.h.b16 %v2910
    %v3772 = vunpack.c.l.b16 %v2911
    %v3773 = vunpack.c.h.b16 %v2911
    %v3774 = vunpack.c.l.b16 %v2912
    %v3775 = vunpack.c.h.b16 %v2912
    %v3776 = vunpack.c.l.b16 %v2913
    %v3777 = vunpack.c.h.b16 %v2913
    %v3778 = vunpack.c.l.b16 %v2914
    %v3779 = vunpack.c.h.b16 %v2914
    %v3780 = vunpack.c.l.b16 %v2915
    %v3781 = vunpack.c.h.b16 %v2915
    %v3782 = vunpack.c.l.b16 %v2916
    %v3783 = vunpack.c.h.b16 %v2916
    %v3784 = vunpack.c.l.b16 %v2917
    %v3785 = vunpack.c.h.b16 %v2917
    %v3786 = vunpack.c.l.b16 %v2918
    %v3787 = vunpack.c.h.b16 %v2918
    %v3788 = vunpack.c.l.b16 %v2919
    %v3789 = vunpack.c.h.b16 %v2919
    %v3790 = vunpack.c.l.b16 %v2920
    %v3791 = vunpack.c.h.b16 %v2920
    %v3792 = vunpack.c.l.b16 %v2921
    %v3793 = vunpack.c.h.b16 %v2921
    %v3794 = vunpack.c.l.b16 %v2922
    %v3795 = vunpack.c.h.b16 %v2922
    %v3796 = vunpack.c.l.b16 %v2923
    %v3797 = vunpack.c.h.b16 %v2923
    %v3798 = vunpack.c.l.b16 %v2924
    %v3799 = vunpack.c.h.b16 %v2924
    %v3800 = vunpack.c.l.b16 %v2925
    %v3801 = vunpack.c.h.b16 %v2925
    %v3802 = vunpack.c.l.b16 %v2926
    %v3803 = vunpack.c.h.b16 %v2926
    %v3804 = vunpack.c.l.b16 %v2927
    %v3805 = vunpack.c.h.b16 %v2927
    %v3806 = vunpack.c.l.b16 %v2928
    %v3807 = vunpack.c.h.b16 %v2928
    %v3808 = vunpack.c.l.b16 %v2929
    %v3809 = vunpack.c.h.b16 %v2929
    %v3810 = vunpack.c.l.b16 %v2930
    %v3811 = vunpack.c.h.b16 %v2930
    %v3812 = vunpack.c.l.b16 %v2931
    %v3813 = vunpack.c.h.b16 %v2931
    %v3814 = vunpack.c.l.b16 %v2932
    %v3815 = vunpack.c.h.b16 %v2932
    %v3816 = vunpack.c.l.b16 %v2933
    %v3817 = vunpack.c.h.b16 %v2933
    %v3818 = vunpack.c.l.b16 %v2934
    %v3819 = vunpack.c.h.b16 %v2934
    %v3820 = vunpack.c.l.b16 %v2935
    %v3821 = vunpack.c.h.b16 %v2935
    %v3822 = vunpack.c.l.b16 %v2936
    %v3823 = vunpack.c.h.b16 %v2936
    %v3824 = vunpack.c.l.b16 %v2937
    %v3825 = vunpack.c.h.b16 %v2937
    %v3826 = vunpack.c.l.b16 %v2938
    %v3827 = vunpack.c.h.b16 %v2938
    %v3828 = vunpack.c.l.b16 %v2939
    %v3829 = vunpack.c.h.b16 %v2939
    %v3830 = vunpack.c.l.b16 %v2940
    %v3831 = vunpack.c.h.b16 %v2940
    %v3832 = vunpack.c.l.b16 %v2941
    %v3833 = vunpack.c.h.b16 %v2941
    %v3834 = vunpack.c.l.b16 %v2942
    %v3835 = vunpack.c.h.b16 %v2942
    %v3836 = vunpack.c.l.b16 %v2943
    %v3837 = vunpack.c.h.b16 %v2943
    %v3838 = vunpack.c.l.b16 %v2944
    %v3839 = vunpack.c.h.b16 %v2944
    %v3840 = vunpack.c.l.b16 %v2945
    %v3841 = vunpack.c.h.b16 %v2945
    %v3842 = vunpack.c.l.b16 %v2946
    %v3843 = vunpack.c.h.b16 %v2946
    %v3844 = vunpack.c.l.b16 %v2947
    %v3845 = vunpack.c.h.b16 %v2947
    %v3846 = vunpack.c.l.b16 %v2948
    %v3847 = vunpack.c.h.b16 %v2948
    %v3848 = vunpack.c.l.b16 %v2949
    %v3849 = vunpack.c.h.b16 %v2949
    %v3850 = vunpack.c.l.b16 %v2950
    %v3851 = vunpack.c.h.b16 %v2950
    %v3852 = vunpack.c.l.b16 %v2951
    %v3853 = vunpack.c.h.b16 %v2951
    %v3854 = vunpack.c.l.b16 %v2952
    %v3855 = vunpack.c.h.b16 %v2952
    %v3856 = vunpack.c.l.b16 %v2953
    %v3857 = vunpack.c.h.b16 %v2953
    %v3858 = vunpack.c.l.b16 %v2954
    %v3859 = vunpack.c.h.b16 %v2954
    %v3860 = vunpack.c.l.b16 %v2955
    %v3861 = vunpack.c.h.b16 %v2955
    %v3862 = vunpack.c.l.b16 %v2956
    %v3863 = vunpack.c.h.b16 %v2956
    %v3864 = vunpack.c.l.b16 %v2957
    %v3865 = vunpack.c.h.b16 %v2957
    %v3866 = vunpack.c.l.b16 %v2958
    %v3867 = vunpack.c.h.b16 %v2958
    %v3868 = vunpack.c.l.b16 %v2959
    %v3869 = vunpack.c.h.b16 %v2959
    %v3870 = vunpack.c.l.b16 %v2960
    %v3871 = vunpack.c.h.b16 %v2960
    %v3872 = vunpack.c.l.b16 %v2961
    %v3873 = vunpack.c.h.b16 %v2961
    %v3874 = vunpack.c.l.b16 %v2962
    %v3875 = vunpack.c.h.b16 %v2962
    %v3876 = vunpack.c.l.b16 %v2963
    %v3877 = vunpack.c.h.b16 %v2963
    %v3878 = vunpack.c.l.b16 %v2964
    %v3879 = vunpack.c.h.b16 %v2964
    %v3880 = vunpack.c.l.b16 %v2965
    %v3881 = vunpack.c.h.b16 %v2965
    %v3882 = vunpack.c.l.b16 %v2966
    %v3883 = vunpack.c.h.b16 %v2966
    %v3884 = vunpack.c.l.b16 %v2967
    %v3885 = vunpack.c.h.b16 %v2967
    %v3886 = vunpack.c.l.b16 %v2968
    %v3887 = vunpack.c.h.b16 %v2968
    %v3888 = vunpack.c.l.b16 %v2969
    %v3889 = vunpack.c.h.b16 %v2969
    %v3890 = vunpack.c.l.b16 %v2970
    %v3891 = vunpack.c.h.b16 %v2970
    %v3892 = vunpack.c.l.b16 %v2971
    %v3893 = vunpack.c.h.b16 %v2971
    %v3894 = vunpack.c.l.b16 %v2972
    %v3895 = vunpack.c.h.b16 %v2972
    %v3896 = vunpack.c.l.b16 %v2973
    %v3897 = vunpack.c.h.b16 %v2973
    %v3898 = vunpack.c.l.b16 %v2974
    %v3899 = vunpack.c.h.b16 %v2974
    %v3900 = vunpack.c.l.b16 %v2975
    %v3901 = vunpack.c.h.b16 %v2975
    %v3902 = vunpack.c.l.b16 %v2976
    %v3903 = vunpack.c.h.b16 %v2976
    %v3904 = vunpack.c.l.b16 %v2977
    %v3905 = vunpack.c.h.b16 %v2977
    %v3906 = vunpack.c.l.b16 %v2978
    %v3907 = vunpack.c.h.b16 %v2978
    %v3908 = vunpack.c.l.b16 %v2979
    %v3909 = vunpack.c.h.b16 %v2979
    %v3910 = vunpack.c.l.b16 %v2980
    %v3911 = vunpack.c.h.b16 %v2980
    %v3912 = vunpack.c.l.b16 %v2981
    %v3913 = vunpack.c.h.b16 %v2981
    %v3914 = vunpack.c.l.b16 %v2982
    %v3915 = vunpack.c.h.b16 %v2982
    %v3916 = vunpack.c.l.b16 %v2983
    %v3917 = vunpack.c.h.b16 %v2983
    %v3918 = vunpack.c.l.b16 %v2984
    %v3919 = vunpack.c.h.b16 %v2984
    %v3920 = vunpack.c.l.b16 %v2985
    %v3921 = vunpack.c.h.b16 %v2985
    %v3922 = vunpack.c.l.b16 %v2986
    %v3923 = vunpack.c.h.b16 %v2986
    %v3924 = vunpack.c.l.b16 %v2987
    %v3925 = vunpack.c.h.b16 %v2987
    %v3926 = vunpack.c.l.b16 %v2988
    %v3927 = vunpack.c.h.b16 %v2988
    %v3928 = vunpack.c.l.b16 %v2989
    %v3929 = vunpack.c.h.b16 %v2989
    %v3930 = vunpack.c.l.b16 %v2990
    %v3931 = vunpack.c.h.b16 %v2990
    %v3932 = vunpack.c.l.b16 %v2991
    %v3933 = vunpack.c.h.b16 %v2991
    %v3934 = vunpack.c.l.b16 %v2992
    %v3935 = vunpack.c.h.b16 %v2992
    %v3936 = vunpack.c.l.b16 %v2993
    %v3937 = vunpack.c.h.b16 %v2993
    %v3938 = vunpack.c.l.b16 %v2994
    %v3939 = vunpack.c.h.b16 %v2994
    %v3940 = vunpack.c.l.b16 %v2995
    %v3941 = vunpack.c.h.b16 %v2995
    %v3942 = vunpack.c.l.b16 %v2996
    %v3943 = vunpack.c.h.b16 %v2996
    %v3944 = vunpack.c.l.b16 %v2997
    %v3945 = vunpack.c.h.b16 %v2997
    %v3946 = vunpack.c.l.b16 %v2998
    %v3947 = vunpack.c.h.b16 %v2998
    %v3948 = vunpack.c.l.b16 %v2999
    %v3949 = vunpack.c.h.b16 %v2999
    %v3950 = vunpack.c.l.b16 %v3000
    %v3951 = vunpack.c.h.b16 %v3000
    %v3952 = vunpack.c.l.b16 %v3001
    %v3953 = vunpack.c.h.b16 %v3001
    %v3954 = vunpack.c.l.b16 %v3002
    %v3955 = vunpack.c.h.b16 %v3002
    %v3956 = vunpack.c.l.b16 %v3003
    %v3957 = vunpack.c.h.b16 %v3003
    %v3958 = vunpack.c.l.b16 %v3004
    %v3959 = vunpack.c.h.b16 %v3004
    %v3960 = vunpack.c.l.b16 %v3005
    %v3961 = vunpack.c.h.b16 %v3005
    %v3962 = vunpack.c.l.b16 %v3006
    %v3963 = vunpack.c.h.b16 %v3006
    %v3964 = vunpack.c.l.b16 %v3007
    %v3965 = vunpack.c.h.b16 %v3007
    %v3966 = vunpack.c.l.b16 %v3008
    %v3967 = vunpack.c.h.b16 %v3008
    %v3968 = vunpack.c.l.b16 %v3009
    %v3969 = vunpack.c.h.b16 %v3009
    %v3970 = vunpack.c.l.b16 %v3010
    %v3971 = vunpack.c.h.b16 %v3010
    %v3972 = vunpack.c.l.b16 %v3011
    %v3973 = vunpack.c.h.b16 %v3011
    %v3974 = vunpack.c.l.b16 %v3012
    %v3975 = vunpack.c.h.b16 %v3012
    %v3976 = vunpack.c.l.b16 %v3013
    %v3977 = vunpack.c.h.b16 %v3013
    %v3978 = vunpack.c.l.b16 %v3014
    %v3979 = vunpack.c.h.b16 %v3014
    %v3980 = vunpack.c.l.b16 %v3015
    %v3981 = vunpack.c.h.b16 %v3015
    %v3982 = vunpack.c.l.b16 %v3016
    %v3983 = vunpack.c.h.b16 %v3016
    %v3984 = vunpack.c.l.b16 %v3017
    %v3985 = vunpack.c.h.b16 %v3017
    %v3986 = vunpack.c.l.b16 %v3018
    %v3987 = vunpack.c.h.b16 %v3018
    %v3988 = vunpack.c.l.b16 %v3019
    %v3989 = vunpack.c.h.b16 %v3019
    %v3990 = vunpack.c.l.b16 %v3020
    %v3991 = vunpack.c.h.b16 %v3020
    %v3992 = vunpack.c.l.b16 %v3021
    %v3993 = vunpack.c.h.b16 %v3021
    %v3994 = vunpack.c.l.b16 %v3022
    %v3995 = vunpack.c.h.b16 %v3022
    %v3996 = vunpack.c.l.b16 %v3023
    %v3997 = vunpack.c.h.b16 %v3023
    %v3998 = vunpack.c.l.b16 %v3024
    %v3999 = vunpack.c.h.b16 %v3024
    %v4000 = vunpack.c.l.b16 %v3025
    %v4001 = vunpack.c.h.b16 %v3025
    %v4002 = vunpack.c.l.b16 %v3026
    %v4003 = vunpack.c.h.b16 %v3026
    %v4004 = vunpack.c.l.b16 %v3027
    %v4005 = vunpack.c.h.b16 %v3027
    %v4006 = vunpack.c.l.b16 %v3028
    %v4007 = vunpack.c.h.b16 %v3028
    %v4008 = vunpack.c.l.b16 %v3029
    %v4009 = vunpack.c.h.b16 %v3029
    %v4010 = vunpack.c.l.b16 %v3030
    %v4011 = vunpack.c.h.b16 %v3030
    %v4012 = vunpack.c.l.b16 %v3031
    %v4013 = vunpack.c.h.b16 %v3031
    %v4014 = vunpack.c.l.b16 %v3032
    %v4015 = vunpack.c.h.b16 %v3032
    %v4016 = vunpack.c.l.b16 %v3033
    %v4017 = vunpack.c.h.b16 %v3033
    %v4018 = vunpack.c.l.b16 %v3034
    %v4019 = vunpack.c.h.b16 %v3034
    %v4020 = vunpack.c.l.b16 %v3035
    %v4021 = vunpack.c.h.b16 %v3035
    %v4022 = vunpack.c.l.b16 %v3036
    %v4023 = vunpack.c.h.b16 %v3036
    %v4024 = vunpack.c.l.b16 %v3037
    %v4025 = vunpack.c.h.b16 %v3037
    %v4026 = vunpack.c.l.b16 %v3038
    %v4027 = vunpack.c.h.b16 %v3038
    %v4028 = vunpack.c.l.b16 %v3039
    %v4029 = vunpack.c.h.b16 %v3039
    %v4030 = vunpack.c.l.b16 %v3040
    %v4031 = vunpack.c.h.b16 %v3040
    %v4032 = vpack.c.b16 %v3528, %v3520
    %v4033 = vpack.c.b16 %v3529, %v3521
    %v4034 = vpack.c.b16 %v3530, %v3522
    %v4035 = vpack.c.b16 %v3531, %v3523
    %v4036 = vpack.c.b16 %v3532, %v3524
    %v4037 = vpack.c.b16 %v3533, %v3525
    %v4038 = vpack.c.b16 %v3534, %v3526
    %v4039 = vpack.c.b16 %v3535, %v3527
    %v4040 = vpack.c.b16 %v3544, %v3536
    %v4041 = vpack.c.b16 %v3545, %v3537
    %v4042 = vpack.c.b16 %v3546, %v3538
    %v4043 = vpack.c.b16 %v3547, %v3539
    %v4044 = vpack.c.b16 %v3548, %v3540
    %v4045 = vpack.c.b16 %v3549, %v3541
    %v4046 = vpack.c.b16 %v3550, %v3542
    %v4047 = vpack.c.b16 %v3551, %v3543
    %v4048 = vpack.c.b16 %v3560, %v3552
    %v4049 = vpack.c.b16 %v3561, %v3553
    %v4050 = vpack.c.b16 %v3562, %v3554
    %v4051 = vpack.c.b16 %v3563, %v3555
    %v4052 = vpack.c.b16 %v3564, %v3556
    %v4053 = vpack.c.b16 %v3565, %v3557
    %v4054 = vpack.c.b16 %v3566, %v3558
    %v4055 = vpack.c.b16 %v3567, %v3559
    %v4056 = vpack.c.b16 %v3576, %v3568
    %v4057 = vpack.c.b16 %v3577, %v3569
    %v4058 = vpack.c.b16 %v3578, %v3570
    %v4059 = vpack.c.b16 %v3579, %v3571
    %v4060 = vpack.c.b16 %v3580, %v3572
    %v4061 = vpack.c.b16 %v3581, %v3573
    %v4062 = vpack.c.b16 %v3582, %v3574
    %v4063 = vpack.c.b16 %v3583, %v3575
    %v4064 = vpack.c.b16 %v3592, %v3584
    %v4065 = vpack.c.b16 %v3593, %v3585
    %v4066 = vpack.c.b16 %v3594, %v3586
    %v4067 = vpack.c.b16 %v3595, %v3587
    %v4068 = vpack.c.b16 %v3596, %v3588
    %v4069 = vpack.c.b16 %v3597, %v3589
    %v4070 = vpack.c.b16 %v3598, %v3590
    %v4071 = vpack.c.b16 %v3599, %v3591
    %v4072 = vpack.c.b16 %v3608, %v3600
    %v4073 = vpack.c.b16 %v3609, %v3601
    %v4074 = vpack.c.b16 %v3610, %v3602
    %v4075 = vpack.c.b16 %v3611, %v3603
    %v4076 = vpack.c.b16 %v3612, %v3604
    %v4077 = vpack.c.b16 %v3613, %v3605
    %v4078 = vpack.c.b16 %v3614, %v3606
    %v4079 = vpack.c.b16 %v3615, %v3607
    %v4080 = vpack.c.b16 %v3624, %v3616
    %v4081 = vpack.c.b16 %v3625, %v3617
    %v4082 = vpack.c.b16 %v3626, %v3618
    %v4083 = vpack.c.b16 %v3627, %v3619
    %v4084 = vpack.c.b16 %v3628, %v3620
    %v4085 = vpack.c.b16 %v3629, %v3621
    %v4086 = vpack.c.b16 %v3630, %v3622
    %v4087 = vpack.c.b16 %v3631, %v3623
    %v4088 = vpack.c.b16 %v3640, %v3632
    %v4089 = vpack.c.b16 %v3641, %v3633
    %v4090 = vpack.c.b16 %v3642, %v3634
    %v4091 = vpack.c.b16 %v3643, %v3635
    %v4092 = vpack.c.b16 %v3644, %v3636
    %v4093 = vpack.c.b16 %v3645, %v3637
    %v4094 = vpack.c.b16 %v3646, %v3638
    %v4095 = vpack.c.b16 %v3647, %v3639
    %v4096 = vpack.c.b16 %v3656, %v3648
    %v4097 = vpack.c.b16 %v3657, %v3649
    %v4098 = vpack.c.b16 %v3658, %v3650
    %v4099 = vpack.c.b16 %v3659, %v3651
    %v4100 = vpack.c.b16 %v3660, %v3652
    %v4101 = vpack.c.b16 %v3661, %v3653
    %v4102 = vpack.c.b16 %v3662, %v3654
    %v4103 = vpack.c.b16 %v3663, %v3655
    %v4104 = vpack.c.b16 %v3672, %v3664
    %v4105 = vpack.c.b16 %v3673, %v3665
    %v4106 = vpack.c.b16 %v3674, %v3666
    %v4107 = vpack.c.b16 %v3675, %v3667
    %v4108 = vpack.c.b16 %v3676, %v3668
    %v4109 = vpack.c.b16 %v3677, %v3669
    %v4110 = vpack.c.b16 %v3678, %v3670
    %v4111 = vpack.c.b16 %v3679, %v3671
    %v4112 = vpack.c.b16 %v3688, %v3680
    %v4113 = vpack.c.b16 %v3689, %v3681
    %v4114 = vpack.c.b16 %v3690, %v3682
    %v4115 = vpack.c.b16 %v3691, %v3683
    %v4116 = vpack.c.b16 %v3692, %v3684
    %v4117 = vpack.c.b16 %v3693, %v3685
    %v4118 = vpack.c.b16 %v3694, %v3686
    %v4119 = vpack.c.b16 %v3695, %v3687
    %v4120 = vpack.c.b16 %v3704, %v3696
    %v4121 = vpack.c.b16 %v3705, %v3697
    %v4122 = vpack.c.b16 %v3706, %v3698
    %v4123 = vpack.c.b16 %v3707, %v3699
    %v4124 = vpack.c.b16 %v3708, %v3700
    %v4125 = vpack.c.b16 %v3709, %v3701
    %v4126 = vpack.c.b16 %v3710, %v3702
    %v4127 = vpack.c.b16 %v3711, %v3703
    %v4128 = vpack.c.b16 %v3720, %v3712
    %v4129 = vpack.c.b16 %v3721, %v3713
    %v4130 = vpack.c.b16 %v3722, %v3714
    %v4131 = vpack.c.b16 %v3723, %v3715
    %v4132 = vpack.c.b16 %v3724, %v3716
    %v4133 = vpack.c.b16 %v3725, %v3717
    %v4134 = vpack.c.b16 %v3726, %v3718
    %v4135 = vpack.c.b16 %v3727, %v3719
    %v4136 = vpack.c.b16 %v3736, %v3728
    %v4137 = vpack.c.b16 %v3737, %v3729
    %v4138 = vpack.c.b16 %v3738, %v3730
    %v4139 = vpack.c.b16 %v3739, %v3731
    %v4140 = vpack.c.b16 %v3740, %v3732
    %v4141 = vpack.c.b16 %v3741, %v3733
    %v4142 = vpack.c.b16 %v3742, %v3734
    %v4143 = vpack.c.b16 %v3743, %v3735
    %v4144 = vpack.c.b16 %v3752, %v3744
    %v4145 = vpack.c.b16 %v3753, %v3745
    %v4146 = vpack.c.b16 %v3754, %v3746
    %v4147 = vpack.c.b16 %v3755, %v3747
    %v4148 = vpack.c.b16 %v3756, %v3748
    %v4149 = vpack.c.b16 %v3757, %v3749
    %v4150 = vpack.c.b16 %v3758, %v3750
    %v4151 = vpack.c.b16 %v3759, %v3751
    %v4152 = vpack.c.b16 %v3768, %v3760
    %v4153 = vpack.c.b16 %v3769, %v3761
    %v4154 = vpack.c.b16 %v3770, %v3762
    %v4155 = vpack.c.b16 %v3771, %v3763
    %v4156 = vpack.c.b16 %v3772, %v3764
    %v4157 = vpack.c.b16 %v3773, %v3765
    %v4158 = vpack.c.b16 %v3774, %v3766
    %v4159 = vpack.c.b16 %v3775, %v3767
    %v4160 = vpack.c.b16 %v3784, %v3776
    %v4161 = vpack.c.b16 %v3785, %v3777
    %v4162 = vpack.c.b16 %v3786, %v3778
    %v4163 = vpack.c.b16 %v3787, %v3779
    %v4164 = vpack.c.b16 %v3788, %v3780
    %v4165 = vpack.c.b16 %v3789, %v3781
    %v4166 = vpack.c.b16 %v3790, %v3782
    %v4167 = vpack.c.b16 %v3791, %v3783
    %v4168 = vpack.c.b16 %v3800, %v3792
    %v4169 = vpack.c.b16 %v3801, %v3793
    %v4170 = vpack.c.b16 %v3802, %v3794
    %v4171 = vpack.c.b16 %v3803, %v3795
    %v4172 = vpack.c.b16 %v3804, %v3796
    %v4173 = vpack.c.b16 %v3805, %v3797
    %v4174 = vpack.c.b16 %v3806, %v3798
    %v4175 = vpack.c.b16 %v3807, %v3799
    %v4176 = vpack.c.b16 %v3816, %v3808
    %v4177 = vpack.c.b16 %v3817, %v3809
    %v4178 = vpack.c.b16 %v3818, %v3810
    %v4179 = vpack.c.b16 %v3819, %v3811
    %v4180 = vpack.c.b16 %v3820, %v3812
    %v4181 = vpack.c.b16 %v3821, %v3813
    %v4182 = vpack.c.b16 %v3822, %v3814
    %v4183 = vpack.c.b16 %v3823, %v3815
    %v4184 = vpack.c.b16 %v3832, %v3824
    %v4185 = vpack.c.b16 %v3833, %v3825
    %v4186 = vpack.c.b16 %v3834, %v3826
    %v4187 = vpack.c.b16 %v3835, %v3827
    %v4188 = vpack.c.b16 %v3836, %v3828
    %v4189 = vpack.c.b16 %v3837, %v3829
    %v4190 = vpack.c.b16 %v3838, %v3830
    %v4191 = vpack.c.b16 %v3839, %v3831
    %v4192 = vpack.c.b16 %v3848, %v3840
    %v4193 = vpack.c.b16 %v3849, %v3841
    %v4194 = vpack.c.b16 %v3850, %v3842
    %v4195 = vpack.c.b16 %v3851, %v3843
    %v4196 = vpack.c.b16 %v3852, %v3844
    %v4197 = vpack.c.b16 %v3853, %v3845
    %v4198 = vpack.c.b16 %v3854, %v3846
    %v4199 = vpack.c.b16 %v3855, %v3847
    %v4200 = vpack.c.b16 %v3864, %v3856
    %v4201 = vpack.c.b16 %v3865, %v3857
    %v4202 = vpack.c.b16 %v3866, %v3858
    %v4203 = vpack.c.b16 %v3867, %v3859
    %v4204 = vpack.c.b16 %v3868, %v3860
    %v4205 = vpack.c.b16 %v3869, %v3861
    %v4206 = vpack.c.b16 %v3870, %v3862
    %v4207 = vpack.c.b16 %v3871, %v3863
    %v4208 = vpack.c.b16 %v3880, %v3872
    %v4209 = vpack.c.b16 %v3881, %v3873
    %v4210 = vpack.c.b16 %v3882, %v3874
    %v4211 = vpack.c.b16 %v3883, %v3875
    %v4212 = vpack.c.b16 %v3884, %v3876
    %v4213 = vpack.c.b16 %v3885, %v3877
    %v4214 = vpack.c.b16 %v3886, %v3878
    %v4215 = vpack.c.b16 %v3887, %v3879
    %v4216 = vpack.c.b16 %v3896, %v3888
    %v4217 = vpack.c.b16 %v3897, %v3889
    %v4218 = vpack.c.b16 %v3898, %v3890
    %v4219 = vpack.c.b16 %v3899, %v3891
    %v4220 = vpack.c.b16 %v3900, %v3892
    %v4221 = vpack.c.b16 %v3901, %v3893
    %v4222 = vpack.c.b16 %v3902, %v3894
    %v4223 = vpack.c.b16 %v3903, %v3895
    %v4224 = vpack.c.b16 %v3912, %v3904
    %v4225 = vpack.c.b16 %v3913, %v3905
    %v4226 = vpack.c.b16 %v3914, %v3906
    %v4227 = vpack.c.b16 %v3915, %v3907
    %v4228 = vpack.c.b16 %v3916, %v3908
    %v4229 = vpack.c.b16 %v3917, %v3909
    %v4230 = vpack.c.b16 %v3918, %v3910
    %v4231 = vpack.c.b16 %v3919, %v3911
    %v4232 = vpack.c.b16 %v3928, %v3920
    %v4233 = vpack.c.b16 %v3929, %v3921
    %v4234 = vpack.c.b16 %v3930, %v3922
    %v4235 = vpack.c.b16 %v3931, %v3923
    %v4236 = vpack.c.b16 %v3932, %v3924
    %v4237 = vpack.c.b16 %v3933, %v3925
    %v4238 = vpack.c.b16 %v3934, %v3926
    %v4239 = vpack.c.b16 %v3935, %v3927
    %v4240 = vpack.c.b16 %v3944, %v3936
    %v4241 = vpack.c.b16 %v3945, %v3937
    %v4242 = vpack.c.b16 %v3946, %v3938
    %v4243 = vpack.c.b16 %v3947, %v3939
    %v4244 = vpack.c.b16 %v3948, %v3940
    %v4245 = vpack.c.b16 %v3949, %v3941
    %v4246 = vpack.c.b16 %v3950, %v3942
    %v4247 = vpack.c.b16 %v3951, %v3943
    %v4248 = vpack.c.b16 %v3960, %v3952
    %v4249 = vpack.c.b16 %v3961, %v3953
    %v4250 = vpack.c.b16 %v3962, %v3954
    %v4251 = vpack.c.b16 %v3963, %v3955
    %v4252 = vpack.c.b16 %v3964, %v3956
    %v4253 = vpack.c.b16 %v3965, %v3957
    %v4254 = vpack.c.b16 %v3966, %v3958
    %v4255 = vpack.c.b16 %v3967, %v3959
    %v4256 = vpack.c.b16 %v3976, %v3968
    %v4257 = vpack.c.b16 %v3977, %v3969
    %v4258 = vpack.c.b16 %v3978, %v3970
    %v4259 = vpack.c.b16 %v3979, %v3971
    %v4260 = vpack.c.b16 %v3980, %v3972
    %v4261 = vpack.c.b16 %v3981, %v3973
    %v4262 = vpack.c.b16 %v3982, %v3974
    %v4263 = vpack.c.b16 %v3983, %v3975
    %v4264 = vpack.c.b16 %v3992, %v3984
    %v4265 = vpack.c.b16 %v3993, %v3985
    %v4266 = vpack.c.b16 %v3994, %v3986
    %v4267 = vpack.c.b16 %v3995, %v3987
    %v4268 = vpack.c.b16 %v3996, %v3988
    %v4269 = vpack.c.b16 %v3997, %v3989
    %v4270 = vpack.c.b16 %v3998, %v3990
    %v4271 = vpack.c.b16 %v3999, %v3991
    %v4272 = vpack.c.b16 %v4008, %v4000
    %v4273 = vpack.c.b16 %v4009, %v4001
    %v4274 = vpack.c.b16 %v4010, %v4002
    %v4275 = vpack.c.b16 %v4011, %v4003
    %v4276 = vpack.c.b16 %v4012, %v4004
    %v4277 = vpack.c.b16 %v4013, %v4005
    %v4278 = vpack.c.b16 %v4014, %v4006
    %v4279 = vpack.c.b16 %v4015, %v4007
    %v4280 = vpack.c.b16 %v4024, %v4016
    %v4281 = vpack.c.b16 %v4025, %v4017
    %v4282 = vpack.c.b16 %v4026, %v4018
    %v4283 = vpack.c.b16 %v4027, %v4019
    %v4284 = vpack.c.b16 %v4028, %v4020
    %v4285 = vpack.c.b16 %v4029, %v4021
    %v4286 = vpack.c.b16 %v4030, %v4022
    %v4287 = vpack.c.b16 %v4031, %v4023
    %4544 = vmatprep.subr.bf16.mxu0 %v4033
    %4545 = vmatpush1.bf16.msra.mxu0 %v4032
    %4546 = vmatprep.subr.bf16.mxu0 %v4041
    %4547 = vmatpush1.bf16.msra.mxu0 %v4040
    %4548 = vmatprep.subr.bf16.mxu0 %v4049
    %4549 = vmatpush1.bf16.msra.mxu0 %v4048
    %4550 = vmatprep.subr.bf16.mxu0 %v4057
    %4551 = vmatpush1.bf16.msra.mxu0 %v4056
    %4552 = vmatprep.subr.bf16.mxu0 %v4065
    %4553 = vmatpush1.bf16.msra.mxu0 %v4064
    %4554 = vmatprep.subr.bf16.mxu0 %v4073
    %4555 = vmatpush1.bf16.msra.mxu0 %v4072
    %4556 = vmatprep.subr.bf16.mxu0 %v4081
    %4557 = vmatpush1.bf16.msra.mxu0 %v4080
    %4558 = vmatprep.subr.bf16.mxu0 %v4089
    %4559 = vmatpush1.bf16.msra.mxu0 %v4088
    %4560 = vmatprep.subr.bf16.mxu0 %v4097
    %4561 = vmatpush1.bf16.msra.mxu0 %v4096
    %4562 = vmatprep.subr.bf16.mxu0 %v4105
    %4563 = vmatpush1.bf16.msra.mxu0 %v4104
    %4564 = vmatprep.subr.bf16.mxu0 %v4113
    %4565 = vmatpush1.bf16.msra.mxu0 %v4112
    %4566 = vmatprep.subr.bf16.mxu0 %v4121
    %4567 = vmatpush1.bf16.msra.mxu0 %v4120
    %4568 = vmatprep.subr.bf16.mxu0 %v4129
    %4569 = vmatpush1.bf16.msra.mxu0 %v4128
    %4570 = vmatprep.subr.bf16.mxu0 %v4137
    %4571 = vmatpush1.bf16.msra.mxu0 %v4136
    %4572 = vmatprep.subr.bf16.mxu0 %v4145
    %4573 = vmatpush1.bf16.msra.mxu0 %v4144
    %4574 = vmatprep.subr.bf16.mxu0 %v4153
    %4575 = vmatpush1.bf16.msra.mxu0 %v4152
    %4576 = vmatprep.mubr.bf16.mxu0 %v3216
    %4577 = vmatmul.mubr.bf16.gmra.mrb[0].mxu0 %v3215
    %v4578 = vpop.f32.mrb[0].mxu0
    %v4579 = vadd.f32 %v3227, %v4578
    %v4580 = vpop.f32.mrb[0].mxu0
    %v4581 = vadd.f32 %v3231, %v4580
    %v4582 = vpop.f32.mrb[0].mxu0
    %v4583 = vadd.f32 %v3227, %v4582
    %v4584 = vpop.f32.mrb[0].mxu0
    %v4585 = vadd.f32 %v3231, %v4584
    %4586 = vmatprep.mubr.bf16.mxu0 %v3220
    %4587 = vmatmul.mubr.bf16.gmra.mrb[0].mxu0 %v3219
    %v4588 = vpop.f32.mrb[0].mxu0
    %v4589 = vadd.f32 %v3227, %v4588
    %v4590 = vpop.f32.mrb[0].mxu0
    %v4591 = vadd.f32 %v3231, %v4590
    %v4592 = vpop.f32.mrb[0].mxu0
    %v4593 = vpop.f32.mrb[0].mxu0
    %4594 = vdwg.mxu0
    %4595 = vmatprep.subr.bf16.mxu0 %v4161
    %4596 = vmatpush1.bf16.msra.mxu0 %v4160
    %4597 = vmatprep.subr.bf16.mxu0 %v4169
    %4598 = vmatpush1.bf16.msra.mxu0 %v4168
    %4599 = vmatprep.subr.bf16.mxu0 %v4177
    %4600 = vmatpush1.bf16.msra.mxu0 %v4176
    %4601 = vmatprep.subr.bf16.mxu0 %v4185
    %4602 = vmatpush1.bf16.msra.mxu0 %v4184
    %4603 = vmatprep.subr.bf16.mxu0 %v4193
    %4604 = vmatpush1.bf16.msra.mxu0 %v4192
    %4605 = vmatprep.subr.bf16.mxu0 %v4201
    %4606 = vmatpush1.bf16.msra.mxu0 %v4200
    %4607 = vmatprep.subr.bf16.mxu0 %v4209
    %4608 = vmatpush1.bf16.msra.mxu0 %v4208
    %4609 = vmatprep.subr.bf16.mxu0 %v4217
    %4610 = vmatpush1.bf16.msra.mxu0 %v4216
    %4611 = vmatprep.subr.bf16.mxu0 %v4225
    %4612 = vmatpush1.bf16.msra.mxu0 %v4224
    %4613 = vmatprep.subr.bf16.mxu0 %v4233
    %4614 = vmatpush1.bf16.msra.mxu0 %v4232
    %4615 = vmatprep.subr.bf16.mxu0 %v4241
    %4616 = vmatpush1.bf16.msra.mxu0 %v4240
    %4617 = vmatprep.subr.bf16.mxu0 %v4249
    %4618 = vmatpush1.bf16.msra.mxu0 %v4248
    %4619 = vmatprep.subr.bf16.mxu0 %v4257
    %4620 = vmatpush1.bf16.msra.mxu0 %v4256
    %4621 = vmatprep.subr.bf16.mxu0 %v4265
    %4622 = vmatpush1.bf16.msra.mxu0 %v4264
    %4623 = vmatprep.subr.bf16.mxu0 %v4273
    %4624 = vmatpush1.bf16.msra.mxu0 %v4272
    %4625 = vmatprep.subr.bf16.mxu0 %v4281
    %4626 = vmatpush1.bf16.msra.mxu0 %v4280
    %4627 = vmatprep.mubr.bf16.mxu0 %v3218
    %4628 = vmatmul.mubr.bf16.gmra.mrb[0].mxu0 %v3217
    %v4629 = vpop.f32.mrb[0].mxu0
    %v4630 = vadd.f32 %v4579, %v4629
    %v4631 = vpop.f32.mrb[0].mxu0
    %v4632 = vadd.f32 %v4581, %v4631
    %v4633 = vpop.f32.mrb[0].mxu0
    %v4634 = vadd.f32 %v4583, %v4633
    %v4635 = vpop.f32.mrb[0].mxu0
    %v4636 = vadd.f32 %v4585, %v4635
    %4637 = vmatprep.mubr.bf16.mxu0 %v3222
    %4638 = vmatmul.mubr.bf16.gmra.mrb[0].mxu0 %v3221
    %v4639 = vpop.f32.mrb[0].mxu0
    %v4640 = vadd.f32 %v4589, %v4639
    %v4641 = vpop.f32.mrb[0].mxu0
    %v4642 = vadd.f32 %v4591, %v4641
    %v4643 = vpop.f32.mrb[0].mxu0
    %v4644 = vpop.f32.mrb[0].mxu0
    %4645 = vdwg.mxu0
    %4646 = vmatprep.subr.bf16.mxu0 %v4035
    %4647 = vmatpush1.bf16.msra.mxu0 %v4034
    %4648 = vmatprep.subr.bf16.mxu0 %v4043
    %4649 = vmatpush1.bf16.msra.mxu0 %v4042
    %4650 = vmatprep.subr.bf16.mxu0 %v4051
    %4651 = vmatpush1.bf16.msra.mxu0 %v4050
    %4652 = vmatprep.subr.bf16.mxu0 %v4059
    %4653 = vmatpush1.bf16.msra.mxu0 %v4058
    %4654 = vmatprep.subr.bf16.mxu0 %v4067
    %4655 = vmatpush1.bf16.msra.mxu0 %v4066
    %4656 = vmatprep.subr.bf16.mxu0 %v4075
    %4657 = vmatpush1.bf16.msra.mxu0 %v4074
    %4658 = vmatprep.subr.bf16.mxu0 %v4083
    %4659 = vmatpush1.bf16.msra.mxu0 %v4082
    %4660 = vmatprep.subr.bf16.mxu0 %v4091
    %4661 = vmatpush1.bf16.msra.mxu0 %v4090
    %4662 = vmatprep.subr.bf16.mxu0 %v4099
    %4663 = vmatpush1.bf16.msra.mxu0 %v4098
    %4664 = vmatprep.subr.bf16.mxu0 %v4107
    %4665 = vmatpush1.bf16.msra.mxu0 %v4106
    %4666 = vmatprep.subr.bf16.mxu0 %v4115
    %4667 = vmatpush1.bf16.msra.mxu0 %v4114
    %4668 = vmatprep.subr.bf16.mxu0 %v4123
    %4669 = vmatpush1.bf16.msra.mxu0 %v4122
    %4670 = vmatprep.subr.bf16.mxu0 %v4131
    %4671 = vmatpush1.bf16.msra.mxu0 %v4130
    %4672 = vmatprep.subr.bf16.mxu0 %v4139
    %4673 = vmatpush1.bf16.msra.mxu0 %v4138
    %4674 = vmatprep.subr.bf16.mxu0 %v4147
    %4675 = vmatpush1.bf16.msra.mxu0 %v4146
    %4676 = vmatprep.subr.bf16.mxu0 %v4155
    %4677 = vmatpush1.bf16.msra.mxu0 %v4154
    %4678 = vmatprep.mubr.bf16.mxu0 %v3216
    %4679 = vmatmul.mubr.bf16.gmra.mrb[0].mxu0 %v3215
    %v4680 = vpop.f32.mrb[0].mxu0
    %v4681 = vadd.f32 %v3235, %v4680
    %v4682 = vpop.f32.mrb[0].mxu0
    %v4683 = vadd.f32 %v3239, %v4682
    %v4684 = vpop.f32.mrb[0].mxu0
    %v4685 = vadd.f32 %v3235, %v4684
    %v4686 = vpop.f32.mrb[0].mxu0
    %v4687 = vadd.f32 %v3239, %v4686
    %4688 = vmatprep.mubr.bf16.mxu0 %v3220
    %4689 = vmatmul.mubr.bf16.gmra.mrb[0].mxu0 %v3219
    %v4690 = vpop.f32.mrb[0].mxu0
    %v4691 = vadd.f32 %v3235, %v4690
    %v4692 = vpop.f32.mrb[0].mxu0
    %v4693 = vadd.f32 %v3239, %v4692
    %v4694 = vpop.f32.mrb[0].mxu0
    %v4695 = vpop.f32.mrb[0].mxu0
    %4696 = vdwg.mxu0
    %4697 = vmatprep.subr.bf16.mxu0 %v4163
    %4698 = vmatpush1.bf16.msra.mxu0 %v4162
    %4699 = vmatprep.subr.bf16.mxu0 %v4171
    %4700 = vmatpush1.bf16.msra.mxu0 %v4170
    %4701 = vmatprep.subr.bf16.mxu0 %v4179
    %4702 = vmatpush1.bf16.msra.mxu0 %v4178
    %4703 = vmatprep.subr.bf16.mxu0 %v4187
    %4704 = vmatpush1.bf16.msra.mxu0 %v4186
    %4705 = vmatprep.subr.bf16.mxu0 %v4195
    %4706 = vmatpush1.bf16.msra.mxu0 %v4194
    %4707 = vmatprep.subr.bf16.mxu0 %v4203
    %4708 = vmatpush1.bf16.msra.mxu0 %v4202
    %4709 = vmatprep.subr.bf16.mxu0 %v4211
    %4710 = vmatpush1.bf16.msra.mxu0 %v4210
    %4711 = vmatprep.subr.bf16.mxu0 %v4219
    %4712 = vmatpush1.bf16.msra.mxu0 %v4218
    %4713 = vmatprep.subr.bf16.mxu0 %v4227
    %4714 = vmatpush1.bf16.msra.mxu0 %v4226
    %4715 = vmatprep.subr.bf16.mxu0 %v4235
    %4716 = vmatpush1.bf16.msra.mxu0 %v4234
    %4717 = vmatprep.subr.bf16.mxu0 %v4243
    %4718 = vmatpush1.bf16.msra.mxu0 %v4242
    %4719 = vmatprep.subr.bf16.mxu0 %v4251
    %4720 = vmatpush1.bf16.msra.mxu0 %v4250
    %4721 = vmatprep.subr.bf16.mxu0 %v4259
    %4722 = vmatpush1.bf16.msra.mxu0 %v4258
    %4723 = vmatprep.subr.bf16.mxu0 %v4267
    %4724 = vmatpush1.bf16.msra.mxu0 %v4266
    %4725 = vmatprep.subr.bf16.mxu0 %v4275
    %4726 = vmatpush1.bf16.msra.mxu0 %v4274
    %4727 = vmatprep.subr.bf16.mxu0 %v4283
    %4728 = vmatpush1.bf16.msra.mxu0 %v4282
    %4729 = vmatprep.mubr.bf16.mxu0 %v3218
    %4730 = vmatmul.mubr.bf16.gmra.mrb[0].mxu0 %v3217
    %v4731 = vpop.f32.mrb[0].mxu0
    %v4732 = vadd.f32 %v4681, %v4731
    %v4733 = vpop.f32.mrb[0].mxu0
    %v4734 = vadd.f32 %v4683, %v4733
    %v4735 = vpop.f32.mrb[0].mxu0
    %v4736 = vadd.f32 %v4685, %v4735
    %v4737 = vpop.f32.mrb[0].mxu0
    %v4738 = vadd.f32 %v4687, %v4737
    %4739 = vmatprep.mubr.bf16.mxu0 %v3222
    %4740 = vmatmul.mubr.bf16.gmra.mrb[0].mxu0 %v3221
    %v4741 = vpop.f32.mrb[0].mxu0
    %v4742 = vadd.f32 %v4691, %v4741
    %v4743 = vpop.f32.mrb[0].mxu0
    %v4744 = vadd.f32 %v4693, %v4743
    %v4745 = vpop.f32.mrb[0].mxu0
    %v4746 = vpop.f32.mrb[0].mxu0
    %4747 = vdwg.mxu0
    %4748 = vmatprep.subr.bf16.mxu0 %v4037
    %4749 = vmatpush1.bf16.msra.mxu0 %v4036
    %4750 = vmatprep.subr.bf16.mxu0 %v4045
    %4751 = vmatpush1.bf16.msra.mxu0 %v4044
    %4752 = vmatprep.subr.bf16.mxu0 %v4053
    %4753 = vmatpush1.bf16.msra.mxu0 %v4052
    %4754 = vmatprep.subr.bf16.mxu0 %v4061
    %4755 = vmatpush1.bf16.msra.mxu0 %v4060
    %4756 = vmatprep.subr.bf16.mxu0 %v4069
    %4757 = vmatpush1.bf16.msra.mxu0 %v4068
    %4758 = vmatprep.subr.bf16.mxu0 %v4077
    %4759 = vmatpush1.bf16.msra.mxu0 %v4076
    %4760 = vmatprep.subr.bf16.mxu0 %v4085
    %4761 = vmatpush1.bf16.msra.mxu0 %v4084
    %4762 = vmatprep.subr.bf16.mxu0 %v4093
    %4763 = vmatpush1.bf16.msra.mxu0 %v4092
    %4764 = vmatprep.subr.bf16.mxu0 %v4101
    %4765 = vmatpush1.bf16.msra.mxu0 %v4100
    %4766 = vmatprep.subr.bf16.mxu0 %v4109
    %4767 = vmatpush1.bf16.msra.mxu0 %v4108
    %4768 = vmatprep.subr.bf16.mxu0 %v4117
    %4769 = vmatpush1.bf16.msra.mxu0 %v4116
    %4770 = vmatprep.subr.bf16.mxu0 %v4125
    %4771 = vmatpush1.bf16.msra.mxu0 %v4124
    %4772 = vmatprep.subr.bf16.mxu0 %v4133
    %4773 = vmatpush1.bf16.msra.mxu0 %v4132
    %4774 = vmatprep.subr.bf16.mxu0 %v4141
    %4775 = vmatpush1.bf16.msra.mxu0 %v4140
    %4776 = vmatprep.subr.bf16.mxu0 %v4149
    %4777 = vmatpush1.bf16.msra.mxu0 %v4148
    %4778 = vmatprep.subr.bf16.mxu0 %v4157
    %4779 = vmatpush1.bf16.msra.mxu0 %v4156
    %4780 = vmatprep.mubr.bf16.mxu0 %v3216
    %4781 = vmatmul.mubr.bf16.gmra.mrb[0].mxu0 %v3215
    %v4782 = vpop.f32.mrb[0].mxu0
    %v4783 = vadd.f32 %v3243, %v4782
    %v4784 = vpop.f32.mrb[0].mxu0
    %v4785 = vadd.f32 %v3247, %v4784
    %v4786 = vpop.f32.mrb[0].mxu0
    %v4787 = vadd.f32 %v3243, %v4786
    %v4788 = vpop.f32.mrb[0].mxu0
    %v4789 = vadd.f32 %v3247, %v4788
    %4790 = vmatprep.mubr.bf16.mxu0 %v3220
    %4791 = vmatmul.mubr.bf16.gmra.mrb[0].mxu0 %v3219
    %v4792 = vpop.f32.mrb[0].mxu0
    %v4793 = vadd.f32 %v3243, %v4792
    %v4794 = vpop.f32.mrb[0].mxu0
    %v4795 = vadd.f32 %v3247, %v4794
    %v4796 = vpop.f32.mrb[0].mxu0
    %v4797 = vpop.f32.mrb[0].mxu0
    %4798 = vdwg.mxu0
    %4799 = vmatprep.subr.bf16.mxu0 %v4165
    %4800 = vmatpush1.bf16.msra.mxu0 %v4164
    %4801 = vmatprep.subr.bf16.mxu0 %v4173
    %4802 = vmatpush1.bf16.msra.mxu0 %v4172
    %4803 = vmatprep.subr.bf16.mxu0 %v4181
    %4804 = vmatpush1.bf16.msra.mxu0 %v4180
    %4805 = vmatprep.subr.bf16.mxu0 %v4189
    %4806 = vmatpush1.bf16.msra.mxu0 %v4188
    %4807 = vmatprep.subr.bf16.mxu0 %v4197
    %4808 = vmatpush1.bf16.msra.mxu0 %v4196
    %4809 = vmatprep.subr.bf16.mxu0 %v4205
    %4810 = vmatpush1.bf16.msra.mxu0 %v4204
    %4811 = vmatprep.subr.bf16.mxu0 %v4213
    %4812 = vmatpush1.bf16.msra.mxu0 %v4212
    %4813 = vmatprep.subr.bf16.mxu0 %v4221
    %4814 = vmatpush1.bf16.msra.mxu0 %v4220
    %4815 = vmatprep.subr.bf16.mxu0 %v4229
    %4816 = vmatpush1.bf16.msra.mxu0 %v4228
    %4817 = vmatprep.subr.bf16.mxu0 %v4237
    %4818 = vmatpush1.bf16.msra.mxu0 %v4236
    %4819 = vmatprep.subr.bf16.mxu0 %v4245
    %4820 = vmatpush1.bf16.msra.mxu0 %v4244
    %4821 = vmatprep.subr.bf16.mxu0 %v4253
    %4822 = vmatpush1.bf16.msra.mxu0 %v4252
    %4823 = vmatprep.subr.bf16.mxu0 %v4261
    %4824 = vmatpush1.bf16.msra.mxu0 %v4260
    %4825 = vmatprep.subr.bf16.mxu0 %v4269
    %4826 = vmatpush1.bf16.msra.mxu0 %v4268
    %4827 = vmatprep.subr.bf16.mxu0 %v4277
    %4828 = vmatpush1.bf16.msra.mxu0 %v4276
    %4829 = vmatprep.subr.bf16.mxu0 %v4285
    %4830 = vmatpush1.bf16.msra.mxu0 %v4284
    %4831 = vmatprep.mubr.bf16.mxu0 %v3218
    %4832 = vmatmul.mubr.bf16.gmra.mrb[0].mxu0 %v3217
    %v4833 = vpop.f32.mrb[0].mxu0
    %v4834 = vadd.f32 %v4783, %v4833
    %v4835 = vpop.f32.mrb[0].mxu0
    %v4836 = vadd.f32 %v4785, %v4835
    %v4837 = vpop.f32.mrb[0].mxu0
    %v4838 = vadd.f32 %v4787, %v4837
    %v4839 = vpop.f32.mrb[0].mxu0
    %v4840 = vadd.f32 %v4789, %v4839
    %4841 = vmatprep.mubr.bf16.mxu0 %v3222
    %4842 = vmatmul.mubr.bf16.gmra.mrb[0].mxu0 %v3221
    %v4843 = vpop.f32.mrb[0].mxu0
    %v4844 = vadd.f32 %v4793, %v4843
    %v4845 = vpop.f32.mrb[0].mxu0
    %v4846 = vadd.f32 %v4795, %v4845
    %v4847 = vpop.f32.mrb[0].mxu0
    %v4848 = vpop.f32.mrb[0].mxu0
    %4849 = vdwg.mxu0
    %4850 = vmatprep.subr.bf16.mxu0 %v4039
    %4851 = vmatpush1.bf16.msra.mxu0 %v4038
    %4852 = vmatprep.subr.bf16.mxu0 %v4047
    %4853 = vmatpush1.bf16.msra.mxu0 %v4046
    %4854 = vmatprep.subr.bf16.mxu0 %v4055
    %4855 = vmatpush1.bf16.msra.mxu0 %v4054
    %4856 = vmatprep.subr.bf16.mxu0 %v4063
    %4857 = vmatpush1.bf16.msra.mxu0 %v4062
    %4858 = vmatprep.subr.bf16.mxu0 %v4071
    %4859 = vmatpush1.bf16.msra.mxu0 %v4070
    %4860 = vmatprep.subr.bf16.mxu0 %v4079
    %4861 = vmatpush1.bf16.msra.mxu0 %v4078
    %4862 = vmatprep.subr.bf16.mxu0 %v4087
    %4863 = vmatpush1.bf16.msra.mxu0 %v4086
    %4864 = vmatprep.subr.bf16.mxu0 %v4095
    %4865 = vmatpush1.bf16.msra.mxu0 %v4094
    %4866 = vmatprep.subr.bf16.mxu0 %v4103
    %4867 = vmatpush1.bf16.msra.mxu0 %v4102
    %4868 = vmatprep.subr.bf16.mxu0 %v4111
    %4869 = vmatpush1.bf16.msra.mxu0 %v4110
    %4870 = vmatprep.subr.bf16.mxu0 %v4119
    %4871 = vmatpush1.bf16.msra.mxu0 %v4118
    %4872 = vmatprep.subr.bf16.mxu0 %v4127
    %4873 = vmatpush1.bf16.msra.mxu0 %v4126
    %4874 = vmatprep.subr.bf16.mxu0 %v4135
    %4875 = vmatpush1.bf16.msra.mxu0 %v4134
    %4876 = vmatprep.subr.bf16.mxu0 %v4143
    %4877 = vmatpush1.bf16.msra.mxu0 %v4142
    %4878 = vmatprep.subr.bf16.mxu0 %v4151
    %4879 = vmatpush1.bf16.msra.mxu0 %v4150
    %4880 = vmatprep.subr.bf16.mxu0 %v4159
    %4881 = vmatpush1.bf16.msra.mxu0 %v4158
    %4882 = vmatprep.mubr.bf16.mxu0 %v3216
    %4883 = vmatmul.mubr.bf16.gmra.mrb[0].mxu0 %v3215
    %v4884 = vpop.f32.mrb[0].mxu0
    %v4885 = vadd.f32 %v3251, %v4884
    %v4886 = vpop.f32.mrb[0].mxu0
    %v4887 = vadd.f32 %v3255, %v4886
    %v4888 = vpop.f32.mrb[0].mxu0
    %v4889 = vadd.f32 %v3251, %v4888
    %v4890 = vpop.f32.mrb[0].mxu0
    %v4891 = vadd.f32 %v3255, %v4890
    %4892 = vmatprep.mubr.bf16.mxu0 %v3220
    %4893 = vmatmul.mubr.bf16.gmra.mrb[0].mxu0 %v3219
    %v4894 = vpop.f32.mrb[0].mxu0
    %v4895 = vadd.f32 %v3251, %v4894
    %v4896 = vpop.f32.mrb[0].mxu0
    %v4897 = vadd.f32 %v3255, %v4896
    %v4898 = vpop.f32.mrb[0].mxu0
    %v4899 = vpop.f32.mrb[0].mxu0
    %4900 = vdwg.mxu0
    %4901 = vmatprep.subr.bf16.mxu0 %v4167
    %4902 = vmatpush1.bf16.msra.mxu0 %v4166
    %4903 = vmatprep.subr.bf16.mxu0 %v4175
    %4904 = vmatpush1.bf16.msra.mxu0 %v4174
    %4905 = vmatprep.subr.bf16.mxu0 %v4183
    %4906 = vmatpush1.bf16.msra.mxu0 %v4182
    %4907 = vmatprep.subr.bf16.mxu0 %v4191
    %4908 = vmatpush1.bf16.msra.mxu0 %v4190
    %4909 = vmatprep.subr.bf16.mxu0 %v4199
    %4910 = vmatpush1.bf16.msra.mxu0 %v4198
    %4911 = vmatprep.subr.bf16.mxu0 %v4207
    %4912 = vmatpush1.bf16.msra.mxu0 %v4206
    %4913 = vmatprep.subr.bf16.mxu0 %v4215
    %4914 = vmatpush1.bf16.msra.mxu0 %v4214
    %4915 = vmatprep.subr.bf16.mxu0 %v4223
    %4916 = vmatpush1.bf16.msra.mxu0 %v4222
    %4917 = vmatprep.subr.bf16.mxu0 %v4231
    %4918 = vmatpush1.bf16.msra.mxu0 %v4230
    %4919 = vmatprep.subr.bf16.mxu0 %v4239
    %4920 = vmatpush1.bf16.msra.mxu0 %v4238
    %4921 = vmatprep.subr.bf16.mxu0 %v4247
    %4922 = vmatpush1.bf16.msra.mxu0 %v4246
    %4923 = vmatprep.subr.bf16.mxu0 %v4255
    %4924 = vmatpush1.bf16.msra.mxu0 %v4254
    %4925 = vmatprep.subr.bf16.mxu0 %v4263
    %4926 = vmatpush1.bf16.msra.mxu0 %v4262
    %4927 = vmatprep.subr.bf16.mxu0 %v4271
    %4928 = vmatpush1.bf16.msra.mxu0 %v4270
    %4929 = vmatprep.subr.bf16.mxu0 %v4279
    %4930 = vmatpush1.bf16.msra.mxu0 %v4278
    %4931 = vmatprep.subr.bf16.mxu0 %v4287
    %4932 = vmatpush1.bf16.msra.mxu0 %v4286
    %4933 = vmatprep.mubr.bf16.mxu0 %v3218
    %4934 = vmatmul.mubr.bf16.gmra.mrb[0].mxu0 %v3217
    %v4935 = vpop.f32.mrb[0].mxu0
    %v4936 = vadd.f32 %v4885, %v4935
    %v4937 = vpop.f32.mrb[0].mxu0
    %v4938 = vadd.f32 %v4887, %v4937
    %v4939 = vpop.f32.mrb[0].mxu0
    %v4940 = vadd.f32 %v4889, %v4939
    %v4941 = vpop.f32.mrb[0].mxu0
    %v4942 = vadd.f32 %v4891, %v4941
    %4943 = vmatprep.mubr.bf16.mxu0 %v3222
    %4944 = vmatmul.mubr.bf16.gmra.mrb[0].mxu0 %v3221
    %v4945 = vpop.f32.mrb[0].mxu0
    %v4946 = vadd.f32 %v4895, %v4945
    %v4947 = vpop.f32.mrb[0].mxu0
    %v4948 = vadd.f32 %v4897, %v4947
    %v4949 = vpop.f32.mrb[0].mxu0
    %v4950 = vpop.f32.mrb[0].mxu0
    %4951 = vdwg.mxu0
    %v4952 = vmax.f32 %v4630, 0.0
    %v4953 = vmax.f32 %v4632, 0.0
    %v4954 = vmax.f32 %v4732, 0.0
    %v4955 = vmax.f32 %v4734, 0.0
    %v4956 = vmax.f32 %v4834, 0.0
    %v4957 = vmax.f32 %v4836, 0.0
    %v4958 = vmax.f32 %v4936, 0.0
    %v4959 = vmax.f32 %v4938, 0.0
    %v4960 = vmax.f32 %v4634, 0.0
    %v4961 = vmax.f32 %v4636, 0.0
    %v4962 = vmax.f32 %v4736, 0.0
    %v4963 = vmax.f32 %v4738, 0.0
    %v4964 = vmax.f32 %v4838, 0.0
    %v4965 = vmax.f32 %v4840, 0.0
    %v4966 = vmax.f32 %v4940, 0.0
    %v4967 = vmax.f32 %v4942, 0.0
    %v4968 = vmax.f32 %v4640, 0.0
    %v4969 = vmax.f32 %v4642, 0.0
    %v4970 = vmax.f32 %v4742, 0.0
    %v4971 = vmax.f32 %v4744, 0.0
    %v4972 = vmax.f32 %v4844, 0.0
    %v4973 = vmax.f32 %v4846, 0.0
    %v4974 = vmax.f32 %v4946, 0.0
    %v4975 = vmax.f32 %v4948, 0.0
    %v4988 = vcombine.low %v4952, %v4953
    %v4989 = vcombine.high %v4952, %v4953
    %v4990 = vcombine.low %v4954, %v4955
    %v4991 = vcombine.high %v4954, %v4955
    %v4993 = vunpack.c.l.s4 1966171168
    %v4994 = vunpack.c.0.s8 %v4993
    %v4995 = vlaneseq
    %v4996 = vshrl.u32 %v4995, 7
    %v4997 = vsub.s32 %v4994, %v4996
    %v4998 = vrot.slane %v4988, %v4997
    %v5000 = vunpack.c.l.s4 1966171168
    %v5001 = vunpack.c.0.s8 %v5000
    %v5002 = vlaneseq
    %v5003 = vshrl.u32 %v5002, 7
    %v5004 = vsub.s32 %v5001, %v5003
    %v5005 = vrot.slane %v4989, %v5004
    %v5007 = vunpack.c.l.s4 1966171168
    %v5008 = vunpack.c.0.s8 %v5007
    %v5009 = vlaneseq
    %v5010 = vshrl.u32 %v5009, 7
    %v5011 = vsub.s32 %v5008, %v5010
    %v5012 = vrot.slane %v4990, %v5011
    %v5014 = vunpack.c.l.s4 1966171168
    %v5015 = vunpack.c.0.s8 %v5014
    %v5016 = vlaneseq
    %v5017 = vshrl.u32 %v5016, 7
    %v5018 = vsub.s32 %v5015, %v5017
    %v5019 = vrot.slane %v4991, %v5018
    %v5020 = vcombine.low %v4998, %v5012
    %v5021 = vcombine.high %v4998, %v5012
    %v5022 = vcombine.low %v5005, %v5019
    %v5023 = vcombine.high %v5005, %v5019
    %v5025 = vunpack.c.l.s4 1966171168
    %v5026 = vunpack.c.0.s8 %v5025
    %v5027 = vlaneseq
    %v5028 = vshrl.u32 %v5027, 7
    %v5029 = vsub.s32 %v5026, %v5028
    %v5030 = vrot.slane %v5020, %v5029
    %v5032 = vunpack.c.l.s4 1966171168
    %v5033 = vunpack.c.0.s8 %v5032
    %v5034 = vlaneseq
    %v5035 = vshrl.u32 %v5034, 7
    %v5036 = vsub.s32 %v5033, %v5035
    %v5037 = vrot.slane %v5022, %v5036
    %v5039 = vunpack.c.l.s4 1966171168
    %v5040 = vunpack.c.0.s8 %v5039
    %v5041 = vlaneseq
    %v5042 = vshrl.u32 %v5041, 7
    %v5043 = vsub.s32 %v5040, %v5042
    %v5044 = vrot.slane %v5021, %v5043
    %v5046 = vunpack.c.l.s4 1966171168
    %v5047 = vunpack.c.0.s8 %v5046
    %v5048 = vlaneseq
    %v5049 = vshrl.u32 %v5048, 7
    %v5050 = vsub.s32 %v5047, %v5049
    %v5051 = vrot.slane %v5023, %v5050
    %v5052 = vcombine.high %v5030, %v5030
    %v5053 = vcombine.high %v5037, %v5037
    %v5054 = vcombine.high %v5044, %v5044
    %v5055 = vcombine.high %v5051, %v5051
    %v5056 = vcombine.low %v4960, %v4961
    %v5057 = vcombine.high %v4960, %v4961
    %v5058 = vcombine.low %v4962, %v4963
    %v5059 = vcombine.high %v4962, %v4963
    %v5061 = vunpack.c.l.s4 1966171168
    %v5062 = vunpack.c.0.s8 %v5061
    %v5063 = vlaneseq
    %v5064 = vshrl.u32 %v5063, 7
    %v5065 = vsub.s32 %v5062, %v5064
    %v5066 = vrot.slane %v5056, %v5065
    %v5068 = vunpack.c.l.s4 1966171168
    %v5069 = vunpack.c.0.s8 %v5068
    %v5070 = vlaneseq
    %v5071 = vshrl.u32 %v5070, 7
    %v5072 = vsub.s32 %v5069, %v5071
    %v5073 = vrot.slane %v5057, %v5072
    %v5075 = vunpack.c.l.s4 1966171168
    %v5076 = vunpack.c.0.s8 %v5075
    %v5077 = vlaneseq
    %v5078 = vshrl.u32 %v5077, 7
    %v5079 = vsub.s32 %v5076, %v5078
    %v5080 = vrot.slane %v5058, %v5079
    %v5082 = vunpack.c.l.s4 1966171168
    %v5083 = vunpack.c.0.s8 %v5082
    %v5084 = vlaneseq
    %v5085 = vshrl.u32 %v5084, 7
    %v5086 = vsub.s32 %v5083, %v5085
    %v5087 = vrot.slane %v5059, %v5086
    %v5088 = vcombine.low %v5066, %v5080
    %v5089 = vcombine.high %v5066, %v5080
    %v5090 = vcombine.low %v5073, %v5087
    %v5091 = vcombine.high %v5073, %v5087
    %v5093 = vunpack.c.l.s4 1966171168
    %v5094 = vunpack.c.0.s8 %v5093
    %v5095 = vlaneseq
    %v5096 = vshrl.u32 %v5095, 7
    %v5097 = vsub.s32 %v5094, %v5096
    %v5098 = vrot.slane %v5088, %v5097
    %v5100 = vunpack.c.l.s4 1966171168
    %v5101 = vunpack.c.0.s8 %v5100
    %v5102 = vlaneseq
    %v5103 = vshrl.u32 %v5102, 7
    %v5104 = vsub.s32 %v5101, %v5103
    %v5105 = vrot.slane %v5090, %v5104
    %v5107 = vunpack.c.l.s4 1966171168
    %v5108 = vunpack.c.0.s8 %v5107
    %v5109 = vlaneseq
    %v5110 = vshrl.u32 %v5109, 7
    %v5111 = vsub.s32 %v5108, %v5110
    %v5112 = vrot.slane %v5089, %v5111
    %v5114 = vunpack.c.l.s4 1966171168
    %v5115 = vunpack.c.0.s8 %v5114
    %v5116 = vlaneseq
    %v5117 = vshrl.u32 %v5116, 7
    %v5118 = vsub.s32 %v5115, %v5117
    %v5119 = vrot.slane %v5091, %v5118
    %v5120 = vcombine.high %v5098, %v5098
    %v5121 = vcombine.high %v5105, %v5105
    %v5122 = vcombine.high %v5112, %v5112
    %v5123 = vcombine.high %v5119, %v5119
    %v5124 = vcombine.low %v4968, %v4969
    %v5125 = vcombine.low %v4970, %v4971
    %v5127 = vunpack.c.l.s4 1966171168
    %v5128 = vunpack.c.0.s8 %v5127
    %v5129 = vlaneseq
    %v5130 = vshrl.u32 %v5129, 7
    %v5131 = vsub.s32 %v5128, %v5130
    %v5132 = vrot.slane %v5124, %v5131
    %v5134 = vunpack.c.l.s4 1966171168
    %v5135 = vunpack.c.0.s8 %v5134
    %v5136 = vlaneseq
    %v5137 = vshrl.u32 %v5136, 7
    %v5138 = vsub.s32 %v5135, %v5137
    %v5139 = vrot.slane %v5125, %v5138
    %v5140 = vcombine.low %v5132, %v5139
    %v5141 = vcombine.high %v5132, %v5139
    %v5143 = vunpack.c.l.s4 1966171168
    %v5144 = vunpack.c.0.s8 %v5143
    %v5145 = vlaneseq
    %v5146 = vshrl.u32 %v5145, 7
    %v5147 = vsub.s32 %v5144, %v5146
    %v5148 = vrot.slane %v5140, %v5147
    %v5150 = vunpack.c.l.s4 1966171168
    %v5151 = vunpack.c.0.s8 %v5150
    %v5152 = vlaneseq
    %v5153 = vshrl.u32 %v5152, 7
    %v5154 = vsub.s32 %v5151, %v5153
    %v5155 = vrot.slane %v5141, %v5154
    %v5156 = vlaneseq
    %v5157 = vshrl.u32 %v5156, 7
    %v5158 = vsub.s32 0, %v5157
    %v5159 = vrot.slane %v5030, %v5158
    %v5160 = vlaneseq
    %v5161 = vshrl.u32 %v5160, 7
    %v5162 = vsub.s32 1, %v5161
    %v5163 = vrot.slane %v5030, %v5162
    %v5164 = vlaneseq
    %v5165 = vshrl.u32 %v5164, 7
    %v5166 = vsub.s32 2, %v5165
    %v5167 = vrot.slane %v5030, %v5166
    %v5168 = vlaneseq
    %v5169 = vshrl.u32 %v5168, 7
    %v5170 = vsub.s32 3, %v5169
    %v5171 = vrot.slane %v5030, %v5170
    %v5172 = vlaneseq
    %v5173 = vshrl.u32 %v5172, 7
    %v5174 = vsub.s32 0, %v5173
    %v5175 = vrot.slane %v5044, %v5174
    %v5176 = vlaneseq
    %v5177 = vshrl.u32 %v5176, 7
    %v5178 = vsub.s32 1, %v5177
    %v5179 = vrot.slane %v5044, %v5178
    %v5180 = vlaneseq
    %v5181 = vshrl.u32 %v5180, 7
    %v5182 = vsub.s32 2, %v5181
    %v5183 = vrot.slane %v5044, %v5182
    %v5184 = vlaneseq
    %v5185 = vshrl.u32 %v5184, 7
    %v5186 = vsub.s32 3, %v5185
    %v5187 = vrot.slane %v5044, %v5186
    %v5188 = vlaneseq
    %v5189 = vshrl.u32 %v5188, 7
    %v5190 = vsub.s32 0, %v5189
    %v5191 = vrot.slane %v5052, %v5190
    %v5192 = vlaneseq
    %v5193 = vshrl.u32 %v5192, 7
    %v5194 = vsub.s32 1, %v5193
    %v5195 = vrot.slane %v5052, %v5194
    %v5196 = vlaneseq
    %v5197 = vshrl.u32 %v5196, 7
    %v5198 = vsub.s32 2, %v5197
    %v5199 = vrot.slane %v5052, %v5198
    %v5200 = vlaneseq
    %v5201 = vshrl.u32 %v5200, 7
    %v5202 = vsub.s32 3, %v5201
    %v5203 = vrot.slane %v5052, %v5202
    %v5204 = vlaneseq
    %v5205 = vshrl.u32 %v5204, 7
    %v5206 = vsub.s32 0, %v5205
    %v5207 = vrot.slane %v5054, %v5206
    %v5208 = vlaneseq
    %v5209 = vshrl.u32 %v5208, 7
    %v5210 = vsub.s32 1, %v5209
    %v5211 = vrot.slane %v5054, %v5210
    %v5212 = vlaneseq
    %v5213 = vshrl.u32 %v5212, 7
    %v5214 = vsub.s32 2, %v5213
    %v5215 = vrot.slane %v5054, %v5214
    %v5216 = vlaneseq
    %v5217 = vshrl.u32 %v5216, 7
    %v5218 = vsub.s32 3, %v5217
    %v5219 = vrot.slane %v5054, %v5218
    %v5220 = vlaneseq
    %v5221 = vshrl.u32 %v5220, 7
    %v5222 = vsub.s32 0, %v5221
    %v5223 = vrot.slane %v5037, %v5222
    %v5224 = vlaneseq
    %v5225 = vshrl.u32 %v5224, 7
    %v5226 = vsub.s32 1, %v5225
    %v5227 = vrot.slane %v5037, %v5226
    %v5228 = vlaneseq
    %v5229 = vshrl.u32 %v5228, 7
    %v5230 = vsub.s32 2, %v5229
    %v5231 = vrot.slane %v5037, %v5230
    %v5232 = vlaneseq
    %v5233 = vshrl.u32 %v5232, 7
    %v5234 = vsub.s32 3, %v5233
    %v5235 = vrot.slane %v5037, %v5234
    %v5236 = vlaneseq
    %v5237 = vshrl.u32 %v5236, 7
    %v5238 = vsub.s32 0, %v5237
    %v5239 = vrot.slane %v5051, %v5238
    %v5240 = vlaneseq
    %v5241 = vshrl.u32 %v5240, 7
    %v5242 = vsub.s32 1, %v5241
    %v5243 = vrot.slane %v5051, %v5242
    %v5244 = vlaneseq
    %v5245 = vshrl.u32 %v5244, 7
    %v5246 = vsub.s32 2, %v5245
    %v5247 = vrot.slane %v5051, %v5246
    %v5248 = vlaneseq
    %v5249 = vshrl.u32 %v5248, 7
    %v5250 = vsub.s32 3, %v5249
    %v5251 = vrot.slane %v5051, %v5250
    %v5252 = vlaneseq
    %v5253 = vshrl.u32 %v5252, 7
    %v5254 = vsub.s32 0, %v5253
    %v5255 = vrot.slane %v5053, %v5254
    %v5256 = vlaneseq
    %v5257 = vshrl.u32 %v5256, 7
    %v5258 = vsub.s32 1, %v5257
    %v5259 = vrot.slane %v5053, %v5258
    %v5260 = vlaneseq
    %v5261 = vshrl.u32 %v5260, 7
    %v5262 = vsub.s32 2, %v5261
    %v5263 = vrot.slane %v5053, %v5262
    %v5264 = vlaneseq
    %v5265 = vshrl.u32 %v5264, 7
    %v5266 = vsub.s32 3, %v5265
    %v5267 = vrot.slane %v5053, %v5266
    %v5268 = vlaneseq
    %v5269 = vshrl.u32 %v5268, 7
    %v5270 = vsub.s32 0, %v5269
    %v5271 = vrot.slane %v5055, %v5270
    %v5272 = vlaneseq
    %v5273 = vshrl.u32 %v5272, 7
    %v5274 = vsub.s32 1, %v5273
    %v5275 = vrot.slane %v5055, %v5274
    %v5276 = vlaneseq
    %v5277 = vshrl.u32 %v5276, 7
    %v5278 = vsub.s32 2, %v5277
    %v5279 = vrot.slane %v5055, %v5278
    %v5280 = vlaneseq
    %v5281 = vshrl.u32 %v5280, 7
    %v5282 = vsub.s32 3, %v5281
    %v5283 = vrot.slane %v5055, %v5282
    %v5284 = vlaneseq
    %v5285 = vshrl.u32 %v5284, 7
    %v5286 = vsub.s32 0, %v5285
    %v5287 = vrot.slane %v5098, %v5286
    %v5288 = vlaneseq
    %v5289 = vshrl.u32 %v5288, 7
    %v5290 = vsub.s32 1, %v5289
    %v5291 = vrot.slane %v5098, %v5290
    %v5292 = vlaneseq
    %v5293 = vshrl.u32 %v5292, 7
    %v5294 = vsub.s32 2, %v5293
    %v5295 = vrot.slane %v5098, %v5294
    %v5296 = vlaneseq
    %v5297 = vshrl.u32 %v5296, 7
    %v5298 = vsub.s32 3, %v5297
    %v5299 = vrot.slane %v5098, %v5298
    %v5300 = vlaneseq
    %v5301 = vshrl.u32 %v5300, 7
    %v5302 = vsub.s32 0, %v5301
    %v5303 = vrot.slane %v5112, %v5302
    %v5304 = vlaneseq
    %v5305 = vshrl.u32 %v5304, 7
    %v5306 = vsub.s32 1, %v5305
    %v5307 = vrot.slane %v5112, %v5306
    %v5308 = vlaneseq
    %v5309 = vshrl.u32 %v5308, 7
    %v5310 = vsub.s32 2, %v5309
    %v5311 = vrot.slane %v5112, %v5310
    %v5312 = vlaneseq
    %v5313 = vshrl.u32 %v5312, 7
    %v5314 = vsub.s32 3, %v5313
    %v5315 = vrot.slane %v5112, %v5314
    %v5316 = vlaneseq
    %v5317 = vshrl.u32 %v5316, 7
    %v5318 = vsub.s32 0, %v5317
    %v5319 = vrot.slane %v5120, %v5318
    %v5320 = vlaneseq
    %v5321 = vshrl.u32 %v5320, 7
    %v5322 = vsub.s32 1, %v5321
    %v5323 = vrot.slane %v5120, %v5322
    %v5324 = vlaneseq
    %v5325 = vshrl.u32 %v5324, 7
    %v5326 = vsub.s32 2, %v5325
    %v5327 = vrot.slane %v5120, %v5326
    %v5328 = vlaneseq
    %v5329 = vshrl.u32 %v5328, 7
    %v5330 = vsub.s32 3, %v5329
    %v5331 = vrot.slane %v5120, %v5330
    %v5332 = vlaneseq
    %v5333 = vshrl.u32 %v5332, 7
    %v5334 = vsub.s32 0, %v5333
    %v5335 = vrot.slane %v5122, %v5334
    %v5336 = vlaneseq
    %v5337 = vshrl.u32 %v5336, 7
    %v5338 = vsub.s32 1, %v5337
    %v5339 = vrot.slane %v5122, %v5338
    %v5340 = vlaneseq
    %v5341 = vshrl.u32 %v5340, 7
    %v5342 = vsub.s32 2, %v5341
    %v5343 = vrot.slane %v5122, %v5342
    %v5344 = vlaneseq
    %v5345 = vshrl.u32 %v5344, 7
    %v5346 = vsub.s32 3, %v5345
    %v5347 = vrot.slane %v5122, %v5346
    %v5348 = vlaneseq
    %v5349 = vshrl.u32 %v5348, 7
    %v5350 = vsub.s32 0, %v5349
    %v5351 = vrot.slane %v5105, %v5350
    %v5352 = vlaneseq
    %v5353 = vshrl.u32 %v5352, 7
    %v5354 = vsub.s32 1, %v5353
    %v5355 = vrot.slane %v5105, %v5354
    %v5356 = vlaneseq
    %v5357 = vshrl.u32 %v5356, 7
    %v5358 = vsub.s32 2, %v5357
    %v5359 = vrot.slane %v5105, %v5358
    %v5360 = vlaneseq
    %v5361 = vshrl.u32 %v5360, 7
    %v5362 = vsub.s32 3, %v5361
    %v5363 = vrot.slane %v5105, %v5362
    %v5364 = vlaneseq
    %v5365 = vshrl.u32 %v5364, 7
    %v5366 = vsub.s32 0, %v5365
    %v5367 = vrot.slane %v5119, %v5366
    %v5368 = vlaneseq
    %v5369 = vshrl.u32 %v5368, 7
    %v5370 = vsub.s32 1, %v5369
    %v5371 = vrot.slane %v5119, %v5370
    %v5372 = vlaneseq
    %v5373 = vshrl.u32 %v5372, 7
    %v5374 = vsub.s32 2, %v5373
    %v5375 = vrot.slane %v5119, %v5374
    %v5376 = vlaneseq
    %v5377 = vshrl.u32 %v5376, 7
    %v5378 = vsub.s32 3, %v5377
    %v5379 = vrot.slane %v5119, %v5378
    %v5380 = vlaneseq
    %v5381 = vshrl.u32 %v5380, 7
    %v5382 = vsub.s32 0, %v5381
    %v5383 = vrot.slane %v5121, %v5382
    %v5384 = vlaneseq
    %v5385 = vshrl.u32 %v5384, 7
    %v5386 = vsub.s32 1, %v5385
    %v5387 = vrot.slane %v5121, %v5386
    %v5388 = vlaneseq
    %v5389 = vshrl.u32 %v5388, 7
    %v5390 = vsub.s32 2, %v5389
    %v5391 = vrot.slane %v5121, %v5390
    %v5392 = vlaneseq
    %v5393 = vshrl.u32 %v5392, 7
    %v5394 = vsub.s32 3, %v5393
    %v5395 = vrot.slane %v5121, %v5394
    %v5396 = vlaneseq
    %v5397 = vshrl.u32 %v5396, 7
    %v5398 = vsub.s32 0, %v5397
    %v5399 = vrot.slane %v5123, %v5398
    %v5400 = vlaneseq
    %v5401 = vshrl.u32 %v5400, 7
    %v5402 = vsub.s32 1, %v5401
    %v5403 = vrot.slane %v5123, %v5402
    %v5404 = vlaneseq
    %v5405 = vshrl.u32 %v5404, 7
    %v5406 = vsub.s32 2, %v5405
    %v5407 = vrot.slane %v5123, %v5406
    %v5408 = vlaneseq
    %v5409 = vshrl.u32 %v5408, 7
    %v5410 = vsub.s32 3, %v5409
    %v5411 = vrot.slane %v5123, %v5410
    %v5412 = vlaneseq
    %v5413 = vshrl.u32 %v5412, 7
    %v5414 = vsub.s32 0, %v5413
    %v5415 = vrot.slane %v5148, %v5414
    %v5416 = vlaneseq
    %v5417 = vshrl.u32 %v5416, 7
    %v5418 = vsub.s32 1, %v5417
    %v5419 = vrot.slane %v5148, %v5418
    %v5420 = vlaneseq
    %v5421 = vshrl.u32 %v5420, 7
    %v5422 = vsub.s32 2, %v5421
    %v5423 = vrot.slane %v5148, %v5422
    %v5424 = vlaneseq
    %v5425 = vshrl.u32 %v5424, 7
    %v5426 = vsub.s32 3, %v5425
    %v5427 = vrot.slane %v5148, %v5426
    %v5428 = vlaneseq
    %v5429 = vshrl.u32 %v5428, 7
    %v5430 = vsub.s32 0, %v5429
    %v5431 = vrot.slane %v5155, %v5430
    %v5432 = vlaneseq
    %v5433 = vshrl.u32 %v5432, 7
    %v5434 = vsub.s32 1, %v5433
    %v5435 = vrot.slane %v5155, %v5434
    %v5436 = vlaneseq
    %v5437 = vshrl.u32 %v5436, 7
    %v5438 = vsub.s32 2, %v5437
    %v5439 = vrot.slane %v5155, %v5438
    %v5440 = vlaneseq
    %v5441 = vshrl.u32 %v5440, 7
    %v5442 = vsub.s32 3, %v5441
    %v5443 = vrot.slane %v5155, %v5442
    %v5444 = vcombine.low %v5159, %v5163
    %v5445 = vcombine.low %v5167, %v5171
    %v5447 = vunpack.c.l.s4 1983009808
    %v5448 = vunpack.c.0.s8 %v5447
    %v5449 = vlaneseq
    %v5450 = vshrl.u32 %v5449, 7
    %v5451 = vsub.s32 %v5448, %v5450
    %v5452 = vrot.slane %v5444, %v5451
    %v5454 = vunpack.c.l.s4 1983009808
    %v5455 = vunpack.c.0.s8 %v5454
    %v5456 = vlaneseq
    %v5457 = vshrl.u32 %v5456, 7
    %v5458 = vsub.s32 %v5455, %v5457
    %v5459 = vrot.slane %v5445, %v5458
    %v5460 = vcombine.low %v5452, %v5459
    %v5461 = vcombine.low %v5175, %v5179
    %v5462 = vcombine.low %v5183, %v5187
    %v5464 = vunpack.c.l.s4 1983009808
    %v5465 = vunpack.c.0.s8 %v5464
    %v5466 = vlaneseq
    %v5467 = vshrl.u32 %v5466, 7
    %v5468 = vsub.s32 %v5465, %v5467
    %v5469 = vrot.slane %v5461, %v5468
    %v5471 = vunpack.c.l.s4 1983009808
    %v5472 = vunpack.c.0.s8 %v5471
    %v5473 = vlaneseq
    %v5474 = vshrl.u32 %v5473, 7
    %v5475 = vsub.s32 %v5472, %v5474
    %v5476 = vrot.slane %v5462, %v5475
    %v5477 = vcombine.low %v5469, %v5476
    %v5478 = vcombine.low %v5191, %v5195
    %v5479 = vcombine.low %v5199, %v5203
    %v5481 = vunpack.c.l.s4 1983009808
    %v5482 = vunpack.c.0.s8 %v5481
    %v5483 = vlaneseq
    %v5484 = vshrl.u32 %v5483, 7
    %v5485 = vsub.s32 %v5482, %v5484
    %v5486 = vrot.slane %v5478, %v5485
    %v5488 = vunpack.c.l.s4 1983009808
    %v5489 = vunpack.c.0.s8 %v5488
    %v5490 = vlaneseq
    %v5491 = vshrl.u32 %v5490, 7
    %v5492 = vsub.s32 %v5489, %v5491
    %v5493 = vrot.slane %v5479, %v5492
    %v5494 = vcombine.low %v5486, %v5493
    %v5495 = vcombine.low %v5207, %v5211
    %v5496 = vcombine.low %v5215, %v5219
    %v5498 = vunpack.c.l.s4 1983009808
    %v5499 = vunpack.c.0.s8 %v5498
    %v5500 = vlaneseq
    %v5501 = vshrl.u32 %v5500, 7
    %v5502 = vsub.s32 %v5499, %v5501
    %v5503 = vrot.slane %v5495, %v5502
    %v5505 = vunpack.c.l.s4 1983009808
    %v5506 = vunpack.c.0.s8 %v5505
    %v5507 = vlaneseq
    %v5508 = vshrl.u32 %v5507, 7
    %v5509 = vsub.s32 %v5506, %v5508
    %v5510 = vrot.slane %v5496, %v5509
    %v5511 = vcombine.low %v5503, %v5510
    %v5512 = vcombine.low %v5223, %v5227
    %v5513 = vcombine.low %v5231, %v5235
    %v5515 = vunpack.c.l.s4 1983009808
    %v5516 = vunpack.c.0.s8 %v5515
    %v5517 = vlaneseq
    %v5518 = vshrl.u32 %v5517, 7
    %v5519 = vsub.s32 %v5516, %v5518
    %v5520 = vrot.slane %v5512, %v5519
    %v5522 = vunpack.c.l.s4 1983009808
    %v5523 = vunpack.c.0.s8 %v5522
    %v5524 = vlaneseq
    %v5525 = vshrl.u32 %v5524, 7
    %v5526 = vsub.s32 %v5523, %v5525
    %v5527 = vrot.slane %v5513, %v5526
    %v5528 = vcombine.low %v5520, %v5527
    %v5529 = vcombine.low %v5239, %v5243
    %v5530 = vcombine.low %v5247, %v5251
    %v5532 = vunpack.c.l.s4 1983009808
    %v5533 = vunpack.c.0.s8 %v5532
    %v5534 = vlaneseq
    %v5535 = vshrl.u32 %v5534, 7
    %v5536 = vsub.s32 %v5533, %v5535
    %v5537 = vrot.slane %v5529, %v5536
    %v5539 = vunpack.c.l.s4 1983009808
    %v5540 = vunpack.c.0.s8 %v5539
    %v5541 = vlaneseq
    %v5542 = vshrl.u32 %v5541, 7
    %v5543 = vsub.s32 %v5540, %v5542
    %v5544 = vrot.slane %v5530, %v5543
    %v5545 = vcombine.low %v5537, %v5544
    %v5546 = vcombine.low %v5255, %v5259
    %v5547 = vcombine.low %v5263, %v5267
    %v5549 = vunpack.c.l.s4 1983009808
    %v5550 = vunpack.c.0.s8 %v5549
    %v5551 = vlaneseq
    %v5552 = vshrl.u32 %v5551, 7
    %v5553 = vsub.s32 %v5550, %v5552
    %v5554 = vrot.slane %v5546, %v5553
    %v5556 = vunpack.c.l.s4 1983009808
    %v5557 = vunpack.c.0.s8 %v5556
    %v5558 = vlaneseq
    %v5559 = vshrl.u32 %v5558, 7
    %v5560 = vsub.s32 %v5557, %v5559
    %v5561 = vrot.slane %v5547, %v5560
    %v5562 = vcombine.low %v5554, %v5561
    %v5563 = vcombine.low %v5271, %v5275
    %v5564 = vcombine.low %v5279, %v5283
    %v5566 = vunpack.c.l.s4 1983009808
    %v5567 = vunpack.c.0.s8 %v5566
    %v5568 = vlaneseq
    %v5569 = vshrl.u32 %v5568, 7
    %v5570 = vsub.s32 %v5567, %v5569
    %v5571 = vrot.slane %v5563, %v5570
    %v5573 = vunpack.c.l.s4 1983009808
    %v5574 = vunpack.c.0.s8 %v5573
    %v5575 = vlaneseq
    %v5576 = vshrl.u32 %v5575, 7
    %v5577 = vsub.s32 %v5574, %v5576
    %v5578 = vrot.slane %v5564, %v5577
    %v5579 = vcombine.low %v5571, %v5578
    %v5580 = vcombine.low %v5287, %v5291
    %v5581 = vcombine.low %v5295, %v5299
    %v5583 = vunpack.c.l.s4 1983009808
    %v5584 = vunpack.c.0.s8 %v5583
    %v5585 = vlaneseq
    %v5586 = vshrl.u32 %v5585, 7
    %v5587 = vsub.s32 %v5584, %v5586
    %v5588 = vrot.slane %v5580, %v5587
    %v5590 = vunpack.c.l.s4 1983009808
    %v5591 = vunpack.c.0.s8 %v5590
    %v5592 = vlaneseq
    %v5593 = vshrl.u32 %v5592, 7
    %v5594 = vsub.s32 %v5591, %v5593
    %v5595 = vrot.slane %v5581, %v5594
    %v5596 = vcombine.low %v5588, %v5595
    %v5597 = vcombine.low %v5303, %v5307
    %v5598 = vcombine.low %v5311, %v5315
    %v5600 = vunpack.c.l.s4 1983009808
    %v5601 = vunpack.c.0.s8 %v5600
    %v5602 = vlaneseq
    %v5603 = vshrl.u32 %v5602, 7
    %v5604 = vsub.s32 %v5601, %v5603
    %v5605 = vrot.slane %v5597, %v5604
    %v5607 = vunpack.c.l.s4 1983009808
    %v5608 = vunpack.c.0.s8 %v5607
    %v5609 = vlaneseq
    %v5610 = vshrl.u32 %v5609, 7
    %v5611 = vsub.s32 %v5608, %v5610
    %v5612 = vrot.slane %v5598, %v5611
    %v5613 = vcombine.low %v5605, %v5612
    %v5614 = vcombine.low %v5319, %v5323
    %v5615 = vcombine.low %v5327, %v5331
    %v5617 = vunpack.c.l.s4 1983009808
    %v5618 = vunpack.c.0.s8 %v5617
    %v5619 = vlaneseq
    %v5620 = vshrl.u32 %v5619, 7
    %v5621 = vsub.s32 %v5618, %v5620
    %v5622 = vrot.slane %v5614, %v5621
    %v5624 = vunpack.c.l.s4 1983009808
    %v5625 = vunpack.c.0.s8 %v5624
    %v5626 = vlaneseq
    %v5627 = vshrl.u32 %v5626, 7
    %v5628 = vsub.s32 %v5625, %v5627
    %v5629 = vrot.slane %v5615, %v5628
    %v5630 = vcombine.low %v5622, %v5629
    %v5631 = vcombine.low %v5335, %v5339
    %v5632 = vcombine.low %v5343, %v5347
    %v5634 = vunpack.c.l.s4 1983009808
    %v5635 = vunpack.c.0.s8 %v5634
    %v5636 = vlaneseq
    %v5637 = vshrl.u32 %v5636, 7
    %v5638 = vsub.s32 %v5635, %v5637
    %v5639 = vrot.slane %v5631, %v5638
    %v5641 = vunpack.c.l.s4 1983009808
    %v5642 = vunpack.c.0.s8 %v5641
    %v5643 = vlaneseq
    %v5644 = vshrl.u32 %v5643, 7
    %v5645 = vsub.s32 %v5642, %v5644
    %v5646 = vrot.slane %v5632, %v5645
    %v5647 = vcombine.low %v5639, %v5646
    %v5648 = vcombine.low %v5351, %v5355
    %v5649 = vcombine.low %v5359, %v5363
    %v5651 = vunpack.c.l.s4 1983009808
    %v5652 = vunpack.c.0.s8 %v5651
    %v5653 = vlaneseq
    %v5654 = vshrl.u32 %v5653, 7
    %v5655 = vsub.s32 %v5652, %v5654
    %v5656 = vrot.slane %v5648, %v5655
    %v5658 = vunpack.c.l.s4 1983009808
    %v5659 = vunpack.c.0.s8 %v5658
    %v5660 = vlaneseq
    %v5661 = vshrl.u32 %v5660, 7
    %v5662 = vsub.s32 %v5659, %v5661
    %v5663 = vrot.slane %v5649, %v5662
    %v5664 = vcombine.low %v5656, %v5663
    %v5665 = vcombine.low %v5367, %v5371
    %v5666 = vcombine.low %v5375, %v5379
    %v5668 = vunpack.c.l.s4 1983009808
    %v5669 = vunpack.c.0.s8 %v5668
    %v5670 = vlaneseq
    %v5671 = vshrl.u32 %v5670, 7
    %v5672 = vsub.s32 %v5669, %v5671
    %v5673 = vrot.slane %v5665, %v5672
    %v5675 = vunpack.c.l.s4 1983009808
    %v5676 = vunpack.c.0.s8 %v5675
    %v5677 = vlaneseq
    %v5678 = vshrl.u32 %v5677, 7
    %v5679 = vsub.s32 %v5676, %v5678
    %v5680 = vrot.slane %v5666, %v5679
    %v5681 = vcombine.low %v5673, %v5680
    %v5682 = vcombine.low %v5383, %v5387
    %v5683 = vcombine.low %v5391, %v5395
    %v5685 = vunpack.c.l.s4 1983009808
    %v5686 = vunpack.c.0.s8 %v5685
    %v5687 = vlaneseq
    %v5688 = vshrl.u32 %v5687, 7
    %v5689 = vsub.s32 %v5686, %v5688
    %v5690 = vrot.slane %v5682, %v5689
    %v5692 = vunpack.c.l.s4 1983009808
    %v5693 = vunpack.c.0.s8 %v5692
    %v5694 = vlaneseq
    %v5695 = vshrl.u32 %v5694, 7
    %v5696 = vsub.s32 %v5693, %v5695
    %v5697 = vrot.slane %v5683, %v5696
    %v5698 = vcombine.low %v5690, %v5697
    %v5699 = vcombine.low %v5399, %v5403
    %v5700 = vcombine.low %v5407, %v5411
    %v5702 = vunpack.c.l.s4 1983009808
    %v5703 = vunpack.c.0.s8 %v5702
    %v5704 = vlaneseq
    %v5705 = vshrl.u32 %v5704, 7
    %v5706 = vsub.s32 %v5703, %v5705
    %v5707 = vrot.slane %v5699, %v5706
    %v5709 = vunpack.c.l.s4 1983009808
    %v5710 = vunpack.c.0.s8 %v5709
    %v5711 = vlaneseq
    %v5712 = vshrl.u32 %v5711, 7
    %v5713 = vsub.s32 %v5710, %v5712
    %v5714 = vrot.slane %v5700, %v5713
    %v5715 = vcombine.low %v5707, %v5714
    %v5716 = vcombine.low %v5415, %v5419
    %v5717 = vcombine.low %v5423, %v5427
    %v5719 = vunpack.c.l.s4 1983009808
    %v5720 = vunpack.c.0.s8 %v5719
    %v5721 = vlaneseq
    %v5722 = vshrl.u32 %v5721, 7
    %v5723 = vsub.s32 %v5720, %v5722
    %v5724 = vrot.slane %v5716, %v5723
    %v5726 = vunpack.c.l.s4 1983009808
    %v5727 = vunpack.c.0.s8 %v5726
    %v5728 = vlaneseq
    %v5729 = vshrl.u32 %v5728, 7
    %v5730 = vsub.s32 %v5727, %v5729
    %v5731 = vrot.slane %v5717, %v5730
    %v5732 = vcombine.low %v5724, %v5731
    %v5733 = vcombine.low %v5431, %v5435
    %v5734 = vcombine.low %v5439, %v5443
    %v5736 = vunpack.c.l.s4 1983009808
    %v5737 = vunpack.c.0.s8 %v5736
    %v5738 = vlaneseq
    %v5739 = vshrl.u32 %v5738, 7
    %v5740 = vsub.s32 %v5737, %v5739
    %v5741 = vrot.slane %v5733, %v5740
    %v5743 = vunpack.c.l.s4 1983009808
    %v5744 = vunpack.c.0.s8 %v5743
    %v5745 = vlaneseq
    %v5746 = vshrl.u32 %v5745, 7
    %v5747 = vsub.s32 %v5744, %v5746
    %v5748 = vrot.slane %v5734, %v5747
    %v5749 = vcombine.low %v5741, %v5748
    %v5762 = vcombine.low %v4956, %v4957
    %v5763 = vcombine.high %v4956, %v4957
    %v5764 = vcombine.low %v4958, %v4959
    %v5765 = vcombine.high %v4958, %v4959
    %v5767 = vunpack.c.l.s4 1966171168
    %v5768 = vunpack.c.0.s8 %v5767
    %v5769 = vlaneseq
    %v5770 = vshrl.u32 %v5769, 7
    %v5771 = vsub.s32 %v5768, %v5770
    %v5772 = vrot.slane %v5762, %v5771
    %v5774 = vunpack.c.l.s4 1966171168
    %v5775 = vunpack.c.0.s8 %v5774
    %v5776 = vlaneseq
    %v5777 = vshrl.u32 %v5776, 7
    %v5778 = vsub.s32 %v5775, %v5777
    %v5779 = vrot.slane %v5763, %v5778
    %v5781 = vunpack.c.l.s4 1966171168
    %v5782 = vunpack.c.0.s8 %v5781
    %v5783 = vlaneseq
    %v5784 = vshrl.u32 %v5783, 7
    %v5785 = vsub.s32 %v5782, %v5784
    %v5786 = vrot.slane %v5764, %v5785
    %v5788 = vunpack.c.l.s4 1966171168
    %v5789 = vunpack.c.0.s8 %v5788
    %v5790 = vlaneseq
    %v5791 = vshrl.u32 %v5790, 7
    %v5792 = vsub.s32 %v5789, %v5791
    %v5793 = vrot.slane %v5765, %v5792
    %v5794 = vcombine.low %v5772, %v5786
    %v5795 = vcombine.high %v5772, %v5786
    %v5796 = vcombine.low %v5779, %v5793
    %v5797 = vcombine.high %v5779, %v5793
    %v5799 = vunpack.c.l.s4 1966171168
    %v5800 = vunpack.c.0.s8 %v5799
    %v5801 = vlaneseq
    %v5802 = vshrl.u32 %v5801, 7
    %v5803 = vsub.s32 %v5800, %v5802
    %v5804 = vrot.slane %v5794, %v5803
    %v5806 = vunpack.c.l.s4 1966171168
    %v5807 = vunpack.c.0.s8 %v5806
    %v5808 = vlaneseq
    %v5809 = vshrl.u32 %v5808, 7
    %v5810 = vsub.s32 %v5807, %v5809
    %v5811 = vrot.slane %v5796, %v5810
    %v5813 = vunpack.c.l.s4 1966171168
    %v5814 = vunpack.c.0.s8 %v5813
    %v5815 = vlaneseq
    %v5816 = vshrl.u32 %v5815, 7
    %v5817 = vsub.s32 %v5814, %v5816
    %v5818 = vrot.slane %v5795, %v5817
    %v5820 = vunpack.c.l.s4 1966171168
    %v5821 = vunpack.c.0.s8 %v5820
    %v5822 = vlaneseq
    %v5823 = vshrl.u32 %v5822, 7
    %v5824 = vsub.s32 %v5821, %v5823
    %v5825 = vrot.slane %v5797, %v5824
    %v5826 = vcombine.high %v5804, %v5804
    %v5827 = vcombine.high %v5811, %v5811
    %v5828 = vcombine.high %v5818, %v5818
    %v5829 = vcombine.high %v5825, %v5825
    %v5830 = vcombine.low %v4964, %v4965
    %v5831 = vcombine.high %v4964, %v4965
    %v5832 = vcombine.low %v4966, %v4967
    %v5833 = vcombine.high %v4966, %v4967
    %v5835 = vunpack.c.l.s4 1966171168
    %v5836 = vunpack.c.0.s8 %v5835
    %v5837 = vlaneseq
    %v5838 = vshrl.u32 %v5837, 7
    %v5839 = vsub.s32 %v5836, %v5838
    %v5840 = vrot.slane %v5830, %v5839
    %v5842 = vunpack.c.l.s4 1966171168
    %v5843 = vunpack.c.0.s8 %v5842
    %v5844 = vlaneseq
    %v5845 = vshrl.u32 %v5844, 7
    %v5846 = vsub.s32 %v5843, %v5845
    %v5847 = vrot.slane %v5831, %v5846
    %v5849 = vunpack.c.l.s4 1966171168
    %v5850 = vunpack.c.0.s8 %v5849
    %v5851 = vlaneseq
    %v5852 = vshrl.u32 %v5851, 7
    %v5853 = vsub.s32 %v5850, %v5852
    %v5854 = vrot.slane %v5832, %v5853
    %v5856 = vunpack.c.l.s4 1966171168
    %v5857 = vunpack.c.0.s8 %v5856
    %v5858 = vlaneseq
    %v5859 = vshrl.u32 %v5858, 7
    %v5860 = vsub.s32 %v5857, %v5859
    %v5861 = vrot.slane %v5833, %v5860
    %v5862 = vcombine.low %v5840, %v5854
    %v5863 = vcombine.high %v5840, %v5854
    %v5864 = vcombine.low %v5847, %v5861
    %v5865 = vcombine.high %v5847, %v5861
    %v5867 = vunpack.c.l.s4 1966171168
    %v5868 = vunpack.c.0.s8 %v5867
    %v5869 = vlaneseq
    %v5870 = vshrl.u32 %v5869, 7
    %v5871 = vsub.s32 %v5868, %v5870
    %v5872 = vrot.slane %v5862, %v5871
    %v5874 = vunpack.c.l.s4 1966171168
    %v5875 = vunpack.c.0.s8 %v5874
    %v5876 = vlaneseq
    %v5877 = vshrl.u32 %v5876, 7
    %v5878 = vsub.s32 %v5875, %v5877
    %v5879 = vrot.slane %v5864, %v5878
    %v5881 = vunpack.c.l.s4 1966171168
    %v5882 = vunpack.c.0.s8 %v5881
    %v5883 = vlaneseq
    %v5884 = vshrl.u32 %v5883, 7
    %v5885 = vsub.s32 %v5882, %v5884
    %v5886 = vrot.slane %v5863, %v5885
    %v5888 = vunpack.c.l.s4 1966171168
    %v5889 = vunpack.c.0.s8 %v5888
    %v5890 = vlaneseq
    %v5891 = vshrl.u32 %v5890, 7
    %v5892 = vsub.s32 %v5889, %v5891
    %v5893 = vrot.slane %v5865, %v5892
    %v5894 = vcombine.high %v5872, %v5872
    %v5895 = vcombine.high %v5879, %v5879
    %v5896 = vcombine.high %v5886, %v5886
    %v5897 = vcombine.high %v5893, %v5893
    %v5898 = vcombine.low %v4972, %v4973
    %v5899 = vcombine.low %v4974, %v4975
    %v5901 = vunpack.c.l.s4 1966171168
    %v5902 = vunpack.c.0.s8 %v5901
    %v5903 = vlaneseq
    %v5904 = vshrl.u32 %v5903, 7
    %v5905 = vsub.s32 %v5902, %v5904
    %v5906 = vrot.slane %v5898, %v5905
    %v5908 = vunpack.c.l.s4 1966171168
    %v5909 = vunpack.c.0.s8 %v5908
    %v5910 = vlaneseq
    %v5911 = vshrl.u32 %v5910, 7
    %v5912 = vsub.s32 %v5909, %v5911
    %v5913 = vrot.slane %v5899, %v5912
    %v5914 = vcombine.low %v5906, %v5913
    %v5915 = vcombine.high %v5906, %v5913
    %v5917 = vunpack.c.l.s4 1966171168
    %v5918 = vunpack.c.0.s8 %v5917
    %v5919 = vlaneseq
    %v5920 = vshrl.u32 %v5919, 7
    %v5921 = vsub.s32 %v5918, %v5920
    %v5922 = vrot.slane %v5914, %v5921
    %v5924 = vunpack.c.l.s4 1966171168
    %v5925 = vunpack.c.0.s8 %v5924
    %v5926 = vlaneseq
    %v5927 = vshrl.u32 %v5926, 7
    %v5928 = vsub.s32 %v5925, %v5927
    %v5929 = vrot.slane %v5915, %v5928
    %v5930 = vlaneseq
    %v5931 = vshrl.u32 %v5930, 7
    %v5932 = vsub.s32 0, %v5931
    %v5933 = vrot.slane %v5804, %v5932
    %v5934 = vlaneseq
    %v5935 = vshrl.u32 %v5934, 7
    %v5936 = vsub.s32 1, %v5935
    %v5937 = vrot.slane %v5804, %v5936
    %v5938 = vlaneseq
    %v5939 = vshrl.u32 %v5938, 7
    %v5940 = vsub.s32 2, %v5939
    %v5941 = vrot.slane %v5804, %v5940
    %v5942 = vlaneseq
    %v5943 = vshrl.u32 %v5942, 7
    %v5944 = vsub.s32 3, %v5943
    %v5945 = vrot.slane %v5804, %v5944
    %v5946 = vlaneseq
    %v5947 = vshrl.u32 %v5946, 7
    %v5948 = vsub.s32 0, %v5947
    %v5949 = vrot.slane %v5818, %v5948
    %v5950 = vlaneseq
    %v5951 = vshrl.u32 %v5950, 7
    %v5952 = vsub.s32 1, %v5951
    %v5953 = vrot.slane %v5818, %v5952
    %v5954 = vlaneseq
    %v5955 = vshrl.u32 %v5954, 7
    %v5956 = vsub.s32 2, %v5955
    %v5957 = vrot.slane %v5818, %v5956
    %v5958 = vlaneseq
    %v5959 = vshrl.u32 %v5958, 7
    %v5960 = vsub.s32 3, %v5959
    %v5961 = vrot.slane %v5818, %v5960
    %v5962 = vlaneseq
    %v5963 = vshrl.u32 %v5962, 7
    %v5964 = vsub.s32 0, %v5963
    %v5965 = vrot.slane %v5826, %v5964
    %v5966 = vlaneseq
    %v5967 = vshrl.u32 %v5966, 7
    %v5968 = vsub.s32 1, %v5967
    %v5969 = vrot.slane %v5826, %v5968
    %v5970 = vlaneseq
    %v5971 = vshrl.u32 %v5970, 7
    %v5972 = vsub.s32 2, %v5971
    %v5973 = vrot.slane %v5826, %v5972
    %v5974 = vlaneseq
    %v5975 = vshrl.u32 %v5974, 7
    %v5976 = vsub.s32 3, %v5975
    %v5977 = vrot.slane %v5826, %v5976
    %v5978 = vlaneseq
    %v5979 = vshrl.u32 %v5978, 7
    %v5980 = vsub.s32 0, %v5979
    %v5981 = vrot.slane %v5828, %v5980
    %v5982 = vlaneseq
    %v5983 = vshrl.u32 %v5982, 7
    %v5984 = vsub.s32 1, %v5983
    %v5985 = vrot.slane %v5828, %v5984
    %v5986 = vlaneseq
    %v5987 = vshrl.u32 %v5986, 7
    %v5988 = vsub.s32 2, %v5987
    %v5989 = vrot.slane %v5828, %v5988
    %v5990 = vlaneseq
    %v5991 = vshrl.u32 %v5990, 7
    %v5992 = vsub.s32 3, %v5991
    %v5993 = vrot.slane %v5828, %v5992
    %v5994 = vlaneseq
    %v5995 = vshrl.u32 %v5994, 7
    %v5996 = vsub.s32 0, %v5995
    %v5997 = vrot.slane %v5811, %v5996
    %v5998 = vlaneseq
    %v5999 = vshrl.u32 %v5998, 7
    %v6000 = vsub.s32 1, %v5999
    %v6001 = vrot.slane %v5811, %v6000
    %v6002 = vlaneseq
    %v6003 = vshrl.u32 %v6002, 7
    %v6004 = vsub.s32 2, %v6003
    %v6005 = vrot.slane %v5811, %v6004
    %v6006 = vlaneseq
    %v6007 = vshrl.u32 %v6006, 7
    %v6008 = vsub.s32 3, %v6007
    %v6009 = vrot.slane %v5811, %v6008
    %v6010 = vlaneseq
    %v6011 = vshrl.u32 %v6010, 7
    %v6012 = vsub.s32 0, %v6011
    %v6013 = vrot.slane %v5825, %v6012
    %v6014 = vlaneseq
    %v6015 = vshrl.u32 %v6014, 7
    %v6016 = vsub.s32 1, %v6015
    %v6017 = vrot.slane %v5825, %v6016
    %v6018 = vlaneseq
    %v6019 = vshrl.u32 %v6018, 7
    %v6020 = vsub.s32 2, %v6019
    %v6021 = vrot.slane %v5825, %v6020
    %v6022 = vlaneseq
    %v6023 = vshrl.u32 %v6022, 7
    %v6024 = vsub.s32 3, %v6023
    %v6025 = vrot.slane %v5825, %v6024
    %v6026 = vlaneseq
    %v6027 = vshrl.u32 %v6026, 7
    %v6028 = vsub.s32 0, %v6027
    %v6029 = vrot.slane %v5827, %v6028
    %v6030 = vlaneseq
    %v6031 = vshrl.u32 %v6030, 7
    %v6032 = vsub.s32 1, %v6031
    %v6033 = vrot.slane %v5827, %v6032
    %v6034 = vlaneseq
    %v6035 = vshrl.u32 %v6034, 7
    %v6036 = vsub.s32 2, %v6035
    %v6037 = vrot.slane %v5827, %v6036
    %v6038 = vlaneseq
    %v6039 = vshrl.u32 %v6038, 7
    %v6040 = vsub.s32 3, %v6039
    %v6041 = vrot.slane %v5827, %v6040
    %v6042 = vlaneseq
    %v6043 = vshrl.u32 %v6042, 7
    %v6044 = vsub.s32 0, %v6043
    %v6045 = vrot.slane %v5829, %v6044
    %v6046 = vlaneseq
    %v6047 = vshrl.u32 %v6046, 7
    %v6048 = vsub.s32 1, %v6047
    %v6049 = vrot.slane %v5829, %v6048
    %v6050 = vlaneseq
    %v6051 = vshrl.u32 %v6050, 7
    %v6052 = vsub.s32 2, %v6051
    %v6053 = vrot.slane %v5829, %v6052
    %v6054 = vlaneseq
    %v6055 = vshrl.u32 %v6054, 7
    %v6056 = vsub.s32 3, %v6055
    %v6057 = vrot.slane %v5829, %v6056
    %v6058 = vlaneseq
    %v6059 = vshrl.u32 %v6058, 7
    %v6060 = vsub.s32 0, %v6059
    %v6061 = vrot.slane %v5872, %v6060
    %v6062 = vlaneseq
    %v6063 = vshrl.u32 %v6062, 7
    %v6064 = vsub.s32 1, %v6063
    %v6065 = vrot.slane %v5872, %v6064
    %v6066 = vlaneseq
    %v6067 = vshrl.u32 %v6066, 7
    %v6068 = vsub.s32 2, %v6067
    %v6069 = vrot.slane %v5872, %v6068
    %v6070 = vlaneseq
    %v6071 = vshrl.u32 %v6070, 7
    %v6072 = vsub.s32 3, %v6071
    %v6073 = vrot.slane %v5872, %v6072
    %v6074 = vlaneseq
    %v6075 = vshrl.u32 %v6074, 7
    %v6076 = vsub.s32 0, %v6075
    %v6077 = vrot.slane %v5886, %v6076
    %v6078 = vlaneseq
    %v6079 = vshrl.u32 %v6078, 7
    %v6080 = vsub.s32 1, %v6079
    %v6081 = vrot.slane %v5886, %v6080
    %v6082 = vlaneseq
    %v6083 = vshrl.u32 %v6082, 7
    %v6084 = vsub.s32 2, %v6083
    %v6085 = vrot.slane %v5886, %v6084
    %v6086 = vlaneseq
    %v6087 = vshrl.u32 %v6086, 7
    %v6088 = vsub.s32 3, %v6087
    %v6089 = vrot.slane %v5886, %v6088
    %v6090 = vlaneseq
    %v6091 = vshrl.u32 %v6090, 7
    %v6092 = vsub.s32 0, %v6091
    %v6093 = vrot.slane %v5894, %v6092
    %v6094 = vlaneseq
    %v6095 = vshrl.u32 %v6094, 7
    %v6096 = vsub.s32 1, %v6095
    %v6097 = vrot.slane %v5894, %v6096
    %v6098 = vlaneseq
    %v6099 = vshrl.u32 %v6098, 7
    %v6100 = vsub.s32 2, %v6099
    %v6101 = vrot.slane %v5894, %v6100
    %v6102 = vlaneseq
    %v6103 = vshrl.u32 %v6102, 7
    %v6104 = vsub.s32 3, %v6103
    %v6105 = vrot.slane %v5894, %v6104
    %v6106 = vlaneseq
    %v6107 = vshrl.u32 %v6106, 7
    %v6108 = vsub.s32 0, %v6107
    %v6109 = vrot.slane %v5896, %v6108
    %v6110 = vlaneseq
    %v6111 = vshrl.u32 %v6110, 7
    %v6112 = vsub.s32 1, %v6111
    %v6113 = vrot.slane %v5896, %v6112
    %v6114 = vlaneseq
    %v6115 = vshrl.u32 %v6114, 7
    %v6116 = vsub.s32 2, %v6115
    %v6117 = vrot.slane %v5896, %v6116
    %v6118 = vlaneseq
    %v6119 = vshrl.u32 %v6118, 7
    %v6120 = vsub.s32 3, %v6119
    %v6121 = vrot.slane %v5896, %v6120
    %v6122 = vlaneseq
    %v6123 = vshrl.u32 %v6122, 7
    %v6124 = vsub.s32 0, %v6123
    %v6125 = vrot.slane %v5879, %v6124
    %v6126 = vlaneseq
    %v6127 = vshrl.u32 %v6126, 7
    %v6128 = vsub.s32 1, %v6127
    %v6129 = vrot.slane %v5879, %v6128
    %v6130 = vlaneseq
    %v6131 = vshrl.u32 %v6130, 7
    %v6132 = vsub.s32 2, %v6131
    %v6133 = vrot.slane %v5879, %v6132
    %v6134 = vlaneseq
    %v6135 = vshrl.u32 %v6134, 7
    %v6136 = vsub.s32 3, %v6135
    %v6137 = vrot.slane %v5879, %v6136
    %v6138 = vlaneseq
    %v6139 = vshrl.u32 %v6138, 7
    %v6140 = vsub.s32 0, %v6139
    %v6141 = vrot.slane %v5893, %v6140
    %v6142 = vlaneseq
    %v6143 = vshrl.u32 %v6142, 7
    %v6144 = vsub.s32 1, %v6143
    %v6145 = vrot.slane %v5893, %v6144
    %v6146 = vlaneseq
    %v6147 = vshrl.u32 %v6146, 7
    %v6148 = vsub.s32 2, %v6147
    %v6149 = vrot.slane %v5893, %v6148
    %v6150 = vlaneseq
    %v6151 = vshrl.u32 %v6150, 7
    %v6152 = vsub.s32 3, %v6151
    %v6153 = vrot.slane %v5893, %v6152
    %v6154 = vlaneseq
    %v6155 = vshrl.u32 %v6154, 7
    %v6156 = vsub.s32 0, %v6155
    %v6157 = vrot.slane %v5895, %v6156
    %v6158 = vlaneseq
    %v6159 = vshrl.u32 %v6158, 7
    %v6160 = vsub.s32 1, %v6159
    %v6161 = vrot.slane %v5895, %v6160
    %v6162 = vlaneseq
    %v6163 = vshrl.u32 %v6162, 7
    %v6164 = vsub.s32 2, %v6163
    %v6165 = vrot.slane %v5895, %v6164
    %v6166 = vlaneseq
    %v6167 = vshrl.u32 %v6166, 7
    %v6168 = vsub.s32 3, %v6167
    %v6169 = vrot.slane %v5895, %v6168
    %v6170 = vlaneseq
    %v6171 = vshrl.u32 %v6170, 7
    %v6172 = vsub.s32 0, %v6171
    %v6173 = vrot.slane %v5897, %v6172
    %v6174 = vlaneseq
    %v6175 = vshrl.u32 %v6174, 7
    %v6176 = vsub.s32 1, %v6175
    %v6177 = vrot.slane %v5897, %v6176
    %v6178 = vlaneseq
    %v6179 = vshrl.u32 %v6178, 7
    %v6180 = vsub.s32 2, %v6179
    %v6181 = vrot.slane %v5897, %v6180
    %v6182 = vlaneseq
    %v6183 = vshrl.u32 %v6182, 7
    %v6184 = vsub.s32 3, %v6183
    %v6185 = vrot.slane %v5897, %v6184
    %v6186 = vlaneseq
    %v6187 = vshrl.u32 %v6186, 7
    %v6188 = vsub.s32 0, %v6187
    %v6189 = vrot.slane %v5922, %v6188
    %v6190 = vlaneseq
    %v6191 = vshrl.u32 %v6190, 7
    %v6192 = vsub.s32 1, %v6191
    %v6193 = vrot.slane %v5922, %v6192
    %v6194 = vlaneseq
    %v6195 = vshrl.u32 %v6194, 7
    %v6196 = vsub.s32 2, %v6195
    %v6197 = vrot.slane %v5922, %v6196
    %v6198 = vlaneseq
    %v6199 = vshrl.u32 %v6198, 7
    %v6200 = vsub.s32 3, %v6199
    %v6201 = vrot.slane %v5922, %v6200
    %v6202 = vlaneseq
    %v6203 = vshrl.u32 %v6202, 7
    %v6204 = vsub.s32 0, %v6203
    %v6205 = vrot.slane %v5929, %v6204
    %v6206 = vlaneseq
    %v6207 = vshrl.u32 %v6206, 7
    %v6208 = vsub.s32 1, %v6207
    %v6209 = vrot.slane %v5929, %v6208
    %v6210 = vlaneseq
    %v6211 = vshrl.u32 %v6210, 7
    %v6212 = vsub.s32 2, %v6211
    %v6213 = vrot.slane %v5929, %v6212
    %v6214 = vlaneseq
    %v6215 = vshrl.u32 %v6214, 7
    %v6216 = vsub.s32 3, %v6215
    %v6217 = vrot.slane %v5929, %v6216
    %v6218 = vcombine.low %v5933, %v5937
    %v6219 = vcombine.low %v5941, %v5945
    %v6221 = vunpack.c.l.s4 1983009808
    %v6222 = vunpack.c.0.s8 %v6221
    %v6223 = vlaneseq
    %v6224 = vshrl.u32 %v6223, 7
    %v6225 = vsub.s32 %v6222, %v6224
    %v6226 = vrot.slane %v6218, %v6225
    %v6228 = vunpack.c.l.s4 1983009808
    %v6229 = vunpack.c.0.s8 %v6228
    %v6230 = vlaneseq
    %v6231 = vshrl.u32 %v6230, 7
    %v6232 = vsub.s32 %v6229, %v6231
    %v6233 = vrot.slane %v6219, %v6232
    %v6234 = vcombine.low %v6226, %v6233
    %v6235 = vcombine.low %v5949, %v5953
    %v6236 = vcombine.low %v5957, %v5961
    %v6238 = vunpack.c.l.s4 1983009808
    %v6239 = vunpack.c.0.s8 %v6238
    %v6240 = vlaneseq
    %v6241 = vshrl.u32 %v6240, 7
    %v6242 = vsub.s32 %v6239, %v6241
    %v6243 = vrot.slane %v6235, %v6242
    %v6245 = vunpack.c.l.s4 1983009808
    %v6246 = vunpack.c.0.s8 %v6245
    %v6247 = vlaneseq
    %v6248 = vshrl.u32 %v6247, 7
    %v6249 = vsub.s32 %v6246, %v6248
    %v6250 = vrot.slane %v6236, %v6249
    %v6251 = vcombine.low %v6243, %v6250
    %v6252 = vcombine.low %v5965, %v5969
    %v6253 = vcombine.low %v5973, %v5977
    %v6255 = vunpack.c.l.s4 1983009808
    %v6256 = vunpack.c.0.s8 %v6255
    %v6257 = vlaneseq
    %v6258 = vshrl.u32 %v6257, 7
    %v6259 = vsub.s32 %v6256, %v6258
    %v6260 = vrot.slane %v6252, %v6259
    %v6262 = vunpack.c.l.s4 1983009808
    %v6263 = vunpack.c.0.s8 %v6262
    %v6264 = vlaneseq
    %v6265 = vshrl.u32 %v6264, 7
    %v6266 = vsub.s32 %v6263, %v6265
    %v6267 = vrot.slane %v6253, %v6266
    %v6268 = vcombine.low %v6260, %v6267
    %v6269 = vcombine.low %v5981, %v5985
    %v6270 = vcombine.low %v5989, %v5993
    %v6272 = vunpack.c.l.s4 1983009808
    %v6273 = vunpack.c.0.s8 %v6272
    %v6274 = vlaneseq
    %v6275 = vshrl.u32 %v6274, 7
    %v6276 = vsub.s32 %v6273, %v6275
    %v6277 = vrot.slane %v6269, %v6276
    %v6279 = vunpack.c.l.s4 1983009808
    %v6280 = vunpack.c.0.s8 %v6279
    %v6281 = vlaneseq
    %v6282 = vshrl.u32 %v6281, 7
    %v6283 = vsub.s32 %v6280, %v6282
    %v6284 = vrot.slane %v6270, %v6283
    %v6285 = vcombine.low %v6277, %v6284
    %v6286 = vcombine.low %v5997, %v6001
    %v6287 = vcombine.low %v6005, %v6009
    %v6289 = vunpack.c.l.s4 1983009808
    %v6290 = vunpack.c.0.s8 %v6289
    %v6291 = vlaneseq
    %v6292 = vshrl.u32 %v6291, 7
    %v6293 = vsub.s32 %v6290, %v6292
    %v6294 = vrot.slane %v6286, %v6293
    %v6296 = vunpack.c.l.s4 1983009808
    %v6297 = vunpack.c.0.s8 %v6296
    %v6298 = vlaneseq
    %v6299 = vshrl.u32 %v6298, 7
    %v6300 = vsub.s32 %v6297, %v6299
    %v6301 = vrot.slane %v6287, %v6300
    %v6302 = vcombine.low %v6294, %v6301
    %v6303 = vcombine.low %v6013, %v6017
    %v6304 = vcombine.low %v6021, %v6025
    %v6306 = vunpack.c.l.s4 1983009808
    %v6307 = vunpack.c.0.s8 %v6306
    %v6308 = vlaneseq
    %v6309 = vshrl.u32 %v6308, 7
    %v6310 = vsub.s32 %v6307, %v6309
    %v6311 = vrot.slane %v6303, %v6310
    %v6313 = vunpack.c.l.s4 1983009808
    %v6314 = vunpack.c.0.s8 %v6313
    %v6315 = vlaneseq
    %v6316 = vshrl.u32 %v6315, 7
    %v6317 = vsub.s32 %v6314, %v6316
    %v6318 = vrot.slane %v6304, %v6317
    %v6319 = vcombine.low %v6311, %v6318
    %v6320 = vcombine.low %v6029, %v6033
    %v6321 = vcombine.low %v6037, %v6041
    %v6323 = vunpack.c.l.s4 1983009808
    %v6324 = vunpack.c.0.s8 %v6323
    %v6325 = vlaneseq
    %v6326 = vshrl.u32 %v6325, 7
    %v6327 = vsub.s32 %v6324, %v6326
    %v6328 = vrot.slane %v6320, %v6327
    %v6330 = vunpack.c.l.s4 1983009808
    %v6331 = vunpack.c.0.s8 %v6330
    %v6332 = vlaneseq
    %v6333 = vshrl.u32 %v6332, 7
    %v6334 = vsub.s32 %v6331, %v6333
    %v6335 = vrot.slane %v6321, %v6334
    %v6336 = vcombine.low %v6328, %v6335
    %v6337 = vcombine.low %v6045, %v6049
    %v6338 = vcombine.low %v6053, %v6057
    %v6340 = vunpack.c.l.s4 1983009808
    %v6341 = vunpack.c.0.s8 %v6340
    %v6342 = vlaneseq
    %v6343 = vshrl.u32 %v6342, 7
    %v6344 = vsub.s32 %v6341, %v6343
    %v6345 = vrot.slane %v6337, %v6344
    %v6347 = vunpack.c.l.s4 1983009808
    %v6348 = vunpack.c.0.s8 %v6347
    %v6349 = vlaneseq
    %v6350 = vshrl.u32 %v6349, 7
    %v6351 = vsub.s32 %v6348, %v6350
    %v6352 = vrot.slane %v6338, %v6351
    %v6353 = vcombine.low %v6345, %v6352
    %v6354 = vcombine.low %v6061, %v6065
    %v6355 = vcombine.low %v6069, %v6073
    %v6357 = vunpack.c.l.s4 1983009808
    %v6358 = vunpack.c.0.s8 %v6357
    %v6359 = vlaneseq
    %v6360 = vshrl.u32 %v6359, 7
    %v6361 = vsub.s32 %v6358, %v6360
    %v6362 = vrot.slane %v6354, %v6361
    %v6364 = vunpack.c.l.s4 1983009808
    %v6365 = vunpack.c.0.s8 %v6364
    %v6366 = vlaneseq
    %v6367 = vshrl.u32 %v6366, 7
    %v6368 = vsub.s32 %v6365, %v6367
    %v6369 = vrot.slane %v6355, %v6368
    %v6370 = vcombine.low %v6362, %v6369
    %v6371 = vcombine.low %v6077, %v6081
    %v6372 = vcombine.low %v6085, %v6089
    %v6374 = vunpack.c.l.s4 1983009808
    %v6375 = vunpack.c.0.s8 %v6374
    %v6376 = vlaneseq
    %v6377 = vshrl.u32 %v6376, 7
    %v6378 = vsub.s32 %v6375, %v6377
    %v6379 = vrot.slane %v6371, %v6378
    %v6381 = vunpack.c.l.s4 1983009808
    %v6382 = vunpack.c.0.s8 %v6381
    %v6383 = vlaneseq
    %v6384 = vshrl.u32 %v6383, 7
    %v6385 = vsub.s32 %v6382, %v6384
    %v6386 = vrot.slane %v6372, %v6385
    %v6387 = vcombine.low %v6379, %v6386
    %v6388 = vcombine.low %v6093, %v6097
    %v6389 = vcombine.low %v6101, %v6105
    %v6391 = vunpack.c.l.s4 1983009808
    %v6392 = vunpack.c.0.s8 %v6391
    %v6393 = vlaneseq
    %v6394 = vshrl.u32 %v6393, 7
    %v6395 = vsub.s32 %v6392, %v6394
    %v6396 = vrot.slane %v6388, %v6395
    %v6398 = vunpack.c.l.s4 1983009808
    %v6399 = vunpack.c.0.s8 %v6398
    %v6400 = vlaneseq
    %v6401 = vshrl.u32 %v6400, 7
    %v6402 = vsub.s32 %v6399, %v6401
    %v6403 = vrot.slane %v6389, %v6402
    %v6404 = vcombine.low %v6396, %v6403
    %v6405 = vcombine.low %v6109, %v6113
    %v6406 = vcombine.low %v6117, %v6121
    %v6408 = vunpack.c.l.s4 1983009808
    %v6409 = vunpack.c.0.s8 %v6408
    %v6410 = vlaneseq
    %v6411 = vshrl.u32 %v6410, 7
    %v6412 = vsub.s32 %v6409, %v6411
    %v6413 = vrot.slane %v6405, %v6412
    %v6415 = vunpack.c.l.s4 1983009808
    %v6416 = vunpack.c.0.s8 %v6415
    %v6417 = vlaneseq
    %v6418 = vshrl.u32 %v6417, 7
    %v6419 = vsub.s32 %v6416, %v6418
    %v6420 = vrot.slane %v6406, %v6419
    %v6421 = vcombine.low %v6413, %v6420
    %v6422 = vcombine.low %v6125, %v6129
    %v6423 = vcombine.low %v6133, %v6137
    %v6425 = vunpack.c.l.s4 1983009808
    %v6426 = vunpack.c.0.s8 %v6425
    %v6427 = vlaneseq
    %v6428 = vshrl.u32 %v6427, 7
    %v6429 = vsub.s32 %v6426, %v6428
    %v6430 = vrot.slane %v6422, %v6429
    %v6432 = vunpack.c.l.s4 1983009808
    %v6433 = vunpack.c.0.s8 %v6432
    %v6434 = vlaneseq
    %v6435 = vshrl.u32 %v6434, 7
    %v6436 = vsub.s32 %v6433, %v6435
    %v6437 = vrot.slane %v6423, %v6436
    %v6438 = vcombine.low %v6430, %v6437
    %v6439 = vcombine.low %v6141, %v6145
    %v6440 = vcombine.low %v6149, %v6153
    %v6442 = vunpack.c.l.s4 1983009808
    %v6443 = vunpack.c.0.s8 %v6442
    %v6444 = vlaneseq
    %v6445 = vshrl.u32 %v6444, 7
    %v6446 = vsub.s32 %v6443, %v6445
    %v6447 = vrot.slane %v6439, %v6446
    %v6449 = vunpack.c.l.s4 1983009808
    %v6450 = vunpack.c.0.s8 %v6449
    %v6451 = vlaneseq
    %v6452 = vshrl.u32 %v6451, 7
    %v6453 = vsub.s32 %v6450, %v6452
    %v6454 = vrot.slane %v6440, %v6453
    %v6455 = vcombine.low %v6447, %v6454
    %v6456 = vcombine.low %v6157, %v6161
    %v6457 = vcombine.low %v6165, %v6169
    %v6459 = vunpack.c.l.s4 1983009808
    %v6460 = vunpack.c.0.s8 %v6459
    %v6461 = vlaneseq
    %v6462 = vshrl.u32 %v6461, 7
    %v6463 = vsub.s32 %v6460, %v6462
    %v6464 = vrot.slane %v6456, %v6463
    %v6466 = vunpack.c.l.s4 1983009808
    %v6467 = vunpack.c.0.s8 %v6466
    %v6468 = vlaneseq
    %v6469 = vshrl.u32 %v6468, 7
    %v6470 = vsub.s32 %v6467, %v6469
    %v6471 = vrot.slane %v6457, %v6470
    %v6472 = vcombine.low %v6464, %v6471
    %v6473 = vcombine.low %v6173, %v6177
    %v6474 = vcombine.low %v6181, %v6185
    %v6476 = vunpack.c.l.s4 1983009808
    %v6477 = vunpack.c.0.s8 %v6476
    %v6478 = vlaneseq
    %v6479 = vshrl.u32 %v6478, 7
    %v6480 = vsub.s32 %v6477, %v6479
    %v6481 = vrot.slane %v6473, %v6480
    %v6483 = vunpack.c.l.s4 1983009808
    %v6484 = vunpack.c.0.s8 %v6483
    %v6485 = vlaneseq
    %v6486 = vshrl.u32 %v6485, 7
    %v6487 = vsub.s32 %v6484, %v6486
    %v6488 = vrot.slane %v6474, %v6487
    %v6489 = vcombine.low %v6481, %v6488
    %v6490 = vcombine.low %v6189, %v6193
    %v6491 = vcombine.low %v6197, %v6201
    %v6493 = vunpack.c.l.s4 1983009808
    %v6494 = vunpack.c.0.s8 %v6493
    %v6495 = vlaneseq
    %v6496 = vshrl.u32 %v6495, 7
    %v6497 = vsub.s32 %v6494, %v6496
    %v6498 = vrot.slane %v6490, %v6497
    %v6500 = vunpack.c.l.s4 1983009808
    %v6501 = vunpack.c.0.s8 %v6500
    %v6502 = vlaneseq
    %v6503 = vshrl.u32 %v6502, 7
    %v6504 = vsub.s32 %v6501, %v6503
    %v6505 = vrot.slane %v6491, %v6504
    %v6506 = vcombine.low %v6498, %v6505
    %v6507 = vcombine.low %v6205, %v6209
    %v6508 = vcombine.low %v6213, %v6217
    %v6510 = vunpack.c.l.s4 1983009808
    %v6511 = vunpack.c.0.s8 %v6510
    %v6512 = vlaneseq
    %v6513 = vshrl.u32 %v6512, 7
    %v6514 = vsub.s32 %v6511, %v6513
    %v6515 = vrot.slane %v6507, %v6514
    %v6517 = vunpack.c.l.s4 1983009808
    %v6518 = vunpack.c.0.s8 %v6517
    %v6519 = vlaneseq
    %v6520 = vshrl.u32 %v6519, 7
    %v6521 = vsub.s32 %v6518, %v6520
    %v6522 = vrot.slane %v6508, %v6521
    %v6523 = vcombine.low %v6515, %v6522
    %v6524 = vadd.s32 %v2272, 24
    %v6525 = vadd.s32 %v2272, 32
    %vm6526 = vcmp.lt.s32.totalorder %v2272, 0
    %v6527 = vsub.s32 0, %v2272
    %v6528 = vsel %vm6526, %v6527, %v2272
    %v6529 = vmul.u32.u64.compose %v6528, 3817748708
    %v6530 = vextract.low.u32 %v6529
    %v6531 = vextract.high.u32 %v6529
    %v6532 = vshrl.u32 %v6531, 4
    %v6533 = vmul.u32 %v6532, 18
    %v6534 = vsub.s32 %v6528, %v6533
    %v6535 = vsub.s32 0, %v6534
    %v6536 = vsel %vm6526, %v6535, %v6534
    %vm6537 = vcmp.lt.s32.totalorder %v2273, 0
    %v6538 = vsub.s32 0, %v2273
    %v6539 = vsel %vm6537, %v6538, %v2273
    %v6540 = vmul.u32.u64.compose %v6539, 3817748708
    %v6541 = vextract.low.u32 %v6540
    %v6542 = vextract.high.u32 %v6540
    %v6543 = vshrl.u32 %v6542, 4
    %v6544 = vmul.u32 %v6543, 18
    %v6545 = vsub.s32 %v6539, %v6544
    %v6546 = vsub.s32 0, %v6545
    %v6547 = vsel %vm6537, %v6546, %v6545
    %vm6548 = vcmp.lt.s32.totalorder %v2274, 0
    %v6549 = vsub.s32 0, %v2274
    %v6550 = vsel %vm6548, %v6549, %v2274
    %v6551 = vmul.u32.u64.compose %v6550, 3817748708
    %v6552 = vextract.low.u32 %v6551
    %v6553 = vextract.high.u32 %v6551
    %v6554 = vshrl.u32 %v6553, 4
    %v6555 = vmul.u32 %v6554, 18
    %v6556 = vsub.s32 %v6550, %v6555
    %v6557 = vsub.s32 0, %v6556
    %v6558 = vsel %vm6548, %v6557, %v6556
    %vm6559 = vcmp.lt.s32.totalorder %v6524, 0
    %v6560 = vsub.s32 0, %v6524
    %v6561 = vsel %vm6559, %v6560, %v6524
    %v6562 = vmul.u32.u64.compose %v6561, 3817748708
    %v6563 = vextract.low.u32 %v6562
    %v6564 = vextract.high.u32 %v6562
    %v6565 = vshrl.u32 %v6564, 4
    %v6566 = vmul.u32 %v6565, 18
    %v6567 = vsub.s32 %v6561, %v6566
    %v6568 = vsub.s32 0, %v6567
    %v6569 = vsel %vm6559, %v6568, %v6567
    %vm6570 = vcmp.lt.s32.totalorder %v6525, 0
    %v6571 = vsub.s32 0, %v6525
    %v6572 = vsel %vm6570, %v6571, %v6525
    %v6573 = vmul.u32.u64.compose %v6572, 3817748708
    %v6574 = vextract.low.u32 %v6573
    %v6575 = vextract.high.u32 %v6573
    %v6576 = vshrl.u32 %v6575, 4
    %v6577 = vmul.u32 %v6576, 18
    %v6578 = vsub.s32 %v6572, %v6577
    %v6579 = vsub.s32 0, %v6578
    %v6580 = vsel %vm6570, %v6579, %v6578
    %vm6581 = vcmp.ne.s32.totalorder %v6536, 0
    %vm6582 = vcmp.ne.s32.totalorder %v6547, 0
    %vm6583 = vcmp.ne.s32.totalorder %v6558, 0
    %vm6584 = vcmp.ne.s32.totalorder %v6569, 0
    %vm6585 = vcmp.ne.s32.totalorder %v6580, 0
    %vm6586 = vcmp.lt.s32.totalorder %v6536, 0
    %vm6587 = vcmp.lt.s32.totalorder %v6547, 0
    %vm6588 = vcmp.lt.s32.totalorder %v6558, 0
    %vm6589 = vcmp.lt.s32.totalorder %v6569, 0
    %vm6590 = vcmp.lt.s32.totalorder %v6580, 0
    %vm6591 = vmand %vm6586, %vm6581
    %vm6592 = vmand %vm6587, %vm6582
    %vm6593 = vmand %vm6588, %vm6583
    %vm6594 = vmand %vm6589, %vm6584
    %vm6595 = vmand %vm6590, %vm6585
    %v6596 = vadd.s32 %v6536, 18
    %v6597 = vadd.s32 %v6547, 18
    %v6598 = vadd.s32 %v6558, 18
    %v6599 = vadd.s32 %v6569, 18
    %v6600 = vadd.s32 %v6580, 18
    %v6601 = vsel %vm6591, %v6596, %v6536
    %v6602 = vsel %vm6592, %v6597, %v6547
    %v6603 = vsel %vm6593, %v6598, %v6558
    %v6604 = vsel %vm6594, %v6599, %v6569
    %v6605 = vsel %vm6595, %v6600, %v6580
    %vm6606 = vcmp.eq.s32.totalorder %v6601, 0
    %vm6607 = vcmp.eq.s32.totalorder %v6602, 0
    %vm6608 = vcmp.eq.s32.totalorder %v6603, 0
    %vm6609 = vcmp.eq.s32.totalorder %v6604, 0
    %vm6610 = vcmp.eq.s32.totalorder %v6605, 0
    %vm6611 = vcmp.eq.s32.totalorder %v6601, 17
    %vm6612 = vcmp.eq.s32.totalorder %v6602, 17
    %vm6613 = vcmp.eq.s32.totalorder %v6603, 17
    %vm6614 = vcmp.eq.s32.totalorder %v6604, 17
    %vm6615 = vcmp.eq.s32.totalorder %v6605, 17
    %vm6616 = vmor %vm6606, %vm6611
    %vm6617 = vmor %vm6607, %vm6612
    %vm6618 = vmor %vm6608, %vm6613
    %vm6619 = vmor %vm6609, %vm6614
    %vm6620 = vmor %vm6610, %vm6615
    %vm6621 = vcmp.lt.s32.totalorder %v6524, 0
    %v6622 = vsub.s32 0, %v6524
    %v6623 = vsel %vm6621, %v6622, %v6524
    %v6624 = vshrl.u32 %v6623, 1
    %v6625 = vand.u32 %v6623, 1
    %v6626 = vsub.s32 0, %v6625
    %v6627 = vsel %vm6621, %v6626, %v6625
    %vm6628 = vcmp.lt.s32.totalorder %v6525, 0
    %v6629 = vsub.s32 0, %v6525
    %v6630 = vsel %vm6628, %v6629, %v6525
    %v6631 = vshrl.u32 %v6630, 1
    %v6632 = vand.u32 %v6630, 1
    %v6633 = vsub.s32 0, %v6632
    %v6634 = vsel %vm6628, %v6633, %v6632
    %vm6635 = vcmp.ne.s32.totalorder %v6627, 0
    %vm6636 = vcmp.ne.s32.totalorder %v6634, 0
    %vm6637 = vcmp.lt.s32.totalorder %v6627, 0
    %vm6638 = vcmp.lt.s32.totalorder %v6634, 0
    %vm6639 = vmand %vm6637, %vm6635
    %vm6640 = vmand %vm6638, %vm6636
    %v6641 = vadd.s32 %v6627, 2
    %v6642 = vadd.s32 %v6634, 2
    %v6643 = vsel %vm6639, %v6641, %v6627
    %v6644 = vsel %vm6640, %v6642, %v6634
    %vm6645 = vcmp.eq.s32.totalorder %v6643, 0
    %vm6646 = vcmp.eq.s32.totalorder %v6644, 0
    %v6647 = vcombine.low %v5460, %v5477
    %v6648 = vcombine.high %v5460, %v5477
    %v6649 = vcombine.low %v5494, %v5511
    %v6650 = vcombine.high %v5494, %v5511
    %v6652 = vunpack.c.l.s4 1983009808
    %v6653 = vunpack.c.0.s8 %v6652
    %v6654 = vlaneseq
    %v6655 = vshrl.u32 %v6654, 7
    %v6656 = vsub.s32 %v6653, %v6655
    %v6657 = vrot.slane %v6647, %v6656
    %v6659 = vunpack.c.l.s4 1983009808
    %v6660 = vunpack.c.0.s8 %v6659
    %v6661 = vlaneseq
    %v6662 = vshrl.u32 %v6661, 7
    %v6663 = vsub.s32 %v6660, %v6662
    %v6664 = vrot.slane %v6648, %v6663
    %v6666 = vunpack.c.l.s4 1983009808
    %v6667 = vunpack.c.0.s8 %v6666
    %v6668 = vlaneseq
    %v6669 = vshrl.u32 %v6668, 7
    %v6670 = vsub.s32 %v6667, %v6669
    %v6671 = vrot.slane %v6649, %v6670
    %v6673 = vunpack.c.l.s4 1983009808
    %v6674 = vunpack.c.0.s8 %v6673
    %v6675 = vlaneseq
    %v6676 = vshrl.u32 %v6675, 7
    %v6677 = vsub.s32 %v6674, %v6676
    %v6678 = vrot.slane %v6650, %v6677
    %v6679 = vcombine.low %v6657, %v6671
    %v6680 = vcombine.high %v6657, %v6671
    %v6681 = vcombine.low %v6664, %v6678
    %v6682 = vcombine.high %v6664, %v6678
    %v6683 = vcombine.low %v5528, %v5545
    %v6684 = vcombine.high %v5528, %v5545
    %v6685 = vcombine.low %v5562, %v5579
    %v6686 = vcombine.high %v5562, %v5579
    %v6688 = vunpack.c.l.s4 1983009808
    %v6689 = vunpack.c.0.s8 %v6688
    %v6690 = vlaneseq
    %v6691 = vshrl.u32 %v6690, 7
    %v6692 = vsub.s32 %v6689, %v6691
    %v6693 = vrot.slane %v6683, %v6692
    %v6695 = vunpack.c.l.s4 1983009808
    %v6696 = vunpack.c.0.s8 %v6695
    %v6697 = vlaneseq
    %v6698 = vshrl.u32 %v6697, 7
    %v6699 = vsub.s32 %v6696, %v6698
    %v6700 = vrot.slane %v6684, %v6699
    %v6702 = vunpack.c.l.s4 1983009808
    %v6703 = vunpack.c.0.s8 %v6702
    %v6704 = vlaneseq
    %v6705 = vshrl.u32 %v6704, 7
    %v6706 = vsub.s32 %v6703, %v6705
    %v6707 = vrot.slane %v6685, %v6706
    %v6709 = vunpack.c.l.s4 1983009808
    %v6710 = vunpack.c.0.s8 %v6709
    %v6711 = vlaneseq
    %v6712 = vshrl.u32 %v6711, 7
    %v6713 = vsub.s32 %v6710, %v6712
    %v6714 = vrot.slane %v6686, %v6713
    %v6715 = vcombine.low %v6693, %v6707
    %v6716 = vcombine.high %v6693, %v6707
    %v6717 = vcombine.low %v6700, %v6714
    %v6718 = vcombine.high %v6700, %v6714
    %v6719 = vcombine.low %v5596, %v5613
    %v6720 = vcombine.high %v5596, %v5613
    %v6721 = vcombine.low %v5630, %v5647
    %v6722 = vcombine.high %v5630, %v5647
    %v6724 = vunpack.c.l.s4 1983009808
    %v6725 = vunpack.c.0.s8 %v6724
    %v6726 = vlaneseq
    %v6727 = vshrl.u32 %v6726, 7
    %v6728 = vsub.s32 %v6725, %v6727
    %v6729 = vrot.slane %v6719, %v6728
    %v6731 = vunpack.c.l.s4 1983009808
    %v6732 = vunpack.c.0.s8 %v6731
    %v6733 = vlaneseq
    %v6734 = vshrl.u32 %v6733, 7
    %v6735 = vsub.s32 %v6732, %v6734
    %v6736 = vrot.slane %v6720, %v6735
    %v6738 = vunpack.c.l.s4 1983009808
    %v6739 = vunpack.c.0.s8 %v6738
    %v6740 = vlaneseq
    %v6741 = vshrl.u32 %v6740, 7
    %v6742 = vsub.s32 %v6739, %v6741
    %v6743 = vrot.slane %v6721, %v6742
    %v6745 = vunpack.c.l.s4 1983009808
    %v6746 = vunpack.c.0.s8 %v6745
    %v6747 = vlaneseq
    %v6748 = vshrl.u32 %v6747, 7
    %v6749 = vsub.s32 %v6746, %v6748
    %v6750 = vrot.slane %v6722, %v6749
    %v6751 = vcombine.low %v6729, %v6743
    %v6752 = vcombine.high %v6729, %v6743
    %v6753 = vcombine.low %v6736, %v6750
    %v6754 = vcombine.high %v6736, %v6750
    %v6755 = vcombine.low %v5664, %v5681
    %v6756 = vcombine.high %v5664, %v5681
    %v6757 = vcombine.low %v5698, %v5715
    %v6758 = vcombine.high %v5698, %v5715
    %v6760 = vunpack.c.l.s4 1983009808
    %v6761 = vunpack.c.0.s8 %v6760
    %v6762 = vlaneseq
    %v6763 = vshrl.u32 %v6762, 7
    %v6764 = vsub.s32 %v6761, %v6763
    %v6765 = vrot.slane %v6755, %v6764
    %v6767 = vunpack.c.l.s4 1983009808
    %v6768 = vunpack.c.0.s8 %v6767
    %v6769 = vlaneseq
    %v6770 = vshrl.u32 %v6769, 7
    %v6771 = vsub.s32 %v6768, %v6770
    %v6772 = vrot.slane %v6756, %v6771
    %v6774 = vunpack.c.l.s4 1983009808
    %v6775 = vunpack.c.0.s8 %v6774
    %v6776 = vlaneseq
    %v6777 = vshrl.u32 %v6776, 7
    %v6778 = vsub.s32 %v6775, %v6777
    %v6779 = vrot.slane %v6757, %v6778
    %v6781 = vunpack.c.l.s4 1983009808
    %v6782 = vunpack.c.0.s8 %v6781
    %v6783 = vlaneseq
    %v6784 = vshrl.u32 %v6783, 7
    %v6785 = vsub.s32 %v6782, %v6784
    %v6786 = vrot.slane %v6758, %v6785
    %v6787 = vcombine.low %v6765, %v6779
    %v6788 = vcombine.high %v6765, %v6779
    %v6789 = vcombine.low %v6772, %v6786
    %v6790 = vcombine.high %v6772, %v6786
    %v6791 = vcombine.low %v5732, %v5749
    %v6792 = vcombine.high %v5732, %v5749
    %v6794 = vunpack.c.l.s4 1983009808
    %v6795 = vunpack.c.0.s8 %v6794
    %v6796 = vlaneseq
    %v6797 = vshrl.u32 %v6796, 7
    %v6798 = vsub.s32 %v6795, %v6797
    %v6799 = vrot.slane %v6791, %v6798
    %v6801 = vunpack.c.l.s4 1983009808
    %v6802 = vunpack.c.0.s8 %v6801
    %v6803 = vlaneseq
    %v6804 = vshrl.u32 %v6803, 7
    %v6805 = vsub.s32 %v6802, %v6804
    %v6806 = vrot.slane %v6792, %v6805
    %v6807 = vcombine.high %v6799, %v6799
    %v6808 = vcombine.high %v6806, %v6806
    %v6829 = vcombine.low %v6234, %v6251
    %v6830 = vcombine.high %v6234, %v6251
    %v6831 = vcombine.low %v6268, %v6285
    %v6832 = vcombine.high %v6268, %v6285
    %v6834 = vunpack.c.l.s4 1983009808
    %v6835 = vunpack.c.0.s8 %v6834
    %v6836 = vlaneseq
    %v6837 = vshrl.u32 %v6836, 7
    %v6838 = vsub.s32 %v6835, %v6837
    %v6839 = vrot.slane %v6829, %v6838
    %v6841 = vunpack.c.l.s4 1983009808
    %v6842 = vunpack.c.0.s8 %v6841
    %v6843 = vlaneseq
    %v6844 = vshrl.u32 %v6843, 7
    %v6845 = vsub.s32 %v6842, %v6844
    %v6846 = vrot.slane %v6830, %v6845
    %v6848 = vunpack.c.l.s4 1983009808
    %v6849 = vunpack.c.0.s8 %v6848
    %v6850 = vlaneseq
    %v6851 = vshrl.u32 %v6850, 7
    %v6852 = vsub.s32 %v6849, %v6851
    %v6853 = vrot.slane %v6831, %v6852
    %v6855 = vunpack.c.l.s4 1983009808
    %v6856 = vunpack.c.0.s8 %v6855
    %v6857 = vlaneseq
    %v6858 = vshrl.u32 %v6857, 7
    %v6859 = vsub.s32 %v6856, %v6858
    %v6860 = vrot.slane %v6832, %v6859
    %v6861 = vcombine.low %v6839, %v6853
    %v6862 = vcombine.high %v6839, %v6853
    %v6863 = vcombine.low %v6846, %v6860
    %v6864 = vcombine.high %v6846, %v6860
    %v6865 = vcombine.low %v6302, %v6319
    %v6866 = vcombine.high %v6302, %v6319
    %v6867 = vcombine.low %v6336, %v6353
    %v6868 = vcombine.high %v6336, %v6353
    %v6870 = vunpack.c.l.s4 1983009808
    %v6871 = vunpack.c.0.s8 %v6870
    %v6872 = vlaneseq
    %v6873 = vshrl.u32 %v6872, 7
    %v6874 = vsub.s32 %v6871, %v6873
    %v6875 = vrot.slane %v6865, %v6874
    %v6877 = vunpack.c.l.s4 1983009808
    %v6878 = vunpack.c.0.s8 %v6877
    %v6879 = vlaneseq
    %v6880 = vshrl.u32 %v6879, 7
    %v6881 = vsub.s32 %v6878, %v6880
    %v6882 = vrot.slane %v6866, %v6881
    %v6884 = vunpack.c.l.s4 1983009808
    %v6885 = vunpack.c.0.s8 %v6884
    %v6886 = vlaneseq
    %v6887 = vshrl.u32 %v6886, 7
    %v6888 = vsub.s32 %v6885, %v6887
    %v6889 = vrot.slane %v6867, %v6888
    %v6891 = vunpack.c.l.s4 1983009808
    %v6892 = vunpack.c.0.s8 %v6891
    %v6893 = vlaneseq
    %v6894 = vshrl.u32 %v6893, 7
    %v6895 = vsub.s32 %v6892, %v6894
    %v6896 = vrot.slane %v6868, %v6895
    %v6897 = vcombine.low %v6875, %v6889
    %v6898 = vcombine.high %v6875, %v6889
    %v6899 = vcombine.low %v6882, %v6896
    %v6900 = vcombine.high %v6882, %v6896
    %v6901 = vcombine.low %v6370, %v6387
    %v6902 = vcombine.high %v6370, %v6387
    %v6903 = vcombine.low %v6404, %v6421
    %v6904 = vcombine.high %v6404, %v6421
    %v6906 = vunpack.c.l.s4 1983009808
    %v6907 = vunpack.c.0.s8 %v6906
    %v6908 = vlaneseq
    %v6909 = vshrl.u32 %v6908, 7
    %v6910 = vsub.s32 %v6907, %v6909
    %v6911 = vrot.slane %v6901, %v6910
    %v6913 = vunpack.c.l.s4 1983009808
    %v6914 = vunpack.c.0.s8 %v6913
    %v6915 = vlaneseq
    %v6916 = vshrl.u32 %v6915, 7
    %v6917 = vsub.s32 %v6914, %v6916
    %v6918 = vrot.slane %v6902, %v6917
    %v6920 = vunpack.c.l.s4 1983009808
    %v6921 = vunpack.c.0.s8 %v6920
    %v6922 = vlaneseq
    %v6923 = vshrl.u32 %v6922, 7
    %v6924 = vsub.s32 %v6921, %v6923
    %v6925 = vrot.slane %v6903, %v6924
    %v6927 = vunpack.c.l.s4 1983009808
    %v6928 = vunpack.c.0.s8 %v6927
    %v6929 = vlaneseq
    %v6930 = vshrl.u32 %v6929, 7
    %v6931 = vsub.s32 %v6928, %v6930
    %v6932 = vrot.slane %v6904, %v6931
    %v6933 = vcombine.low %v6911, %v6925
    %v6934 = vcombine.high %v6911, %v6925
    %v6935 = vcombine.low %v6918, %v6932
    %v6936 = vcombine.high %v6918, %v6932
    %v6937 = vcombine.low %v6438, %v6455
    %v6938 = vcombine.high %v6438, %v6455
    %v6939 = vcombine.low %v6472, %v6489
    %v6940 = vcombine.high %v6472, %v6489
    %v6942 = vunpack.c.l.s4 1983009808
    %v6943 = vunpack.c.0.s8 %v6942
    %v6944 = vlaneseq
    %v6945 = vshrl.u32 %v6944, 7
    %v6946 = vsub.s32 %v6943, %v6945
    %v6947 = vrot.slane %v6937, %v6946
    %v6949 = vunpack.c.l.s4 1983009808
    %v6950 = vunpack.c.0.s8 %v6949
    %v6951 = vlaneseq
    %v6952 = vshrl.u32 %v6951, 7
    %v6953 = vsub.s32 %v6950, %v6952
    %v6954 = vrot.slane %v6938, %v6953
    %v6956 = vunpack.c.l.s4 1983009808
    %v6957 = vunpack.c.0.s8 %v6956
    %v6958 = vlaneseq
    %v6959 = vshrl.u32 %v6958, 7
    %v6960 = vsub.s32 %v6957, %v6959
    %v6961 = vrot.slane %v6939, %v6960
    %v6963 = vunpack.c.l.s4 1983009808
    %v6964 = vunpack.c.0.s8 %v6963
    %v6965 = vlaneseq
    %v6966 = vshrl.u32 %v6965, 7
    %v6967 = vsub.s32 %v6964, %v6966
    %v6968 = vrot.slane %v6940, %v6967
    %v6969 = vcombine.low %v6947, %v6961
    %v6970 = vcombine.high %v6947, %v6961
    %v6971 = vcombine.low %v6954, %v6968
    %v6972 = vcombine.high %v6954, %v6968
    %v6973 = vcombine.low %v6506, %v6523
    %v6974 = vcombine.high %v6506, %v6523
    %v6976 = vunpack.c.l.s4 1983009808
    %v6977 = vunpack.c.0.s8 %v6976
    %v6978 = vlaneseq
    %v6979 = vshrl.u32 %v6978, 7
    %v6980 = vsub.s32 %v6977, %v6979
    %v6981 = vrot.slane %v6973, %v6980
    %v6983 = vunpack.c.l.s4 1983009808
    %v6984 = vunpack.c.0.s8 %v6983
    %v6985 = vlaneseq
    %v6986 = vshrl.u32 %v6985, 7
    %v6987 = vsub.s32 %v6984, %v6986
    %v6988 = vrot.slane %v6974, %v6987
    %v6989 = vcombine.high %v6981, %v6981
    %v6990 = vcombine.high %v6988, %v6988
    %v7011 = vsel %vm2368, %v6679, %v6861
    %v7012 = vsel %vm2368, %v6680, %v6862
    %v7013 = vsel %vm2368, %v6681, %v6863
    %v7014 = vsel %vm2368, %v6682, %v6864
    %v7015 = vsel %vm2369, %v6715, %v6897
    %v7016 = vsel %vm2369, %v6716, %v6898
    %v7017 = vsel %vm2369, %v6717, %v6899
    %v7018 = vsel %vm2369, %v6718, %v6900
    %v7019 = vsel %vm2370, %v6751, %v6933
    %v7020 = vsel %vm2370, %v6752, %v6934
    %v7021 = vsel %vm2370, %v6753, %v6935
    %v7022 = vsel %vm2370, %v6754, %v6936
    %v7023 = vsel %vm6645, %v6787, %v6969
    %v7024 = vsel %vm6645, %v6788, %v6970
    %v7025 = vsel %vm6645, %v6789, %v6971
    %v7026 = vsel %vm6645, %v6790, %v6972
    %v7027 = vsel %vm6646, %v6799, %v6981
    %v7028 = vsel %vm6646, %v6807, %v6989
    %v7029 = vsel %vm6646, %v6806, %v6988
    %v7030 = vsel %vm6646, %v6808, %v6990
    %v7031 = vsel %vm6616, 0.0, %v7011
    %v7032 = vsel %vm6616, 0.0, %v7012
    %v7033 = vsel %vm6616, 0.0, %v7013
    %v7034 = vsel %vm6616, 0.0, %v7014
    %v7035 = vsel %vm6617, 0.0, %v7015
    %v7036 = vsel %vm6617, 0.0, %v7016
    %v7037 = vsel %vm6617, 0.0, %v7017
    %v7038 = vsel %vm6617, 0.0, %v7018
    %v7039 = vsel %vm6618, 0.0, %v7019
    %v7040 = vsel %vm6618, 0.0, %v7020
    %v7041 = vsel %vm6618, 0.0, %v7021
    %v7042 = vsel %vm6618, 0.0, %v7022
    %v7043 = vsel %vm6619, 0.0, %v7023
    %v7044 = vsel %vm6619, 0.0, %v7024
    %v7045 = vsel %vm6619, 0.0, %v7025
    %v7046 = vsel %vm6619, 0.0, %v7026
    %v7047 = vsel %vm6620, 0.0, %v7027
    %v7048 = vsel %vm6620, 0.0, %v7028
    %v7049 = vsel %vm6620, 0.0, %v7029
    %v7050 = vsel %vm6620, 0.0, %v7030
    %v7071 = vcombine.low %v7031, %v7032
    %v7072 = vcombine.high %v7031, %v7032
    %v7073 = vcombine.low %v7033, %v7034
    %v7074 = vcombine.high %v7033, %v7034
    %v7076 = vunpack.c.l.s4 1983009808
    %v7077 = vunpack.c.0.s8 %v7076
    %v7078 = vlaneseq
    %v7079 = vshrl.u32 %v7078, 7
    %v7080 = vsub.s32 %v7077, %v7079
    %v7081 = vrot.slane %v7071, %v7080
    %v7083 = vunpack.c.l.s4 1983009808
    %v7084 = vunpack.c.0.s8 %v7083
    %v7085 = vlaneseq
    %v7086 = vshrl.u32 %v7085, 7
    %v7087 = vsub.s32 %v7084, %v7086
    %v7088 = vrot.slane %v7072, %v7087
    %v7090 = vunpack.c.l.s4 1983009808
    %v7091 = vunpack.c.0.s8 %v7090
    %v7092 = vlaneseq
    %v7093 = vshrl.u32 %v7092, 7
    %v7094 = vsub.s32 %v7091, %v7093
    %v7095 = vrot.slane %v7073, %v7094
    %v7097 = vunpack.c.l.s4 1983009808
    %v7098 = vunpack.c.0.s8 %v7097
    %v7099 = vlaneseq
    %v7100 = vshrl.u32 %v7099, 7
    %v7101 = vsub.s32 %v7098, %v7100
    %v7102 = vrot.slane %v7074, %v7101
    %v7103 = vcombine.low %v7081, %v7095
    %v7104 = vcombine.high %v7081, %v7095
    %v7105 = vcombine.low %v7088, %v7102
    %v7106 = vcombine.high %v7088, %v7102
    %v7107 = vcombine.low %v7035, %v7036
    %v7108 = vcombine.high %v7035, %v7036
    %v7109 = vcombine.low %v7037, %v7038
    %v7110 = vcombine.high %v7037, %v7038
    %v7112 = vunpack.c.l.s4 1983009808
    %v7113 = vunpack.c.0.s8 %v7112
    %v7114 = vlaneseq
    %v7115 = vshrl.u32 %v7114, 7
    %v7116 = vsub.s32 %v7113, %v7115
    %v7117 = vrot.slane %v7107, %v7116
    %v7119 = vunpack.c.l.s4 1983009808
    %v7120 = vunpack.c.0.s8 %v7119
    %v7121 = vlaneseq
    %v7122 = vshrl.u32 %v7121, 7
    %v7123 = vsub.s32 %v7120, %v7122
    %v7124 = vrot.slane %v7108, %v7123
    %v7126 = vunpack.c.l.s4 1983009808
    %v7127 = vunpack.c.0.s8 %v7126
    %v7128 = vlaneseq
    %v7129 = vshrl.u32 %v7128, 7
    %v7130 = vsub.s32 %v7127, %v7129
    %v7131 = vrot.slane %v7109, %v7130
    %v7133 = vunpack.c.l.s4 1983009808
    %v7134 = vunpack.c.0.s8 %v7133
    %v7135 = vlaneseq
    %v7136 = vshrl.u32 %v7135, 7
    %v7137 = vsub.s32 %v7134, %v7136
    %v7138 = vrot.slane %v7110, %v7137
    %v7139 = vcombine.low %v7117, %v7131
    %v7140 = vcombine.high %v7117, %v7131
    %v7141 = vcombine.low %v7124, %v7138
    %v7142 = vcombine.high %v7124, %v7138
    %v7143 = vcombine.low %v7039, %v7040
    %v7144 = vcombine.high %v7039, %v7040
    %v7145 = vcombine.low %v7041, %v7042
    %v7146 = vcombine.high %v7041, %v7042
    %v7148 = vunpack.c.l.s4 1983009808
    %v7149 = vunpack.c.0.s8 %v7148
    %v7150 = vlaneseq
    %v7151 = vshrl.u32 %v7150, 7
    %v7152 = vsub.s32 %v7149, %v7151
    %v7153 = vrot.slane %v7143, %v7152
    %v7155 = vunpack.c.l.s4 1983009808
    %v7156 = vunpack.c.0.s8 %v7155
    %v7157 = vlaneseq
    %v7158 = vshrl.u32 %v7157, 7
    %v7159 = vsub.s32 %v7156, %v7158
    %v7160 = vrot.slane %v7144, %v7159
    %v7162 = vunpack.c.l.s4 1983009808
    %v7163 = vunpack.c.0.s8 %v7162
    %v7164 = vlaneseq
    %v7165 = vshrl.u32 %v7164, 7
    %v7166 = vsub.s32 %v7163, %v7165
    %v7167 = vrot.slane %v7145, %v7166
    %v7169 = vunpack.c.l.s4 1983009808
    %v7170 = vunpack.c.0.s8 %v7169
    %v7171 = vlaneseq
    %v7172 = vshrl.u32 %v7171, 7
    %v7173 = vsub.s32 %v7170, %v7172
    %v7174 = vrot.slane %v7146, %v7173
    %v7175 = vcombine.low %v7153, %v7167
    %v7176 = vcombine.high %v7153, %v7167
    %v7177 = vcombine.low %v7160, %v7174
    %v7178 = vcombine.high %v7160, %v7174
    %v7179 = vcombine.low %v7043, %v7044
    %v7180 = vcombine.high %v7043, %v7044
    %v7181 = vcombine.low %v7045, %v7046
    %v7182 = vcombine.high %v7045, %v7046
    %v7184 = vunpack.c.l.s4 1983009808
    %v7185 = vunpack.c.0.s8 %v7184
    %v7186 = vlaneseq
    %v7187 = vshrl.u32 %v7186, 7
    %v7188 = vsub.s32 %v7185, %v7187
    %v7189 = vrot.slane %v7179, %v7188
    %v7191 = vunpack.c.l.s4 1983009808
    %v7192 = vunpack.c.0.s8 %v7191
    %v7193 = vlaneseq
    %v7194 = vshrl.u32 %v7193, 7
    %v7195 = vsub.s32 %v7192, %v7194
    %v7196 = vrot.slane %v7180, %v7195
    %v7198 = vunpack.c.l.s4 1983009808
    %v7199 = vunpack.c.0.s8 %v7198
    %v7200 = vlaneseq
    %v7201 = vshrl.u32 %v7200, 7
    %v7202 = vsub.s32 %v7199, %v7201
    %v7203 = vrot.slane %v7181, %v7202
    %v7205 = vunpack.c.l.s4 1983009808
    %v7206 = vunpack.c.0.s8 %v7205
    %v7207 = vlaneseq
    %v7208 = vshrl.u32 %v7207, 7
    %v7209 = vsub.s32 %v7206, %v7208
    %v7210 = vrot.slane %v7182, %v7209
    %v7211 = vcombine.low %v7189, %v7203
    %v7212 = vcombine.high %v7189, %v7203
    %v7213 = vcombine.low %v7196, %v7210
    %v7214 = vcombine.high %v7196, %v7210
    %v7215 = vcombine.low %v7047, %v7048
    %v7216 = vcombine.low %v7049, %v7050
    %v7218 = vunpack.c.l.s4 1983009808
    %v7219 = vunpack.c.0.s8 %v7218
    %v7220 = vlaneseq
    %v7221 = vshrl.u32 %v7220, 7
    %v7222 = vsub.s32 %v7219, %v7221
    %v7223 = vrot.slane %v7215, %v7222
    %v7225 = vunpack.c.l.s4 1983009808
    %v7226 = vunpack.c.0.s8 %v7225
    %v7227 = vlaneseq
    %v7228 = vshrl.u32 %v7227, 7
    %v7229 = vsub.s32 %v7226, %v7228
    %v7230 = vrot.slane %v7216, %v7229
    %v7231 = vcombine.low %v7223, %v7230
    %v7232 = vcombine.high %v7223, %v7230
    %v7233 = vcombine.low %v7103, %v7104
    %v7234 = vcombine.high %v7103, %v7104
    %v7235 = vcombine.low %v7105, %v7106
    %v7236 = vcombine.high %v7105, %v7106
    %v7238 = vunpack.c.l.s4 1983009808
    %v7239 = vunpack.c.0.s8 %v7238
    %v7240 = vlaneseq
    %v7241 = vshrl.u32 %v7240, 7
    %v7242 = vsub.s32 %v7239, %v7241
    %v7243 = vrot.slane %v7233, %v7242
    %v7245 = vunpack.c.l.s4 1983009808
    %v7246 = vunpack.c.0.s8 %v7245
    %v7247 = vlaneseq
    %v7248 = vshrl.u32 %v7247, 7
    %v7249 = vsub.s32 %v7246, %v7248
    %v7250 = vrot.slane %v7234, %v7249
    %v7252 = vunpack.c.l.s4 1983009808
    %v7253 = vunpack.c.0.s8 %v7252
    %v7254 = vlaneseq
    %v7255 = vshrl.u32 %v7254, 7
    %v7256 = vsub.s32 %v7253, %v7255
    %v7257 = vrot.slane %v7235, %v7256
    %v7259 = vunpack.c.l.s4 1983009808
    %v7260 = vunpack.c.0.s8 %v7259
    %v7261 = vlaneseq
    %v7262 = vshrl.u32 %v7261, 7
    %v7263 = vsub.s32 %v7260, %v7262
    %v7264 = vrot.slane %v7236, %v7263
    %v7265 = vcombine.low %v7243, %v7257
    %v7266 = vcombine.high %v7243, %v7257
    %v7267 = vcombine.low %v7250, %v7264
    %v7268 = vcombine.high %v7250, %v7264
    %v7269 = vcombine.low %v7139, %v7140
    %v7270 = vcombine.high %v7139, %v7140
    %v7271 = vcombine.low %v7141, %v7142
    %v7272 = vcombine.high %v7141, %v7142
    %v7274 = vunpack.c.l.s4 1983009808
    %v7275 = vunpack.c.0.s8 %v7274
    %v7276 = vlaneseq
    %v7277 = vshrl.u32 %v7276, 7
    %v7278 = vsub.s32 %v7275, %v7277
    %v7279 = vrot.slane %v7269, %v7278
    %v7281 = vunpack.c.l.s4 1983009808
    %v7282 = vunpack.c.0.s8 %v7281
    %v7283 = vlaneseq
    %v7284 = vshrl.u32 %v7283, 7
    %v7285 = vsub.s32 %v7282, %v7284
    %v7286 = vrot.slane %v7270, %v7285
    %v7288 = vunpack.c.l.s4 1983009808
    %v7289 = vunpack.c.0.s8 %v7288
    %v7290 = vlaneseq
    %v7291 = vshrl.u32 %v7290, 7
    %v7292 = vsub.s32 %v7289, %v7291
    %v7293 = vrot.slane %v7271, %v7292
    %v7295 = vunpack.c.l.s4 1983009808
    %v7296 = vunpack.c.0.s8 %v7295
    %v7297 = vlaneseq
    %v7298 = vshrl.u32 %v7297, 7
    %v7299 = vsub.s32 %v7296, %v7298
    %v7300 = vrot.slane %v7272, %v7299
    %v7301 = vcombine.low %v7279, %v7293
    %v7302 = vcombine.high %v7279, %v7293
    %v7303 = vcombine.low %v7286, %v7300
    %v7304 = vcombine.high %v7286, %v7300
    %v7305 = vcombine.high %v7175, %v7175
    %v7307 = vunpack.c.l.s4 1983009808
    %v7308 = vunpack.c.0.s8 %v7307
    %v7309 = vlaneseq
    %v7310 = vshrl.u32 %v7309, 7
    %v7311 = vsub.s32 %v7308, %v7310
    %v7312 = vrot.slane %v7175, %v7311
    %v7314 = vunpack.c.l.s4 1983009808
    %v7315 = vunpack.c.0.s8 %v7314
    %v7316 = vlaneseq
    %v7317 = vshrl.u32 %v7316, 7
    %v7318 = vsub.s32 %v7315, %v7317
    %v7319 = vrot.slane %v7305, %v7318
    %v7320 = vcombine.high %v7312, %v7312
    %v7321 = vcombine.high %v7319, %v7319
    %v7322 = vcombine.low %v7176, %v7177
    %v7323 = vcombine.high %v7176, %v7177
    %v7324 = vcombine.low %v7178, %v7211
    %v7325 = vcombine.high %v7178, %v7211
    %v7327 = vunpack.c.l.s4 1983009808
    %v7328 = vunpack.c.0.s8 %v7327
    %v7329 = vlaneseq
    %v7330 = vshrl.u32 %v7329, 7
    %v7331 = vsub.s32 %v7328, %v7330
    %v7332 = vrot.slane %v7322, %v7331
    %v7334 = vunpack.c.l.s4 1983009808
    %v7335 = vunpack.c.0.s8 %v7334
    %v7336 = vlaneseq
    %v7337 = vshrl.u32 %v7336, 7
    %v7338 = vsub.s32 %v7335, %v7337
    %v7339 = vrot.slane %v7323, %v7338
    %v7341 = vunpack.c.l.s4 1983009808
    %v7342 = vunpack.c.0.s8 %v7341
    %v7343 = vlaneseq
    %v7344 = vshrl.u32 %v7343, 7
    %v7345 = vsub.s32 %v7342, %v7344
    %v7346 = vrot.slane %v7324, %v7345
    %v7348 = vunpack.c.l.s4 1983009808
    %v7349 = vunpack.c.0.s8 %v7348
    %v7350 = vlaneseq
    %v7351 = vshrl.u32 %v7350, 7
    %v7352 = vsub.s32 %v7349, %v7351
    %v7353 = vrot.slane %v7325, %v7352
    %v7354 = vcombine.low %v7332, %v7346
    %v7355 = vcombine.high %v7332, %v7346
    %v7356 = vcombine.low %v7339, %v7353
    %v7357 = vcombine.high %v7339, %v7353
    %v7358 = vcombine.low %v7212, %v7213
    %v7359 = vcombine.high %v7212, %v7213
    %v7360 = vcombine.low %v7214, %v7231
    %v7361 = vcombine.high %v7214, %v7231
    %v7363 = vunpack.c.l.s4 1983009808
    %v7364 = vunpack.c.0.s8 %v7363
    %v7365 = vlaneseq
    %v7366 = vshrl.u32 %v7365, 7
    %v7367 = vsub.s32 %v7364, %v7366
    %v7368 = vrot.slane %v7358, %v7367
    %v7370 = vunpack.c.l.s4 1983009808
    %v7371 = vunpack.c.0.s8 %v7370
    %v7372 = vlaneseq
    %v7373 = vshrl.u32 %v7372, 7
    %v7374 = vsub.s32 %v7371, %v7373
    %v7375 = vrot.slane %v7359, %v7374
    %v7377 = vunpack.c.l.s4 1983009808
    %v7378 = vunpack.c.0.s8 %v7377
    %v7379 = vlaneseq
    %v7380 = vshrl.u32 %v7379, 7
    %v7381 = vsub.s32 %v7378, %v7380
    %v7382 = vrot.slane %v7360, %v7381
    %v7384 = vunpack.c.l.s4 1983009808
    %v7385 = vunpack.c.0.s8 %v7384
    %v7386 = vlaneseq
    %v7387 = vshrl.u32 %v7386, 7
    %v7388 = vsub.s32 %v7385, %v7387
    %v7389 = vrot.slane %v7361, %v7388
    %v7390 = vcombine.low %v7368, %v7382
    %v7391 = vcombine.high %v7368, %v7382
    %v7392 = vcombine.low %v7375, %v7389
    %v7393 = vcombine.high %v7375, %v7389
    %v7394 = vcombine.high %v7232, %v7232
    %v7396 = vunpack.c.l.s4 1983009808
    %v7397 = vunpack.c.0.s8 %v7396
    %v7398 = vlaneseq
    %v7399 = vshrl.u32 %v7398, 7
    %v7400 = vsub.s32 %v7397, %v7399
    %v7401 = vrot.slane %v7232, %v7400
    %v7403 = vunpack.c.l.s4 1983009808
    %v7404 = vunpack.c.0.s8 %v7403
    %v7405 = vlaneseq
    %v7406 = vshrl.u32 %v7405, 7
    %v7407 = vsub.s32 %v7404, %v7406
    %v7408 = vrot.slane %v7394, %v7407
    %v7409 = vcombine.high %v7401, %v7401
    %v7410 = vcombine.high %v7408, %v7408
    %v7411 = vrot.slane %v7265, 1
    %v7412 = vrot.slane %v7301, 1
    %v7413 = vsel %vm2588, %v7411, %v7412
    %v7414 = vrot.slane %v7266, 1
    %v7415 = vrot.slane %v7302, 1
    %v7416 = vsel %vm2588, %v7414, %v7415
    %v7417 = vrot.slane %v7267, 1
    %v7418 = vrot.slane %v7303, 1
    %v7419 = vsel %vm2588, %v7417, %v7418
    %v7420 = vrot.slane %v7268, 1
    %v7421 = vrot.slane %v7304, 1
    %v7422 = vsel %vm2588, %v7420, %v7421
    %v7423 = vrot.slane %v7312, 1
    %v7424 = vsel %vm2588, %v7412, %v7423
    %v7425 = vrot.slane %v7320, 1
    %v7426 = vsel %vm2588, %v7415, %v7425
    %v7427 = vrot.slane %v7319, 1
    %v7428 = vsel %vm2588, %v7418, %v7427
    %v7429 = vrot.slane %v7321, 1
    %v7430 = vsel %vm2588, %v7421, %v7429
    %v7431 = vrot.slane %v7354, 1
    %v7432 = vrot.slane %v7390, 1
    %v7433 = vsel %vm2588, %v7431, %v7432
    %v7434 = vrot.slane %v7355, 1
    %v7435 = vrot.slane %v7391, 1
    %v7436 = vsel %vm2588, %v7434, %v7435
    %v7437 = vrot.slane %v7356, 1
    %v7438 = vrot.slane %v7392, 1
    %v7439 = vsel %vm2588, %v7437, %v7438
    %v7440 = vrot.slane %v7357, 1
    %v7441 = vrot.slane %v7393, 1
    %v7442 = vsel %vm2588, %v7440, %v7441
    %v7443 = vrot.slane %v7401, 1
    %v7444 = vsel %vm2588, %v7432, %v7443
    %v7445 = vrot.slane %v7409, 1
    %v7446 = vsel %vm2588, %v7435, %v7445
    %v7447 = vrot.slane %v7408, 1
    %v7448 = vsel %vm2588, %v7438, %v7447
    %v7449 = vrot.slane %v7410, 1
    %v7450 = vsel %vm2588, %v7441, %v7449
    %v7451 = vcombine.low %v7265, %v7266
    %v7452 = vcombine.high %v7265, %v7266
    %v7453 = vcombine.low %v7267, %v7268
    %v7454 = vcombine.high %v7267, %v7268
    %v7455 = vcombine.low %v7413, %v7416
    %v7456 = vcombine.high %v7413, %v7416
    %v7457 = vcombine.low %v7419, %v7422
    %v7458 = vcombine.high %v7419, %v7422
    %v7460 = vunpack.c.l.s4 1966171168
    %v7461 = vunpack.c.0.s8 %v7460
    %v7462 = vlaneseq
    %v7463 = vshrl.u32 %v7462, 7
    %v7464 = vsub.s32 %v7461, %v7463
    %v7465 = vrot.slane %v7451, %v7464
    %v7467 = vunpack.c.l.s4 1966171168
    %v7468 = vunpack.c.0.s8 %v7467
    %v7469 = vlaneseq
    %v7470 = vshrl.u32 %v7469, 7
    %v7471 = vsub.s32 %v7468, %v7470
    %v7472 = vrot.slane %v7452, %v7471
    %v7474 = vunpack.c.l.s4 1966171168
    %v7475 = vunpack.c.0.s8 %v7474
    %v7476 = vlaneseq
    %v7477 = vshrl.u32 %v7476, 7
    %v7478 = vsub.s32 %v7475, %v7477
    %v7479 = vrot.slane %v7453, %v7478
    %v7481 = vunpack.c.l.s4 1966171168
    %v7482 = vunpack.c.0.s8 %v7481
    %v7483 = vlaneseq
    %v7484 = vshrl.u32 %v7483, 7
    %v7485 = vsub.s32 %v7482, %v7484
    %v7486 = vrot.slane %v7454, %v7485
    %v7488 = vunpack.c.l.s4 1966171168
    %v7489 = vunpack.c.0.s8 %v7488
    %v7490 = vlaneseq
    %v7491 = vshrl.u32 %v7490, 7
    %v7492 = vsub.s32 %v7489, %v7491
    %v7493 = vrot.slane %v7455, %v7492
    %v7495 = vunpack.c.l.s4 1966171168
    %v7496 = vunpack.c.0.s8 %v7495
    %v7497 = vlaneseq
    %v7498 = vshrl.u32 %v7497, 7
    %v7499 = vsub.s32 %v7496, %v7498
    %v7500 = vrot.slane %v7456, %v7499
    %v7502 = vunpack.c.l.s4 1966171168
    %v7503 = vunpack.c.0.s8 %v7502
    %v7504 = vlaneseq
    %v7505 = vshrl.u32 %v7504, 7
    %v7506 = vsub.s32 %v7503, %v7505
    %v7507 = vrot.slane %v7457, %v7506
    %v7509 = vunpack.c.l.s4 1966171168
    %v7510 = vunpack.c.0.s8 %v7509
    %v7511 = vlaneseq
    %v7512 = vshrl.u32 %v7511, 7
    %v7513 = vsub.s32 %v7510, %v7512
    %v7514 = vrot.slane %v7458, %v7513
    %v7515 = vcombine.low %v7465, %v7479
    %v7516 = vcombine.high %v7465, %v7479
    %v7517 = vcombine.low %v7472, %v7486
    %v7518 = vcombine.high %v7472, %v7486
    %v7519 = vcombine.low %v7493, %v7507
    %v7520 = vcombine.high %v7493, %v7507
    %v7521 = vcombine.low %v7500, %v7514
    %v7522 = vcombine.high %v7500, %v7514
    %v7524 = vunpack.c.l.s4 1966171168
    %v7525 = vunpack.c.0.s8 %v7524
    %v7526 = vlaneseq
    %v7527 = vshrl.u32 %v7526, 7
    %v7528 = vsub.s32 %v7525, %v7527
    %v7529 = vrot.slane %v7515, %v7528
    %v7531 = vunpack.c.l.s4 1966171168
    %v7532 = vunpack.c.0.s8 %v7531
    %v7533 = vlaneseq
    %v7534 = vshrl.u32 %v7533, 7
    %v7535 = vsub.s32 %v7532, %v7534
    %v7536 = vrot.slane %v7517, %v7535
    %v7538 = vunpack.c.l.s4 1966171168
    %v7539 = vunpack.c.0.s8 %v7538
    %v7540 = vlaneseq
    %v7541 = vshrl.u32 %v7540, 7
    %v7542 = vsub.s32 %v7539, %v7541
    %v7543 = vrot.slane %v7516, %v7542
    %v7545 = vunpack.c.l.s4 1966171168
    %v7546 = vunpack.c.0.s8 %v7545
    %v7547 = vlaneseq
    %v7548 = vshrl.u32 %v7547, 7
    %v7549 = vsub.s32 %v7546, %v7548
    %v7550 = vrot.slane %v7518, %v7549
    %v7552 = vunpack.c.l.s4 1966171168
    %v7553 = vunpack.c.0.s8 %v7552
    %v7554 = vlaneseq
    %v7555 = vshrl.u32 %v7554, 7
    %v7556 = vsub.s32 %v7553, %v7555
    %v7557 = vrot.slane %v7519, %v7556
    %v7559 = vunpack.c.l.s4 1966171168
    %v7560 = vunpack.c.0.s8 %v7559
    %v7561 = vlaneseq
    %v7562 = vshrl.u32 %v7561, 7
    %v7563 = vsub.s32 %v7560, %v7562
    %v7564 = vrot.slane %v7521, %v7563
    %v7566 = vunpack.c.l.s4 1966171168
    %v7567 = vunpack.c.0.s8 %v7566
    %v7568 = vlaneseq
    %v7569 = vshrl.u32 %v7568, 7
    %v7570 = vsub.s32 %v7567, %v7569
    %v7571 = vrot.slane %v7520, %v7570
    %v7573 = vunpack.c.l.s4 1966171168
    %v7574 = vunpack.c.0.s8 %v7573
    %v7575 = vlaneseq
    %v7576 = vshrl.u32 %v7575, 7
    %v7577 = vsub.s32 %v7574, %v7576
    %v7578 = vrot.slane %v7522, %v7577
    %v7579 = vcombine.low %v7529, %v7557
    %v7580 = vcombine.high %v7529, %v7557
    %v7581 = vcombine.low %v7536, %v7564
    %v7582 = vcombine.high %v7536, %v7564
    %v7583 = vcombine.low %v7543, %v7571
    %v7584 = vcombine.high %v7543, %v7571
    %v7585 = vcombine.low %v7550, %v7578
    %v7586 = vcombine.high %v7550, %v7578
    %v7587 = vcombine.low %v7301, %v7302
    %v7588 = vcombine.high %v7301, %v7302
    %v7589 = vcombine.low %v7303, %v7304
    %v7590 = vcombine.high %v7303, %v7304
    %v7591 = vcombine.low %v7424, %v7426
    %v7592 = vcombine.high %v7424, %v7426
    %v7593 = vcombine.low %v7428, %v7430
    %v7594 = vcombine.high %v7428, %v7430
    %v7596 = vunpack.c.l.s4 1966171168
    %v7597 = vunpack.c.0.s8 %v7596
    %v7598 = vlaneseq
    %v7599 = vshrl.u32 %v7598, 7
    %v7600 = vsub.s32 %v7597, %v7599
    %v7601 = vrot.slane %v7587, %v7600
    %v7603 = vunpack.c.l.s4 1966171168
    %v7604 = vunpack.c.0.s8 %v7603
    %v7605 = vlaneseq
    %v7606 = vshrl.u32 %v7605, 7
    %v7607 = vsub.s32 %v7604, %v7606
    %v7608 = vrot.slane %v7588, %v7607
    %v7610 = vunpack.c.l.s4 1966171168
    %v7611 = vunpack.c.0.s8 %v7610
    %v7612 = vlaneseq
    %v7613 = vshrl.u32 %v7612, 7
    %v7614 = vsub.s32 %v7611, %v7613
    %v7615 = vrot.slane %v7589, %v7614
    %v7617 = vunpack.c.l.s4 1966171168
    %v7618 = vunpack.c.0.s8 %v7617
    %v7619 = vlaneseq
    %v7620 = vshrl.u32 %v7619, 7
    %v7621 = vsub.s32 %v7618, %v7620
    %v7622 = vrot.slane %v7590, %v7621
    %v7624 = vunpack.c.l.s4 1966171168
    %v7625 = vunpack.c.0.s8 %v7624
    %v7626 = vlaneseq
    %v7627 = vshrl.u32 %v7626, 7
    %v7628 = vsub.s32 %v7625, %v7627
    %v7629 = vrot.slane %v7591, %v7628
    %v7631 = vunpack.c.l.s4 1966171168
    %v7632 = vunpack.c.0.s8 %v7631
    %v7633 = vlaneseq
    %v7634 = vshrl.u32 %v7633, 7
    %v7635 = vsub.s32 %v7632, %v7634
    %v7636 = vrot.slane %v7592, %v7635
    %v7638 = vunpack.c.l.s4 1966171168
    %v7639 = vunpack.c.0.s8 %v7638
    %v7640 = vlaneseq
    %v7641 = vshrl.u32 %v7640, 7
    %v7642 = vsub.s32 %v7639, %v7641
    %v7643 = vrot.slane %v7593, %v7642
    %v7645 = vunpack.c.l.s4 1966171168
    %v7646 = vunpack.c.0.s8 %v7645
    %v7647 = vlaneseq
    %v7648 = vshrl.u32 %v7647, 7
    %v7649 = vsub.s32 %v7646, %v7648
    %v7650 = vrot.slane %v7594, %v7649
    %v7651 = vcombine.low %v7601, %v7615
    %v7652 = vcombine.high %v7601, %v7615
    %v7653 = vcombine.low %v7608, %v7622
    %v7654 = vcombine.high %v7608, %v7622
    %v7655 = vcombine.low %v7629, %v7643
    %v7656 = vcombine.high %v7629, %v7643
    %v7657 = vcombine.low %v7636, %v7650
    %v7658 = vcombine.high %v7636, %v7650
    %v7660 = vunpack.c.l.s4 1966171168
    %v7661 = vunpack.c.0.s8 %v7660
    %v7662 = vlaneseq
    %v7663 = vshrl.u32 %v7662, 7
    %v7664 = vsub.s32 %v7661, %v7663
    %v7665 = vrot.slane %v7651, %v7664
    %v7667 = vunpack.c.l.s4 1966171168
    %v7668 = vunpack.c.0.s8 %v7667
    %v7669 = vlaneseq
    %v7670 = vshrl.u32 %v7669, 7
    %v7671 = vsub.s32 %v7668, %v7670
    %v7672 = vrot.slane %v7653, %v7671
    %v7674 = vunpack.c.l.s4 1966171168
    %v7675 = vunpack.c.0.s8 %v7674
    %v7676 = vlaneseq
    %v7677 = vshrl.u32 %v7676, 7
    %v7678 = vsub.s32 %v7675, %v7677
    %v7679 = vrot.slane %v7652, %v7678
    %v7681 = vunpack.c.l.s4 1966171168
    %v7682 = vunpack.c.0.s8 %v7681
    %v7683 = vlaneseq
    %v7684 = vshrl.u32 %v7683, 7
    %v7685 = vsub.s32 %v7682, %v7684
    %v7686 = vrot.slane %v7654, %v7685
    %v7688 = vunpack.c.l.s4 1966171168
    %v7689 = vunpack.c.0.s8 %v7688
    %v7690 = vlaneseq
    %v7691 = vshrl.u32 %v7690, 7
    %v7692 = vsub.s32 %v7689, %v7691
    %v7693 = vrot.slane %v7655, %v7692
    %v7695 = vunpack.c.l.s4 1966171168
    %v7696 = vunpack.c.0.s8 %v7695
    %v7697 = vlaneseq
    %v7698 = vshrl.u32 %v7697, 7
    %v7699 = vsub.s32 %v7696, %v7698
    %v7700 = vrot.slane %v7657, %v7699
    %v7702 = vunpack.c.l.s4 1966171168
    %v7703 = vunpack.c.0.s8 %v7702
    %v7704 = vlaneseq
    %v7705 = vshrl.u32 %v7704, 7
    %v7706 = vsub.s32 %v7703, %v7705
    %v7707 = vrot.slane %v7656, %v7706
    %v7709 = vunpack.c.l.s4 1966171168
    %v7710 = vunpack.c.0.s8 %v7709
    %v7711 = vlaneseq
    %v7712 = vshrl.u32 %v7711, 7
    %v7713 = vsub.s32 %v7710, %v7712
    %v7714 = vrot.slane %v7658, %v7713
    %v7715 = vcombine.low %v7665, %v7693
    %v7716 = vcombine.high %v7665, %v7693
    %v7717 = vcombine.low %v7672, %v7700
    %v7718 = vcombine.high %v7672, %v7700
    %v7719 = vcombine.low %v7679, %v7707
    %v7720 = vcombine.high %v7679, %v7707
    %v7721 = vcombine.low %v7686, %v7714
    %v7722 = vcombine.high %v7686, %v7714
    %v7723 = vcombine.low %v7312, %v7320
    %v7724 = vcombine.low %v7319, %v7321
    %v7725 = vcombine.low %v7423, %v7425
    %v7726 = vcombine.low %v7427, %v7429
    %v7728 = vunpack.c.l.s4 1966171168
    %v7729 = vunpack.c.0.s8 %v7728
    %v7730 = vlaneseq
    %v7731 = vshrl.u32 %v7730, 7
    %v7732 = vsub.s32 %v7729, %v7731
    %v7733 = vrot.slane %v7723, %v7732
    %v7735 = vunpack.c.l.s4 1966171168
    %v7736 = vunpack.c.0.s8 %v7735
    %v7737 = vlaneseq
    %v7738 = vshrl.u32 %v7737, 7
    %v7739 = vsub.s32 %v7736, %v7738
    %v7740 = vrot.slane %v7724, %v7739
    %v7742 = vunpack.c.l.s4 1966171168
    %v7743 = vunpack.c.0.s8 %v7742
    %v7744 = vlaneseq
    %v7745 = vshrl.u32 %v7744, 7
    %v7746 = vsub.s32 %v7743, %v7745
    %v7747 = vrot.slane %v7725, %v7746
    %v7749 = vunpack.c.l.s4 1966171168
    %v7750 = vunpack.c.0.s8 %v7749
    %v7751 = vlaneseq
    %v7752 = vshrl.u32 %v7751, 7
    %v7753 = vsub.s32 %v7750, %v7752
    %v7754 = vrot.slane %v7726, %v7753
    %v7755 = vcombine.low %v7733, %v7740
    %v7756 = vcombine.low %v7747, %v7754
    %v7758 = vunpack.c.l.s4 1966171168
    %v7759 = vunpack.c.0.s8 %v7758
    %v7760 = vlaneseq
    %v7761 = vshrl.u32 %v7760, 7
    %v7762 = vsub.s32 %v7759, %v7761
    %v7763 = vrot.slane %v7755, %v7762
    %v7765 = vunpack.c.l.s4 1966171168
    %v7766 = vunpack.c.0.s8 %v7765
    %v7767 = vlaneseq
    %v7768 = vshrl.u32 %v7767, 7
    %v7769 = vsub.s32 %v7766, %v7768
    %v7770 = vrot.slane %v7756, %v7769
    %v7771 = vcombine.low %v7763, %v7770
    %v7772 = vcombine.low %v7354, %v7355
    %v7773 = vcombine.high %v7354, %v7355
    %v7774 = vcombine.low %v7356, %v7357
    %v7775 = vcombine.high %v7356, %v7357
    %v7776 = vcombine.low %v7433, %v7436
    %v7777 = vcombine.high %v7433, %v7436
    %v7778 = vcombine.low %v7439, %v7442
    %v7779 = vcombine.high %v7439, %v7442
    %v7781 = vunpack.c.l.s4 1966171168
    %v7782 = vunpack.c.0.s8 %v7781
    %v7783 = vlaneseq
    %v7784 = vshrl.u32 %v7783, 7
    %v7785 = vsub.s32 %v7782, %v7784
    %v7786 = vrot.slane %v7772, %v7785
    %v7788 = vunpack.c.l.s4 1966171168
    %v7789 = vunpack.c.0.s8 %v7788
    %v7790 = vlaneseq
    %v7791 = vshrl.u32 %v7790, 7
    %v7792 = vsub.s32 %v7789, %v7791
    %v7793 = vrot.slane %v7773, %v7792
    %v7795 = vunpack.c.l.s4 1966171168
    %v7796 = vunpack.c.0.s8 %v7795
    %v7797 = vlaneseq
    %v7798 = vshrl.u32 %v7797, 7
    %v7799 = vsub.s32 %v7796, %v7798
    %v7800 = vrot.slane %v7774, %v7799
    %v7802 = vunpack.c.l.s4 1966171168
    %v7803 = vunpack.c.0.s8 %v7802
    %v7804 = vlaneseq
    %v7805 = vshrl.u32 %v7804, 7
    %v7806 = vsub.s32 %v7803, %v7805
    %v7807 = vrot.slane %v7775, %v7806
    %v7809 = vunpack.c.l.s4 1966171168
    %v7810 = vunpack.c.0.s8 %v7809
    %v7811 = vlaneseq
    %v7812 = vshrl.u32 %v7811, 7
    %v7813 = vsub.s32 %v7810, %v7812
    %v7814 = vrot.slane %v7776, %v7813
    %v7816 = vunpack.c.l.s4 1966171168
    %v7817 = vunpack.c.0.s8 %v7816
    %v7818 = vlaneseq
    %v7819 = vshrl.u32 %v7818, 7
    %v7820 = vsub.s32 %v7817, %v7819
    %v7821 = vrot.slane %v7777, %v7820
    %v7823 = vunpack.c.l.s4 1966171168
    %v7824 = vunpack.c.0.s8 %v7823
    %v7825 = vlaneseq
    %v7826 = vshrl.u32 %v7825, 7
    %v7827 = vsub.s32 %v7824, %v7826
    %v7828 = vrot.slane %v7778, %v7827
    %v7830 = vunpack.c.l.s4 1966171168
    %v7831 = vunpack.c.0.s8 %v7830
    %v7832 = vlaneseq
    %v7833 = vshrl.u32 %v7832, 7
    %v7834 = vsub.s32 %v7831, %v7833
    %v7835 = vrot.slane %v7779, %v7834
    %v7836 = vcombine.low %v7786, %v7800
    %v7837 = vcombine.high %v7786, %v7800
    %v7838 = vcombine.low %v7793, %v7807
    %v7839 = vcombine.high %v7793, %v7807
    %v7840 = vcombine.low %v7814, %v7828
    %v7841 = vcombine.high %v7814, %v7828
    %v7842 = vcombine.low %v7821, %v7835
    %v7843 = vcombine.high %v7821, %v7835
    %v7845 = vunpack.c.l.s4 1966171168
    %v7846 = vunpack.c.0.s8 %v7845
    %v7847 = vlaneseq
    %v7848 = vshrl.u32 %v7847, 7
    %v7849 = vsub.s32 %v7846, %v7848
    %v7850 = vrot.slane %v7836, %v7849
    %v7852 = vunpack.c.l.s4 1966171168
    %v7853 = vunpack.c.0.s8 %v7852
    %v7854 = vlaneseq
    %v7855 = vshrl.u32 %v7854, 7
    %v7856 = vsub.s32 %v7853, %v7855
    %v7857 = vrot.slane %v7838, %v7856
    %v7859 = vunpack.c.l.s4 1966171168
    %v7860 = vunpack.c.0.s8 %v7859
    %v7861 = vlaneseq
    %v7862 = vshrl.u32 %v7861, 7
    %v7863 = vsub.s32 %v7860, %v7862
    %v7864 = vrot.slane %v7837, %v7863
    %v7866 = vunpack.c.l.s4 1966171168
    %v7867 = vunpack.c.0.s8 %v7866
    %v7868 = vlaneseq
    %v7869 = vshrl.u32 %v7868, 7
    %v7870 = vsub.s32 %v7867, %v7869
    %v7871 = vrot.slane %v7839, %v7870
    %v7873 = vunpack.c.l.s4 1966171168
    %v7874 = vunpack.c.0.s8 %v7873
    %v7875 = vlaneseq
    %v7876 = vshrl.u32 %v7875, 7
    %v7877 = vsub.s32 %v7874, %v7876
    %v7878 = vrot.slane %v7840, %v7877
    %v7880 = vunpack.c.l.s4 1966171168
    %v7881 = vunpack.c.0.s8 %v7880
    %v7882 = vlaneseq
    %v7883 = vshrl.u32 %v7882, 7
    %v7884 = vsub.s32 %v7881, %v7883
    %v7885 = vrot.slane %v7842, %v7884
    %v7887 = vunpack.c.l.s4 1966171168
    %v7888 = vunpack.c.0.s8 %v7887
    %v7889 = vlaneseq
    %v7890 = vshrl.u32 %v7889, 7
    %v7891 = vsub.s32 %v7888, %v7890
    %v7892 = vrot.slane %v7841, %v7891
    %v7894 = vunpack.c.l.s4 1966171168
    %v7895 = vunpack.c.0.s8 %v7894
    %v7896 = vlaneseq
    %v7897 = vshrl.u32 %v7896, 7
    %v7898 = vsub.s32 %v7895, %v7897
    %v7899 = vrot.slane %v7843, %v7898
    %v7900 = vcombine.low %v7850, %v7878
    %v7901 = vcombine.high %v7850, %v7878
    %v7902 = vcombine.low %v7857, %v7885
    %v7903 = vcombine.high %v7857, %v7885
    %v7904 = vcombine.low %v7864, %v7892
    %v7905 = vcombine.high %v7864, %v7892
    %v7906 = vcombine.low %v7871, %v7899
    %v7907 = vcombine.high %v7871, %v7899
    %v7908 = vcombine.low %v7390, %v7391
    %v7909 = vcombine.high %v7390, %v7391
    %v7910 = vcombine.low %v7392, %v7393
    %v7911 = vcombine.high %v7392, %v7393
    %v7912 = vcombine.low %v7444, %v7446
    %v7913 = vcombine.high %v7444, %v7446
    %v7914 = vcombine.low %v7448, %v7450
    %v7915 = vcombine.high %v7448, %v7450
    %v7917 = vunpack.c.l.s4 1966171168
    %v7918 = vunpack.c.0.s8 %v7917
    %v7919 = vlaneseq
    %v7920 = vshrl.u32 %v7919, 7
    %v7921 = vsub.s32 %v7918, %v7920
    %v7922 = vrot.slane %v7908, %v7921
    %v7924 = vunpack.c.l.s4 1966171168
    %v7925 = vunpack.c.0.s8 %v7924
    %v7926 = vlaneseq
    %v7927 = vshrl.u32 %v7926, 7
    %v7928 = vsub.s32 %v7925, %v7927
    %v7929 = vrot.slane %v7909, %v7928
    %v7931 = vunpack.c.l.s4 1966171168
    %v7932 = vunpack.c.0.s8 %v7931
    %v7933 = vlaneseq
    %v7934 = vshrl.u32 %v7933, 7
    %v7935 = vsub.s32 %v7932, %v7934
    %v7936 = vrot.slane %v7910, %v7935
    %v7938 = vunpack.c.l.s4 1966171168
    %v7939 = vunpack.c.0.s8 %v7938
    %v7940 = vlaneseq
    %v7941 = vshrl.u32 %v7940, 7
    %v7942 = vsub.s32 %v7939, %v7941
    %v7943 = vrot.slane %v7911, %v7942
    %v7945 = vunpack.c.l.s4 1966171168
    %v7946 = vunpack.c.0.s8 %v7945
    %v7947 = vlaneseq
    %v7948 = vshrl.u32 %v7947, 7
    %v7949 = vsub.s32 %v7946, %v7948
    %v7950 = vrot.slane %v7912, %v7949
    %v7952 = vunpack.c.l.s4 1966171168
    %v7953 = vunpack.c.0.s8 %v7952
    %v7954 = vlaneseq
    %v7955 = vshrl.u32 %v7954, 7
    %v7956 = vsub.s32 %v7953, %v7955
    %v7957 = vrot.slane %v7913, %v7956
    %v7959 = vunpack.c.l.s4 1966171168
    %v7960 = vunpack.c.0.s8 %v7959
    %v7961 = vlaneseq
    %v7962 = vshrl.u32 %v7961, 7
    %v7963 = vsub.s32 %v7960, %v7962
    %v7964 = vrot.slane %v7914, %v7963
    %v7966 = vunpack.c.l.s4 1966171168
    %v7967 = vunpack.c.0.s8 %v7966
    %v7968 = vlaneseq
    %v7969 = vshrl.u32 %v7968, 7
    %v7970 = vsub.s32 %v7967, %v7969
    %v7971 = vrot.slane %v7915, %v7970
    %v7972 = vcombine.low %v7922, %v7936
    %v7973 = vcombine.high %v7922, %v7936
    %v7974 = vcombine.low %v7929, %v7943
    %v7975 = vcombine.high %v7929, %v7943
    %v7976 = vcombine.low %v7950, %v7964
    %v7977 = vcombine.high %v7950, %v7964
    %v7978 = vcombine.low %v7957, %v7971
    %v7979 = vcombine.high %v7957, %v7971
    %v7981 = vunpack.c.l.s4 1966171168
    %v7982 = vunpack.c.0.s8 %v7981
    %v7983 = vlaneseq
    %v7984 = vshrl.u32 %v7983, 7
    %v7985 = vsub.s32 %v7982, %v7984
    %v7986 = vrot.slane %v7972, %v7985
    %v7988 = vunpack.c.l.s4 1966171168
    %v7989 = vunpack.c.0.s8 %v7988
    %v7990 = vlaneseq
    %v7991 = vshrl.u32 %v7990, 7
    %v7992 = vsub.s32 %v7989, %v7991
    %v7993 = vrot.slane %v7974, %v7992
    %v7995 = vunpack.c.l.s4 1966171168
    %v7996 = vunpack.c.0.s8 %v7995
    %v7997 = vlaneseq
    %v7998 = vshrl.u32 %v7997, 7
    %v7999 = vsub.s32 %v7996, %v7998
    %v8000 = vrot.slane %v7973, %v7999
    %v8002 = vunpack.c.l.s4 1966171168
    %v8003 = vunpack.c.0.s8 %v8002
    %v8004 = vlaneseq
    %v8005 = vshrl.u32 %v8004, 7
    %v8006 = vsub.s32 %v8003, %v8005
    %v8007 = vrot.slane %v7975, %v8006
    %v8009 = vunpack.c.l.s4 1966171168
    %v8010 = vunpack.c.0.s8 %v8009
    %v8011 = vlaneseq
    %v8012 = vshrl.u32 %v8011, 7
    %v8013 = vsub.s32 %v8010, %v8012
    %v8014 = vrot.slane %v7976, %v8013
    %v8016 = vunpack.c.l.s4 1966171168
    %v8017 = vunpack.c.0.s8 %v8016
    %v8018 = vlaneseq
    %v8019 = vshrl.u32 %v8018, 7
    %v8020 = vsub.s32 %v8017, %v8019
    %v8021 = vrot.slane %v7978, %v8020
    %v8023 = vunpack.c.l.s4 1966171168
    %v8024 = vunpack.c.0.s8 %v8023
    %v8025 = vlaneseq
    %v8026 = vshrl.u32 %v8025, 7
    %v8027 = vsub.s32 %v8024, %v8026
    %v8028 = vrot.slane %v7977, %v8027
    %v8030 = vunpack.c.l.s4 1966171168
    %v8031 = vunpack.c.0.s8 %v8030
    %v8032 = vlaneseq
    %v8033 = vshrl.u32 %v8032, 7
    %v8034 = vsub.s32 %v8031, %v8033
    %v8035 = vrot.slane %v7979, %v8034
    %v8036 = vcombine.low %v7986, %v8014
    %v8037 = vcombine.high %v7986, %v8014
    %v8038 = vcombine.low %v7993, %v8021
    %v8039 = vcombine.high %v7993, %v8021
    %v8040 = vcombine.low %v8000, %v8028
    %v8041 = vcombine.high %v8000, %v8028
    %v8042 = vcombine.low %v8007, %v8035
    %v8043 = vcombine.high %v8007, %v8035
    %v8044 = vcombine.low %v7401, %v7409
    %v8045 = vcombine.low %v7408, %v7410
    %v8046 = vcombine.low %v7443, %v7445
    %v8047 = vcombine.low %v7447, %v7449
    %v8049 = vunpack.c.l.s4 1966171168
    %v8050 = vunpack.c.0.s8 %v8049
    %v8051 = vlaneseq
    %v8052 = vshrl.u32 %v8051, 7
    %v8053 = vsub.s32 %v8050, %v8052
    %v8054 = vrot.slane %v8044, %v8053
    %v8056 = vunpack.c.l.s4 1966171168
    %v8057 = vunpack.c.0.s8 %v8056
    %v8058 = vlaneseq
    %v8059 = vshrl.u32 %v8058, 7
    %v8060 = vsub.s32 %v8057, %v8059
    %v8061 = vrot.slane %v8045, %v8060
    %v8063 = vunpack.c.l.s4 1966171168
    %v8064 = vunpack.c.0.s8 %v8063
    %v8065 = vlaneseq
    %v8066 = vshrl.u32 %v8065, 7
    %v8067 = vsub.s32 %v8064, %v8066
    %v8068 = vrot.slane %v8046, %v8067
    %v8070 = vunpack.c.l.s4 1966171168
    %v8071 = vunpack.c.0.s8 %v8070
    %v8072 = vlaneseq
    %v8073 = vshrl.u32 %v8072, 7
    %v8074 = vsub.s32 %v8071, %v8073
    %v8075 = vrot.slane %v8047, %v8074
    %v8076 = vcombine.low %v8054, %v8061
    %v8077 = vcombine.low %v8068, %v8075
    %v8079 = vunpack.c.l.s4 1966171168
    %v8080 = vunpack.c.0.s8 %v8079
    %v8081 = vlaneseq
    %v8082 = vshrl.u32 %v8081, 7
    %v8083 = vsub.s32 %v8080, %v8082
    %v8084 = vrot.slane %v8076, %v8083
    %v8086 = vunpack.c.l.s4 1966171168
    %v8087 = vunpack.c.0.s8 %v8086
    %v8088 = vlaneseq
    %v8089 = vshrl.u32 %v8088, 7
    %v8090 = vsub.s32 %v8087, %v8089
    %v8091 = vrot.slane %v8077, %v8090
    %v8092 = vcombine.low %v8084, %v8091
    %v8093 = vld [vmem:[%s11] sm:$0xff]
    %v8094 = vld [vmem:[%s11 + $0x8] sm:$0xff]
    %v8095 = vld [vmem:[%s11 + $0x10] sm:$0xff]
    %v8096 = vld [vmem:[%s11 + $0x18] sm:$0xff]
    %v8097 = vld [vmem:[%s11 + $0x20] sm:$0xff]
    %v8098 = vld [vmem:[%s11 + $0x28] sm:$0xff]
    %v8099 = vld [vmem:[%s11 + $0x30] sm:$0xff]
    %v8100 = vld [vmem:[%s11 + $0x38] sm:$0xff]
    %v8101 = vld [vmem:[%s11 + $0x40] sm:$0xff]
    %v8102 = vld [vmem:[%s11 + $0x48] sm:$0xff]
    %v8103 = vld [vmem:[%s11 + $0x50] sm:$0xff]
    %v8104 = vld [vmem:[%s11 + $0x58] sm:$0xff]
    %v8105 = vld [vmem:[%s11 + $0x60] sm:$0xff]
    %v8106 = vld [vmem:[%s11 + $0x68] sm:$0xff]
    %v8107 = vld [vmem:[%s11 + $0x70] sm:$0xff]
    %v8108 = vld [vmem:[%s11 + $0x78] sm:$0xff]
    %v8109 = vld [vmem:[%s11 + $0x80] sm:$0xff]
    %v8110 = vld [vmem:[%s11 + $0x88] sm:$0xff]
    %v8111 = vld [vmem:[%s11 + $0x90] sm:$0xff]
    %v8112 = vld [vmem:[%s11 + $0x98] sm:$0xff]
    %v8113 = vld [vmem:[%s11 + $0xa0] sm:$0xff]
    %v8114 = vld [vmem:[%s11 + $0xa8] sm:$0xff]
    %v8115 = vld [vmem:[%s11 + $0xb0] sm:$0xff]
    %v8116 = vld [vmem:[%s11 + $0xb8] sm:$0xff]
    %v8117 = vld [vmem:[%s11 + $0xc0] sm:$0xff]
    %v8118 = vld [vmem:[%s11 + $0xc8] sm:$0xff]
    %v8119 = vld [vmem:[%s11 + $0xd0] sm:$0xff]
    %v8120 = vld [vmem:[%s11 + $0xd8] sm:$0xff]
    %v8121 = vld [vmem:[%s11 + $0xe0] sm:$0xff]
    %v8122 = vld [vmem:[%s11 + $0xe8] sm:$0xff]
    %v8123 = vld [vmem:[%s11 + $0xf0] sm:$0xff]
    %v8124 = vld [vmem:[%s11 + $0xf8] sm:$0xff]
    %v8125 = vld [vmem:[%s11 + $0x100] sm:$0xff]
    %v8126 = vld [vmem:[%s11 + $0x108] sm:$0xff]
    %v8127 = vld [vmem:[%s11 + $0x110] sm:$0xff]
    %v8128 = vld [vmem:[%s11 + $0x118] sm:$0xff]
    %v8129 = vld [vmem:[%s11 + $0x120] sm:$0xff]
    %v8130 = vld [vmem:[%s11 + $0x128] sm:$0xff]
    %v8131 = vld [vmem:[%s11 + $0x130] sm:$0xff]
    %v8132 = vld [vmem:[%s11 + $0x138] sm:$0xff]
    %v8133 = vld [vmem:[%s11 + $0x140] sm:$0xff]
    %v8134 = vld [vmem:[%s11 + $0x148] sm:$0xff]
    %v8135 = vld [vmem:[%s11 + $0x150] sm:$0xff]
    %v8136 = vld [vmem:[%s11 + $0x158] sm:$0xff]
    %v8137 = vld [vmem:[%s11 + $0x160] sm:$0xff]
    %v8138 = vld [vmem:[%s11 + $0x168] sm:$0xff]
    %v8139 = vld [vmem:[%s11 + $0x170] sm:$0xff]
    %v8140 = vld [vmem:[%s11 + $0x178] sm:$0xff]
    %v8141 = vld [vmem:[%s11 + $0x180] sm:$0xff]
    %v8142 = vld [vmem:[%s11 + $0x188] sm:$0xff]
    %v8143 = vld [vmem:[%s11 + $0x190] sm:$0xff]
    %v8144 = vld [vmem:[%s11 + $0x198] sm:$0xff]
    %v8145 = vld [vmem:[%s11 + $0x1a0] sm:$0xff]
    %v8146 = vld [vmem:[%s11 + $0x1a8] sm:$0xff]
    %v8147 = vld [vmem:[%s11 + $0x1b0] sm:$0xff]
    %v8148 = vld [vmem:[%s11 + $0x1b8] sm:$0xff]
    %v8149 = vld [vmem:[%s11 + $0x1c0] sm:$0xff]
    %v8150 = vld [vmem:[%s11 + $0x1c8] sm:$0xff]
    %v8151 = vld [vmem:[%s11 + $0x1d0] sm:$0xff]
    %v8152 = vld [vmem:[%s11 + $0x1d8] sm:$0xff]
    %v8153 = vld [vmem:[%s11 + $0x1e0] sm:$0xff]
    %v8154 = vld [vmem:[%s11 + $0x1e8] sm:$0xff]
    %v8155 = vld [vmem:[%s11 + $0x1f0] sm:$0xff]
    %v8156 = vld [vmem:[%s11 + $0x1f8] sm:$0xff]
    %v8157 = vld [vmem:[%s11 + $0x200] sm:$0xff]
    %v8158 = vld [vmem:[%s11 + $0x208] sm:$0xff]
    %v8159 = vld [vmem:[%s11 + $0x210] sm:$0xff]
    %v8160 = vld [vmem:[%s11 + $0x218] sm:$0xff]
    %v8161 = vld [vmem:[%s11 + $0x220] sm:$0xff]
    %v8162 = vld [vmem:[%s11 + $0x228] sm:$0xff]
    %v8163 = vld [vmem:[%s11 + $0x230] sm:$0xff]
    %v8164 = vld [vmem:[%s11 + $0x238] sm:$0xff]
    %v8165 = vld [vmem:[%s11 + $0x240] sm:$0xff]
    %v8166 = vld [vmem:[%s11 + $0x248] sm:$0xff]
    %v8167 = vld [vmem:[%s11 + $0x250] sm:$0xff]
    %v8168 = vld [vmem:[%s11 + $0x258] sm:$0xff]
    %v8169 = vld [vmem:[%s11 + $0x260] sm:$0xff]
    %v8170 = vld [vmem:[%s11 + $0x268] sm:$0xff]
    %v8171 = vld [vmem:[%s11 + $0x270] sm:$0xff]
    %v8172 = vld [vmem:[%s11 + $0x278] sm:$0xff]
    %v8173 = vld [vmem:[%s11 + $0x280] sm:$0xff]
    %v8174 = vld [vmem:[%s11 + $0x288] sm:$0xff]
    %v8175 = vld [vmem:[%s11 + $0x290] sm:$0xff]
    %v8176 = vld [vmem:[%s11 + $0x298] sm:$0xff]
    %v8177 = vld [vmem:[%s11 + $0x2a0] sm:$0xff]
    %v8178 = vld [vmem:[%s11 + $0x2a8] sm:$0xff]
    %v8179 = vld [vmem:[%s11 + $0x2b0] sm:$0xff]
    %v8180 = vld [vmem:[%s11 + $0x2b8] sm:$0xff]
    %v8181 = vld [vmem:[%s11 + $0x2c0] sm:$0xff]
    %v8182 = vld [vmem:[%s11 + $0x2c8] sm:$0xff]
    %v8183 = vld [vmem:[%s11 + $0x2d0] sm:$0xff]
    %v8184 = vld [vmem:[%s11 + $0x2d8] sm:$0xff]
    %v8185 = vld [vmem:[%s11 + $0x2e0] sm:$0xff]
    %v8186 = vld [vmem:[%s11 + $0x2e8] sm:$0xff]
    %v8187 = vld [vmem:[%s11 + $0x2f0] sm:$0xff]
    %v8188 = vld [vmem:[%s11 + $0x2f8] sm:$0xff]
    %v8189 = vld [vmem:[%s11 + $0x300] sm:$0xff]
    %v8190 = vld [vmem:[%s11 + $0x308] sm:$0xff]
    %v8191 = vld [vmem:[%s11 + $0x310] sm:$0xff]
    %v8192 = vld [vmem:[%s11 + $0x318] sm:$0xff]
    %v8193 = vld [vmem:[%s11 + $0x320] sm:$0xff]
    %v8194 = vld [vmem:[%s11 + $0x328] sm:$0xff]
    %v8195 = vld [vmem:[%s11 + $0x330] sm:$0xff]
    %v8196 = vld [vmem:[%s11 + $0x338] sm:$0xff]
    %v8197 = vld [vmem:[%s11 + $0x340] sm:$0xff]
    %v8198 = vld [vmem:[%s11 + $0x348] sm:$0xff]
    %v8199 = vld [vmem:[%s11 + $0x350] sm:$0xff]
    %v8200 = vld [vmem:[%s11 + $0x358] sm:$0xff]
    %v8201 = vld [vmem:[%s11 + $0x360] sm:$0xff]
    %v8202 = vld [vmem:[%s11 + $0x368] sm:$0xff]
    %v8203 = vld [vmem:[%s11 + $0x370] sm:$0xff]
    %v8204 = vld [vmem:[%s11 + $0x378] sm:$0xff]
    %v8205 = vld [vmem:[%s11 + $0x380] sm:$0xff]
    %v8206 = vld [vmem:[%s11 + $0x388] sm:$0xff]
    %v8207 = vld [vmem:[%s11 + $0x390] sm:$0xff]
    %v8208 = vld [vmem:[%s11 + $0x398] sm:$0xff]
    %v8209 = vld [vmem:[%s11 + $0x3a0] sm:$0xff]
    %v8210 = vld [vmem:[%s11 + $0x3a8] sm:$0xff]
    %v8211 = vld [vmem:[%s11 + $0x3b0] sm:$0xff]
    %v8212 = vld [vmem:[%s11 + $0x3b8] sm:$0xff]
    %v8213 = vld [vmem:[%s11 + $0x3c0] sm:$0xff]
    %v8214 = vld [vmem:[%s11 + $0x3c8] sm:$0xff]
    %v8215 = vld [vmem:[%s11 + $0x3d0] sm:$0xff]
    %v8216 = vld [vmem:[%s11 + $0x3d8] sm:$0xff]
    %v8217 = vld [vmem:[%s11 + $0x3e0] sm:$0xff]
    %v8218 = vld [vmem:[%s11 + $0x3e8] sm:$0xff]
    %v8219 = vld [vmem:[%s11 + $0x3f0] sm:$0xff]
    %v8220 = vld [vmem:[%s11 + $0x3f8] sm:$0xff]
    %v8221 = vld [vmem:[%s12] sm:$0x1]
    %v8223 = vlaneseq
    %v8224 = vshrl.u32 %v8223, 7
    %v8225 = vsub.s32 0, %v8224
    %v8226 = vrot.slane %v8221, %v8225
    %v8228 = vcombine.low %v7579, %v7583
    %v8229 = vcombine.high %v7579, %v7583
    %v8230 = vcombine.low %v7580, %v7584
    %v8231 = vcombine.high %v7580, %v7584
    %v8232 = vcombine.low %v7581, %v7585
    %v8233 = vcombine.high %v7581, %v7585
    %v8234 = vcombine.low %v7582, %v7586
    %v8235 = vcombine.high %v7582, %v7586
    %v8237 = vunpack.c.l.s4 1966171168
    %v8238 = vunpack.c.0.s8 %v8237
    %v8239 = vlaneseq
    %v8240 = vshrl.u32 %v8239, 7
    %v8241 = vsub.s32 %v8238, %v8240
    %v8242 = vrot.slane %v8228, %v8241
    %v8244 = vunpack.c.l.s4 1966171168
    %v8245 = vunpack.c.0.s8 %v8244
    %v8246 = vlaneseq
    %v8247 = vshrl.u32 %v8246, 7
    %v8248 = vsub.s32 %v8245, %v8247
    %v8249 = vrot.slane %v8229, %v8248
    %v8251 = vunpack.c.l.s4 1966171168
    %v8252 = vunpack.c.0.s8 %v8251
    %v8253 = vlaneseq
    %v8254 = vshrl.u32 %v8253, 7
    %v8255 = vsub.s32 %v8252, %v8254
    %v8256 = vrot.slane %v8230, %v8255
    %v8258 = vunpack.c.l.s4 1966171168
    %v8259 = vunpack.c.0.s8 %v8258
    %v8260 = vlaneseq
    %v8261 = vshrl.u32 %v8260, 7
    %v8262 = vsub.s32 %v8259, %v8261
    %v8263 = vrot.slane %v8231, %v8262
    %v8265 = vunpack.c.l.s4 1966171168
    %v8266 = vunpack.c.0.s8 %v8265
    %v8267 = vlaneseq
    %v8268 = vshrl.u32 %v8267, 7
    %v8269 = vsub.s32 %v8266, %v8268
    %v8270 = vrot.slane %v8232, %v8269
    %v8272 = vunpack.c.l.s4 1966171168
    %v8273 = vunpack.c.0.s8 %v8272
    %v8274 = vlaneseq
    %v8275 = vshrl.u32 %v8274, 7
    %v8276 = vsub.s32 %v8273, %v8275
    %v8277 = vrot.slane %v8233, %v8276
    %v8279 = vunpack.c.l.s4 1966171168
    %v8280 = vunpack.c.0.s8 %v8279
    %v8281 = vlaneseq
    %v8282 = vshrl.u32 %v8281, 7
    %v8283 = vsub.s32 %v8280, %v8282
    %v8284 = vrot.slane %v8234, %v8283
    %v8286 = vunpack.c.l.s4 1966171168
    %v8287 = vunpack.c.0.s8 %v8286
    %v8288 = vlaneseq
    %v8289 = vshrl.u32 %v8288, 7
    %v8290 = vsub.s32 %v8287, %v8289
    %v8291 = vrot.slane %v8235, %v8290
    %v8292 = vcombine.low %v8242, %v8256
    %v8293 = vcombine.high %v8242, %v8256
    %v8294 = vcombine.low %v8249, %v8263
    %v8295 = vcombine.high %v8249, %v8263
    %v8296 = vcombine.low %v8270, %v8284
    %v8297 = vcombine.high %v8270, %v8284
    %v8298 = vcombine.low %v8277, %v8291
    %v8299 = vcombine.high %v8277, %v8291
    %v8301 = vunpack.c.l.s4 1966171168
    %v8302 = vunpack.c.0.s8 %v8301
    %v8303 = vlaneseq
    %v8304 = vshrl.u32 %v8303, 7
    %v8305 = vsub.s32 %v8302, %v8304
    %v8306 = vrot.slane %v8292, %v8305
    %v8308 = vunpack.c.l.s4 1966171168
    %v8309 = vunpack.c.0.s8 %v8308
    %v8310 = vlaneseq
    %v8311 = vshrl.u32 %v8310, 7
    %v8312 = vsub.s32 %v8309, %v8311
    %v8313 = vrot.slane %v8294, %v8312
    %v8315 = vunpack.c.l.s4 1966171168
    %v8316 = vunpack.c.0.s8 %v8315
    %v8317 = vlaneseq
    %v8318 = vshrl.u32 %v8317, 7
    %v8319 = vsub.s32 %v8316, %v8318
    %v8320 = vrot.slane %v8293, %v8319
    %v8322 = vunpack.c.l.s4 1966171168
    %v8323 = vunpack.c.0.s8 %v8322
    %v8324 = vlaneseq
    %v8325 = vshrl.u32 %v8324, 7
    %v8326 = vsub.s32 %v8323, %v8325
    %v8327 = vrot.slane %v8295, %v8326
    %v8329 = vunpack.c.l.s4 1966171168
    %v8330 = vunpack.c.0.s8 %v8329
    %v8331 = vlaneseq
    %v8332 = vshrl.u32 %v8331, 7
    %v8333 = vsub.s32 %v8330, %v8332
    %v8334 = vrot.slane %v8296, %v8333
    %v8336 = vunpack.c.l.s4 1966171168
    %v8337 = vunpack.c.0.s8 %v8336
    %v8338 = vlaneseq
    %v8339 = vshrl.u32 %v8338, 7
    %v8340 = vsub.s32 %v8337, %v8339
    %v8341 = vrot.slane %v8298, %v8340
    %v8343 = vunpack.c.l.s4 1966171168
    %v8344 = vunpack.c.0.s8 %v8343
    %v8345 = vlaneseq
    %v8346 = vshrl.u32 %v8345, 7
    %v8347 = vsub.s32 %v8344, %v8346
    %v8348 = vrot.slane %v8297, %v8347
    %v8350 = vunpack.c.l.s4 1966171168
    %v8351 = vunpack.c.0.s8 %v8350
    %v8352 = vlaneseq
    %v8353 = vshrl.u32 %v8352, 7
    %v8354 = vsub.s32 %v8351, %v8353
    %v8355 = vrot.slane %v8299, %v8354
    %v8356 = vcombine.low %v8306, %v8334
    %v8357 = vcombine.high %v8306, %v8334
    %v8358 = vcombine.low %v8313, %v8341
    %v8359 = vcombine.high %v8313, %v8341
    %v8360 = vcombine.low %v8320, %v8348
    %v8361 = vcombine.high %v8320, %v8348
    %v8362 = vcombine.low %v8327, %v8355
    %v8363 = vcombine.high %v8327, %v8355
    %v8364 = vcombine.low %v7715, %v7719
    %v8365 = vcombine.high %v7715, %v7719
    %v8366 = vcombine.low %v7716, %v7720
    %v8367 = vcombine.high %v7716, %v7720
    %v8368 = vcombine.low %v7717, %v7721
    %v8369 = vcombine.high %v7717, %v7721
    %v8370 = vcombine.low %v7718, %v7722
    %v8371 = vcombine.high %v7718, %v7722
    %v8373 = vunpack.c.l.s4 1966171168
    %v8374 = vunpack.c.0.s8 %v8373
    %v8375 = vlaneseq
    %v8376 = vshrl.u32 %v8375, 7
    %v8377 = vsub.s32 %v8374, %v8376
    %v8378 = vrot.slane %v8364, %v8377
    %v8380 = vunpack.c.l.s4 1966171168
    %v8381 = vunpack.c.0.s8 %v8380
    %v8382 = vlaneseq
    %v8383 = vshrl.u32 %v8382, 7
    %v8384 = vsub.s32 %v8381, %v8383
    %v8385 = vrot.slane %v8365, %v8384
    %v8387 = vunpack.c.l.s4 1966171168
    %v8388 = vunpack.c.0.s8 %v8387
    %v8389 = vlaneseq
    %v8390 = vshrl.u32 %v8389, 7
    %v8391 = vsub.s32 %v8388, %v8390
    %v8392 = vrot.slane %v8366, %v8391
    %v8394 = vunpack.c.l.s4 1966171168
    %v8395 = vunpack.c.0.s8 %v8394
    %v8396 = vlaneseq
    %v8397 = vshrl.u32 %v8396, 7
    %v8398 = vsub.s32 %v8395, %v8397
    %v8399 = vrot.slane %v8367, %v8398
    %v8401 = vunpack.c.l.s4 1966171168
    %v8402 = vunpack.c.0.s8 %v8401
    %v8403 = vlaneseq
    %v8404 = vshrl.u32 %v8403, 7
    %v8405 = vsub.s32 %v8402, %v8404
    %v8406 = vrot.slane %v8368, %v8405
    %v8408 = vunpack.c.l.s4 1966171168
    %v8409 = vunpack.c.0.s8 %v8408
    %v8410 = vlaneseq
    %v8411 = vshrl.u32 %v8410, 7
    %v8412 = vsub.s32 %v8409, %v8411
    %v8413 = vrot.slane %v8369, %v8412
    %v8415 = vunpack.c.l.s4 1966171168
    %v8416 = vunpack.c.0.s8 %v8415
    %v8417 = vlaneseq
    %v8418 = vshrl.u32 %v8417, 7
    %v8419 = vsub.s32 %v8416, %v8418
    %v8420 = vrot.slane %v8370, %v8419
    %v8422 = vunpack.c.l.s4 1966171168
    %v8423 = vunpack.c.0.s8 %v8422
    %v8424 = vlaneseq
    %v8425 = vshrl.u32 %v8424, 7
    %v8426 = vsub.s32 %v8423, %v8425
    %v8427 = vrot.slane %v8371, %v8426
    %v8428 = vcombine.low %v8378, %v8392
    %v8429 = vcombine.high %v8378, %v8392
    %v8430 = vcombine.low %v8385, %v8399
    %v8431 = vcombine.high %v8385, %v8399
    %v8432 = vcombine.low %v8406, %v8420
    %v8433 = vcombine.high %v8406, %v8420
    %v8434 = vcombine.low %v8413, %v8427
    %v8435 = vcombine.high %v8413, %v8427
    %v8437 = vunpack.c.l.s4 1966171168
    %v8438 = vunpack.c.0.s8 %v8437
    %v8439 = vlaneseq
    %v8440 = vshrl.u32 %v8439, 7
    %v8441 = vsub.s32 %v8438, %v8440
    %v8442 = vrot.slane %v8428, %v8441
    %v8444 = vunpack.c.l.s4 1966171168
    %v8445 = vunpack.c.0.s8 %v8444
    %v8446 = vlaneseq
    %v8447 = vshrl.u32 %v8446, 7
    %v8448 = vsub.s32 %v8445, %v8447
    %v8449 = vrot.slane %v8430, %v8448
    %v8451 = vunpack.c.l.s4 1966171168
    %v8452 = vunpack.c.0.s8 %v8451
    %v8453 = vlaneseq
    %v8454 = vshrl.u32 %v8453, 7
    %v8455 = vsub.s32 %v8452, %v8454
    %v8456 = vrot.slane %v8429, %v8455
    %v8458 = vunpack.c.l.s4 1966171168
    %v8459 = vunpack.c.0.s8 %v8458
    %v8460 = vlaneseq
    %v8461 = vshrl.u32 %v8460, 7
    %v8462 = vsub.s32 %v8459, %v8461
    %v8463 = vrot.slane %v8431, %v8462
    %v8465 = vunpack.c.l.s4 1966171168
    %v8466 = vunpack.c.0.s8 %v8465
    %v8467 = vlaneseq
    %v8468 = vshrl.u32 %v8467, 7
    %v8469 = vsub.s32 %v8466, %v8468
    %v8470 = vrot.slane %v8432, %v8469
    %v8472 = vunpack.c.l.s4 1966171168
    %v8473 = vunpack.c.0.s8 %v8472
    %v8474 = vlaneseq
    %v8475 = vshrl.u32 %v8474, 7
    %v8476 = vsub.s32 %v8473, %v8475
    %v8477 = vrot.slane %v8434, %v8476
    %v8479 = vunpack.c.l.s4 1966171168
    %v8480 = vunpack.c.0.s8 %v8479
    %v8481 = vlaneseq
    %v8482 = vshrl.u32 %v8481, 7
    %v8483 = vsub.s32 %v8480, %v8482
    %v8484 = vrot.slane %v8433, %v8483
    %v8486 = vunpack.c.l.s4 1966171168
    %v8487 = vunpack.c.0.s8 %v8486
    %v8488 = vlaneseq
    %v8489 = vshrl.u32 %v8488, 7
    %v8490 = vsub.s32 %v8487, %v8489
    %v8491 = vrot.slane %v8435, %v8490
    %v8492 = vcombine.low %v8442, %v8470
    %v8493 = vcombine.high %v8442, %v8470
    %v8494 = vcombine.low %v8449, %v8477
    %v8495 = vcombine.high %v8449, %v8477
    %v8496 = vcombine.low %v8456, %v8484
    %v8497 = vcombine.high %v8456, %v8484
    %v8498 = vcombine.low %v8463, %v8491
    %v8499 = vcombine.high %v8463, %v8491
    %v8500 = vcombine.low %v7771, %v7900
    %v8501 = vcombine.high %v7771, %v7900
    %v8502 = vcombine.low %v7904, %v7901
    %v8503 = vcombine.high %v7904, %v7901
    %v8504 = vcombine.low %v7905, %v7902
    %v8505 = vcombine.high %v7905, %v7902
    %v8506 = vcombine.low %v7906, %v7903
    %v8507 = vcombine.high %v7906, %v7903
    %v8509 = vunpack.c.l.s4 1966171168
    %v8510 = vunpack.c.0.s8 %v8509
    %v8511 = vlaneseq
    %v8512 = vshrl.u32 %v8511, 7
    %v8513 = vsub.s32 %v8510, %v8512
    %v8514 = vrot.slane %v8500, %v8513
    %v8516 = vunpack.c.l.s4 1966171168
    %v8517 = vunpack.c.0.s8 %v8516
    %v8518 = vlaneseq
    %v8519 = vshrl.u32 %v8518, 7
    %v8520 = vsub.s32 %v8517, %v8519
    %v8521 = vrot.slane %v8501, %v8520
    %v8523 = vunpack.c.l.s4 1966171168
    %v8524 = vunpack.c.0.s8 %v8523
    %v8525 = vlaneseq
    %v8526 = vshrl.u32 %v8525, 7
    %v8527 = vsub.s32 %v8524, %v8526
    %v8528 = vrot.slane %v8502, %v8527
    %v8530 = vunpack.c.l.s4 1966171168
    %v8531 = vunpack.c.0.s8 %v8530
    %v8532 = vlaneseq
    %v8533 = vshrl.u32 %v8532, 7
    %v8534 = vsub.s32 %v8531, %v8533
    %v8535 = vrot.slane %v8503, %v8534
    %v8537 = vunpack.c.l.s4 1966171168
    %v8538 = vunpack.c.0.s8 %v8537
    %v8539 = vlaneseq
    %v8540 = vshrl.u32 %v8539, 7
    %v8541 = vsub.s32 %v8538, %v8540
    %v8542 = vrot.slane %v8504, %v8541
    %v8544 = vunpack.c.l.s4 1966171168
    %v8545 = vunpack.c.0.s8 %v8544
    %v8546 = vlaneseq
    %v8547 = vshrl.u32 %v8546, 7
    %v8548 = vsub.s32 %v8545, %v8547
    %v8549 = vrot.slane %v8505, %v8548
    %v8551 = vunpack.c.l.s4 1966171168
    %v8552 = vunpack.c.0.s8 %v8551
    %v8553 = vlaneseq
    %v8554 = vshrl.u32 %v8553, 7
    %v8555 = vsub.s32 %v8552, %v8554
    %v8556 = vrot.slane %v8506, %v8555
    %v8558 = vunpack.c.l.s4 1966171168
    %v8559 = vunpack.c.0.s8 %v8558
    %v8560 = vlaneseq
    %v8561 = vshrl.u32 %v8560, 7
    %v8562 = vsub.s32 %v8559, %v8561
    %v8563 = vrot.slane %v8507, %v8562
    %v8564 = vcombine.low %v8514, %v8528
    %v8565 = vcombine.high %v8514, %v8528
    %v8566 = vcombine.low %v8521, %v8535
    %v8567 = vcombine.high %v8521, %v8535
    %v8568 = vcombine.low %v8542, %v8556
    %v8569 = vcombine.high %v8542, %v8556
    %v8570 = vcombine.low %v8549, %v8563
    %v8571 = vcombine.high %v8549, %v8563
    %v8573 = vunpack.c.l.s4 1966171168
    %v8574 = vunpack.c.0.s8 %v8573
    %v8575 = vlaneseq
    %v8576 = vshrl.u32 %v8575, 7
    %v8577 = vsub.s32 %v8574, %v8576
    %v8578 = vrot.slane %v8564, %v8577
    %v8580 = vunpack.c.l.s4 1966171168
    %v8581 = vunpack.c.0.s8 %v8580
    %v8582 = vlaneseq
    %v8583 = vshrl.u32 %v8582, 7
    %v8584 = vsub.s32 %v8581, %v8583
    %v8585 = vrot.slane %v8566, %v8584
    %v8587 = vunpack.c.l.s4 1966171168
    %v8588 = vunpack.c.0.s8 %v8587
    %v8589 = vlaneseq
    %v8590 = vshrl.u32 %v8589, 7
    %v8591 = vsub.s32 %v8588, %v8590
    %v8592 = vrot.slane %v8565, %v8591
    %v8594 = vunpack.c.l.s4 1966171168
    %v8595 = vunpack.c.0.s8 %v8594
    %v8596 = vlaneseq
    %v8597 = vshrl.u32 %v8596, 7
    %v8598 = vsub.s32 %v8595, %v8597
    %v8599 = vrot.slane %v8567, %v8598
    %v8601 = vunpack.c.l.s4 1966171168
    %v8602 = vunpack.c.0.s8 %v8601
    %v8603 = vlaneseq
    %v8604 = vshrl.u32 %v8603, 7
    %v8605 = vsub.s32 %v8602, %v8604
    %v8606 = vrot.slane %v8568, %v8605
    %v8608 = vunpack.c.l.s4 1966171168
    %v8609 = vunpack.c.0.s8 %v8608
    %v8610 = vlaneseq
    %v8611 = vshrl.u32 %v8610, 7
    %v8612 = vsub.s32 %v8609, %v8611
    %v8613 = vrot.slane %v8570, %v8612
    %v8615 = vunpack.c.l.s4 1966171168
    %v8616 = vunpack.c.0.s8 %v8615
    %v8617 = vlaneseq
    %v8618 = vshrl.u32 %v8617, 7
    %v8619 = vsub.s32 %v8616, %v8618
    %v8620 = vrot.slane %v8569, %v8619
    %v8622 = vunpack.c.l.s4 1966171168
    %v8623 = vunpack.c.0.s8 %v8622
    %v8624 = vlaneseq
    %v8625 = vshrl.u32 %v8624, 7
    %v8626 = vsub.s32 %v8623, %v8625
    %v8627 = vrot.slane %v8571, %v8626
    %v8628 = vcombine.low %v8578, %v8606
    %v8629 = vcombine.high %v8578, %v8606
    %v8630 = vcombine.low %v8585, %v8613
    %v8631 = vcombine.high %v8585, %v8613
    %v8632 = vcombine.low %v8592, %v8620
    %v8633 = vcombine.high %v8592, %v8620
    %v8634 = vcombine.low %v8599, %v8627
    %v8635 = vcombine.high %v8599, %v8627
    %v8636 = vcombine.low %v7907, %v8036
    %v8637 = vcombine.high %v7907, %v8036
    %v8638 = vcombine.low %v8040, %v8037
    %v8639 = vcombine.high %v8040, %v8037
    %v8640 = vcombine.low %v8041, %v8038
    %v8641 = vcombine.high %v8041, %v8038
    %v8642 = vcombine.low %v8042, %v8039
    %v8643 = vcombine.high %v8042, %v8039
    %v8645 = vunpack.c.l.s4 1966171168
    %v8646 = vunpack.c.0.s8 %v8645
    %v8647 = vlaneseq
    %v8648 = vshrl.u32 %v8647, 7
    %v8649 = vsub.s32 %v8646, %v8648
    %v8650 = vrot.slane %v8636, %v8649
    %v8652 = vunpack.c.l.s4 1966171168
    %v8653 = vunpack.c.0.s8 %v8652
    %v8654 = vlaneseq
    %v8655 = vshrl.u32 %v8654, 7
    %v8656 = vsub.s32 %v8653, %v8655
    %v8657 = vrot.slane %v8637, %v8656
    %v8659 = vunpack.c.l.s4 1966171168
    %v8660 = vunpack.c.0.s8 %v8659
    %v8661 = vlaneseq
    %v8662 = vshrl.u32 %v8661, 7
    %v8663 = vsub.s32 %v8660, %v8662
    %v8664 = vrot.slane %v8638, %v8663
    %v8666 = vunpack.c.l.s4 1966171168
    %v8667 = vunpack.c.0.s8 %v8666
    %v8668 = vlaneseq
    %v8669 = vshrl.u32 %v8668, 7
    %v8670 = vsub.s32 %v8667, %v8669
    %v8671 = vrot.slane %v8639, %v8670
    %v8673 = vunpack.c.l.s4 1966171168
    %v8674 = vunpack.c.0.s8 %v8673
    %v8675 = vlaneseq
    %v8676 = vshrl.u32 %v8675, 7
    %v8677 = vsub.s32 %v8674, %v8676
    %v8678 = vrot.slane %v8640, %v8677
    %v8680 = vunpack.c.l.s4 1966171168
    %v8681 = vunpack.c.0.s8 %v8680
    %v8682 = vlaneseq
    %v8683 = vshrl.u32 %v8682, 7
    %v8684 = vsub.s32 %v8681, %v8683
    %v8685 = vrot.slane %v8641, %v8684
    %v8687 = vunpack.c.l.s4 1966171168
    %v8688 = vunpack.c.0.s8 %v8687
    %v8689 = vlaneseq
    %v8690 = vshrl.u32 %v8689, 7
    %v8691 = vsub.s32 %v8688, %v8690
    %v8692 = vrot.slane %v8642, %v8691
    %v8694 = vunpack.c.l.s4 1966171168
    %v8695 = vunpack.c.0.s8 %v8694
    %v8696 = vlaneseq
    %v8697 = vshrl.u32 %v8696, 7
    %v8698 = vsub.s32 %v8695, %v8697
    %v8699 = vrot.slane %v8643, %v8698
    %v8700 = vcombine.low %v8650, %v8664
    %v8701 = vcombine.high %v8650, %v8664
    %v8702 = vcombine.low %v8657, %v8671
    %v8703 = vcombine.high %v8657, %v8671
    %v8704 = vcombine.low %v8678, %v8692
    %v8705 = vcombine.high %v8678, %v8692
    %v8706 = vcombine.low %v8685, %v8699
    %v8707 = vcombine.high %v8685, %v8699
    %v8709 = vunpack.c.l.s4 1966171168
    %v8710 = vunpack.c.0.s8 %v8709
    %v8711 = vlaneseq
    %v8712 = vshrl.u32 %v8711, 7
    %v8713 = vsub.s32 %v8710, %v8712
    %v8714 = vrot.slane %v8700, %v8713
    %v8716 = vunpack.c.l.s4 1966171168
    %v8717 = vunpack.c.0.s8 %v8716
    %v8718 = vlaneseq
    %v8719 = vshrl.u32 %v8718, 7
    %v8720 = vsub.s32 %v8717, %v8719
    %v8721 = vrot.slane %v8702, %v8720
    %v8723 = vunpack.c.l.s4 1966171168
    %v8724 = vunpack.c.0.s8 %v8723
    %v8725 = vlaneseq
    %v8726 = vshrl.u32 %v8725, 7
    %v8727 = vsub.s32 %v8724, %v8726
    %v8728 = vrot.slane %v8701, %v8727
    %v8730 = vunpack.c.l.s4 1966171168
    %v8731 = vunpack.c.0.s8 %v8730
    %v8732 = vlaneseq
    %v8733 = vshrl.u32 %v8732, 7
    %v8734 = vsub.s32 %v8731, %v8733
    %v8735 = vrot.slane %v8703, %v8734
    %v8737 = vunpack.c.l.s4 1966171168
    %v8738 = vunpack.c.0.s8 %v8737
    %v8739 = vlaneseq
    %v8740 = vshrl.u32 %v8739, 7
    %v8741 = vsub.s32 %v8738, %v8740
    %v8742 = vrot.slane %v8704, %v8741
    %v8744 = vunpack.c.l.s4 1966171168
    %v8745 = vunpack.c.0.s8 %v8744
    %v8746 = vlaneseq
    %v8747 = vshrl.u32 %v8746, 7
    %v8748 = vsub.s32 %v8745, %v8747
    %v8749 = vrot.slane %v8706, %v8748
    %v8751 = vunpack.c.l.s4 1966171168
    %v8752 = vunpack.c.0.s8 %v8751
    %v8753 = vlaneseq
    %v8754 = vshrl.u32 %v8753, 7
    %v8755 = vsub.s32 %v8752, %v8754
    %v8756 = vrot.slane %v8705, %v8755
    %v8758 = vunpack.c.l.s4 1966171168
    %v8759 = vunpack.c.0.s8 %v8758
    %v8760 = vlaneseq
    %v8761 = vshrl.u32 %v8760, 7
    %v8762 = vsub.s32 %v8759, %v8761
    %v8763 = vrot.slane %v8707, %v8762
    %v8764 = vcombine.low %v8714, %v8742
    %v8765 = vcombine.high %v8714, %v8742
    %v8766 = vcombine.low %v8721, %v8749
    %v8767 = vcombine.high %v8721, %v8749
    %v8768 = vcombine.low %v8728, %v8756
    %v8769 = vcombine.high %v8728, %v8756
    %v8770 = vcombine.low %v8735, %v8763
    %v8771 = vcombine.high %v8735, %v8763
    %v8772 = vcombine.low %v8043, %v8092
    %v8773 = vcombine.high %v8043, %v8092
    %v8775 = vunpack.c.l.s4 1966171168
    %v8776 = vunpack.c.0.s8 %v8775
    %v8777 = vlaneseq
    %v8778 = vshrl.u32 %v8777, 7
    %v8779 = vsub.s32 %v8776, %v8778
    %v8780 = vrot.slane %v8772, %v8779
    %v8782 = vunpack.c.l.s4 1966171168
    %v8783 = vunpack.c.0.s8 %v8782
    %v8784 = vlaneseq
    %v8785 = vshrl.u32 %v8784, 7
    %v8786 = vsub.s32 %v8783, %v8785
    %v8787 = vrot.slane %v8773, %v8786
    %v8788 = vcombine.high %v8780, %v8780
    %v8789 = vcombine.high %v8787, %v8787
    %v8791 = vunpack.c.l.s4 1966171168
    %v8792 = vunpack.c.0.s8 %v8791
    %v8793 = vlaneseq
    %v8794 = vshrl.u32 %v8793, 7
    %v8795 = vsub.s32 %v8792, %v8794
    %v8796 = vrot.slane %v8780, %v8795
    %v8798 = vunpack.c.l.s4 1966171168
    %v8799 = vunpack.c.0.s8 %v8798
    %v8800 = vlaneseq
    %v8801 = vshrl.u32 %v8800, 7
    %v8802 = vsub.s32 %v8799, %v8801
    %v8803 = vrot.slane %v8787, %v8802
    %v8805 = vunpack.c.l.s4 1966171168
    %v8806 = vunpack.c.0.s8 %v8805
    %v8807 = vlaneseq
    %v8808 = vshrl.u32 %v8807, 7
    %v8809 = vsub.s32 %v8806, %v8808
    %v8810 = vrot.slane %v8788, %v8809
    %v8812 = vunpack.c.l.s4 1966171168
    %v8813 = vunpack.c.0.s8 %v8812
    %v8814 = vlaneseq
    %v8815 = vshrl.u32 %v8814, 7
    %v8816 = vsub.s32 %v8813, %v8815
    %v8817 = vrot.slane %v8789, %v8816
    %v8818 = vcombine.high %v8796, %v8796
    %v8819 = vcombine.high %v8803, %v8803
    %v8820 = vcombine.high %v8810, %v8810
    %v8821 = vcombine.high %v8817, %v8817
    %8862 = vmatprep.subr.mxu0 0.0
    %8863 = vmatpush1.msra.mxu0 %v8093
    %8864 = vmatprep.subr.mxu0 0.0
    %8865 = vmatpush1.msra.mxu0 %v8094
    %8866 = vmatprep.subr.mxu0 0.0
    %8867 = vmatpush1.msra.mxu0 %v8095
    %8868 = vmatprep.subr.mxu0 0.0
    %8869 = vmatpush1.msra.mxu0 %v8096
    %8870 = vmatprep.subr.mxu0 0.0
    %8871 = vmatpush1.msra.mxu0 %v8097
    %8872 = vmatprep.subr.mxu0 0.0
    %8873 = vmatpush1.msra.mxu0 %v8098
    %8874 = vmatprep.subr.mxu0 0.0
    %8875 = vmatpush1.msra.mxu0 %v8099
    %8876 = vmatprep.subr.mxu0 0.0
    %8877 = vmatpush1.msra.mxu0 %v8100
    %8878 = vmatprep.subr.mxu0 0.0
    %8879 = vmatpush1.msra.mxu0 %v8101
    %8880 = vmatprep.subr.mxu0 0.0
    %8881 = vmatpush1.msra.mxu0 %v8102
    %8882 = vmatprep.subr.mxu0 0.0
    %8883 = vmatpush1.msra.mxu0 %v8103
    %8884 = vmatprep.subr.mxu0 0.0
    %8885 = vmatpush1.msra.mxu0 %v8104
    %8886 = vmatprep.subr.mxu0 0.0
    %8887 = vmatpush1.msra.mxu0 %v8105
    %8888 = vmatprep.subr.mxu0 0.0
    %8889 = vmatpush1.msra.mxu0 %v8106
    %8890 = vmatprep.subr.mxu0 0.0
    %8891 = vmatpush1.msra.mxu0 %v8107
    %8892 = vmatprep.subr.mxu0 0.0
    %8893 = vmatpush1.msra.mxu0 %v8108
    %8894 = vmatprep.subr.mxu0 0.0
    %8895 = vmatpush1.msra.mxu0 %v8109
    %8896 = vmatprep.subr.mxu0 0.0
    %8897 = vmatpush1.msra.mxu0 %v8110
    %8898 = vmatprep.subr.mxu0 0.0
    %8899 = vmatpush1.msra.mxu0 %v8111
    %8900 = vmatprep.subr.mxu0 0.0
    %8901 = vmatpush1.msra.mxu0 %v8112
    %8902 = vmatprep.subr.mxu0 0.0
    %8903 = vmatpush1.msra.mxu0 %v8113
    %8904 = vmatprep.subr.mxu0 0.0
    %8905 = vmatpush1.msra.mxu0 %v8114
    %8906 = vmatprep.subr.mxu0 0.0
    %8907 = vmatpush1.msra.mxu0 %v8115
    %8908 = vmatprep.subr.mxu0 0.0
    %8909 = vmatpush1.msra.mxu0 %v8116
    %8910 = vmatprep.subr.mxu0 0.0
    %8911 = vmatpush1.msra.mxu0 %v8117
    %8912 = vmatprep.subr.mxu0 0.0
    %8913 = vmatpush1.msra.mxu0 %v8118
    %8914 = vmatprep.subr.mxu0 0.0
    %8915 = vmatpush1.msra.mxu0 %v8119
    %8916 = vmatprep.subr.mxu0 0.0
    %8917 = vmatpush1.msra.mxu0 %v8120
    %8918 = vmatprep.subr.mxu0 0.0
    %8919 = vmatpush1.msra.mxu0 %v8121
    %8920 = vmatprep.subr.mxu0 0.0
    %8921 = vmatpush1.msra.mxu0 %v8122
    %8922 = vmatprep.subr.mxu0 0.0
    %8923 = vmatpush1.msra.mxu0 %v8123
    %8924 = vmatprep.subr.mxu0 0.0
    %8925 = vmatpush1.msra.mxu0 %v8124
    %8926 = vmatprep.mubr.f32.mxu0 %v8360
    %8927 = vmatmul.mubr.f32.gmra.mrb[0].mxu0 %v8356
    %v8928 = vpop.f32.mrb[0].mxu0
    %v8929 = vadd.f32 %v8226, %v8928
    %v8930 = vpop.f32.mrb[0].mxu0
    %8931 = vmatprep.mubr.f32.mxu0 %v8496
    %8932 = vmatmul.mubr.f32.gmra.mrb[0].mxu0 %v8492
    %v8933 = vpop.f32.mrb[0].mxu0
    %v8934 = vadd.f32 %v8226, %v8933
    %v8935 = vpop.f32.mrb[0].mxu0
    %8936 = vmatprep.mubr.f32.mxu0 %v8632
    %8937 = vmatmul.mubr.f32.gmra.mrb[0].mxu0 %v8628
    %v8938 = vpop.f32.mrb[0].mxu0
    %v8939 = vadd.f32 %v8226, %v8938
    %v8940 = vpop.f32.mrb[0].mxu0
    %8941 = vmatprep.mubr.f32.mxu0 %v8768
    %8942 = vmatmul.mubr.f32.gmra.mrb[0].mxu0 %v8764
    %v8943 = vpop.f32.mrb[0].mxu0
    %v8944 = vadd.f32 %v8226, %v8943
    %v8945 = vpop.f32.mrb[0].mxu0
    %8946 = vmatprep.mubr.f32.mxu0 %v8810
    %8947 = vmatmul.mubr.f32.gmra.mrb[0].mxu0 %v8796
    %v8948 = vpop.f32.mrb[0].mxu0
    %v8949 = vadd.f32 %v8226, %v8948
    %v8950 = vpop.f32.mrb[0].mxu0
    %8951 = vdwg.mxu0
    %8952 = vmatprep.subr.mxu0 0.0
    %8953 = vmatpush1.msra.mxu0 %v8125
    %8954 = vmatprep.subr.mxu0 0.0
    %8955 = vmatpush1.msra.mxu0 %v8126
    %8956 = vmatprep.subr.mxu0 0.0
    %8957 = vmatpush1.msra.mxu0 %v8127
    %8958 = vmatprep.subr.mxu0 0.0
    %8959 = vmatpush1.msra.mxu0 %v8128
    %8960 = vmatprep.subr.mxu0 0.0
    %8961 = vmatpush1.msra.mxu0 %v8129
    %8962 = vmatprep.subr.mxu0 0.0
    %8963 = vmatpush1.msra.mxu0 %v8130
    %8964 = vmatprep.subr.mxu0 0.0
    %8965 = vmatpush1.msra.mxu0 %v8131
    %8966 = vmatprep.subr.mxu0 0.0
    %8967 = vmatpush1.msra.mxu0 %v8132
    %8968 = vmatprep.subr.mxu0 0.0
    %8969 = vmatpush1.msra.mxu0 %v8133
    %8970 = vmatprep.subr.mxu0 0.0
    %8971 = vmatpush1.msra.mxu0 %v8134
    %8972 = vmatprep.subr.mxu0 0.0
    %8973 = vmatpush1.msra.mxu0 %v8135
    %8974 = vmatprep.subr.mxu0 0.0
    %8975 = vmatpush1.msra.mxu0 %v8136
    %8976 = vmatprep.subr.mxu0 0.0
    %8977 = vmatpush1.msra.mxu0 %v8137
    %8978 = vmatprep.subr.mxu0 0.0
    %8979 = vmatpush1.msra.mxu0 %v8138
    %8980 = vmatprep.subr.mxu0 0.0
    %8981 = vmatpush1.msra.mxu0 %v8139
    %8982 = vmatprep.subr.mxu0 0.0
    %8983 = vmatpush1.msra.mxu0 %v8140
    %8984 = vmatprep.subr.mxu0 0.0
    %8985 = vmatpush1.msra.mxu0 %v8141
    %8986 = vmatprep.subr.mxu0 0.0
    %8987 = vmatpush1.msra.mxu0 %v8142
    %8988 = vmatprep.subr.mxu0 0.0
    %8989 = vmatpush1.msra.mxu0 %v8143
    %8990 = vmatprep.subr.mxu0 0.0
    %8991 = vmatpush1.msra.mxu0 %v8144
    %8992 = vmatprep.subr.mxu0 0.0
    %8993 = vmatpush1.msra.mxu0 %v8145
    %8994 = vmatprep.subr.mxu0 0.0
    %8995 = vmatpush1.msra.mxu0 %v8146
    %8996 = vmatprep.subr.mxu0 0.0
    %8997 = vmatpush1.msra.mxu0 %v8147
    %8998 = vmatprep.subr.mxu0 0.0
    %8999 = vmatpush1.msra.mxu0 %v8148
    %9000 = vmatprep.subr.mxu0 0.0
    %9001 = vmatpush1.msra.mxu0 %v8149
    %9002 = vmatprep.subr.mxu0 0.0
    %9003 = vmatpush1.msra.mxu0 %v8150
    %9004 = vmatprep.subr.mxu0 0.0
    %9005 = vmatpush1.msra.mxu0 %v8151
    %9006 = vmatprep.subr.mxu0 0.0
    %9007 = vmatpush1.msra.mxu0 %v8152
    %9008 = vmatprep.subr.mxu0 0.0
    %9009 = vmatpush1.msra.mxu0 %v8153
    %9010 = vmatprep.subr.mxu0 0.0
    %9011 = vmatpush1.msra.mxu0 %v8154
    %9012 = vmatprep.subr.mxu0 0.0
    %9013 = vmatpush1.msra.mxu0 %v8155
    %9014 = vmatprep.subr.mxu0 0.0
    %9015 = vmatpush1.msra.mxu0 %v8156
    %9016 = vmatprep.mubr.f32.mxu0 %v8361
    %9017 = vmatmul.mubr.f32.gmra.mrb[0].mxu0 %v8357
    %v9018 = vpop.f32.mrb[0].mxu0
    %v9019 = vadd.f32 %v8929, %v9018
    %v9020 = vpop.f32.mrb[0].mxu0
    %9021 = vmatprep.mubr.f32.mxu0 %v8497
    %9022 = vmatmul.mubr.f32.gmra.mrb[0].mxu0 %v8493
    %v9023 = vpop.f32.mrb[0].mxu0
    %v9024 = vadd.f32 %v8934, %v9023
    %v9025 = vpop.f32.mrb[0].mxu0
    %9026 = vmatprep.mubr.f32.mxu0 %v8633
    %9027 = vmatmul.mubr.f32.gmra.mrb[0].mxu0 %v8629
    %v9028 = vpop.f32.mrb[0].mxu0
    %v9029 = vadd.f32 %v8939, %v9028
    %v9030 = vpop.f32.mrb[0].mxu0
    %9031 = vmatprep.mubr.f32.mxu0 %v8769
    %9032 = vmatmul.mubr.f32.gmra.mrb[0].mxu0 %v8765
    %v9033 = vpop.f32.mrb[0].mxu0
    %v9034 = vadd.f32 %v8944, %v9033
    %v9035 = vpop.f32.mrb[0].mxu0
    %9036 = vmatprep.mubr.f32.mxu0 %v8820
    %9037 = vmatmul.mubr.f32.gmra.mrb[0].mxu0 %v8818
    %v9038 = vpop.f32.mrb[0].mxu0
    %v9039 = vadd.f32 %v8949, %v9038
    %v9040 = vpop.f32.mrb[0].mxu0
    %9041 = vdwg.mxu0
    %9042 = vmatprep.subr.mxu0 0.0
    %9043 = vmatpush1.msra.mxu0 %v8157
    %9044 = vmatprep.subr.mxu0 0.0
    %9045 = vmatpush1.msra.mxu0 %v8158
    %9046 = vmatprep.subr.mxu0 0.0
    %9047 = vmatpush1.msra.mxu0 %v8159
    %9048 = vmatprep.subr.mxu0 0.0
    %9049 = vmatpush1.msra.mxu0 %v8160
    %9050 = vmatprep.subr.mxu0 0.0
    %9051 = vmatpush1.msra.mxu0 %v8161
    %9052 = vmatprep.subr.mxu0 0.0
    %9053 = vmatpush1.msra.mxu0 %v8162
    %9054 = vmatprep.subr.mxu0 0.0
    %9055 = vmatpush1.msra.mxu0 %v8163
    %9056 = vmatprep.subr.mxu0 0.0
    %9057 = vmatpush1.msra.mxu0 %v8164
    %9058 = vmatprep.subr.mxu0 0.0
    %9059 = vmatpush1.msra.mxu0 %v8165
    %9060 = vmatprep.subr.mxu0 0.0
    %9061 = vmatpush1.msra.mxu0 %v8166
    %9062 = vmatprep.subr.mxu0 0.0
    %9063 = vmatpush1.msra.mxu0 %v8167
    %9064 = vmatprep.subr.mxu0 0.0
    %9065 = vmatpush1.msra.mxu0 %v8168
    %9066 = vmatprep.subr.mxu0 0.0
    %9067 = vmatpush1.msra.mxu0 %v8169
    %9068 = vmatprep.subr.mxu0 0.0
    %9069 = vmatpush1.msra.mxu0 %v8170
    %9070 = vmatprep.subr.mxu0 0.0
    %9071 = vmatpush1.msra.mxu0 %v8171
    %9072 = vmatprep.subr.mxu0 0.0
    %9073 = vmatpush1.msra.mxu0 %v8172
    %9074 = vmatprep.subr.mxu0 0.0
    %9075 = vmatpush1.msra.mxu0 %v8173
    %9076 = vmatprep.subr.mxu0 0.0
    %9077 = vmatpush1.msra.mxu0 %v8174
    %9078 = vmatprep.subr.mxu0 0.0
    %9079 = vmatpush1.msra.mxu0 %v8175
    %9080 = vmatprep.subr.mxu0 0.0
    %9081 = vmatpush1.msra.mxu0 %v8176
    %9082 = vmatprep.subr.mxu0 0.0
    %9083 = vmatpush1.msra.mxu0 %v8177
    %9084 = vmatprep.subr.mxu0 0.0
    %9085 = vmatpush1.msra.mxu0 %v8178
    %9086 = vmatprep.subr.mxu0 0.0
    %9087 = vmatpush1.msra.mxu0 %v8179
    %9088 = vmatprep.subr.mxu0 0.0
    %9089 = vmatpush1.msra.mxu0 %v8180
    %9090 = vmatprep.subr.mxu0 0.0
    %9091 = vmatpush1.msra.mxu0 %v8181
    %9092 = vmatprep.subr.mxu0 0.0
    %9093 = vmatpush1.msra.mxu0 %v8182
    %9094 = vmatprep.subr.mxu0 0.0
    %9095 = vmatpush1.msra.mxu0 %v8183
    %9096 = vmatprep.subr.mxu0 0.0
    %9097 = vmatpush1.msra.mxu0 %v8184
    %9098 = vmatprep.subr.mxu0 0.0
    %9099 = vmatpush1.msra.mxu0 %v8185
    %9100 = vmatprep.subr.mxu0 0.0
    %9101 = vmatpush1.msra.mxu0 %v8186
    %9102 = vmatprep.subr.mxu0 0.0
    %9103 = vmatpush1.msra.mxu0 %v8187
    %9104 = vmatprep.subr.mxu0 0.0
    %9105 = vmatpush1.msra.mxu0 %v8188
    %9106 = vmatprep.mubr.f32.mxu0 %v8362
    %9107 = vmatmul.mubr.f32.gmra.mrb[0].mxu0 %v8358
    %v9108 = vpop.f32.mrb[0].mxu0
    %v9109 = vadd.f32 %v9019, %v9108
    %v9110 = vpop.f32.mrb[0].mxu0
    %9111 = vmatprep.mubr.f32.mxu0 %v8498
    %9112 = vmatmul.mubr.f32.gmra.mrb[0].mxu0 %v8494
    %v9113 = vpop.f32.mrb[0].mxu0
    %v9114 = vadd.f32 %v9024, %v9113
    %v9115 = vpop.f32.mrb[0].mxu0
    %9116 = vmatprep.mubr.f32.mxu0 %v8634
    %9117 = vmatmul.mubr.f32.gmra.mrb[0].mxu0 %v8630
    %v9118 = vpop.f32.mrb[0].mxu0
    %v9119 = vadd.f32 %v9029, %v9118
    %v9120 = vpop.f32.mrb[0].mxu0
    %9121 = vmatprep.mubr.f32.mxu0 %v8770
    %9122 = vmatmul.mubr.f32.gmra.mrb[0].mxu0 %v8766
    %v9123 = vpop.f32.mrb[0].mxu0
    %v9124 = vadd.f32 %v9034, %v9123
    %v9125 = vpop.f32.mrb[0].mxu0
    %9126 = vmatprep.mubr.f32.mxu0 %v8817
    %9127 = vmatmul.mubr.f32.gmra.mrb[0].mxu0 %v8803
    %v9128 = vpop.f32.mrb[0].mxu0
    %v9129 = vadd.f32 %v9039, %v9128
    %v9130 = vpop.f32.mrb[0].mxu0
    %9131 = vdwg.mxu0
    %9132 = vmatprep.subr.mxu0 0.0
    %9133 = vmatpush1.msra.mxu0 %v8189
    %9134 = vmatprep.subr.mxu0 0.0
    %9135 = vmatpush1.msra.mxu0 %v8190
    %9136 = vmatprep.subr.mxu0 0.0
    %9137 = vmatpush1.msra.mxu0 %v8191
    %9138 = vmatprep.subr.mxu0 0.0
    %9139 = vmatpush1.msra.mxu0 %v8192
    %9140 = vmatprep.subr.mxu0 0.0
    %9141 = vmatpush1.msra.mxu0 %v8193
    %9142 = vmatprep.subr.mxu0 0.0
    %9143 = vmatpush1.msra.mxu0 %v8194
    %9144 = vmatprep.subr.mxu0 0.0
    %9145 = vmatpush1.msra.mxu0 %v8195
    %9146 = vmatprep.subr.mxu0 0.0
    %9147 = vmatpush1.msra.mxu0 %v8196
    %9148 = vmatprep.subr.mxu0 0.0
    %9149 = vmatpush1.msra.mxu0 %v8197
    %9150 = vmatprep.subr.mxu0 0.0
    %9151 = vmatpush1.msra.mxu0 %v8198
    %9152 = vmatprep.subr.mxu0 0.0
    %9153 = vmatpush1.msra.mxu0 %v8199
    %9154 = vmatprep.subr.mxu0 0.0
    %9155 = vmatpush1.msra.mxu0 %v8200
    %9156 = vmatprep.subr.mxu0 0.0
    %9157 = vmatpush1.msra.mxu0 %v8201
    %9158 = vmatprep.subr.mxu0 0.0
    %9159 = vmatpush1.msra.mxu0 %v8202
    %9160 = vmatprep.subr.mxu0 0.0
    %9161 = vmatpush1.msra.mxu0 %v8203
    %9162 = vmatprep.subr.mxu0 0.0
    %9163 = vmatpush1.msra.mxu0 %v8204
    %9164 = vmatprep.subr.mxu0 0.0
    %9165 = vmatpush1.msra.mxu0 %v8205
    %9166 = vmatprep.subr.mxu0 0.0
    %9167 = vmatpush1.msra.mxu0 %v8206
    %9168 = vmatprep.subr.mxu0 0.0
    %9169 = vmatpush1.msra.mxu0 %v8207
    %9170 = vmatprep.subr.mxu0 0.0
    %9171 = vmatpush1.msra.mxu0 %v8208
    %9172 = vmatprep.subr.mxu0 0.0
    %9173 = vmatpush1.msra.mxu0 %v8209
    %9174 = vmatprep.subr.mxu0 0.0
    %9175 = vmatpush1.msra.mxu0 %v8210
    %9176 = vmatprep.subr.mxu0 0.0
    %9177 = vmatpush1.msra.mxu0 %v8211
    %9178 = vmatprep.subr.mxu0 0.0
    %9179 = vmatpush1.msra.mxu0 %v8212
    %9180 = vmatprep.subr.mxu0 0.0
    %9181 = vmatpush1.msra.mxu0 %v8213
    %9182 = vmatprep.subr.mxu0 0.0
    %9183 = vmatpush1.msra.mxu0 %v8214
    %9184 = vmatprep.subr.mxu0 0.0
    %9185 = vmatpush1.msra.mxu0 %v8215
    %9186 = vmatprep.subr.mxu0 0.0
    %9187 = vmatpush1.msra.mxu0 %v8216
    %9188 = vmatprep.subr.mxu0 0.0
    %9189 = vmatpush1.msra.mxu0 %v8217
    %9190 = vmatprep.subr.mxu0 0.0
    %9191 = vmatpush1.msra.mxu0 %v8218
    %9192 = vmatprep.subr.mxu0 0.0
    %9193 = vmatpush1.msra.mxu0 %v8219
    %9194 = vmatprep.subr.mxu0 0.0
    %9195 = vmatpush1.msra.mxu0 %v8220
    %9196 = vmatprep.mubr.f32.mxu0 %v8363
    %9197 = vmatmul.mubr.f32.gmra.mrb[0].mxu0 %v8359
    %v9198 = vpop.f32.mrb[0].mxu0
    %v9199 = vadd.f32 %v9109, %v9198
    %v9200 = vpop.f32.mrb[0].mxu0
    %9201 = vmatprep.mubr.f32.mxu0 %v8499
    %9202 = vmatmul.mubr.f32.gmra.mrb[0].mxu0 %v8495
    %v9203 = vpop.f32.mrb[0].mxu0
    %v9204 = vadd.f32 %v9114, %v9203
    %v9205 = vpop.f32.mrb[0].mxu0
    %9206 = vmatprep.mubr.f32.mxu0 %v8635
    %9207 = vmatmul.mubr.f32.gmra.mrb[0].mxu0 %v8631
    %v9208 = vpop.f32.mrb[0].mxu0
    %v9209 = vadd.f32 %v9119, %v9208
    %v9210 = vpop.f32.mrb[0].mxu0
    %9211 = vmatprep.mubr.f32.mxu0 %v8771
    %9212 = vmatmul.mubr.f32.gmra.mrb[0].mxu0 %v8767
    %v9213 = vpop.f32.mrb[0].mxu0
    %v9214 = vadd.f32 %v9124, %v9213
    %v9215 = vpop.f32.mrb[0].mxu0
    %9216 = vmatprep.mubr.f32.mxu0 %v8821
    %9217 = vmatmul.mubr.f32.gmra.mrb[0].mxu0 %v8819
    %v9218 = vpop.f32.mrb[0].mxu0
    %v9219 = vadd.f32 %v9129, %v9218
    %v9220 = vpop.f32.mrb[0].mxu0
    %9221 = vdwg.mxu0
    %v9222 = vxor.u32 %v9199, 2147483648
    %v9223 = vxor.u32 %v9204, 2147483648
    %v9224 = vxor.u32 %v9209, 2147483648
    %v9225 = vxor.u32 %v9214, 2147483648
    %v9226 = vxor.u32 %v9219, 2147483648
    %v9227 = vmul.f32 %v9222, 1.442695
    %v9228 = vpow.pop %v9227
    %v9229 = vmul.f32 %v9223, 1.442695
    %v9230 = vpow.pop %v9229
    %v9231 = vmul.f32 %v9224, 1.442695
    %v9232 = vpow.pop %v9231
    %v9233 = vmul.f32 %v9225, 1.442695
    %v9234 = vpow.pop %v9233
    %v9235 = vmul.f32 %v9226, 1.442695
    %v9236 = vpow.pop %v9235
    %v9237 = vadd.f32 %v9228, 1.0
    %v9238 = vadd.f32 %v9230, 1.0
    %v9239 = vadd.f32 %v9232, 1.0
    %v9240 = vadd.f32 %v9234, 1.0
    %v9241 = vadd.f32 %v9236, 1.0
    %v9242 = vrcp.pop %v9237
    %v9243 = vmul.f32 1.0, %v9242
    %v9244 = vrcp.pop %v9238
    %v9245 = vmul.f32 1.0, %v9244
    %v9246 = vrcp.pop %v9239
    %v9247 = vmul.f32 1.0, %v9246
    %v9248 = vrcp.pop %v9240
    %v9249 = vmul.f32 1.0, %v9248
    %v9250 = vrcp.pop %v9241
    %v9251 = vmul.f32 1.0, %v9250
    %v9257 = vcombine.high %v9243, %v9243
    %v9259 = vunpack.c.l.s4 1966171168
    %v9260 = vunpack.c.0.s8 %v9259
    %v9261 = vlaneseq
    %v9262 = vshrl.u32 %v9261, 7
    %v9263 = vsub.s32 %v9260, %v9262
    %v9264 = vrot.slane %v9243, %v9263
    %v9266 = vunpack.c.l.s4 1966171168
    %v9267 = vunpack.c.0.s8 %v9266
    %v9268 = vlaneseq
    %v9269 = vshrl.u32 %v9268, 7
    %v9270 = vsub.s32 %v9267, %v9269
    %v9271 = vrot.slane %v9257, %v9270
    %v9272 = vcombine.high %v9264, %v9264
    %v9273 = vcombine.high %v9271, %v9271
    %v9275 = vunpack.c.l.s4 1966171168
    %v9276 = vunpack.c.0.s8 %v9275
    %v9277 = vlaneseq
    %v9278 = vshrl.u32 %v9277, 7
    %v9279 = vsub.s32 %v9276, %v9278
    %v9280 = vrot.slane %v9264, %v9279
    %v9282 = vunpack.c.l.s4 1966171168
    %v9283 = vunpack.c.0.s8 %v9282
    %v9284 = vlaneseq
    %v9285 = vshrl.u32 %v9284, 7
    %v9286 = vsub.s32 %v9283, %v9285
    %v9287 = vrot.slane %v9271, %v9286
    %v9289 = vunpack.c.l.s4 1966171168
    %v9290 = vunpack.c.0.s8 %v9289
    %v9291 = vlaneseq
    %v9292 = vshrl.u32 %v9291, 7
    %v9293 = vsub.s32 %v9290, %v9292
    %v9294 = vrot.slane %v9272, %v9293
    %v9296 = vunpack.c.l.s4 1966171168
    %v9297 = vunpack.c.0.s8 %v9296
    %v9298 = vlaneseq
    %v9299 = vshrl.u32 %v9298, 7
    %v9300 = vsub.s32 %v9297, %v9299
    %v9301 = vrot.slane %v9273, %v9300
    %v9302 = vcombine.high %v9280, %v9280
    %v9303 = vcombine.high %v9287, %v9287
    %v9304 = vcombine.high %v9294, %v9294
    %v9305 = vcombine.high %v9301, %v9301
    %v9306 = vcombine.high %v9245, %v9245
    %v9308 = vunpack.c.l.s4 1966171168
    %v9309 = vunpack.c.0.s8 %v9308
    %v9310 = vlaneseq
    %v9311 = vshrl.u32 %v9310, 7
    %v9312 = vsub.s32 %v9309, %v9311
    %v9313 = vrot.slane %v9245, %v9312
    %v9315 = vunpack.c.l.s4 1966171168
    %v9316 = vunpack.c.0.s8 %v9315
    %v9317 = vlaneseq
    %v9318 = vshrl.u32 %v9317, 7
    %v9319 = vsub.s32 %v9316, %v9318
    %v9320 = vrot.slane %v9306, %v9319
    %v9321 = vcombine.high %v9313, %v9313
    %v9322 = vcombine.high %v9320, %v9320
    %v9324 = vunpack.c.l.s4 1966171168
    %v9325 = vunpack.c.0.s8 %v9324
    %v9326 = vlaneseq
    %v9327 = vshrl.u32 %v9326, 7
    %v9328 = vsub.s32 %v9325, %v9327
    %v9329 = vrot.slane %v9313, %v9328
    %v9331 = vunpack.c.l.s4 1966171168
    %v9332 = vunpack.c.0.s8 %v9331
    %v9333 = vlaneseq
    %v9334 = vshrl.u32 %v9333, 7
    %v9335 = vsub.s32 %v9332, %v9334
    %v9336 = vrot.slane %v9320, %v9335
    %v9338 = vunpack.c.l.s4 1966171168
    %v9339 = vunpack.c.0.s8 %v9338
    %v9340 = vlaneseq
    %v9341 = vshrl.u32 %v9340, 7
    %v9342 = vsub.s32 %v9339, %v9341
    %v9343 = vrot.slane %v9321, %v9342
    %v9345 = vunpack.c.l.s4 1966171168
    %v9346 = vunpack.c.0.s8 %v9345
    %v9347 = vlaneseq
    %v9348 = vshrl.u32 %v9347, 7
    %v9349 = vsub.s32 %v9346, %v9348
    %v9350 = vrot.slane %v9322, %v9349
    %v9351 = vcombine.high %v9329, %v9329
    %v9352 = vcombine.high %v9336, %v9336
    %v9353 = vcombine.high %v9343, %v9343
    %v9354 = vcombine.high %v9350, %v9350
    %v9355 = vcombine.high %v9247, %v9247
    %v9357 = vunpack.c.l.s4 1966171168
    %v9358 = vunpack.c.0.s8 %v9357
    %v9359 = vlaneseq
    %v9360 = vshrl.u32 %v9359, 7
    %v9361 = vsub.s32 %v9358, %v9360
    %v9362 = vrot.slane %v9247, %v9361
    %v9364 = vunpack.c.l.s4 1966171168
    %v9365 = vunpack.c.0.s8 %v9364
    %v9366 = vlaneseq
    %v9367 = vshrl.u32 %v9366, 7
    %v9368 = vsub.s32 %v9365, %v9367
    %v9369 = vrot.slane %v9355, %v9368
    %v9370 = vcombine.high %v9362, %v9362
    %v9371 = vcombine.high %v9369, %v9369
    %v9373 = vunpack.c.l.s4 1966171168
    %v9374 = vunpack.c.0.s8 %v9373
    %v9375 = vlaneseq
    %v9376 = vshrl.u32 %v9375, 7
    %v9377 = vsub.s32 %v9374, %v9376
    %v9378 = vrot.slane %v9362, %v9377
    %v9380 = vunpack.c.l.s4 1966171168
    %v9381 = vunpack.c.0.s8 %v9380
    %v9382 = vlaneseq
    %v9383 = vshrl.u32 %v9382, 7
    %v9384 = vsub.s32 %v9381, %v9383
    %v9385 = vrot.slane %v9369, %v9384
    %v9387 = vunpack.c.l.s4 1966171168
    %v9388 = vunpack.c.0.s8 %v9387
    %v9389 = vlaneseq
    %v9390 = vshrl.u32 %v9389, 7
    %v9391 = vsub.s32 %v9388, %v9390
    %v9392 = vrot.slane %v9370, %v9391
    %v9394 = vunpack.c.l.s4 1966171168
    %v9395 = vunpack.c.0.s8 %v9394
    %v9396 = vlaneseq
    %v9397 = vshrl.u32 %v9396, 7
    %v9398 = vsub.s32 %v9395, %v9397
    %v9399 = vrot.slane %v9371, %v9398
    %v9400 = vcombine.high %v9378, %v9378
    %v9401 = vcombine.high %v9385, %v9385
    %v9402 = vcombine.high %v9392, %v9392
    %v9403 = vcombine.high %v9399, %v9399
    %v9404 = vcombine.high %v9249, %v9249
    %v9406 = vunpack.c.l.s4 1966171168
    %v9407 = vunpack.c.0.s8 %v9406
    %v9408 = vlaneseq
    %v9409 = vshrl.u32 %v9408, 7
    %v9410 = vsub.s32 %v9407, %v9409
    %v9411 = vrot.slane %v9249, %v9410
    %v9413 = vunpack.c.l.s4 1966171168
    %v9414 = vunpack.c.0.s8 %v9413
    %v9415 = vlaneseq
    %v9416 = vshrl.u32 %v9415, 7
    %v9417 = vsub.s32 %v9414, %v9416
    %v9418 = vrot.slane %v9404, %v9417
    %v9419 = vcombine.high %v9411, %v9411
    %v9420 = vcombine.high %v9418, %v9418
    %v9422 = vunpack.c.l.s4 1966171168
    %v9423 = vunpack.c.0.s8 %v9422
    %v9424 = vlaneseq
    %v9425 = vshrl.u32 %v9424, 7
    %v9426 = vsub.s32 %v9423, %v9425
    %v9427 = vrot.slane %v9411, %v9426
    %v9429 = vunpack.c.l.s4 1966171168
    %v9430 = vunpack.c.0.s8 %v9429
    %v9431 = vlaneseq
    %v9432 = vshrl.u32 %v9431, 7
    %v9433 = vsub.s32 %v9430, %v9432
    %v9434 = vrot.slane %v9418, %v9433
    %v9436 = vunpack.c.l.s4 1966171168
    %v9437 = vunpack.c.0.s8 %v9436
    %v9438 = vlaneseq
    %v9439 = vshrl.u32 %v9438, 7
    %v9440 = vsub.s32 %v9437, %v9439
    %v9441 = vrot.slane %v9419, %v9440
    %v9443 = vunpack.c.l.s4 1966171168
    %v9444 = vunpack.c.0.s8 %v9443
    %v9445 = vlaneseq
    %v9446 = vshrl.u32 %v9445, 7
    %v9447 = vsub.s32 %v9444, %v9446
    %v9448 = vrot.slane %v9420, %v9447
    %v9449 = vcombine.high %v9427, %v9427
    %v9450 = vcombine.high %v9434, %v9434
    %v9451 = vcombine.high %v9441, %v9441
    %v9452 = vcombine.high %v9448, %v9448
    %v9454 = vunpack.c.l.s4 1966171168
    %v9455 = vunpack.c.0.s8 %v9454
    %v9456 = vlaneseq
    %v9457 = vshrl.u32 %v9456, 7
    %v9458 = vsub.s32 %v9455, %v9457
    %v9459 = vrot.slane %v9251, %v9458
    %v9460 = vcombine.high %v9459, %v9459
    %v9462 = vunpack.c.l.s4 1966171168
    %v9463 = vunpack.c.0.s8 %v9462
    %v9464 = vlaneseq
    %v9465 = vshrl.u32 %v9464, 7
    %v9466 = vsub.s32 %v9463, %v9465
    %v9467 = vrot.slane %v9459, %v9466
    %v9469 = vunpack.c.l.s4 1966171168
    %v9470 = vunpack.c.0.s8 %v9469
    %v9471 = vlaneseq
    %v9472 = vshrl.u32 %v9471, 7
    %v9473 = vsub.s32 %v9470, %v9472
    %v9474 = vrot.slane %v9460, %v9473
    %v9475 = vlaneseq
    %v9476 = vshrl.u32 %v9475, 7
    %v9477 = vsub.s32 0, %v9476
    %v9478 = vrot.slane %v9280, %v9477
    %v9479 = vlaneseq
    %v9480 = vshrl.u32 %v9479, 7
    %v9481 = vsub.s32 0, %v9480
    %v9482 = vrot.slane %v9294, %v9481
    %v9483 = vlaneseq
    %v9484 = vshrl.u32 %v9483, 7
    %v9485 = vsub.s32 0, %v9484
    %v9486 = vrot.slane %v9302, %v9485
    %v9487 = vlaneseq
    %v9488 = vshrl.u32 %v9487, 7
    %v9489 = vsub.s32 0, %v9488
    %v9490 = vrot.slane %v9304, %v9489
    %v9491 = vlaneseq
    %v9492 = vshrl.u32 %v9491, 7
    %v9493 = vsub.s32 0, %v9492
    %v9494 = vrot.slane %v9287, %v9493
    %v9495 = vlaneseq
    %v9496 = vshrl.u32 %v9495, 7
    %v9497 = vsub.s32 0, %v9496
    %v9498 = vrot.slane %v9301, %v9497
    %v9499 = vlaneseq
    %v9500 = vshrl.u32 %v9499, 7
    %v9501 = vsub.s32 0, %v9500
    %v9502 = vrot.slane %v9303, %v9501
    %v9503 = vlaneseq
    %v9504 = vshrl.u32 %v9503, 7
    %v9505 = vsub.s32 0, %v9504
    %v9506 = vrot.slane %v9305, %v9505
    %v9507 = vlaneseq
    %v9508 = vshrl.u32 %v9507, 7
    %v9509 = vsub.s32 0, %v9508
    %v9510 = vrot.slane %v9329, %v9509
    %v9511 = vlaneseq
    %v9512 = vshrl.u32 %v9511, 7
    %v9513 = vsub.s32 0, %v9512
    %v9514 = vrot.slane %v9343, %v9513
    %v9515 = vlaneseq
    %v9516 = vshrl.u32 %v9515, 7
    %v9517 = vsub.s32 0, %v9516
    %v9518 = vrot.slane %v9351, %v9517
    %v9519 = vlaneseq
    %v9520 = vshrl.u32 %v9519, 7
    %v9521 = vsub.s32 0, %v9520
    %v9522 = vrot.slane %v9353, %v9521
    %v9523 = vlaneseq
    %v9524 = vshrl.u32 %v9523, 7
    %v9525 = vsub.s32 0, %v9524
    %v9526 = vrot.slane %v9336, %v9525
    %v9527 = vlaneseq
    %v9528 = vshrl.u32 %v9527, 7
    %v9529 = vsub.s32 0, %v9528
    %v9530 = vrot.slane %v9350, %v9529
    %v9531 = vlaneseq
    %v9532 = vshrl.u32 %v9531, 7
    %v9533 = vsub.s32 0, %v9532
    %v9534 = vrot.slane %v9352, %v9533
    %v9535 = vlaneseq
    %v9536 = vshrl.u32 %v9535, 7
    %v9537 = vsub.s32 0, %v9536
    %v9538 = vrot.slane %v9354, %v9537
    %v9539 = vlaneseq
    %v9540 = vshrl.u32 %v9539, 7
    %v9541 = vsub.s32 0, %v9540
    %v9542 = vrot.slane %v9392, %v9541
    %v9543 = vlaneseq
    %v9544 = vshrl.u32 %v9543, 7
    %v9545 = vsub.s32 0, %v9544
    %v9546 = vrot.slane %v9400, %v9545
    %v9547 = vlaneseq
    %v9548 = vshrl.u32 %v9547, 7
    %v9549 = vsub.s32 0, %v9548
    %v9550 = vrot.slane %v9402, %v9549
    %v9551 = vlaneseq
    %v9552 = vshrl.u32 %v9551, 7
    %v9553 = vsub.s32 0, %v9552
    %v9554 = vrot.slane %v9385, %v9553
    %v9555 = vlaneseq
    %v9556 = vshrl.u32 %v9555, 7
    %v9557 = vsub.s32 0, %v9556
    %v9558 = vrot.slane %v9399, %v9557
    %v9559 = vlaneseq
    %v9560 = vshrl.u32 %v9559, 7
    %v9561 = vsub.s32 0, %v9560
    %v9562 = vrot.slane %v9401, %v9561
    %v9563 = vlaneseq
    %v9564 = vshrl.u32 %v9563, 7
    %v9565 = vsub.s32 0, %v9564
    %v9566 = vrot.slane %v9403, %v9565
    %v9567 = vlaneseq
    %v9568 = vshrl.u32 %v9567, 7
    %v9569 = vsub.s32 0, %v9568
    %v9570 = vrot.slane %v9427, %v9569
    %v9571 = vlaneseq
    %v9572 = vshrl.u32 %v9571, 7
    %v9573 = vsub.s32 0, %v9572
    %v9574 = vrot.slane %v9441, %v9573
    %v9575 = vlaneseq
    %v9576 = vshrl.u32 %v9575, 7
    %v9577 = vsub.s32 0, %v9576
    %v9578 = vrot.slane %v9449, %v9577
    %v9579 = vlaneseq
    %v9580 = vshrl.u32 %v9579, 7
    %v9581 = vsub.s32 0, %v9580
    %v9582 = vrot.slane %v9451, %v9581
    %v9583 = vlaneseq
    %v9584 = vshrl.u32 %v9583, 7
    %v9585 = vsub.s32 0, %v9584
    %v9586 = vrot.slane %v9434, %v9585
    %v9587 = vlaneseq
    %v9588 = vshrl.u32 %v9587, 7
    %v9589 = vsub.s32 0, %v9588
    %v9590 = vrot.slane %v9448, %v9589
    %v9591 = vlaneseq
    %v9592 = vshrl.u32 %v9591, 7
    %v9593 = vsub.s32 0, %v9592
    %v9594 = vrot.slane %v9450, %v9593
    %v9595 = vlaneseq
    %v9596 = vshrl.u32 %v9595, 7
    %v9597 = vsub.s32 0, %v9596
    %v9598 = vrot.slane %v9452, %v9597
    %v9599 = vlaneseq
    %v9600 = vshrl.u32 %v9599, 7
    %v9601 = vsub.s32 0, %v9600
    %v9602 = vrot.slane %v9467, %v9601
    %v9603 = vlaneseq
    %v9604 = vshrl.u32 %v9603, 7
    %v9605 = vsub.s32 0, %v9604
    %v9606 = vrot.slane %v9378, %v9605
    %v9607 = vlaneseq
    %v9608 = vshrl.u32 %v9607, 7
    %v9609 = vsub.s32 0, %v9608
    %v9610 = vrot.slane %v9474, %v9609
    %v9611 = vadd.s32 %v2272, 40
    %v9612 = vadd.s32 %v2272, 48
    %v9613 = vadd.s32 %v2272, 56
    %vm9614 = vcmp.lt.s32.totalorder %v9611, 0
    %v9615 = vsub.s32 0, %v9611
    %v9616 = vsel %vm9614, %v9615, %v9611
    %v9617 = vshrl.u32 %v9616, 1
    %v9618 = vand.u32 %v9616, 1
    %v9619 = vsub.s32 0, %v9618
    %v9620 = vsel %vm9614, %v9619, %v9618
    %vm9621 = vcmp.lt.s32.totalorder %v9612, 0
    %v9622 = vsub.s32 0, %v9612
    %v9623 = vsel %vm9621, %v9622, %v9612
    %v9624 = vshrl.u32 %v9623, 1
    %v9625 = vand.u32 %v9623, 1
    %v9626 = vsub.s32 0, %v9625
    %v9627 = vsel %vm9621, %v9626, %v9625
    %vm9628 = vcmp.lt.s32.totalorder %v9613, 0
    %v9629 = vsub.s32 0, %v9613
    %v9630 = vsel %vm9628, %v9629, %v9613
    %v9631 = vshrl.u32 %v9630, 1
    %v9632 = vand.u32 %v9630, 1
    %v9633 = vsub.s32 0, %v9632
    %v9634 = vsel %vm9628, %v9633, %v9632
    %vm9635 = vcmp.ne.s32.totalorder %v9620, 0
    %vm9636 = vcmp.ne.s32.totalorder %v9627, 0
    %vm9637 = vcmp.ne.s32.totalorder %v9634, 0
    %vm9638 = vcmp.lt.s32.totalorder %v9620, 0
    %vm9639 = vcmp.lt.s32.totalorder %v9627, 0
    %vm9640 = vcmp.lt.s32.totalorder %v9634, 0
    %vm9641 = vmand %vm9638, %vm9635
    %vm9642 = vmand %vm9639, %vm9636
    %vm9643 = vmand %vm9640, %vm9637
    %v9644 = vadd.s32 %v9620, 2
    %v9645 = vadd.s32 %v9627, 2
    %v9646 = vadd.s32 %v9634, 2
    %v9647 = vsel %vm9641, %v9644, %v9620
    %v9648 = vsel %vm9642, %v9645, %v9627
    %v9649 = vsel %vm9643, %v9646, %v9634
    %vm9650 = vcmp.eq.s32.totalorder %v9647, 0
    %vm9651 = vcmp.eq.s32.totalorder %v9648, 0
    %vm9652 = vcmp.eq.s32.totalorder %v9649, 0
    %v9653 = vcombine.low %v9478, %v9482
    %v9654 = vcombine.low %v9486, %v9490
    %v9656 = vunpack.c.l.s4 1983009808
    %v9657 = vunpack.c.0.s8 %v9656
    %v9658 = vlaneseq
    %v9659 = vshrl.u32 %v9658, 7
    %v9660 = vsub.s32 %v9657, %v9659
    %v9661 = vrot.slane %v9653, %v9660
    %v9663 = vunpack.c.l.s4 1983009808
    %v9664 = vunpack.c.0.s8 %v9663
    %v9665 = vlaneseq
    %v9666 = vshrl.u32 %v9665, 7
    %v9667 = vsub.s32 %v9664, %v9666
    %v9668 = vrot.slane %v9654, %v9667
    %v9669 = vcombine.low %v9661, %v9668
    %v9670 = vcombine.low %v9494, %v9498
    %v9671 = vcombine.low %v9502, %v9506
    %v9673 = vunpack.c.l.s4 1983009808
    %v9674 = vunpack.c.0.s8 %v9673
    %v9675 = vlaneseq
    %v9676 = vshrl.u32 %v9675, 7
    %v9677 = vsub.s32 %v9674, %v9676
    %v9678 = vrot.slane %v9670, %v9677
    %v9680 = vunpack.c.l.s4 1983009808
    %v9681 = vunpack.c.0.s8 %v9680
    %v9682 = vlaneseq
    %v9683 = vshrl.u32 %v9682, 7
    %v9684 = vsub.s32 %v9681, %v9683
    %v9685 = vrot.slane %v9671, %v9684
    %v9686 = vcombine.low %v9678, %v9685
    %v9687 = vcombine.low %v9510, %v9514
    %v9688 = vcombine.low %v9518, %v9522
    %v9690 = vunpack.c.l.s4 1983009808
    %v9691 = vunpack.c.0.s8 %v9690
    %v9692 = vlaneseq
    %v9693 = vshrl.u32 %v9692, 7
    %v9694 = vsub.s32 %v9691, %v9693
    %v9695 = vrot.slane %v9687, %v9694
    %v9697 = vunpack.c.l.s4 1983009808
    %v9698 = vunpack.c.0.s8 %v9697
    %v9699 = vlaneseq
    %v9700 = vshrl.u32 %v9699, 7
    %v9701 = vsub.s32 %v9698, %v9700
    %v9702 = vrot.slane %v9688, %v9701
    %v9703 = vcombine.low %v9695, %v9702
    %v9704 = vcombine.low %v9526, %v9530
    %v9705 = vcombine.low %v9534, %v9538
    %v9707 = vunpack.c.l.s4 1983009808
    %v9708 = vunpack.c.0.s8 %v9707
    %v9709 = vlaneseq
    %v9710 = vshrl.u32 %v9709, 7
    %v9711 = vsub.s32 %v9708, %v9710
    %v9712 = vrot.slane %v9704, %v9711
    %v9714 = vunpack.c.l.s4 1983009808
    %v9715 = vunpack.c.0.s8 %v9714
    %v9716 = vlaneseq
    %v9717 = vshrl.u32 %v9716, 7
    %v9718 = vsub.s32 %v9715, %v9717
    %v9719 = vrot.slane %v9705, %v9718
    %v9720 = vcombine.low %v9712, %v9719
    %v9721 = vcombine.low %v9542, %v9546
    %v9722 = vcombine.low %v9550, %v9554
    %v9724 = vunpack.c.l.s4 1983009808
    %v9725 = vunpack.c.0.s8 %v9724
    %v9726 = vlaneseq
    %v9727 = vshrl.u32 %v9726, 7
    %v9728 = vsub.s32 %v9725, %v9727
    %v9729 = vrot.slane %v9721, %v9728
    %v9731 = vunpack.c.l.s4 1983009808
    %v9732 = vunpack.c.0.s8 %v9731
    %v9733 = vlaneseq
    %v9734 = vshrl.u32 %v9733, 7
    %v9735 = vsub.s32 %v9732, %v9734
    %v9736 = vrot.slane %v9722, %v9735
    %v9737 = vcombine.low %v9729, %v9736
    %v9738 = vcombine.low %v9558, %v9562
    %v9739 = vcombine.low %v9566, %v9570
    %v9741 = vunpack.c.l.s4 1983009808
    %v9742 = vunpack.c.0.s8 %v9741
    %v9743 = vlaneseq
    %v9744 = vshrl.u32 %v9743, 7
    %v9745 = vsub.s32 %v9742, %v9744
    %v9746 = vrot.slane %v9738, %v9745
    %v9748 = vunpack.c.l.s4 1983009808
    %v9749 = vunpack.c.0.s8 %v9748
    %v9750 = vlaneseq
    %v9751 = vshrl.u32 %v9750, 7
    %v9752 = vsub.s32 %v9749, %v9751
    %v9753 = vrot.slane %v9739, %v9752
    %v9754 = vcombine.low %v9746, %v9753
    %v9755 = vcombine.low %v9574, %v9578
    %v9756 = vcombine.low %v9582, %v9586
    %v9758 = vunpack.c.l.s4 1983009808
    %v9759 = vunpack.c.0.s8 %v9758
    %v9760 = vlaneseq
    %v9761 = vshrl.u32 %v9760, 7
    %v9762 = vsub.s32 %v9759, %v9761
    %v9763 = vrot.slane %v9755, %v9762
    %v9765 = vunpack.c.l.s4 1983009808
    %v9766 = vunpack.c.0.s8 %v9765
    %v9767 = vlaneseq
    %v9768 = vshrl.u32 %v9767, 7
    %v9769 = vsub.s32 %v9766, %v9768
    %v9770 = vrot.slane %v9756, %v9769
    %v9771 = vcombine.low %v9763, %v9770
    %v9772 = vcombine.low %v9590, %v9594
    %v9773 = vcombine.low %v9598, %v9602
    %v9775 = vunpack.c.l.s4 1983009808
    %v9776 = vunpack.c.0.s8 %v9775
    %v9777 = vlaneseq
    %v9778 = vshrl.u32 %v9777, 7
    %v9779 = vsub.s32 %v9776, %v9778
    %v9780 = vrot.slane %v9772, %v9779
    %v9782 = vunpack.c.l.s4 1983009808
    %v9783 = vunpack.c.0.s8 %v9782
    %v9784 = vlaneseq
    %v9785 = vshrl.u32 %v9784, 7
    %v9786 = vsub.s32 %v9783, %v9785
    %v9787 = vrot.slane %v9773, %v9786
    %v9788 = vcombine.low %v9780, %v9787
    %9789 = vrot.lane.b32.xlu0 %v9669, 96
    %v9790 = vpop.permute.xlu0 %9789
    %9791 = vrot.lane.b32.xlu0 %v9686, 96
    %v9792 = vpop.permute.xlu0 %9791
    %9793 = vrot.lane.b32.xlu0 %v9703, 96
    %v9794 = vpop.permute.xlu0 %9793
    %9795 = vrot.lane.b32.xlu0 %v9720, 96
    %v9796 = vpop.permute.xlu0 %9795
    %9797 = vrot.lane.b32.xlu0 %v9737, 96
    %v9798 = vpop.permute.xlu0 %9797
    %9799 = vrot.lane.b32.xlu0 %v9754, 96
    %v9800 = vpop.permute.xlu0 %9799
    %9801 = vrot.lane.b32.xlu0 %v9771, 96
    %v9802 = vpop.permute.xlu0 %9801
    %9803 = vrot.lane.b32.xlu0 %v9788, 96
    %v9804 = vpop.permute.xlu0 %9803
    %v9813 = vcombine.low %v9482, %v9486
    %v9814 = vcombine.low %v9490, %v9494
    %v9816 = vunpack.c.l.s4 1983009808
    %v9817 = vunpack.c.0.s8 %v9816
    %v9818 = vlaneseq
    %v9819 = vshrl.u32 %v9818, 7
    %v9820 = vsub.s32 %v9817, %v9819
    %v9821 = vrot.slane %v9813, %v9820
    %v9823 = vunpack.c.l.s4 1983009808
    %v9824 = vunpack.c.0.s8 %v9823
    %v9825 = vlaneseq
    %v9826 = vshrl.u32 %v9825, 7
    %v9827 = vsub.s32 %v9824, %v9826
    %v9828 = vrot.slane %v9814, %v9827
    %v9829 = vcombine.low %v9821, %v9828
    %v9830 = vcombine.low %v9498, %v9502
    %v9831 = vcombine.low %v9506, %v9510
    %v9833 = vunpack.c.l.s4 1983009808
    %v9834 = vunpack.c.0.s8 %v9833
    %v9835 = vlaneseq
    %v9836 = vshrl.u32 %v9835, 7
    %v9837 = vsub.s32 %v9834, %v9836
    %v9838 = vrot.slane %v9830, %v9837
    %v9840 = vunpack.c.l.s4 1983009808
    %v9841 = vunpack.c.0.s8 %v9840
    %v9842 = vlaneseq
    %v9843 = vshrl.u32 %v9842, 7
    %v9844 = vsub.s32 %v9841, %v9843
    %v9845 = vrot.slane %v9831, %v9844
    %v9846 = vcombine.low %v9838, %v9845
    %v9847 = vcombine.low %v9514, %v9518
    %v9848 = vcombine.low %v9522, %v9526
    %v9850 = vunpack.c.l.s4 1983009808
    %v9851 = vunpack.c.0.s8 %v9850
    %v9852 = vlaneseq
    %v9853 = vshrl.u32 %v9852, 7
    %v9854 = vsub.s32 %v9851, %v9853
    %v9855 = vrot.slane %v9847, %v9854
    %v9857 = vunpack.c.l.s4 1983009808
    %v9858 = vunpack.c.0.s8 %v9857
    %v9859 = vlaneseq
    %v9860 = vshrl.u32 %v9859, 7
    %v9861 = vsub.s32 %v9858, %v9860
    %v9862 = vrot.slane %v9848, %v9861
    %v9863 = vcombine.low %v9855, %v9862
    %v9864 = vcombine.low %v9530, %v9534
    %v9865 = vcombine.low %v9538, %v9606
    %v9867 = vunpack.c.l.s4 1983009808
    %v9868 = vunpack.c.0.s8 %v9867
    %v9869 = vlaneseq
    %v9870 = vshrl.u32 %v9869, 7
    %v9871 = vsub.s32 %v9868, %v9870
    %v9872 = vrot.slane %v9864, %v9871
    %v9874 = vunpack.c.l.s4 1983009808
    %v9875 = vunpack.c.0.s8 %v9874
    %v9876 = vlaneseq
    %v9877 = vshrl.u32 %v9876, 7
    %v9878 = vsub.s32 %v9875, %v9877
    %v9879 = vrot.slane %v9865, %v9878
    %v9880 = vcombine.low %v9872, %v9879
    %v9881 = vcombine.low %v9546, %v9550
    %v9882 = vcombine.low %v9554, %v9558
    %v9884 = vunpack.c.l.s4 1983009808
    %v9885 = vunpack.c.0.s8 %v9884
    %v9886 = vlaneseq
    %v9887 = vshrl.u32 %v9886, 7
    %v9888 = vsub.s32 %v9885, %v9887
    %v9889 = vrot.slane %v9881, %v9888
    %v9891 = vunpack.c.l.s4 1983009808
    %v9892 = vunpack.c.0.s8 %v9891
    %v9893 = vlaneseq
    %v9894 = vshrl.u32 %v9893, 7
    %v9895 = vsub.s32 %v9892, %v9894
    %v9896 = vrot.slane %v9882, %v9895
    %v9897 = vcombine.low %v9889, %v9896
    %v9898 = vcombine.low %v9562, %v9566
    %v9899 = vcombine.low %v9570, %v9574
    %v9901 = vunpack.c.l.s4 1983009808
    %v9902 = vunpack.c.0.s8 %v9901
    %v9903 = vlaneseq
    %v9904 = vshrl.u32 %v9903, 7
    %v9905 = vsub.s32 %v9902, %v9904
    %v9906 = vrot.slane %v9898, %v9905
    %v9908 = vunpack.c.l.s4 1983009808
    %v9909 = vunpack.c.0.s8 %v9908
    %v9910 = vlaneseq
    %v9911 = vshrl.u32 %v9910, 7
    %v9912 = vsub.s32 %v9909, %v9911
    %v9913 = vrot.slane %v9899, %v9912
    %v9914 = vcombine.low %v9906, %v9913
    %v9915 = vcombine.low %v9578, %v9582
    %v9916 = vcombine.low %v9586, %v9590
    %v9918 = vunpack.c.l.s4 1983009808
    %v9919 = vunpack.c.0.s8 %v9918
    %v9920 = vlaneseq
    %v9921 = vshrl.u32 %v9920, 7
    %v9922 = vsub.s32 %v9919, %v9921
    %v9923 = vrot.slane %v9915, %v9922
    %v9925 = vunpack.c.l.s4 1983009808
    %v9926 = vunpack.c.0.s8 %v9925
    %v9927 = vlaneseq
    %v9928 = vshrl.u32 %v9927, 7
    %v9929 = vsub.s32 %v9926, %v9928
    %v9930 = vrot.slane %v9916, %v9929
    %v9931 = vcombine.low %v9923, %v9930
    %v9932 = vcombine.low %v9594, %v9598
    %v9933 = vcombine.low %v9602, %v9610
    %v9935 = vunpack.c.l.s4 1983009808
    %v9936 = vunpack.c.0.s8 %v9935
    %v9937 = vlaneseq
    %v9938 = vshrl.u32 %v9937, 7
    %v9939 = vsub.s32 %v9936, %v9938
    %v9940 = vrot.slane %v9932, %v9939
    %v9942 = vunpack.c.l.s4 1983009808
    %v9943 = vunpack.c.0.s8 %v9942
    %v9944 = vlaneseq
    %v9945 = vshrl.u32 %v9944, 7
    %v9946 = vsub.s32 %v9943, %v9945
    %v9947 = vrot.slane %v9933, %v9946
    %v9948 = vcombine.low %v9940, %v9947
    %v9957 = vsel %vm2368, %v9790, %v9829
    %v9958 = vsel %vm2369, %v9792, %v9846
    %v9959 = vsel %vm2370, %v9794, %v9863
    %v9960 = vsel %vm6645, %v9796, %v9880
    %v9961 = vsel %vm6646, %v9798, %v9897
    %v9962 = vsel %vm9650, %v9800, %v9914
    %v9963 = vsel %vm9651, %v9802, %v9931
    %v9964 = vsel %vm9652, %v9804, %v9948
    %vm9965 = vcmask 261120
    %9966 = vst.msk [vmem:[#allocation5] sm:$0xff] %vm9965, %v9957
    %9967 = vst.msk [vmem:[#allocation5 + $0x8] sm:$0xff] %vm9965, %v9958
    %9968 = vst.msk [vmem:[#allocation5 + $0x10] sm:$0xff] %vm9965, %v9959
    %9969 = vst.msk [vmem:[#allocation5 + $0x18] sm:$0xff] %vm9965, %v9960
    %9970 = vst.msk [vmem:[#allocation5 + $0x20] sm:$0xff] %vm9965, %v9961
    %9971 = vst.msk [vmem:[#allocation5 + $0x28] sm:$0xff] %vm9965, %v9962
    %9972 = vst.msk [vmem:[#allocation5 + $0x30] sm:$0xff] %vm9965, %v9963
    %9973 = vst.msk [vmem:[#allocation5 + $0x38] sm:$0xff] %vm9965, %v9964
    // Predicated region
    $region58: #{tpu_custom_call.1} parent=1 // pred_check
      _
    $region59: #{tpu_custom_call.1} parent=1 // pred_check_branch
      %9975 = sbr.rel (0) target = $region61
    $region60: #{tpu_custom_call.1} parent=1 // pred_region
      %s9977 = ssub.s32 1024, 1024
      %9978 = vsyncadd [#allocation4], %s9977
      %s9979 = sshll.u32 [#allocation5], 4
      %s9980 = int_to_ptr.vmem [resolvable:$true] %s9979
      %9985 = dma.vmem_to_hbm [thread:$0]  %s9980, 1024, %s13, [#allocation4], 128, 128, 8
    $region61: #{tpu_custom_call.1} parent=1 // pred_fallthru
      _
    // Predicated region
    $region62: #{tpu_custom_call.1} parent=1 // pred_check
      _
    $region63: #{tpu_custom_call.1} parent=1 // pred_check_branch
      %9987 = sbr.rel (0) target = $region65
    $region64: #{tpu_custom_call.1} parent=1 // pred_region
      %9988 = dma.done [#allocation4], 1024
    $region65: #{tpu_custom_call.1} parent=1 // pred_fallthru
      _
    %9989 = vsyncpa [#allocation3], 1
    %9990 = vsyncpa [#allocation4], 1

</llo_original>
